<compile_context>
chip_gen: v5e
topology: v5e:2x2
jax: 0.10.0
libtpu: 0.0.40
codegen_flags: <defaults>
</compile_context>

<pallas_src>
import functools
import numpy as np
import jax
import jax.numpy as jnp
from jax.experimental import pallas as pl
from jax.experimental.pallas import tpu as pltpu

NEG_SLOPE = 0.1          # matches nn.LeakyReLU(0.1) in the reference
BN_EPS = 1e-5
COMPUTE_DTYPE = jnp.bfloat16   # matmul operand / activation storage dtype


# ---------------------------------------------------------------------------
# Pallas kernels
# ---------------------------------------------------------------------------
def _gemm_bias_act_kernel(x_ref, w_ref, b_ref, o_ref, *, neg_slope, apply_act):
    """out = leaky_relu(x @ w + b); bf16 operands, f32 accumulation."""
    acc = jnp.dot(x_ref[...], w_ref[...], preferred_element_type=jnp.float32)
    acc = acc + b_ref[...]
    if apply_act:
        acc = jnp.where(acc >= 0.0, acc, acc * neg_slope)
    o_ref[...] = acc.astype(o_ref.dtype)


def _double_gemm_kernel(x_ref, w1_ref, b1_ref, w2_ref, b2_ref, o_ref, *, neg_slope):
    """Fused [3x3 conv + BN + LeakyReLU] -> [1x1 conv + BN + LeakyReLU]."""
    h = jnp.dot(x_ref[...], w1_ref[...], preferred_element_type=jnp.float32)
    h = h + b1_ref[...]
    h = jnp.where(h >= 0.0, h, h * neg_slope)
    acc = jnp.dot(h.astype(w2_ref.dtype), w2_ref[...],
                  preferred_element_type=jnp.float32)
    acc = acc + b2_ref[...]
    acc = jnp.where(acc >= 0.0, acc, acc * neg_slope)
    o_ref[...] = acc.astype(o_ref.dtype)


def _head_kernel(x_ref, q_ref, w1_ref, b1_ref, w2_ref, b2_ref, o_ref, *, neg_slope):
    """adaptive_avg_pool(7x7) + avg_pool(7) + flatten + fc1 + lrelu + fc2.

    q_ref is the (N, N*H*W) block-diagonal pooling matrix composing the two
    average pools into a single per-batch weighted row sum.
    """
    pooled = jnp.dot(q_ref[...], x_ref[...].astype(jnp.float32),
                     preferred_element_type=jnp.float32)            # (N, C)
    h = jnp.dot(pooled.astype(w1_ref.dtype), w1_ref[...],
                preferred_element_type=jnp.float32) + b1_ref[...]
    h = jnp.where(h >= 0.0, h, h * neg_slope)
    out = jnp.dot(h.astype(w2_ref.dtype), w2_ref[...],
                  preferred_element_type=jnp.float32) + b2_ref[...]
    o_ref[...] = out.astype(o_ref.dtype)


def _max4_kernel(a_ref, b_ref, c_ref, d_ref, o_ref):
    o_ref[...] = jnp.maximum(jnp.maximum(a_ref[...], b_ref[...]),
                             jnp.maximum(c_ref[...], d_ref[...]))


# ---------------------------------------------------------------------------
# Tiling helpers
# ---------------------------------------------------------------------------
def _round_up(x, m):
    return ((x + m - 1) // m) * m


def _m_tiling(M):
    """Adaptive M tiling: (Mp, TM, grid_m).

    Small M -> one full block (no wasted MXU work); large M -> ~512-row tiles
    (multiple grid steps, marked "parallel" so v7x megacore can split them).
    Rows rounded to 16 (bf16 sublane packing)."""
    m = _round_up(M, 16)
    if m <= 384:
        return m, m, 1
    n_tiles = max(2, -(-m // 512))
    tm = _round_up(-(-m // n_tiles), 16)
    return tm * n_tiles, tm, n_tiles


def _pad_rows(x, mp):
    m = x.shape[0]
    return x if mp == m else jnp.pad(x, ((0, mp - m), (0, 0)))


# ---------------------------------------------------------------------------
# Pallas-call wrappers
# ---------------------------------------------------------------------------
def gemm_bias_act(x, w, b, *, apply_act=True, out_dtype=COMPUTE_DTYPE):
    """x:(M,K) @ w:(K,N) + b:(1,N) (+ LeakyReLU). Full-dim K/N blocks."""
    M, K = x.shape
    N = w.shape[1]
    mp, tm, gm = _m_tiling(M)
    xp = _pad_rows(x.astype(COMPUTE_DTYPE), mp)
    kern = functools.partial(_gemm_bias_act_kernel,
                             neg_slope=NEG_SLOPE, apply_act=apply_act)
    out = pl.pallas_call(
        kern,
        out_shape=jax.ShapeDtypeStruct((mp, N), out_dtype),
        grid=(gm,),
        in_specs=[
            pl.BlockSpec((tm, K), lambda i: (i, 0)),
            pl.BlockSpec((K, N), lambda i: (0, 0)),
            pl.BlockSpec((1, N), lambda i: (0, 0)),
        ],
        out_specs=pl.BlockSpec((tm, N), lambda i: (i, 0)),
        compiler_params=pltpu.CompilerParams(
            dimension_semantics=("parallel",)),
    )(xp, w, b)
    return out[:M] if mp != M else out


def double_gemm(x, w1, b1, w2, b2, *, out_dtype=COMPUTE_DTYPE):
    """Fused 3x3-conv GEMM followed by 1x1-conv GEMM in one kernel."""
    M, K = x.shape
    N1, N2 = w1.shape[1], w2.shape[1]
    mp, tm, gm = _m_tiling(M)
    xp = _pad_rows(x.astype(COMPUTE_DTYPE), mp)
    kern = functools.partial(_double_gemm_kernel, neg_slope=NEG_SLOPE)
    out = pl.pallas_call(
        kern,
        out_shape=jax.ShapeDtypeStruct((mp, N2), out_dtype),
        grid=(gm,),
        in_specs=[
            pl.BlockSpec((tm, K), lambda i: (i, 0)),
            pl.BlockSpec((K, N1), lambda i: (0, 0)),
            pl.BlockSpec((1, N1), lambda i: (0, 0)),
            pl.BlockSpec((N1, N2), lambda i: (0, 0)),
            pl.BlockSpec((1, N2), lambda i: (0, 0)),
        ],
        out_specs=pl.BlockSpec((tm, N2), lambda i: (i, 0)),
        compiler_params=pltpu.CompilerParams(
            dimension_semantics=("parallel",)),
    )(xp, w1, b1, w2, b2)
    return out[:M] if mp != M else out


def max_pool_2x2(x):
    """MaxPool2d(kernel=2, stride=2, pad=0) on NHWC (floor mode)."""
    N, H, W, C = x.shape
    Ho, Wo = H // 2, W // 2
    xc = x[:, :Ho * 2, :Wo * 2, :]
    M = N * Ho * Wo
    corners = (xc[:, 0::2, 0::2, :].reshape(M, C),
               xc[:, 0::2, 1::2, :].reshape(M, C),
               xc[:, 1::2, 0::2, :].reshape(M, C),
               xc[:, 1::2, 1::2, :].reshape(M, C))
    out = pl.pallas_call(
        _max4_kernel,
        out_shape=jax.ShapeDtypeStruct((M, C), x.dtype),
        grid=(1,),
        in_specs=[pl.BlockSpec((M, C), lambda i: (0, 0))] * 4,
        out_specs=pl.BlockSpec((M, C), lambda i: (0, 0)),
    )(*corners)
    return out.reshape(N, Ho, Wo, C)


def im2col(x, k, s, p):
    """NHWC im2col -> (N*Ho*Wo, k*k*C) patches (feature order kh, kw, ci)."""
    N, H, W, C = x.shape
    Ho = (H + 2 * p - k) // s + 1
    Wo = (W + 2 * p - k) // s + 1
    xp = jnp.pad(x, ((0, 0), (p, p), (p, p), (0, 0))) if p else x
    cols = []
    for kh in range(k):
        for kw in range(k):
            patch = jax.lax.slice(
                xp, (0, kh, kw, 0),
                (N, kh + (Ho - 1) * s + 1, kw + (Wo - 1) * s + 1, C),
                (1, s, s, 1))
            cols.append(patch.reshape(N * Ho * Wo, C))
    return jnp.concatenate(cols, axis=-1), (N, Ho, Wo)


def conv_block(x, conv_prm, *, k, s, p):
    """Conv2d + BatchNorm(eval, folded) + LeakyReLU as one fused Pallas GEMM."""
    w, b = conv_prm
    patches, (N, Ho, Wo) = im2col(x, k, s, p)
    out = gemm_bias_act(patches, w, b, apply_act=True)
    return out.reshape(N, Ho, Wo, w.shape[1])


def conv_pair_block(x, conv_prm1, conv_prm2, *, k, s, p):
    """[3x3 conv+BN+LeakyReLU] + [1x1 conv+BN+LeakyReLU] in one kernel."""
    w1, b1 = conv_prm1
    w2, b2 = conv_prm2
    patches, (N, Ho, Wo) = im2col(x, k, s, p)
    out = double_gemm(patches, w1, b1, w2, b2)
    return out.reshape(N, Ho, Wo, w2.shape[1])


def _pool_matrix_1d(in_size, out_size):
    """PyTorch adaptive-avg-pool bin matrix (out_size, in_size)."""
    P = np.zeros((out_size, in_size), np.float32)
    for i in range(out_size):
        start = (i * in_size) // out_size
        end = -((-(i + 1) * in_size) // out_size)   # ceil
        P[i, start:end] = 1.0 / (end - start)
    return P


def _head_pool_matrix(N, H, W, pool_out=7, avg_k=7):
    """Composition of AdaptiveAvgPool2d((7,7)) and AvgPool2d(7,1,0) expressed
    as a block-diagonal (N, N*H*W) row-weighting matrix."""
    col_h = _pool_matrix_1d(H, pool_out).sum(axis=0)
    col_w = _pool_matrix_1d(W, pool_out).sum(axis=0)
    p = (np.outer(col_h, col_w) / float(avg_k * avg_k)).reshape(-1)
    Q = np.zeros((N, N * H * W), np.float32)
    for n in range(N):
        Q[n, n * H * W:(n + 1) * H * W] = p
    return Q


def head_forward(x, fc_params):
    """Fused pools + flatten + Linear(256,256) + LeakyReLU + Linear(256,32)."""
    N, H, W, C = x.shape
    x_flat = x.reshape(N * H * W, C)
    q = jnp.asarray(_head_pool_matrix(N, H, W), jnp.float32)
    (w1, b1), (w2, b2) = fc_params
    kern = functools.partial(_head_kernel, neg_slope=NEG_SLOPE)
    out = pl.pallas_call(
        kern,
        out_shape=jax.ShapeDtypeStruct((N, w2.shape[1]), jnp.float32),
        grid=(1,),
        in_specs=[
            pl.BlockSpec((N * H * W, C), lambda i: (0, 0)),
            pl.BlockSpec((N, N * H * W), lambda i: (0, 0)),
            pl.BlockSpec(w1.shape, lambda i: (0, 0)),
            pl.BlockSpec((1, w1.shape[1]), lambda i: (0, 0)),
            pl.BlockSpec(w2.shape, lambda i: (0, 0)),
            pl.BlockSpec((1, w2.shape[1]), lambda i: (0, 0)),
        ],
        out_specs=pl.BlockSpec((N, w2.shape[1]), lambda i: (0, 0)),
    )(x_flat, q, w1, b1, w2, b2)
    return out


# ---------------------------------------------------------------------------
# LiteFace model (in_channels=3, c1=c2=c3=c4=64, f2=32)
# ---------------------------------------------------------------------------
CONV_CFGS = (           # (cout, k, stride, pad)
    (64, 3, 2, 3),
    (64, 3, 1, 1), (16, 1, 1, 0),
    (64, 3, 1, 1), (16, 1, 1, 0),
    (64, 3, 1, 1), (16, 1, 1, 0),
    (256, 3, 1, 1),
)
FC_DIMS = ((256, 256), (256, 32))


def init_params(key, in_channels):
    """Raw PyTorch-style parameters (conv w/b + BN stats, fc w/b)."""
    params = {'convs': [], 'fc': []}
    cin = in_channels
    for cout, k, _, _ in CONV_CFGS:
        key, k1, k2 = jax.random.split(key, 3)
        w = jax.random.normal(k1, (k, k, cin, cout), jnp.float32) * 0.05
        b = jax.random.normal(k2, (cout,), jnp.float32) * 0.01
        gamma = jnp.ones((cout,), jnp.float32)
        beta = jnp.zeros((cout,), jnp.float32)
        mean = jnp.zeros((cout,), jnp.float32)
        var = jnp.ones((cout,), jnp.float32)
        params['convs'].append((w, b, gamma, beta, mean, var))
        cin = cout
    for din, dout in FC_DIMS:
        key, k1, k2 = jax.random.split(key, 3)
        w = jax.random.normal(k1, (din, dout), jnp.float32) * 0.05
        b = jax.random.normal(k2, (dout,), jnp.float32) * 0.01
        params['fc'].append((w, b))
    return params


def prepare_params(raw):
    """One-time fold of eval-mode BatchNorm into the weights/biases + bf16 cast."""
    convs = []
    for w, b, gamma, beta, mean, var in raw['convs']:
        k, _, cin, cout = w.shape
        scale = gamma / jnp.sqrt(var + BN_EPS)
        wmat = (w * scale).reshape(k * k * cin, cout).astype(COMPUTE_DTYPE)
        bias = ((b - mean) * scale + beta).reshape(1, cout).astype(jnp.float32)
        convs.append((wmat, bias))
    fc = []
    for w, b in raw['fc']:
        fc.append((w.astype(COMPUTE_DTYPE), b.reshape(1, -1).astype(jnp.float32)))
    return {'convs': convs, 'fc': fc}


def lite_face_forward(x_nchw, params):
    cw = params['convs']
    x = jnp.transpose(x_nchw, (0, 2, 3, 1)).astype(COMPUTE_DTYPE)   # NCHW -> NHWC
    x = conv_block(x, cw[0], k=3, s=2, p=3)
    x = max_pool_2x2(x)
    x = conv_pair_block(x, cw[1], cw[2], k=3, s=1, p=1)
    x = max_pool_2x2(x)
    x = conv_pair_block(x, cw[3], cw[4], k=3, s=1, p=1)
    x = max_pool_2x2(x)
    x = conv_pair_block(x, cw[5], cw[6], k=3, s=1, p=1)
    x = max_pool_2x2(x)
    x = conv_block(x, cw[7], k=3, s=1, p=1)
    return head_forward(x, params['fc'])


if __name__ == "__main__":
    key = jax.random.PRNGKey(0)
    kx, kp = jax.random.split(key)
    B, C, H, W = 2, 3, 64, 64
    x = jax.random.normal(kx, (B, C, H, W), jnp.float32)
    params = prepare_params(init_params(kp, C))
    fwd = jax.jit(lite_face_forward)
    out = jax.block_until_ready(fwd(x, params))
    assert out.shape == (B, 32), out.shape
    assert bool(jnp.all(jnp.isfinite(out)))
    print("KERNEL_OK")
</pallas_src>

<mosaic_0001>
module attributes {stable_mosaic.version = 11 : i64} {
  func.func @_gemm_bias_act_kernel(%arg0: i32, %arg1: memref<464x27xbf16, #tpu.memory_space<vmem>>, %arg2: memref<27x64xbf16, #tpu.memory_space<vmem>>, %arg3: memref<1x64xf32, #tpu.memory_space<vmem>>, %arg4: memref<464x64xbf16, #tpu.memory_space<vmem>>) attributes {dimension_semantics = [#tpu.dimension_semantics<parallel>], iteration_bounds = array<i64: 5>, scalar_prefetch = 0 : i64, scratch_operands = 0 : i64, tpu.core_type = #tpu.core_type<tc>, window_params = [{transform_indices = @transform_0, window_bounds = array<i64: 464, 27>}, {pipeline_mode = #tpu.pipeline_mode<synchronous>, transform_indices = @transform_1, window_bounds = array<i64: 27, 64>}, {pipeline_mode = #tpu.pipeline_mode<synchronous>, transform_indices = @transform_2, window_bounds = array<i64: 1, 64>}, {transform_indices = @transform_3, window_bounds = array<i64: 464, 64>}]} {
    %c0 = arith.constant 0 : index
    %c0_0 = arith.constant 0 : index
    %0 = vector.load %arg1[%c0, %c0_0] : memref<464x27xbf16, #tpu.memory_space<vmem>>, vector<464x27xbf16>
    %c0_1 = arith.constant 0 : index
    %c0_2 = arith.constant 0 : index
    %1 = vector.load %arg2[%c0_1, %c0_2] : memref<27x64xbf16, #tpu.memory_space<vmem>>, vector<27x64xbf16>
    %cst = arith.constant dense<0.000000e+00> : vector<464x64xf32>
    %2 = tpu.matmul %0, %1, %cst {dimension_numbers = #tpu.dot_dimension_numbers<[1], [0], [0], [1], [0, 0, 1, 1], [], []>} : vector<464x27xbf16>, vector<27x64xbf16>, vector<464x64xf32> -> vector<464x64xf32>
    %c0_3 = arith.constant 0 : index
    %c0_4 = arith.constant 0 : index
    %3 = vector.load %arg3[%c0_3, %c0_4] : memref<1x64xf32, #tpu.memory_space<vmem>>, vector<1x64xf32>
    %4 = vector.broadcast %3 : vector<1x64xf32> to vector<464x64xf32>
    %5 = arith.addf %2, %4 : vector<464x64xf32>
    %cst_5 = arith.constant 0.000000e+00 : f32
    %6 = vector.broadcast %cst_5 : f32 to vector<464x64xf32>
    %7 = arith.cmpf oge, %5, %6 : vector<464x64xf32>
    %cst_6 = arith.constant 1.000000e-01 : f32
    %8 = vector.broadcast %cst_6 : f32 to vector<464x64xf32>
    %9 = arith.mulf %5, %8 : vector<464x64xf32>
    %10 = arith.select %7, %5, %9 : vector<464x64xi1>, vector<464x64xf32>
    %11 = arith.truncf %10 : vector<464x64xf32> to vector<464x64xbf16>
    %c0_7 = arith.constant 0 : index
    %c0_8 = arith.constant 0 : index
    %12 = vector.load %arg4[%c0_7, %c0_8] : memref<464x64xbf16, #tpu.memory_space<vmem>>, vector<464x64xbf16>
    tpu.vector_store %arg4[%c0_7, %c0_8], %11 {strides = array<i32>} : memref<464x64xbf16, #tpu.memory_space<vmem>>, vector<464x64xbf16>,
    return
  }
  func.func @transform_0(%arg0: i32) -> (i32, i32) {
    %c0_i32 = arith.constant 0 : i32
    %c0_i32_0 = arith.constant 0 : i32
    return %arg0, %c0_i32 : i32, i32
  }
  func.func @transform_1(%arg0: i32) -> (i32, i32) {
    %c0_i32 = arith.constant 0 : i32
    %c0_i32_0 = arith.constant 0 : i32
    %c0_i32_1 = arith.constant 0 : i32
    return %c0_i32, %c0_i32_0 : i32, i32
  }
  func.func @transform_2(%arg0: i32) -> (i32, i32) {
    %c0_i32 = arith.constant 0 : i32
    %c0_i32_0 = arith.constant 0 : i32
    %c0_i32_1 = arith.constant 0 : i32
    return %c0_i32, %c0_i32_0 : i32, i32
  }
  func.func @transform_3(%arg0: i32) -> (i32, i32) {
    %c0_i32 = arith.constant 0 : i32
    %c0_i32_0 = arith.constant 0 : i32
    return %arg0, %c0_i32 : i32, i32
  }
}

module attributes {stable_mosaic.version = 11 : i64} {
  func.func @_max4_kernel(%arg0: i32, %arg1: memref<578x64xbf16, #tpu.memory_space<vmem>>, %arg2: memref<578x64xbf16, #tpu.memory_space<vmem>>, %arg3: memref<578x64xbf16, #tpu.memory_space<vmem>>, %arg4: memref<578x64xbf16, #tpu.memory_space<vmem>>, %arg5: memref<578x64xbf16, #tpu.memory_space<vmem>>) attributes {dimension_semantics = [#tpu.dimension_semantics<arbitrary>], iteration_bounds = array<i64: 1>, scalar_prefetch = 0 : i64, scratch_operands = 0 : i64, tpu.core_type = #tpu.core_type<tc>, window_params = [{pipeline_mode = #tpu.pipeline_mode<synchronous>, transform_indices = @transform_0, window_bounds = array<i64: 578, 64>}, {pipeline_mode = #tpu.pipeline_mode<synchronous>, transform_indices = @transform_1, window_bounds = array<i64: 578, 64>}, {pipeline_mode = #tpu.pipeline_mode<synchronous>, transform_indices = @transform_2, window_bounds = array<i64: 578, 64>}, {pipeline_mode = #tpu.pipeline_mode<synchronous>, transform_indices = @transform_3, window_bounds = array<i64: 578, 64>}, {pipeline_mode = #tpu.pipeline_mode<synchronous>, transform_indices = @transform_4, window_bounds = array<i64: 578, 64>}]} {
    %c0 = arith.constant 0 : index
    %c0_0 = arith.constant 0 : index
    %0 = vector.load %arg1[%c0, %c0_0] : memref<578x64xbf16, #tpu.memory_space<vmem>>, vector<578x64xbf16>
    %c0_1 = arith.constant 0 : index
    %c0_2 = arith.constant 0 : index
    %1 = vector.load %arg2[%c0_1, %c0_2] : memref<578x64xbf16, #tpu.memory_space<vmem>>, vector<578x64xbf16>
    %2 = arith.maximumf %0, %1 : vector<578x64xbf16>
    %c0_3 = arith.constant 0 : index
    %c0_4 = arith.constant 0 : index
    %3 = vector.load %arg3[%c0_3, %c0_4] : memref<578x64xbf16, #tpu.memory_space<vmem>>, vector<578x64xbf16>
    %c0_5 = arith.constant 0 : index
    %c0_6 = arith.constant 0 : index
    %4 = vector.load %arg4[%c0_5, %c0_6] : memref<578x64xbf16, #tpu.memory_space<vmem>>, vector<578x64xbf16>
    %5 = arith.maximumf %3, %4 : vector<578x64xbf16>
    %6 = arith.maximumf %2, %5 : vector<578x64xbf16>
    %c0_7 = arith.constant 0 : index
    %c0_8 = arith.constant 0 : index
    %7 = vector.load %arg5[%c0_7, %c0_8] : memref<578x64xbf16, #tpu.memory_space<vmem>>, vector<578x64xbf16>
    tpu.vector_store %arg5[%c0_7, %c0_8], %6 {strides = array<i32>} : memref<578x64xbf16, #tpu.memory_space<vmem>>, vector<578x64xbf16>,
    return
  }
  func.func @transform_0(%arg0: i32) -> (i32, i32) {
    %c0_i32 = arith.constant 0 : i32
    %c0_i32_0 = arith.constant 0 : i32
    %c0_i32_1 = arith.constant 0 : i32
    return %c0_i32, %c0_i32_0 : i32, i32
  }
  func.func @transform_1(%arg0: i32) -> (i32, i32) {
    %c0_i32 = arith.constant 0 : i32
    %c0_i32_0 = arith.constant 0 : i32
    %c0_i32_1 = arith.constant 0 : i32
    return %c0_i32, %c0_i32_0 : i32, i32
  }
  func.func @transform_2(%arg0: i32) -> (i32, i32) {
    %c0_i32 = arith.constant 0 : i32
    %c0_i32_0 = arith.constant 0 : i32
    %c0_i32_1 = arith.constant 0 : i32
    return %c0_i32, %c0_i32_0 : i32, i32
  }
  func.func @transform_3(%arg0: i32) -> (i32, i32) {
    %c0_i32 = arith.constant 0 : i32
    %c0_i32_0 = arith.constant 0 : i32
    %c0_i32_1 = arith.constant 0 : i32
    return %c0_i32, %c0_i32_0 : i32, i32
  }
  func.func @transform_4(%arg0: i32) -> (i32, i32) {
    %c0_i32 = arith.constant 0 : i32
    %c0_i32_0 = arith.constant 0 : i32
    %c0_i32_1 = arith.constant 0 : i32
    return %c0_i32, %c0_i32_0 : i32, i32
  }
}

module attributes {stable_mosaic.version = 11 : i64} {
  func.func @_double_gemm_kernel(%arg0: i32, %arg1: memref<304x576xbf16, #tpu.memory_space<vmem>>, %arg2: memref<576x64xbf16, #tpu.memory_space<vmem>>, %arg3: memref<1x64xf32, #tpu.memory_space<vmem>>, %arg4: memref<64x16xbf16, #tpu.memory_space<vmem>>, %arg5: memref<1x16xf32, #tpu.memory_space<vmem>>, %arg6: memref<304x16xbf16, #tpu.memory_space<vmem>>) attributes {dimension_semantics = [#tpu.dimension_semantics<parallel>], iteration_bounds = array<i64: 2>, scalar_prefetch = 0 : i64, scratch_operands = 0 : i64, tpu.core_type = #tpu.core_type<tc>, window_params = [{transform_indices = @transform_0, window_bounds = array<i64: 304, 576>}, {pipeline_mode = #tpu.pipeline_mode<synchronous>, transform_indices = @transform_1, window_bounds = array<i64: 576, 64>}, {pipeline_mode = #tpu.pipeline_mode<synchronous>, transform_indices = @transform_2, window_bounds = array<i64: 1, 64>}, {pipeline_mode = #tpu.pipeline_mode<synchronous>, transform_indices = @transform_3, window_bounds = array<i64: 64, 16>}, {pipeline_mode = #tpu.pipeline_mode<synchronous>, transform_indices = @transform_4, window_bounds = array<i64: 1, 16>}, {transform_indices = @transform_5, window_bounds = array<i64: 304, 16>}]} {
    %c0 = arith.constant 0 : index
    %c0_0 = arith.constant 0 : index
    %0 = vector.load %arg1[%c0, %c0_0] : memref<304x576xbf16, #tpu.memory_space<vmem>>, vector<304x576xbf16>
    %c0_1 = arith.constant 0 : index
    %c0_2 = arith.constant 0 : index
    %1 = vector.load %arg2[%c0_1, %c0_2] : memref<576x64xbf16, #tpu.memory_space<vmem>>, vector<576x64xbf16>
    %cst = arith.constant dense<0.000000e+00> : vector<304x64xf32>
    %2 = tpu.matmul %0, %1, %cst {dimension_numbers = #tpu.dot_dimension_numbers<[1], [0], [0], [1], [0, 0, 1, 1], [], []>} : vector<304x576xbf16>, vector<576x64xbf16>, vector<304x64xf32> -> vector<304x64xf32>
    %c0_3 = arith.constant 0 : index
    %c0_4 = arith.constant 0 : index
    %3 = vector.load %arg3[%c0_3, %c0_4] : memref<1x64xf32, #tpu.memory_space<vmem>>, vector<1x64xf32>
    %4 = vector.broadcast %3 : vector<1x64xf32> to vector<304x64xf32>
    %5 = arith.addf %2, %4 : vector<304x64xf32>
    %cst_5 = arith.constant 0.000000e+00 : f32
    %6 = vector.broadcast %cst_5 : f32 to vector<304x64xf32>
    %7 = arith.cmpf oge, %5, %6 : vector<304x64xf32>
    %cst_6 = arith.constant 1.000000e-01 : f32
    %8 = vector.broadcast %cst_6 : f32 to vector<304x64xf32>
    %9 = arith.mulf %5, %8 : vector<304x64xf32>
    %10 = arith.select %7, %5, %9 : vector<304x64xi1>, vector<304x64xf32>
    %11 = arith.truncf %10 : vector<304x64xf32> to vector<304x64xbf16>
    %c0_7 = arith.constant 0 : index
    %c0_8 = arith.constant 0 : index
    %12 = vector.load %arg4[%c0_7, %c0_8] : memref<64x16xbf16, #tpu.memory_space<vmem>>, vector<64x16xbf16>
    %cst_9 = arith.constant dense<0.000000e+00> : vector<304x16xf32>
    %13 = tpu.matmul %11, %12, %cst_9 {dimension_numbers = #tpu.dot_dimension_numbers<[1], [0], [0], [1], [0, 0, 1, 1], [], []>} : vector<304x64xbf16>, vector<64x16xbf16>, vector<304x16xf32> -> vector<304x16xf32>
    %c0_10 = arith.constant 0 : index
    %c0_11 = arith.constant 0 : index
    %14 = vector.load %arg5[%c0_10, %c0_11] : memref<1x16xf32, #tpu.memory_space<vmem>>, vector<1x16xf32>
    %15 = vector.broadcast %14 : vector<1x16xf32> to vector<304x16xf32>
    %16 = arith.addf %13, %15 : vector<304x16xf32>
    %cst_12 = arith.constant 0.000000e+00 : f32
    %17 = vector.broadcast %cst_12 : f32 to vector<304x16xf32>
    %18 = arith.cmpf oge, %16, %17 : vector<304x16xf32>
    %cst_13 = arith.constant 1.000000e-01 : f32
    %19 = vector.broadcast %cst_13 : f32 to vector<304x16xf32>
    %20 = arith.mulf %16, %19 : vector<304x16xf32>
    %21 = arith.select %18, %16, %20 : vector<304x16xi1>, vector<304x16xf32>
    %22 = arith.truncf %21 : vector<304x16xf32> to vector<304x16xbf16>
    %c0_14 = arith.constant 0 : index
    %c0_15 = arith.constant 0 : index
    %23 = vector.load %arg6[%c0_14, %c0_15] : memref<304x16xbf16, #tpu.memory_space<vmem>>, vector<304x16xbf16>
    tpu.vector_store %arg6[%c0_14, %c0_15], %22 {strides = array<i32>} : memref<304x16xbf16, #tpu.memory_space<vmem>>, vector<304x16xbf16>,
    return
  }
  func.func @transform_0(%arg0: i32) -> (i32, i32) {
    %c0_i32 = arith.constant 0 : i32
    %c0_i32_0 = arith.constant 0 : i32
    return %arg0, %c0_i32 : i32, i32
  }
  func.func @transform_1(%arg0: i32) -> (i32, i32) {
    %c0_i32 = arith.constant 0 : i32
    %c0_i32_0 = arith.constant 0 : i32
    %c0_i32_1 = arith.constant 0 : i32
    return %c0_i32, %c0_i32_0 : i32, i32
  }
  func.func @transform_2(%arg0: i32) -> (i32, i32) {
    %c0_i32 = arith.constant 0 : i32
    %c0_i32_0 = arith.constant 0 : i32
    %c0_i32_1 = arith.constant 0 : i32
    return %c0_i32, %c0_i32_0 : i32, i32
  }
  func.func @transform_3(%arg0: i32) -> (i32, i32) {
    %c0_i32 = arith.constant 0 : i32
    %c0_i32_0 = arith.constant 0 : i32
    %c0_i32_1 = arith.constant 0 : i32
    return %c0_i32, %c0_i32_0 : i32, i32
  }
  func.func @transform_4(%arg0: i32) -> (i32, i32) {
    %c0_i32 = arith.constant 0 : i32
    %c0_i32_0 = arith.constant 0 : i32
    %c0_i32_1 = arith.constant 0 : i32
    return %c0_i32, %c0_i32_0 : i32, i32
  }
  func.func @transform_5(%arg0: i32) -> (i32, i32) {
    %c0_i32 = arith.constant 0 : i32
    %c0_i32_0 = arith.constant 0 : i32
    return %arg0, %c0_i32 : i32, i32
  }
}

module attributes {stable_mosaic.version = 11 : i64} {
  func.func @_max4_kernel(%arg0: i32, %arg1: memref<128x16xbf16, #tpu.memory_space<vmem>>, %arg2: memref<128x16xbf16, #tpu.memory_space<vmem>>, %arg3: memref<128x16xbf16, #tpu.memory_space<vmem>>, %arg4: memref<128x16xbf16, #tpu.memory_space<vmem>>, %arg5: memref<128x16xbf16, #tpu.memory_space<vmem>>) attributes {dimension_semantics = [#tpu.dimension_semantics<arbitrary>], iteration_bounds = array<i64: 1>, scalar_prefetch = 0 : i64, scratch_operands = 0 : i64, tpu.core_type = #tpu.core_type<tc>, window_params = [{pipeline_mode = #tpu.pipeline_mode<synchronous>, transform_indices = @transform_0, window_bounds = array<i64: 128, 16>}, {pipeline_mode = #tpu.pipeline_mode<synchronous>, transform_indices = @transform_1, window_bounds = array<i64: 128, 16>}, {pipeline_mode = #tpu.pipeline_mode<synchronous>, transform_indices = @transform_2, window_bounds = array<i64: 128, 16>}, {pipeline_mode = #tpu.pipeline_mode<synchronous>, transform_indices = @transform_3, window_bounds = array<i64: 128, 16>}, {pipeline_mode = #tpu.pipeline_mode<synchronous>, transform_indices = @transform_4, window_bounds = array<i64: 128, 16>}]} {
    %c0 = arith.constant 0 : index
    %c0_0 = arith.constant 0 : index
    %0 = vector.load %arg1[%c0, %c0_0] : memref<128x16xbf16, #tpu.memory_space<vmem>>, vector<128x16xbf16>
    %c0_1 = arith.constant 0 : index
    %c0_2 = arith.constant 0 : index
    %1 = vector.load %arg2[%c0_1, %c0_2] : memref<128x16xbf16, #tpu.memory_space<vmem>>, vector<128x16xbf16>
    %2 = arith.maximumf %0, %1 : vector<128x16xbf16>
    %c0_3 = arith.constant 0 : index
    %c0_4 = arith.constant 0 : index
    %3 = vector.load %arg3[%c0_3, %c0_4] : memref<128x16xbf16, #tpu.memory_space<vmem>>, vector<128x16xbf16>
    %c0_5 = arith.constant 0 : index
    %c0_6 = arith.constant 0 : index
    %4 = vector.load %arg4[%c0_5, %c0_6] : memref<128x16xbf16, #tpu.memory_space<vmem>>, vector<128x16xbf16>
    %5 = arith.maximumf %3, %4 : vector<128x16xbf16>
    %6 = arith.maximumf %2, %5 : vector<128x16xbf16>
    %c0_7 = arith.constant 0 : index
    %c0_8 = arith.constant 0 : index
    %7 = vector.load %arg5[%c0_7, %c0_8] : memref<128x16xbf16, #tpu.memory_space<vmem>>, vector<128x16xbf16>
    tpu.vector_store %arg5[%c0_7, %c0_8], %6 {strides = array<i32>} : memref<128x16xbf16, #tpu.memory_space<vmem>>, vector<128x16xbf16>,
    return
  }
  func.func @transform_0(%arg0: i32) -> (i32, i32) {
    %c0_i32 = arith.constant 0 : i32
    %c0_i32_0 = arith.constant 0 : i32
    %c0_i32_1 = arith.constant 0 : i32
    return %c0_i32, %c0_i32_0 : i32, i32
  }
  func.func @transform_1(%arg0: i32) -> (i32, i32) {
    %c0_i32 = arith.constant 0 : i32
    %c0_i32_0 = arith.constant 0 : i32
    %c0_i32_1 = arith.constant 0 : i32
    return %c0_i32, %c0_i32_0 : i32, i32
  }
  func.func @transform_2(%arg0: i32) -> (i32, i32) {
    %c0_i32 = arith.constant 0 : i32
    %c0_i32_0 = arith.constant 0 : i32
    %c0_i32_1 = arith.constant 0 : i32
    return %c0_i32, %c0_i32_0 : i32, i32
  }
  func.func @transform_3(%arg0: i32) -> (i32, i32) {
    %c0_i32 = arith.constant 0 : i32
    %c0_i32_0 = arith.constant 0 : i32
    %c0_i32_1 = arith.constant 0 : i32
    return %c0_i32, %c0_i32_0 : i32, i32
  }
  func.func @transform_4(%arg0: i32) -> (i32, i32) {
    %c0_i32 = arith.constant 0 : i32
    %c0_i32_0 = arith.constant 0 : i32
    %c0_i32_1 = arith.constant 0 : i32
    return %c0_i32, %c0_i32_0 : i32, i32
  }
}

module attributes {stable_mosaic.version = 11 : i64} {
  func.func @_double_gemm_kernel(%arg0: i32, %arg1: memref<128x144xbf16, #tpu.memory_space<vmem>>, %arg2: memref<144x64xbf16, #tpu.memory_space<vmem>>, %arg3: memref<1x64xf32, #tpu.memory_space<vmem>>, %arg4: memref<64x16xbf16, #tpu.memory_space<vmem>>, %arg5: memref<1x16xf32, #tpu.memory_space<vmem>>, %arg6: memref<128x16xbf16, #tpu.memory_space<vmem>>) attributes {dimension_semantics = [#tpu.dimension_semantics<parallel>], iteration_bounds = array<i64: 1>, scalar_prefetch = 0 : i64, scratch_operands = 0 : i64, tpu.core_type = #tpu.core_type<tc>, window_params = [{transform_indices = @transform_0, window_bounds = array<i64: 128, 144>}, {pipeline_mode = #tpu.pipeline_mode<synchronous>, transform_indices = @transform_1, window_bounds = array<i64: 144, 64>}, {pipeline_mode = #tpu.pipeline_mode<synchronous>, transform_indices = @transform_2, window_bounds = array<i64: 1, 64>}, {pipeline_mode = #tpu.pipeline_mode<synchronous>, transform_indices = @transform_3, window_bounds = array<i64: 64, 16>}, {pipeline_mode = #tpu.pipeline_mode<synchronous>, transform_indices = @transform_4, window_bounds = array<i64: 1, 16>}, {transform_indices = @transform_5, window_bounds = array<i64: 128, 16>}]} {
    %c0 = arith.constant 0 : index
    %c0_0 = arith.constant 0 : index
    %0 = vector.load %arg1[%c0, %c0_0] : memref<128x144xbf16, #tpu.memory_space<vmem>>, vector<128x144xbf16>
    %c0_1 = arith.constant 0 : index
    %c0_2 = arith.constant 0 : index
    %1 = vector.load %arg2[%c0_1, %c0_2] : memref<144x64xbf16, #tpu.memory_space<vmem>>, vector<144x64xbf16>
    %cst = arith.constant dense<0.000000e+00> : vector<128x64xf32>
    %2 = tpu.matmul %0, %1, %cst {dimension_numbers = #tpu.dot_dimension_numbers<[1], [0], [0], [1], [0, 0, 1, 1], [], []>} : vector<128x144xbf16>, vector<144x64xbf16>, vector<128x64xf32> -> vector<128x64xf32>
    %c0_3 = arith.constant 0 : index
    %c0_4 = arith.constant 0 : index
    %3 = vector.load %arg3[%c0_3, %c0_4] : memref<1x64xf32, #tpu.memory_space<vmem>>, vector<1x64xf32>
    %4 = vector.broadcast %3 : vector<1x64xf32> to vector<128x64xf32>
    %5 = arith.addf %2, %4 : vector<128x64xf32>
    %cst_5 = arith.constant 0.000000e+00 : f32
    %6 = vector.broadcast %cst_5 : f32 to vector<128x64xf32>
    %7 = arith.cmpf oge, %5, %6 : vector<128x64xf32>
    %cst_6 = arith.constant 1.000000e-01 : f32
    %8 = vector.broadcast %cst_6 : f32 to vector<128x64xf32>
    %9 = arith.mulf %5, %8 : vector<128x64xf32>
    %10 = arith.select %7, %5, %9 : vector<128x64xi1>, vector<128x64xf32>
    %11 = arith.truncf %10 : vector<128x64xf32> to vector<128x64xbf16>
    %c0_7 = arith.constant 0 : index
    %c0_8 = arith.constant 0 : index
    %12 = vector.load %arg4[%c0_7, %c0_8] : memref<64x16xbf16, #tpu.memory_space<vmem>>, vector<64x16xbf16>
    %cst_9 = arith.constant dense<0.000000e+00> : vector<128x16xf32>
    %13 = tpu.matmul %11, %12, %cst_9 {dimension_numbers = #tpu.dot_dimension_numbers<[1], [0], [0], [1], [0, 0, 1, 1], [], []>} : vector<128x64xbf16>, vector<64x16xbf16>, vector<128x16xf32> -> vector<128x16xf32>
    %c0_10 = arith.constant 0 : index
    %c0_11 = arith.constant 0 : index
    %14 = vector.load %arg5[%c0_10, %c0_11] : memref<1x16xf32, #tpu.memory_space<vmem>>, vector<1x16xf32>
    %15 = vector.broadcast %14 : vector<1x16xf32> to vector<128x16xf32>
    %16 = arith.addf %13, %15 : vector<128x16xf32>
    %cst_12 = arith.constant 0.000000e+00 : f32
    %17 = vector.broadcast %cst_12 : f32 to vector<128x16xf32>
    %18 = arith.cmpf oge, %16, %17 : vector<128x16xf32>
    %cst_13 = arith.constant 1.000000e-01 : f32
    %19 = vector.broadcast %cst_13 : f32 to vector<128x16xf32>
    %20 = arith.mulf %16, %19 : vector<128x16xf32>
    %21 = arith.select %18, %16, %20 : vector<128x16xi1>, vector<128x16xf32>
    %22 = arith.truncf %21 : vector<128x16xf32> to vector<128x16xbf16>
    %c0_14 = arith.constant 0 : index
    %c0_15 = arith.constant 0 : index
    %23 = vector.load %arg6[%c0_14, %c0_15] : memref<128x16xbf16, #tpu.memory_space<vmem>>, vector<128x16xbf16>
    tpu.vector_store %arg6[%c0_14, %c0_15], %22 {strides = array<i32>} : memref<128x16xbf16, #tpu.memory_space<vmem>>, vector<128x16xbf16>,
    return
  }
  func.func @transform_0(%arg0: i32) -> (i32, i32) {
    %c0_i32 = arith.constant 0 : i32
    %c0_i32_0 = arith.constant 0 : i32
    return %arg0, %c0_i32 : i32, i32
  }
  func.func @transform_1(%arg0: i32) -> (i32, i32) {
    %c0_i32 = arith.constant 0 : i32
    %c0_i32_0 = arith.constant 0 : i32
    %c0_i32_1 = arith.constant 0 : i32
    return %c0_i32, %c0_i32_0 : i32, i32
  }
  func.func @transform_2(%arg0: i32) -> (i32, i32) {
    %c0_i32 = arith.constant 0 : i32
    %c0_i32_0 = arith.constant 0 : i32
    %c0_i32_1 = arith.constant 0 : i32
    return %c0_i32, %c0_i32_0 : i32, i32
  }
  func.func @transform_3(%arg0: i32) -> (i32, i32) {
    %c0_i32 = arith.constant 0 : i32
    %c0_i32_0 = arith.constant 0 : i32
    %c0_i32_1 = arith.constant 0 : i32
    return %c0_i32, %c0_i32_0 : i32, i32
  }
  func.func @transform_4(%arg0: i32) -> (i32, i32) {
    %c0_i32 = arith.constant 0 : i32
    %c0_i32_0 = arith.constant 0 : i32
    %c0_i32_1 = arith.constant 0 : i32
    return %c0_i32, %c0_i32_0 : i32, i32
  }
  func.func @transform_5(%arg0: i32) -> (i32, i32) {
    %c0_i32 = arith.constant 0 : i32
    %c0_i32_0 = arith.constant 0 : i32
    return %arg0, %c0_i32 : i32, i32
  }
}

module attributes {stable_mosaic.version = 11 : i64} {
  func.func @_max4_kernel(%arg0: i32, %arg1: memref<32x16xbf16, #tpu.memory_space<vmem>>, %arg2: memref<32x16xbf16, #tpu.memory_space<vmem>>, %arg3: memref<32x16xbf16, #tpu.memory_space<vmem>>, %arg4: memref<32x16xbf16, #tpu.memory_space<vmem>>, %arg5: memref<32x16xbf16, #tpu.memory_space<vmem>>) attributes {dimension_semantics = [#tpu.dimension_semantics<arbitrary>], iteration_bounds = array<i64: 1>, scalar_prefetch = 0 : i64, scratch_operands = 0 : i64, tpu.core_type = #tpu.core_type<tc>, window_params = [{pipeline_mode = #tpu.pipeline_mode<synchronous>, transform_indices = @transform_0, window_bounds = array<i64: 32, 16>}, {pipeline_mode = #tpu.pipeline_mode<synchronous>, transform_indices = @transform_1, window_bounds = array<i64: 32, 16>}, {pipeline_mode = #tpu.pipeline_mode<synchronous>, transform_indices = @transform_2, window_bounds = array<i64: 32, 16>}, {pipeline_mode = #tpu.pipeline_mode<synchronous>, transform_indices = @transform_3, window_bounds = array<i64: 32, 16>}, {pipeline_mode = #tpu.pipeline_mode<synchronous>, transform_indices = @transform_4, window_bounds = array<i64: 32, 16>}]} {
    %c0 = arith.constant 0 : index
    %c0_0 = arith.constant 0 : index
    %0 = vector.load %arg1[%c0, %c0_0] : memref<32x16xbf16, #tpu.memory_space<vmem>>, vector<32x16xbf16>
    %c0_1 = arith.constant 0 : index
    %c0_2 = arith.constant 0 : index
    %1 = vector.load %arg2[%c0_1, %c0_2] : memref<32x16xbf16, #tpu.memory_space<vmem>>, vector<32x16xbf16>
    %2 = arith.maximumf %0, %1 : vector<32x16xbf16>
    %c0_3 = arith.constant 0 : index
    %c0_4 = arith.constant 0 : index
    %3 = vector.load %arg3[%c0_3, %c0_4] : memref<32x16xbf16, #tpu.memory_space<vmem>>, vector<32x16xbf16>
    %c0_5 = arith.constant 0 : index
    %c0_6 = arith.constant 0 : index
    %4 = vector.load %arg4[%c0_5, %c0_6] : memref<32x16xbf16, #tpu.memory_space<vmem>>, vector<32x16xbf16>
    %5 = arith.maximumf %3, %4 : vector<32x16xbf16>
    %6 = arith.maximumf %2, %5 : vector<32x16xbf16>
    %c0_7 = arith.constant 0 : index
    %c0_8 = arith.constant 0 : index
    %7 = vector.load %arg5[%c0_7, %c0_8] : memref<32x16xbf16, #tpu.memory_space<vmem>>, vector<32x16xbf16>
    tpu.vector_store %arg5[%c0_7, %c0_8], %6 {strides = array<i32>} : memref<32x16xbf16, #tpu.memory_space<vmem>>, vector<32x16xbf16>,
    return
  }
  func.func @transform_0(%arg0: i32) -> (i32, i32) {
    %c0_i32 = arith.constant 0 : i32
    %c0_i32_0 = arith.constant 0 : i32
    %c0_i32_1 = arith.constant 0 : i32
    return %c0_i32, %c0_i32_0 : i32, i32
  }
  func.func @transform_1(%arg0: i32) -> (i32, i32) {
    %c0_i32 = arith.constant 0 : i32
    %c0_i32_0 = arith.constant 0 : i32
    %c0_i32_1 = arith.constant 0 : i32
    return %c0_i32, %c0_i32_0 : i32, i32
  }
  func.func @transform_2(%arg0: i32) -> (i32, i32) {
    %c0_i32 = arith.constant 0 : i32
    %c0_i32_0 = arith.constant 0 : i32
    %c0_i32_1 = arith.constant 0 : i32
    return %c0_i32, %c0_i32_0 : i32, i32
  }
  func.func @transform_3(%arg0: i32) -> (i32, i32) {
    %c0_i32 = arith.constant 0 : i32
    %c0_i32_0 = arith.constant 0 : i32
    %c0_i32_1 = arith.constant 0 : i32
    return %c0_i32, %c0_i32_0 : i32, i32
  }
  func.func @transform_4(%arg0: i32) -> (i32, i32) {
    %c0_i32 = arith.constant 0 : i32
    %c0_i32_0 = arith.constant 0 : i32
    %c0_i32_1 = arith.constant 0 : i32
    return %c0_i32, %c0_i32_0 : i32, i32
  }
}

module attributes {stable_mosaic.version = 11 : i64} {
  func.func @_double_gemm_kernel(%arg0: i32, %arg1: memref<32x144xbf16, #tpu.memory_space<vmem>>, %arg2: memref<144x64xbf16, #tpu.memory_space<vmem>>, %arg3: memref<1x64xf32, #tpu.memory_space<vmem>>, %arg4: memref<64x16xbf16, #tpu.memory_space<vmem>>, %arg5: memref<1x16xf32, #tpu.memory_space<vmem>>, %arg6: memref<32x16xbf16, #tpu.memory_space<vmem>>) attributes {dimension_semantics = [#tpu.dimension_semantics<parallel>], iteration_bounds = array<i64: 1>, scalar_prefetch = 0 : i64, scratch_operands = 0 : i64, tpu.core_type = #tpu.core_type<tc>, window_params = [{transform_indices = @transform_0, window_bounds = array<i64: 32, 144>}, {pipeline_mode = #tpu.pipeline_mode<synchronous>, transform_indices = @transform_1, window_bounds = array<i64: 144, 64>}, {pipeline_mode = #tpu.pipeline_mode<synchronous>, transform_indices = @transform_2, window_bounds = array<i64: 1, 64>}, {pipeline_mode = #tpu.pipeline_mode<synchronous>, transform_indices = @transform_3, window_bounds = array<i64: 64, 16>}, {pipeline_mode = #tpu.pipeline_mode<synchronous>, transform_indices = @transform_4, window_bounds = array<i64: 1, 16>}, {transform_indices = @transform_5, window_bounds = array<i64: 32, 16>}]} {
    %c0 = arith.constant 0 : index
    %c0_0 = arith.constant 0 : index
    %0 = vector.load %arg1[%c0, %c0_0] : memref<32x144xbf16, #tpu.memory_space<vmem>>, vector<32x144xbf16>
    %c0_1 = arith.constant 0 : index
    %c0_2 = arith.constant 0 : index
    %1 = vector.load %arg2[%c0_1, %c0_2] : memref<144x64xbf16, #tpu.memory_space<vmem>>, vector<144x64xbf16>
    %cst = arith.constant dense<0.000000e+00> : vector<32x64xf32>
    %2 = tpu.matmul %0, %1, %cst {dimension_numbers = #tpu.dot_dimension_numbers<[1], [0], [0], [1], [0, 0, 1, 1], [], []>} : vector<32x144xbf16>, vector<144x64xbf16>, vector<32x64xf32> -> vector<32x64xf32>
    %c0_3 = arith.constant 0 : index
    %c0_4 = arith.constant 0 : index
    %3 = vector.load %arg3[%c0_3, %c0_4] : memref<1x64xf32, #tpu.memory_space<vmem>>, vector<1x64xf32>
    %4 = vector.broadcast %3 : vector<1x64xf32> to vector<32x64xf32>
    %5 = arith.addf %2, %4 : vector<32x64xf32>
    %cst_5 = arith.constant 0.000000e+00 : f32
    %6 = vector.broadcast %cst_5 : f32 to vector<32x64xf32>
    %7 = arith.cmpf oge, %5, %6 : vector<32x64xf32>
    %cst_6 = arith.constant 1.000000e-01 : f32
    %8 = vector.broadcast %cst_6 : f32 to vector<32x64xf32>
    %9 = arith.mulf %5, %8 : vector<32x64xf32>
    %10 = arith.select %7, %5, %9 : vector<32x64xi1>, vector<32x64xf32>
    %11 = arith.truncf %10 : vector<32x64xf32> to vector<32x64xbf16>
    %c0_7 = arith.constant 0 : index
    %c0_8 = arith.constant 0 : index
    %12 = vector.load %arg4[%c0_7, %c0_8] : memref<64x16xbf16, #tpu.memory_space<vmem>>, vector<64x16xbf16>
    %cst_9 = arith.constant dense<0.000000e+00> : vector<32x16xf32>
    %13 = tpu.matmul %11, %12, %cst_9 {dimension_numbers = #tpu.dot_dimension_numbers<[1], [0], [0], [1], [0, 0, 1, 1], [], []>} : vector<32x64xbf16>, vector<64x16xbf16>, vector<32x16xf32> -> vector<32x16xf32>
    %c0_10 = arith.constant 0 : index
    %c0_11 = arith.constant 0 : index
    %14 = vector.load %arg5[%c0_10, %c0_11] : memref<1x16xf32, #tpu.memory_space<vmem>>, vector<1x16xf32>
    %15 = vector.broadcast %14 : vector<1x16xf32> to vector<32x16xf32>
    %16 = arith.addf %13, %15 : vector<32x16xf32>
    %cst_12 = arith.constant 0.000000e+00 : f32
    %17 = vector.broadcast %cst_12 : f32 to vector<32x16xf32>
    %18 = arith.cmpf oge, %16, %17 : vector<32x16xf32>
    %cst_13 = arith.constant 1.000000e-01 : f32
    %19 = vector.broadcast %cst_13 : f32 to vector<32x16xf32>
    %20 = arith.mulf %16, %19 : vector<32x16xf32>
    %21 = arith.select %18, %16, %20 : vector<32x16xi1>, vector<32x16xf32>
    %22 = arith.truncf %21 : vector<32x16xf32> to vector<32x16xbf16>
    %c0_14 = arith.constant 0 : index
    %c0_15 = arith.constant 0 : index
    %23 = vector.load %arg6[%c0_14, %c0_15] : memref<32x16xbf16, #tpu.memory_space<vmem>>, vector<32x16xbf16>
    tpu.vector_store %arg6[%c0_14, %c0_15], %22 {strides = array<i32>} : memref<32x16xbf16, #tpu.memory_space<vmem>>, vector<32x16xbf16>,
    return
  }
  func.func @transform_0(%arg0: i32) -> (i32, i32) {
    %c0_i32 = arith.constant 0 : i32
    %c0_i32_0 = arith.constant 0 : i32
    return %arg0, %c0_i32 : i32, i32
  }
  func.func @transform_1(%arg0: i32) -> (i32, i32) {
    %c0_i32 = arith.constant 0 : i32
    %c0_i32_0 = arith.constant 0 : i32
    %c0_i32_1 = arith.constant 0 : i32
    return %c0_i32, %c0_i32_0 : i32, i32
  }
  func.func @transform_2(%arg0: i32) -> (i32, i32) {
    %c0_i32 = arith.constant 0 : i32
    %c0_i32_0 = arith.constant 0 : i32
    %c0_i32_1 = arith.constant 0 : i32
    return %c0_i32, %c0_i32_0 : i32, i32
  }
  func.func @transform_3(%arg0: i32) -> (i32, i32) {
    %c0_i32 = arith.constant 0 : i32
    %c0_i32_0 = arith.constant 0 : i32
    %c0_i32_1 = arith.constant 0 : i32
    return %c0_i32, %c0_i32_0 : i32, i32
  }
  func.func @transform_4(%arg0: i32) -> (i32, i32) {
    %c0_i32 = arith.constant 0 : i32
    %c0_i32_0 = arith.constant 0 : i32
    %c0_i32_1 = arith.constant 0 : i32
    return %c0_i32, %c0_i32_0 : i32, i32
  }
  func.func @transform_5(%arg0: i32) -> (i32, i32) {
    %c0_i32 = arith.constant 0 : i32
    %c0_i32_0 = arith.constant 0 : i32
    return %arg0, %c0_i32 : i32, i32
  }
}

module attributes {stable_mosaic.version = 11 : i64} {
  func.func @_max4_kernel(%arg0: i32, %arg1: memref<8x16xbf16, #tpu.memory_space<vmem>>, %arg2: memref<8x16xbf16, #tpu.memory_space<vmem>>, %arg3: memref<8x16xbf16, #tpu.memory_space<vmem>>, %arg4: memref<8x16xbf16, #tpu.memory_space<vmem>>, %arg5: memref<8x16xbf16, #tpu.memory_space<vmem>>) attributes {dimension_semantics = [#tpu.dimension_semantics<arbitrary>], iteration_bounds = array<i64: 1>, scalar_prefetch = 0 : i64, scratch_operands = 0 : i64, tpu.core_type = #tpu.core_type<tc>, window_params = [{pipeline_mode = #tpu.pipeline_mode<synchronous>, transform_indices = @transform_0, window_bounds = array<i64: 8, 16>}, {pipeline_mode = #tpu.pipeline_mode<synchronous>, transform_indices = @transform_1, window_bounds = array<i64: 8, 16>}, {pipeline_mode = #tpu.pipeline_mode<synchronous>, transform_indices = @transform_2, window_bounds = array<i64: 8, 16>}, {pipeline_mode = #tpu.pipeline_mode<synchronous>, transform_indices = @transform_3, window_bounds = array<i64: 8, 16>}, {pipeline_mode = #tpu.pipeline_mode<synchronous>, transform_indices = @transform_4, window_bounds = array<i64: 8, 16>}]} {
    %c0 = arith.constant 0 : index
    %c0_0 = arith.constant 0 : index
    %0 = vector.load %arg1[%c0, %c0_0] : memref<8x16xbf16, #tpu.memory_space<vmem>>, vector<8x16xbf16>
    %c0_1 = arith.constant 0 : index
    %c0_2 = arith.constant 0 : index
    %1 = vector.load %arg2[%c0_1, %c0_2] : memref<8x16xbf16, #tpu.memory_space<vmem>>, vector<8x16xbf16>
    %2 = arith.maximumf %0, %1 : vector<8x16xbf16>
    %c0_3 = arith.constant 0 : index
    %c0_4 = arith.constant 0 : index
    %3 = vector.load %arg3[%c0_3, %c0_4] : memref<8x16xbf16, #tpu.memory_space<vmem>>, vector<8x16xbf16>
    %c0_5 = arith.constant 0 : index
    %c0_6 = arith.constant 0 : index
    %4 = vector.load %arg4[%c0_5, %c0_6] : memref<8x16xbf16, #tpu.memory_space<vmem>>, vector<8x16xbf16>
    %5 = arith.maximumf %3, %4 : vector<8x16xbf16>
    %6 = arith.maximumf %2, %5 : vector<8x16xbf16>
    %c0_7 = arith.constant 0 : index
    %c0_8 = arith.constant 0 : index
    %7 = vector.load %arg5[%c0_7, %c0_8] : memref<8x16xbf16, #tpu.memory_space<vmem>>, vector<8x16xbf16>
    tpu.vector_store %arg5[%c0_7, %c0_8], %6 {strides = array<i32>} : memref<8x16xbf16, #tpu.memory_space<vmem>>, vector<8x16xbf16>,
    return
  }
  func.func @transform_0(%arg0: i32) -> (i32, i32) {
    %c0_i32 = arith.constant 0 : i32
    %c0_i32_0 = arith.constant 0 : i32
    %c0_i32_1 = arith.constant 0 : i32
    return %c0_i32, %c0_i32_0 : i32, i32
  }
  func.func @transform_1(%arg0: i32) -> (i32, i32) {
    %c0_i32 = arith.constant 0 : i32
    %c0_i32_0 = arith.constant 0 : i32
    %c0_i32_1 = arith.constant 0 : i32
    return %c0_i32, %c0_i32_0 : i32, i32
  }
  func.func @transform_2(%arg0: i32) -> (i32, i32) {
    %c0_i32 = arith.constant 0 : i32
    %c0_i32_0 = arith.constant 0 : i32
    %c0_i32_1 = arith.constant 0 : i32
    return %c0_i32, %c0_i32_0 : i32, i32
  }
  func.func @transform_3(%arg0: i32) -> (i32, i32) {
    %c0_i32 = arith.constant 0 : i32
    %c0_i32_0 = arith.constant 0 : i32
    %c0_i32_1 = arith.constant 0 : i32
    return %c0_i32, %c0_i32_0 : i32, i32
  }
  func.func @transform_4(%arg0: i32) -> (i32, i32) {
    %c0_i32 = arith.constant 0 : i32
    %c0_i32_0 = arith.constant 0 : i32
    %c0_i32_1 = arith.constant 0 : i32
    return %c0_i32, %c0_i32_0 : i32, i32
  }
}

module attributes {stable_mosaic.version = 11 : i64} {
  func.func @_gemm_bias_act_kernel(%arg0: i32, %arg1: memref<16x144xbf16, #tpu.memory_space<vmem>>, %arg2: memref<144x256xbf16, #tpu.memory_space<vmem>>, %arg3: memref<1x256xf32, #tpu.memory_space<vmem>>, %arg4: memref<16x256xbf16, #tpu.memory_space<vmem>>) attributes {dimension_semantics = [#tpu.dimension_semantics<parallel>], iteration_bounds = array<i64: 1>, scalar_prefetch = 0 : i64, scratch_operands = 0 : i64, tpu.core_type = #tpu.core_type<tc>, window_params = [{transform_indices = @transform_0, window_bounds = array<i64: 16, 144>}, {pipeline_mode = #tpu.pipeline_mode<synchronous>, transform_indices = @transform_1, window_bounds = array<i64: 144, 256>}, {pipeline_mode = #tpu.pipeline_mode<synchronous>, transform_indices = @transform_2, window_bounds = array<i64: 1, 256>}, {transform_indices = @transform_3, window_bounds = array<i64: 16, 256>}]} {
    %c0 = arith.constant 0 : index
    %c0_0 = arith.constant 0 : index
    %0 = vector.load %arg1[%c0, %c0_0] : memref<16x144xbf16, #tpu.memory_space<vmem>>, vector<16x144xbf16>
    %c0_1 = arith.constant 0 : index
    %c0_2 = arith.constant 0 : index
    %1 = vector.load %arg2[%c0_1, %c0_2] : memref<144x256xbf16, #tpu.memory_space<vmem>>, vector<144x256xbf16>
    %cst = arith.constant dense<0.000000e+00> : vector<16x256xf32>
    %2 = tpu.matmul %0, %1, %cst {dimension_numbers = #tpu.dot_dimension_numbers<[1], [0], [0], [1], [0, 0, 1, 1], [], []>} : vector<16x144xbf16>, vector<144x256xbf16>, vector<16x256xf32> -> vector<16x256xf32>
    %c0_3 = arith.constant 0 : index
    %c0_4 = arith.constant 0 : index
    %3 = vector.load %arg3[%c0_3, %c0_4] : memref<1x256xf32, #tpu.memory_space<vmem>>, vector<1x256xf32>
    %4 = vector.broadcast %3 : vector<1x256xf32> to vector<16x256xf32>
    %5 = arith.addf %2, %4 : vector<16x256xf32>
    %cst_5 = arith.constant 0.000000e+00 : f32
    %6 = vector.broadcast %cst_5 : f32 to vector<16x256xf32>
    %7 = arith.cmpf oge, %5, %6 : vector<16x256xf32>
    %cst_6 = arith.constant 1.000000e-01 : f32
    %8 = vector.broadcast %cst_6 : f32 to vector<16x256xf32>
    %9 = arith.mulf %5, %8 : vector<16x256xf32>
    %10 = arith.select %7, %5, %9 : vector<16x256xi1>, vector<16x256xf32>
    %11 = arith.truncf %10 : vector<16x256xf32> to vector<16x256xbf16>
    %c0_7 = arith.constant 0 : index
    %c0_8 = arith.constant 0 : index
    %12 = vector.load %arg4[%c0_7, %c0_8] : memref<16x256xbf16, #tpu.memory_space<vmem>>, vector<16x256xbf16>
    tpu.vector_store %arg4[%c0_7, %c0_8], %11 {strides = array<i32>} : memref<16x256xbf16, #tpu.memory_space<vmem>>, vector<16x256xbf16>,
    return
  }
  func.func @transform_0(%arg0: i32) -> (i32, i32) {
    %c0_i32 = arith.constant 0 : i32
    %c0_i32_0 = arith.constant 0 : i32
    return %arg0, %c0_i32 : i32, i32
  }
  func.func @transform_1(%arg0: i32) -> (i32, i32) {
    %c0_i32 = arith.constant 0 : i32
    %c0_i32_0 = arith.constant 0 : i32
    %c0_i32_1 = arith.constant 0 : i32
    return %c0_i32, %c0_i32_0 : i32, i32
  }
  func.func @transform_2(%arg0: i32) -> (i32, i32) {
    %c0_i32 = arith.constant 0 : i32
    %c0_i32_0 = arith.constant 0 : i32
    %c0_i32_1 = arith.constant 0 : i32
    return %c0_i32, %c0_i32_0 : i32, i32
  }
  func.func @transform_3(%arg0: i32) -> (i32, i32) {
    %c0_i32 = arith.constant 0 : i32
    %c0_i32_0 = arith.constant 0 : i32
    return %arg0, %c0_i32 : i32, i32
  }
}

module attributes {stable_mosaic.version = 11 : i64} {
  func.func @_head_kernel(%arg0: i32, %arg1: memref<8x256xbf16, #tpu.memory_space<vmem>>, %arg2: memref<2x8xf32, #tpu.memory_space<vmem>>, %arg3: memref<256x256xbf16, #tpu.memory_space<vmem>>, %arg4: memref<1x256xf32, #tpu.memory_space<vmem>>, %arg5: memref<256x32xbf16, #tpu.memory_space<vmem>>, %arg6: memref<1x32xf32, #tpu.memory_space<vmem>>, %arg7: memref<2x32xf32, #tpu.memory_space<vmem>>) attributes {dimension_semantics = [#tpu.dimension_semantics<arbitrary>], iteration_bounds = array<i64: 1>, scalar_prefetch = 0 : i64, scratch_operands = 0 : i64, tpu.core_type = #tpu.core_type<tc>, window_params = [{pipeline_mode = #tpu.pipeline_mode<synchronous>, transform_indices = @transform_0, window_bounds = array<i64: 8, 256>}, {pipeline_mode = #tpu.pipeline_mode<synchronous>, transform_indices = @transform_1, window_bounds = array<i64: 2, 8>}, {pipeline_mode = #tpu.pipeline_mode<synchronous>, transform_indices = @transform_2, window_bounds = array<i64: 256, 256>}, {pipeline_mode = #tpu.pipeline_mode<synchronous>, transform_indices = @transform_3, window_bounds = array<i64: 1, 256>}, {pipeline_mode = #tpu.pipeline_mode<synchronous>, transform_indices = @transform_4, window_bounds = array<i64: 256, 32>}, {pipeline_mode = #tpu.pipeline_mode<synchronous>, transform_indices = @transform_5, window_bounds = array<i64: 1, 32>}, {pipeline_mode = #tpu.pipeline_mode<synchronous>, transform_indices = @transform_6, window_bounds = array<i64: 2, 32>}]} {
    %c0 = arith.constant 0 : index
    %c0_0 = arith.constant 0 : index
    %0 = vector.load %arg2[%c0, %c0_0] : memref<2x8xf32, #tpu.memory_space<vmem>>, vector<2x8xf32>
    %c0_1 = arith.constant 0 : index
    %c0_2 = arith.constant 0 : index
    %1 = vector.load %arg1[%c0_1, %c0_2] : memref<8x256xbf16, #tpu.memory_space<vmem>>, vector<8x256xbf16>
    %2 = arith.extf %1 : vector<8x256xbf16> to vector<8x256xf32>
    %cst = arith.constant dense<0.000000e+00> : vector<2x256xf32>
    %3 = tpu.matmul %0, %2, %cst {dimension_numbers = #tpu.dot_dimension_numbers<[1], [0], [0], [1], [0, 0, 1, 1], [], []>} : vector<2x8xf32>, vector<8x256xf32>, vector<2x256xf32> -> vector<2x256xf32>
    %4 = arith.truncf %3 : vector<2x256xf32> to vector<2x256xbf16>
    %c0_3 = arith.constant 0 : index
    %c0_4 = arith.constant 0 : index
    %5 = vector.load %arg3[%c0_3, %c0_4] : memref<256x256xbf16, #tpu.memory_space<vmem>>, vector<256x256xbf16>
    %cst_5 = arith.constant dense<0.000000e+00> : vector<2x256xf32>
    %6 = tpu.matmul %4, %5, %cst_5 {dimension_numbers = #tpu.dot_dimension_numbers<[1], [0], [0], [1], [0, 0, 1, 1], [], []>} : vector<2x256xbf16>, vector<256x256xbf16>, vector<2x256xf32> -> vector<2x256xf32>
    %c0_6 = arith.constant 0 : index
    %c0_7 = arith.constant 0 : index
    %7 = vector.load %arg4[%c0_6, %c0_7] : memref<1x256xf32, #tpu.memory_space<vmem>>, vector<1x256xf32>
    %8 = vector.broadcast %7 : vector<1x256xf32> to vector<2x256xf32>
    %9 = arith.addf %6, %8 : vector<2x256xf32>
    %cst_8 = arith.constant 0.000000e+00 : f32
    %10 = vector.broadcast %cst_8 : f32 to vector<2x256xf32>
    %11 = arith.cmpf oge, %9, %10 : vector<2x256xf32>
    %cst_9 = arith.constant 1.000000e-01 : f32
    %12 = vector.broadcast %cst_9 : f32 to vector<2x256xf32>
    %13 = arith.mulf %9, %12 : vector<2x256xf32>
    %14 = arith.select %11, %9, %13 : vector<2x256xi1>, vector<2x256xf32>
    %15 = arith.truncf %14 : vector<2x256xf32> to vector<2x256xbf16>
    %c0_10 = arith.constant 0 : index
    %c0_11 = arith.constant 0 : index
    %16 = vector.load %arg5[%c0_10, %c0_11] : memref<256x32xbf16, #tpu.memory_space<vmem>>, vector<256x32xbf16>
    %cst_12 = arith.constant dense<0.000000e+00> : vector<2x32xf32>
    %17 = tpu.matmul %15, %16, %cst_12 {dimension_numbers = #tpu.dot_dimension_numbers<[1], [0], [0], [1], [0, 0, 1, 1], [], []>} : vector<2x256xbf16>, vector<256x32xbf16>, vector<2x32xf32> -> vector<2x32xf32>
    %c0_13 = arith.constant 0 : index
    %c0_14 = arith.constant 0 : index
    %18 = vector.load %arg6[%c0_13, %c0_14] : memref<1x32xf32, #tpu.memory_space<vmem>>, vector<1x32xf32>
    %19 = vector.broadcast %18 : vector<1x32xf32> to vector<2x32xf32>
    %20 = arith.addf %17, %19 : vector<2x32xf32>
    %c0_15 = arith.constant 0 : index
    %c0_16 = arith.constant 0 : index
    %21 = vector.load %arg7[%c0_15, %c0_16] : memref<2x32xf32, #tpu.memory_space<vmem>>, vector<2x32xf32>
    tpu.vector_store %arg7[%c0_15, %c0_16], %20 {strides = array<i32>} : memref<2x32xf32, #tpu.memory_space<vmem>>, vector<2x32xf32>,
    return
  }
  func.func @transform_0(%arg0: i32) -> (i32, i32) {
    %c0_i32 = arith.constant 0 : i32
    %c0_i32_0 = arith.constant 0 : i32
    %c0_i32_1 = arith.constant 0 : i32
    return %c0_i32, %c0_i32_0 : i32, i32
  }
  func.func @transform_1(%arg0: i32) -> (i32, i32) {
    %c0_i32 = arith.constant 0 : i32
    %c0_i32_0 = arith.constant 0 : i32
    %c0_i32_1 = arith.constant 0 : i32
    return %c0_i32, %c0_i32_0 : i32, i32
  }
  func.func @transform_2(%arg0: i32) -> (i32, i32) {
    %c0_i32 = arith.constant 0 : i32
    %c0_i32_0 = arith.constant 0 : i32
    %c0_i32_1 = arith.constant 0 : i32
    return %c0_i32, %c0_i32_0 : i32, i32
  }
  func.func @transform_3(%arg0: i32) -> (i32, i32) {
    %c0_i32 = arith.constant 0 : i32
    %c0_i32_0 = arith.constant 0 : i32
    %c0_i32_1 = arith.constant 0 : i32
    return %c0_i32, %c0_i32_0 : i32, i32
  }
  func.func @transform_4(%arg0: i32) -> (i32, i32) {
    %c0_i32 = arith.constant 0 : i32
    %c0_i32_0 = arith.constant 0 : i32
    %c0_i32_1 = arith.constant 0 : i32
    return %c0_i32, %c0_i32_0 : i32, i32
  }
  func.func @transform_5(%arg0: i32) -> (i32, i32) {
    %c0_i32 = arith.constant 0 : i32
    %c0_i32_0 = arith.constant 0 : i32
    %c0_i32_1 = arith.constant 0 : i32
    return %c0_i32, %c0_i32_0 : i32, i32
  }
  func.func @transform_6(%arg0: i32) -> (i32, i32) {
    %c0_i32 = arith.constant 0 : i32
    %c0_i32_0 = arith.constant 0 : i32
    %c0_i32_1 = arith.constant 0 : i32
    return %c0_i32, %c0_i32_0 : i32, i32
  }
}

</mosaic_0001>

<llo_original>
// kernel: lite_face_forward.10
$region0: #{lite_face_forward.10}
  #allocation0 [shape = 'u32[]', space=smem, size = 0x4, offset = 0x4, fixed_abs, tag = 'smem constant byte address 0x4 - core index']
  #allocation1 [shape = 'u32[72,128]{1,0:T(1,128)}', space=vmem, size = 0x9000, scoped, tag = 'internal scratch']
  %s0 = inlined_call_operand.vmem [shape: bf16[2320,27], index: 0, kind: input, shape index: {}]
  %s1 = inlined_call_operand.vmem [shape: bf16[27,64], index: 1, kind: input, shape index: {}]
  %s2 = inlined_call_operand.vmem [shape: f32[1,64], index: 2, kind: input, shape index: {}]
  %s3 = inlined_call_operand.vmem [shape: bf16[2320,64], index: 3, kind: output, shape index: {}]
  %s4 = sld [smem:[#allocation0]]
  $region45: #{lite_face_forward.10} parent=0
    _
  %s6 = ssub.s32 1, %s4
  %s7 = scalar_select 0, %s6, %s4
  loop: start=0, step=1, limit=7
  $region2: #{lite_face_forward.10} parent=0 // loop_pre_header
    _
  $region3: #{lite_face_forward.10} parent=0 // loop_header
    %s9 = sphi 0, %s13
    %p10 = scmp.ge.s32.totalorder %s9, 7
    %s19 = sphi 0, %s21
    %s22 = sphi 0, %s19
    %s23 = sphi 0, %s22
    %s39 = sphi 0, %s23
    %s43 = sphi 0, %s43
    %s45 = sphi 0, %s43
    %s46 = sphi 0, %s45
    %s60 = sphi 0, %s46
    %s64 = sphi 0, %s64
    %s66 = sphi 0, %s64
    %s67 = sphi 0, %s66
    %s81 = sphi 0, %s67
    %s87 = sphi 0, %s89
    %s90 = sphi 0, %s87
    %s91 = sphi 0, %s90
    %s107 = sphi 0, %s91
  $region4: #{lite_face_forward.10} parent=0 // loop_header_branch
    %12 = sbr.rel (%p10) target = $region8
  $region5: #{lite_face_forward.10} parent=0 // loop_body
    %s14 = ssub.s32 %s9, 1
    %s15 = ssub.s32 %s9, 2
    %s16 = sadd.s32 %s9, 1
    %s17 = ssub.s32 %s9, %s16
    %p18 = scmp.eq.s32.totalorder %s17, 0
    %s20 = sadd.s32 %s19, 1
    %s21 = scalar_select %p18, %s19, %s20
    %p24 = pneg %p18
    %p25 = scmp.eq.s32.totalorder %s9, 4
    %p26 = por %p24, %p25
    %p27 = scmp.ne.s32.totalorder %s19, %s22
    %p28 = scmp.eq.s32.totalorder %s9, 0
    %p29 = por %p27, %p28
    %p30 = scmp.ne.s32.totalorder %s19, %s22
    %p31 = scmp.eq.s32.totalorder %s14, 4
    %p32 = por %p30, %p31
    %p33 = scmp.ne.s32.totalorder %s22, %s23
    %p34 = scmp.eq.s32.totalorder %s14, 0
    %p35 = por %p33, %p34
    %p36 = scmp.ne.s32.totalorder %s22, %s23
    %p37 = scmp.eq.s32.totalorder %s15, 4
    %p38 = por %p36, %p37
    %p40 = scmp.ne.s32.totalorder %s23, %s39
    %p41 = scmp.eq.s32.totalorder %s15, 0
    %p42 = por %p40, %p41
    %s44 = sadd.s32 %s43, 1
    %p47 = scmp.eq.s32.totalorder %s9, 4
    %p48 = scmp.ne.s32.totalorder %s43, %s45
    %p49 = scmp.eq.s32.totalorder %s9, 0
    %p50 = por %p48, %p49
    %p51 = scmp.ne.s32.totalorder %s43, %s45
    %p52 = scmp.eq.s32.totalorder %s14, 4
    %p53 = por %p51, %p52
    %p54 = scmp.ne.s32.totalorder %s45, %s46
    %p55 = scmp.eq.s32.totalorder %s14, 0
    %p56 = por %p54, %p55
    %p57 = scmp.ne.s32.totalorder %s45, %s46
    %p58 = scmp.eq.s32.totalorder %s15, 4
    %p59 = por %p57, %p58
    %p61 = scmp.ne.s32.totalorder %s46, %s60
    %p62 = scmp.eq.s32.totalorder %s15, 0
    %p63 = por %p61, %p62
    %s65 = sadd.s32 %s64, 1
    %p68 = scmp.eq.s32.totalorder %s9, 4
    %p69 = scmp.ne.s32.totalorder %s64, %s66
    %p70 = scmp.eq.s32.totalorder %s9, 0
    %p71 = por %p69, %p70
    %p72 = scmp.ne.s32.totalorder %s64, %s66
    %p73 = scmp.eq.s32.totalorder %s14, 4
    %p74 = por %p72, %p73
    %p75 = scmp.ne.s32.totalorder %s66, %s67
    %p76 = scmp.eq.s32.totalorder %s14, 0
    %p77 = por %p75, %p76
    %p78 = scmp.ne.s32.totalorder %s66, %s67
    %p79 = scmp.eq.s32.totalorder %s15, 4
    %p80 = por %p78, %p79
    %p82 = scmp.ne.s32.totalorder %s67, %s81
    %p83 = scmp.eq.s32.totalorder %s15, 0
    %p84 = por %p82, %p83
    %s85 = ssub.s32 %s9, %s16
    %p86 = scmp.eq.s32.totalorder %s85, 0
    %s88 = sadd.s32 %s87, 1
    %s89 = scalar_select %p86, %s87, %s88
    %p92 = pneg %p86
    %p93 = scmp.eq.s32.totalorder %s9, 4
    %p94 = por %p92, %p93
    %p95 = scmp.ne.s32.totalorder %s87, %s90
    %p96 = scmp.eq.s32.totalorder %s9, 0
    %p97 = por %p95, %p96
    %p98 = scmp.ne.s32.totalorder %s87, %s90
    %p99 = scmp.eq.s32.totalorder %s14, 4
    %p100 = por %p98, %p99
    %p101 = scmp.ne.s32.totalorder %s90, %s91
    %p102 = scmp.eq.s32.totalorder %s14, 0
    %p103 = por %p101, %p102
    %p104 = scmp.ne.s32.totalorder %s90, %s91
    %p105 = scmp.eq.s32.totalorder %s15, 4
    %p106 = por %p104, %p105
    %p108 = scmp.ne.s32.totalorder %s91, %s107
    %p109 = scmp.eq.s32.totalorder %s15, 0
    %p110 = por %p108, %p109
    %p111 = scmp.le.s32.totalorder 1, %s9
    %p112 = scmp.lt.s32.totalorder %s9, 6
    %p113 = pnand %p111, %p112
    %p114 = pneg %p113
    // Predicated region
    $region9: #{lite_face_forward.10} parent=5 // pred_check
      _
    $region10: #{lite_face_forward.10} parent=5 // pred_check_branch
      %116 = sbr.rel (%p113) target = $region12
    $region11: #{lite_face_forward.10} parent=5 // pred_region
      %s117 = ssub.s32 %s9, 1
      // Predicated region
      $region13: #{lite_face_forward.10} parent=11 // pred_check
        %p118 = pneg %p56
      $region14: #{lite_face_forward.10} parent=11 // pred_check_branch
        %120 = sbr.rel (%p118) target = $region16
      $region15: #{lite_face_forward.10} parent=11 // pred_region
        _
      $region16: #{lite_face_forward.10} parent=11 // pred_fallthru
        _
      // Predicated region
      $region17: #{lite_face_forward.10} parent=11 // pred_check
        %p121 = pneg %p77
      $region18: #{lite_face_forward.10} parent=11 // pred_check_branch
        %123 = sbr.rel (%p121) target = $region20
      $region19: #{lite_face_forward.10} parent=11 // pred_region
        _
      $region20: #{lite_face_forward.10} parent=11 // pred_fallthru
        _
    $region12: #{lite_face_forward.10} parent=5 // pred_fallthru
      _
    %p124 = scmp.lt.s32.totalorder %s9, 5
    // Predicated region
    $region21: #{lite_face_forward.10} parent=5 // pred_check
      %p125 = pneg %p124
    $region22: #{lite_face_forward.10} parent=5 // pred_check_branch
      %127 = sbr.rel (%p125) target = $region24
    $region23: #{lite_face_forward.10} parent=5 // pred_region
      // Predicated region
      $region25: #{lite_face_forward.10} parent=23 // pred_check
        %p128 = pneg %p29
      $region26: #{lite_face_forward.10} parent=23 // pred_check_branch
        %130 = sbr.rel (%p128) target = $region28
      $region27: #{lite_face_forward.10} parent=23 // pred_region
        %s131 = smul.u32 58, %s9
        %p132 = scmp.lt.s32.totalorder %s131, 289
        %s133 = scalar_select %p132, %s131, 289
        %s134 = smul.addr %s133, 4
        %s135 = scalar_lea.vmem %s0, %s134
        %s136 = smul.u32 58, %s9
      $region28: #{lite_face_forward.10} parent=23 // pred_fallthru
        _
    $region24: #{lite_face_forward.10} parent=5 // pred_fallthru
      _
    %p137 = scmp.le.s32.totalorder 1, %s9
    %p138 = scmp.lt.s32.totalorder %s9, 6
    %p139 = pnand %p137, %p138
    %p140 = pneg %p139
    // Predicated region
    $region29: #{lite_face_forward.10} parent=5 // pred_check
      _
    $region30: #{lite_face_forward.10} parent=5 // pred_check_branch
      %142 = sbr.rel (%p139) target = $region32
    $region31: #{lite_face_forward.10} parent=5 // pred_region
      %s143 = ssub.s32 %s9, 1
      %s144 = smul.u32 58, %s14
      %p145 = scmp.lt.s32.totalorder %s144, 289
      %s146 = scalar_select %p145, %s144, 289
      %s147 = smul.addr %s146, 4
      %s148 = scalar_lea.vmem %s0, %s147
      %p149 = pneg %p35
      %p150 = pneg %p32
      %p151 = pneg %p56
      %p152 = pneg %p53
      %p153 = pneg %p77
      %p154 = pneg %p74
      %p155 = pneg %p103
      %p156 = pneg %p100
      %s157 = smul.u32 58, %s14
      %p158 = scmp.lt.s32.totalorder %s157, 289
      %s159 = scalar_select %p158, %s157, 289
      %s160 = smul.addr %s159, 4
      %s161 = scalar_lea.vmem %s3, %s160
      %s162 = smul.u32 58, %s14
      %p163 = scmp.lt.s32.totalorder %s162, 289
      %s164 = scalar_select %p163, %s162, 289
      %s165 = smul.addr %s164, 4
      %s166 = scalar_lea.vmem %s0, %s165
      %s167 = smul.u32 58, %s14
      %s168 = smul.u32 58, %s14
      %p169 = scmp.lt.s32.totalorder %s168, 289
      %s170 = scalar_select %p169, %s168, 289
      %s171 = smul.addr %s170, 4
      %s172 = scalar_lea.vmem %s3, %s171
      %s173 = smul.u32 58, %s14
      %v175 = vld [vmem:[%s166] sm:$0xf]
      %v176 = vld [vmem:[%s166 + $0x4] sm:$0xf]
      %v177 = vld [vmem:[%s166 + $0x8] sm:$0xf]
      %v178 = vld [vmem:[%s166 + $0xc] sm:$0xf]
      %v179 = vld [vmem:[%s166 + $0x10] sm:$0xf]
      %v180 = vld [vmem:[%s166 + $0x14] sm:$0xf]
      %v181 = vld [vmem:[%s166 + $0x18] sm:$0xf]
      %v182 = vld [vmem:[%s166 + $0x1c] sm:$0xf]
      %v183 = vld [vmem:[%s166 + $0x20] sm:$0xf]
      %v184 = vld [vmem:[%s166 + $0x24] sm:$0xf]
      %v185 = vld [vmem:[%s166 + $0x28] sm:$0xf]
      %v186 = vld [vmem:[%s166 + $0x2c] sm:$0xf]
      %v187 = vld [vmem:[%s166 + $0x30] sm:$0xf]
      %v188 = vld [vmem:[%s166 + $0x34] sm:$0xf]
      %v189 = vld [vmem:[%s166 + $0x38] sm:$0xf]
      %v190 = vld [vmem:[%s166 + $0x3c] sm:$0xf]
      %v191 = vld [vmem:[%s166 + $0x40] sm:$0xf]
      %v192 = vld [vmem:[%s166 + $0x44] sm:$0xf]
      %v193 = vld [vmem:[%s166 + $0x48] sm:$0xf]
      %v194 = vld [vmem:[%s166 + $0x4c] sm:$0xf]
      %v195 = vld [vmem:[%s166 + $0x50] sm:$0xf]
      %v196 = vld [vmem:[%s166 + $0x54] sm:$0xf]
      %v197 = vld [vmem:[%s166 + $0x58] sm:$0xf]
      %v198 = vld [vmem:[%s166 + $0x5c] sm:$0xf]
      %v199 = vld [vmem:[%s166 + $0x60] sm:$0xf]
      %v200 = vld [vmem:[%s166 + $0x64] sm:$0xf]
      %v201 = vld [vmem:[%s166 + $0x68] sm:$0xf]
      %v202 = vld [vmem:[%s166 + $0x6c] sm:$0xf]
      %v203 = vld [vmem:[%s166 + $0x70] sm:$0xf]
      %v204 = vld [vmem:[%s166 + $0x74] sm:$0xf]
      %v205 = vld [vmem:[%s166 + $0x78] sm:$0xf]
      %v206 = vld [vmem:[%s166 + $0x7c] sm:$0xf]
      %v207 = vld [vmem:[%s166 + $0x80] sm:$0xf]
      %v208 = vld [vmem:[%s166 + $0x84] sm:$0xf]
      %v209 = vld [vmem:[%s166 + $0x88] sm:$0xf]
      %v210 = vld [vmem:[%s166 + $0x8c] sm:$0xf]
      %v211 = vld [vmem:[%s166 + $0x90] sm:$0xf]
      %v212 = vld [vmem:[%s166 + $0x94] sm:$0xf]
      %v213 = vld [vmem:[%s166 + $0x98] sm:$0xf]
      %v214 = vld [vmem:[%s166 + $0x9c] sm:$0xf]
      %v215 = vld [vmem:[%s166 + $0xa0] sm:$0xf]
      %v216 = vld [vmem:[%s166 + $0xa4] sm:$0xf]
      %v217 = vld [vmem:[%s166 + $0xa8] sm:$0xf]
      %v218 = vld [vmem:[%s166 + $0xac] sm:$0xf]
      %v219 = vld [vmem:[%s166 + $0xb0] sm:$0xf]
      %v220 = vld [vmem:[%s166 + $0xb4] sm:$0xf]
      %v221 = vld [vmem:[%s166 + $0xb8] sm:$0xf]
      %v222 = vld [vmem:[%s166 + $0xbc] sm:$0xf]
      %v223 = vld [vmem:[%s166 + $0xc0] sm:$0xf]
      %v224 = vld [vmem:[%s166 + $0xc4] sm:$0xf]
      %v225 = vld [vmem:[%s166 + $0xc8] sm:$0xf]
      %v226 = vld [vmem:[%s166 + $0xcc] sm:$0xf]
      %v227 = vld [vmem:[%s166 + $0xd0] sm:$0xf]
      %v228 = vld [vmem:[%s166 + $0xd4] sm:$0xf]
      %v229 = vld [vmem:[%s166 + $0xd8] sm:$0xf]
      %v230 = vld [vmem:[%s166 + $0xdc] sm:$0xf]
      %v231 = vld [vmem:[%s166 + $0xe0] sm:$0xf]
      %v232 = vld [vmem:[%s166 + $0xe4] sm:$0xf]
      %v233 = vld [vmem:[%s1] sm:$0xf]
      %v234 = vld [vmem:[%s1 + $0x4] sm:$0xf]
      %v235 = vld [vmem:[%s1 + $0x8] sm:$0xf]
      %v236 = vld [vmem:[%s1 + $0xc] sm:$0x3]
      %v237 = vld [vmem:[%s2] sm:$0x1]
      %v239 = vperm.slane %v237, 0
      %v299 = vunpack.c.l.b16 %v175
      %v300 = vunpack.c.l.b16 %v176
      %v301 = vunpack.c.l.b16 %v177
      %v302 = vunpack.c.l.b16 %v178
      %v303 = vunpack.c.l.b16 %v179
      %v304 = vunpack.c.l.b16 %v180
      %v305 = vunpack.c.l.b16 %v181
      %v306 = vunpack.c.l.b16 %v182
      %v307 = vunpack.c.l.b16 %v183
      %v308 = vunpack.c.l.b16 %v184
      %v309 = vunpack.c.l.b16 %v185
      %v310 = vunpack.c.l.b16 %v186
      %v311 = vunpack.c.l.b16 %v187
      %v312 = vunpack.c.l.b16 %v188
      %v313 = vunpack.c.l.b16 %v189
      %v314 = vunpack.c.l.b16 %v190
      %v315 = vunpack.c.l.b16 %v191
      %v316 = vunpack.c.l.b16 %v192
      %v317 = vunpack.c.l.b16 %v193
      %v318 = vunpack.c.l.b16 %v194
      %v319 = vunpack.c.l.b16 %v195
      %v320 = vunpack.c.l.b16 %v196
      %v321 = vunpack.c.l.b16 %v197
      %v322 = vunpack.c.l.b16 %v198
      %v323 = vunpack.c.l.b16 %v199
      %v324 = vunpack.c.l.b16 %v200
      %v325 = vunpack.c.l.b16 %v201
      %v326 = vunpack.c.l.b16 %v202
      %v327 = vunpack.c.l.b16 %v203
      %v328 = vunpack.c.l.b16 %v204
      %v329 = vunpack.c.l.b16 %v205
      %v330 = vunpack.c.l.b16 %v206
      %v331 = vunpack.c.l.b16 %v207
      %v332 = vunpack.c.l.b16 %v208
      %v333 = vunpack.c.l.b16 %v209
      %v334 = vunpack.c.l.b16 %v210
      %v335 = vunpack.c.l.b16 %v211
      %v336 = vunpack.c.l.b16 %v212
      %v337 = vunpack.c.l.b16 %v213
      %v338 = vunpack.c.l.b16 %v214
      %v339 = vunpack.c.l.b16 %v215
      %v340 = vunpack.c.l.b16 %v216
      %v341 = vunpack.c.l.b16 %v217
      %v342 = vunpack.c.l.b16 %v218
      %v343 = vunpack.c.l.b16 %v219
      %v344 = vunpack.c.l.b16 %v220
      %v345 = vunpack.c.l.b16 %v221
      %v346 = vunpack.c.l.b16 %v222
      %v347 = vunpack.c.l.b16 %v223
      %v348 = vunpack.c.l.b16 %v224
      %v349 = vunpack.c.l.b16 %v225
      %v350 = vunpack.c.l.b16 %v226
      %v351 = vunpack.c.l.b16 %v227
      %v352 = vunpack.c.l.b16 %v228
      %v353 = vunpack.c.l.b16 %v229
      %v354 = vunpack.c.l.b16 %v230
      %v355 = vunpack.c.l.b16 %v231
      %v356 = vunpack.c.l.b16 %v232
      %v357 = vpack.c.b16 %v300, %v299
      %v358 = vpack.c.b16 %v302, %v301
      %v359 = vpack.c.b16 %v304, %v303
      %v360 = vpack.c.b16 %v306, %v305
      %v361 = vpack.c.b16 %v308, %v307
      %v362 = vpack.c.b16 %v310, %v309
      %v363 = vpack.c.b16 %v312, %v311
      %v364 = vpack.c.b16 %v314, %v313
      %v365 = vpack.c.b16 %v316, %v315
      %v366 = vpack.c.b16 %v318, %v317
      %v367 = vpack.c.b16 %v320, %v319
      %v368 = vpack.c.b16 %v322, %v321
      %v369 = vpack.c.b16 %v324, %v323
      %v370 = vpack.c.b16 %v326, %v325
      %v371 = vpack.c.b16 %v328, %v327
      %v372 = vpack.c.b16 %v330, %v329
      %v373 = vpack.c.b16 %v332, %v331
      %v374 = vpack.c.b16 %v334, %v333
      %v375 = vpack.c.b16 %v336, %v335
      %v376 = vpack.c.b16 %v338, %v337
      %v377 = vpack.c.b16 %v340, %v339
      %v378 = vpack.c.b16 %v342, %v341
      %v379 = vpack.c.b16 %v344, %v343
      %v380 = vpack.c.b16 %v346, %v345
      %v381 = vpack.c.b16 %v348, %v347
      %v382 = vpack.c.b16 %v350, %v349
      %v383 = vpack.c.b16 %v352, %v351
      %v384 = vpack.c.b16 %v354, %v353
      %v385 = vpack.c.b16 %v356, %v355
      %v390 = vunpack.c.l.b16 %v233
      %v391 = vunpack.c.l.b16 %v234
      %v392 = vunpack.c.l.b16 %v235
      %v393 = vunpack.c.l.b16 %v236
      %v394 = vpack.c.b16 %v391, %v390
      %v395 = vpack.c.b16 %v393, %v392
      %vm397 = vcmask 220160
      %v399 = vsel %vm397, %v357, 0
      %v402 = vsel %vm397, %v358, 0
      %v405 = vsel %vm397, %v359, 0
      %v408 = vsel %vm397, %v360, 0
      %v411 = vsel %vm397, %v361, 0
      %v414 = vsel %vm397, %v362, 0
      %v417 = vsel %vm397, %v363, 0
      %v420 = vsel %vm397, %v364, 0
      %v423 = vsel %vm397, %v365, 0
      %v426 = vsel %vm397, %v366, 0
      %v429 = vsel %vm397, %v367, 0
      %v432 = vsel %vm397, %v368, 0
      %v435 = vsel %vm397, %v369, 0
      %v438 = vsel %vm397, %v370, 0
      %v441 = vsel %vm397, %v371, 0
      %v444 = vsel %vm397, %v372, 0
      %v447 = vsel %vm397, %v373, 0
      %v450 = vsel %vm397, %v374, 0
      %v453 = vsel %vm397, %v375, 0
      %v456 = vsel %vm397, %v376, 0
      %v459 = vsel %vm397, %v377, 0
      %v462 = vsel %vm397, %v378, 0
      %v465 = vsel %vm397, %v379, 0
      %v468 = vsel %vm397, %v380, 0
      %v471 = vsel %vm397, %v381, 0
      %v474 = vsel %vm397, %v382, 0
      %v477 = vsel %vm397, %v383, 0
      %v480 = vsel %vm397, %v384, 0
      %v483 = vsel %vm397, %v385, 0
      %vm485 = vcmask 1044480
      %vm486 = vcmask 1045504
      %v487 = vsel %vm485, 4294967295, 65535
      %v488 = vsel %vm486, %v487, 0
      %v490 = vand.u32 %v395, %v488
      %492 = vmatpush.bf16.msra.mxu0 0
      %493 = vmatpush.bf16.msra.mxu0 0
      %494 = vmatpush.bf16.msra.mxu0 0
      %495 = vmatpush.bf16.msra.mxu0 0
      %496 = vmatpush.bf16.msra.mxu0 0
      %497 = vmatpush.bf16.msra.mxu0 0
      %498 = vmatpush.bf16.msra.mxu0 %v490
      %499 = vmatpush.bf16.msra.mxu0 %v394
      %500 = vmatmul.bf16.gmra.mxu0 %v399
      %v501 = vpop.f32.mrf.mxu0
      %v502 = vadd.f32 %v239, %v501
      %v503 = vpop.f32.mrf.mxu0
      %v504 = vadd.f32 %v239, %v503
      %505 = vmatmul.bf16.gmra.mxu0 %v402
      %v506 = vpop.f32.mrf.mxu0
      %v507 = vadd.f32 %v239, %v506
      %v508 = vpop.f32.mrf.mxu0
      %v509 = vadd.f32 %v239, %v508
      %510 = vmatmul.bf16.gmra.mxu0 %v405
      %v511 = vpop.f32.mrf.mxu0
      %v512 = vadd.f32 %v239, %v511
      %v513 = vpop.f32.mrf.mxu0
      %v514 = vadd.f32 %v239, %v513
      %515 = vmatmul.bf16.gmra.mxu0 %v408
      %v516 = vpop.f32.mrf.mxu0
      %v517 = vadd.f32 %v239, %v516
      %v518 = vpop.f32.mrf.mxu0
      %v519 = vadd.f32 %v239, %v518
      %520 = vmatmul.bf16.gmra.mxu0 %v411
      %v521 = vpop.f32.mrf.mxu0
      %v522 = vadd.f32 %v239, %v521
      %v523 = vpop.f32.mrf.mxu0
      %v524 = vadd.f32 %v239, %v523
      %525 = vmatmul.bf16.gmra.mxu0 %v414
      %v526 = vpop.f32.mrf.mxu0
      %v527 = vadd.f32 %v239, %v526
      %v528 = vpop.f32.mrf.mxu0
      %v529 = vadd.f32 %v239, %v528
      %530 = vmatmul.bf16.gmra.mxu0 %v417
      %v531 = vpop.f32.mrf.mxu0
      %v532 = vadd.f32 %v239, %v531
      %v533 = vpop.f32.mrf.mxu0
      %v534 = vadd.f32 %v239, %v533
      %535 = vmatmul.bf16.gmra.mxu0 %v420
      %v536 = vpop.f32.mrf.mxu0
      %v537 = vadd.f32 %v239, %v536
      %v538 = vpop.f32.mrf.mxu0
      %v539 = vadd.f32 %v239, %v538
      %540 = vmatmul.bf16.gmra.mxu0 %v423
      %v541 = vpop.f32.mrf.mxu0
      %v542 = vadd.f32 %v239, %v541
      %v543 = vpop.f32.mrf.mxu0
      %v544 = vadd.f32 %v239, %v543
      %545 = vmatmul.bf16.gmra.mxu0 %v426
      %v546 = vpop.f32.mrf.mxu0
      %v547 = vadd.f32 %v239, %v546
      %v548 = vpop.f32.mrf.mxu0
      %v549 = vadd.f32 %v239, %v548
      %550 = vmatmul.bf16.gmra.mxu0 %v429
      %v551 = vpop.f32.mrf.mxu0
      %v552 = vadd.f32 %v239, %v551
      %v553 = vpop.f32.mrf.mxu0
      %v554 = vadd.f32 %v239, %v553
      %555 = vmatmul.bf16.gmra.mxu0 %v432
      %v556 = vpop.f32.mrf.mxu0
      %v557 = vadd.f32 %v239, %v556
      %v558 = vpop.f32.mrf.mxu0
      %v559 = vadd.f32 %v239, %v558
      %560 = vmatmul.bf16.gmra.mxu0 %v435
      %v561 = vpop.f32.mrf.mxu0
      %v562 = vadd.f32 %v239, %v561
      %v563 = vpop.f32.mrf.mxu0
      %v564 = vadd.f32 %v239, %v563
      %565 = vmatmul.bf16.gmra.mxu0 %v438
      %v566 = vpop.f32.mrf.mxu0
      %v567 = vadd.f32 %v239, %v566
      %v568 = vpop.f32.mrf.mxu0
      %v569 = vadd.f32 %v239, %v568
      %570 = vmatmul.bf16.gmra.mxu0 %v441
      %v571 = vpop.f32.mrf.mxu0
      %v572 = vadd.f32 %v239, %v571
      %v573 = vpop.f32.mrf.mxu0
      %v574 = vadd.f32 %v239, %v573
      %575 = vmatmul.bf16.gmra.mxu0 %v444
      %v576 = vpop.f32.mrf.mxu0
      %v577 = vadd.f32 %v239, %v576
      %v578 = vpop.f32.mrf.mxu0
      %v579 = vadd.f32 %v239, %v578
      %580 = vmatmul.bf16.gmra.mxu0 %v447
      %v581 = vpop.f32.mrf.mxu0
      %v582 = vadd.f32 %v239, %v581
      %v583 = vpop.f32.mrf.mxu0
      %v584 = vadd.f32 %v239, %v583
      %585 = vmatmul.bf16.gmra.mxu0 %v450
      %v586 = vpop.f32.mrf.mxu0
      %v587 = vadd.f32 %v239, %v586
      %v588 = vpop.f32.mrf.mxu0
      %v589 = vadd.f32 %v239, %v588
      %590 = vmatmul.bf16.gmra.mxu0 %v453
      %v591 = vpop.f32.mrf.mxu0
      %v592 = vadd.f32 %v239, %v591
      %v593 = vpop.f32.mrf.mxu0
      %v594 = vadd.f32 %v239, %v593
      %595 = vmatmul.bf16.gmra.mxu0 %v456
      %v596 = vpop.f32.mrf.mxu0
      %v597 = vadd.f32 %v239, %v596
      %v598 = vpop.f32.mrf.mxu0
      %v599 = vadd.f32 %v239, %v598
      %600 = vmatmul.bf16.gmra.mxu0 %v459
      %v601 = vpop.f32.mrf.mxu0
      %v602 = vadd.f32 %v239, %v601
      %v603 = vpop.f32.mrf.mxu0
      %v604 = vadd.f32 %v239, %v603
      %605 = vmatmul.bf16.gmra.mxu0 %v462
      %v606 = vpop.f32.mrf.mxu0
      %v607 = vadd.f32 %v239, %v606
      %v608 = vpop.f32.mrf.mxu0
      %v609 = vadd.f32 %v239, %v608
      %610 = vmatmul.bf16.gmra.mxu0 %v465
      %v611 = vpop.f32.mrf.mxu0
      %v612 = vadd.f32 %v239, %v611
      %v613 = vpop.f32.mrf.mxu0
      %v614 = vadd.f32 %v239, %v613
      %615 = vmatmul.bf16.gmra.mxu0 %v468
      %v616 = vpop.f32.mrf.mxu0
      %v617 = vadd.f32 %v239, %v616
      %v618 = vpop.f32.mrf.mxu0
      %v619 = vadd.f32 %v239, %v618
      %620 = vmatmul.bf16.gmra.mxu0 %v471
      %v621 = vpop.f32.mrf.mxu0
      %v622 = vadd.f32 %v239, %v621
      %v623 = vpop.f32.mrf.mxu0
      %v624 = vadd.f32 %v239, %v623
      %625 = vmatmul.bf16.gmra.mxu0 %v474
      %v626 = vpop.f32.mrf.mxu0
      %v627 = vadd.f32 %v239, %v626
      %v628 = vpop.f32.mrf.mxu0
      %v629 = vadd.f32 %v239, %v628
      %630 = vmatmul.bf16.gmra.mxu0 %v477
      %v631 = vpop.f32.mrf.mxu0
      %v632 = vadd.f32 %v239, %v631
      %v633 = vpop.f32.mrf.mxu0
      %v634 = vadd.f32 %v239, %v633
      %635 = vmatmul.bf16.gmra.mxu0 %v480
      %v636 = vpop.f32.mrf.mxu0
      %v637 = vadd.f32 %v239, %v636
      %v638 = vpop.f32.mrf.mxu0
      %v639 = vadd.f32 %v239, %v638
      %640 = vmatmul.bf16.gmra.mxu0 %v483
      %v641 = vpop.f32.mrf.mxu0
      %v642 = vadd.f32 %v239, %v641
      %v643 = vpop.f32.mrf.mxu0
      %v644 = vadd.f32 %v239, %v643
      %645 = vdwg.mxu0
      %vm646 = vcmp.ge.f32.partialorder %v502, 0.0
      %vm647 = vcmp.ge.f32.partialorder %v504, 0.0
      %vm648 = vcmp.ge.f32.partialorder %v507, 0.0
      %vm649 = vcmp.ge.f32.partialorder %v509, 0.0
      %vm650 = vcmp.ge.f32.partialorder %v512, 0.0
      %vm651 = vcmp.ge.f32.partialorder %v514, 0.0
      %vm652 = vcmp.ge.f32.partialorder %v517, 0.0
      %vm653 = vcmp.ge.f32.partialorder %v519, 0.0
      %vm654 = vcmp.ge.f32.partialorder %v522, 0.0
      %vm655 = vcmp.ge.f32.partialorder %v524, 0.0
      %vm656 = vcmp.ge.f32.partialorder %v527, 0.0
      %vm657 = vcmp.ge.f32.partialorder %v529, 0.0
      %vm658 = vcmp.ge.f32.partialorder %v532, 0.0
      %vm659 = vcmp.ge.f32.partialorder %v534, 0.0
      %vm660 = vcmp.ge.f32.partialorder %v537, 0.0
      %vm661 = vcmp.ge.f32.partialorder %v539, 0.0
      %vm662 = vcmp.ge.f32.partialorder %v542, 0.0
      %vm663 = vcmp.ge.f32.partialorder %v544, 0.0
      %vm664 = vcmp.ge.f32.partialorder %v547, 0.0
      %vm665 = vcmp.ge.f32.partialorder %v549, 0.0
      %vm666 = vcmp.ge.f32.partialorder %v552, 0.0
      %vm667 = vcmp.ge.f32.partialorder %v554, 0.0
      %vm668 = vcmp.ge.f32.partialorder %v557, 0.0
      %vm669 = vcmp.ge.f32.partialorder %v559, 0.0
      %vm670 = vcmp.ge.f32.partialorder %v562, 0.0
      %vm671 = vcmp.ge.f32.partialorder %v564, 0.0
      %vm672 = vcmp.ge.f32.partialorder %v567, 0.0
      %vm673 = vcmp.ge.f32.partialorder %v569, 0.0
      %vm674 = vcmp.ge.f32.partialorder %v572, 0.0
      %vm675 = vcmp.ge.f32.partialorder %v574, 0.0
      %vm676 = vcmp.ge.f32.partialorder %v577, 0.0
      %vm677 = vcmp.ge.f32.partialorder %v579, 0.0
      %vm678 = vcmp.ge.f32.partialorder %v582, 0.0
      %vm679 = vcmp.ge.f32.partialorder %v584, 0.0
      %vm680 = vcmp.ge.f32.partialorder %v587, 0.0
      %vm681 = vcmp.ge.f32.partialorder %v589, 0.0
      %vm682 = vcmp.ge.f32.partialorder %v592, 0.0
      %vm683 = vcmp.ge.f32.partialorder %v594, 0.0
      %vm684 = vcmp.ge.f32.partialorder %v597, 0.0
      %vm685 = vcmp.ge.f32.partialorder %v599, 0.0
      %vm686 = vcmp.ge.f32.partialorder %v602, 0.0
      %vm687 = vcmp.ge.f32.partialorder %v604, 0.0
      %vm688 = vcmp.ge.f32.partialorder %v607, 0.0
      %vm689 = vcmp.ge.f32.partialorder %v609, 0.0
      %vm690 = vcmp.ge.f32.partialorder %v612, 0.0
      %vm691 = vcmp.ge.f32.partialorder %v614, 0.0
      %vm692 = vcmp.ge.f32.partialorder %v617, 0.0
      %vm693 = vcmp.ge.f32.partialorder %v619, 0.0
      %vm694 = vcmp.ge.f32.partialorder %v622, 0.0
      %vm695 = vcmp.ge.f32.partialorder %v624, 0.0
      %vm696 = vcmp.ge.f32.partialorder %v627, 0.0
      %vm697 = vcmp.ge.f32.partialorder %v629, 0.0
      %vm698 = vcmp.ge.f32.partialorder %v632, 0.0
      %vm699 = vcmp.ge.f32.partialorder %v634, 0.0
      %vm700 = vcmp.ge.f32.partialorder %v637, 0.0
      %vm701 = vcmp.ge.f32.partialorder %v639, 0.0
      %vm702 = vcmp.ge.f32.partialorder %v642, 0.0
      %vm703 = vcmp.ge.f32.partialorder %v644, 0.0
      %v704 = vmul.f32 %v502, 0.1
      %v705 = vmul.f32 %v504, 0.1
      %v706 = vmul.f32 %v507, 0.1
      %v707 = vmul.f32 %v509, 0.1
      %v708 = vmul.f32 %v512, 0.1
      %v709 = vmul.f32 %v514, 0.1
      %v710 = vmul.f32 %v517, 0.1
      %v711 = vmul.f32 %v519, 0.1
      %v712 = vmul.f32 %v522, 0.1
      %v713 = vmul.f32 %v524, 0.1
      %v714 = vmul.f32 %v527, 0.1
      %v715 = vmul.f32 %v529, 0.1
      %v716 = vmul.f32 %v532, 0.1
      %v717 = vmul.f32 %v534, 0.1
      %v718 = vmul.f32 %v537, 0.1
      %v719 = vmul.f32 %v539, 0.1
      %v720 = vmul.f32 %v542, 0.1
      %v721 = vmul.f32 %v544, 0.1
      %v722 = vmul.f32 %v547, 0.1
      %v723 = vmul.f32 %v549, 0.1
      %v724 = vmul.f32 %v552, 0.1
      %v725 = vmul.f32 %v554, 0.1
      %v726 = vmul.f32 %v557, 0.1
      %v727 = vmul.f32 %v559, 0.1
      %v728 = vmul.f32 %v562, 0.1
      %v729 = vmul.f32 %v564, 0.1
      %v730 = vmul.f32 %v567, 0.1
      %v731 = vmul.f32 %v569, 0.1
      %v732 = vmul.f32 %v572, 0.1
      %v733 = vmul.f32 %v574, 0.1
      %v734 = vmul.f32 %v577, 0.1
      %v735 = vmul.f32 %v579, 0.1
      %v736 = vmul.f32 %v582, 0.1
      %v737 = vmul.f32 %v584, 0.1
      %v738 = vmul.f32 %v587, 0.1
      %v739 = vmul.f32 %v589, 0.1
      %v740 = vmul.f32 %v592, 0.1
      %v741 = vmul.f32 %v594, 0.1
      %v742 = vmul.f32 %v597, 0.1
      %v743 = vmul.f32 %v599, 0.1
      %v744 = vmul.f32 %v602, 0.1
      %v745 = vmul.f32 %v604, 0.1
      %v746 = vmul.f32 %v607, 0.1
      %v747 = vmul.f32 %v609, 0.1
      %v748 = vmul.f32 %v612, 0.1
      %v749 = vmul.f32 %v614, 0.1
      %v750 = vmul.f32 %v617, 0.1
      %v751 = vmul.f32 %v619, 0.1
      %v752 = vmul.f32 %v622, 0.1
      %v753 = vmul.f32 %v624, 0.1
      %v754 = vmul.f32 %v627, 0.1
      %v755 = vmul.f32 %v629, 0.1
      %v756 = vmul.f32 %v632, 0.1
      %v757 = vmul.f32 %v634, 0.1
      %v758 = vmul.f32 %v637, 0.1
      %v759 = vmul.f32 %v639, 0.1
      %v760 = vmul.f32 %v642, 0.1
      %v761 = vmul.f32 %v644, 0.1
      %v762 = vsel %vm646, %v502, %v704
      %v763 = vsel %vm647, %v504, %v705
      %v764 = vsel %vm648, %v507, %v706
      %v765 = vsel %vm649, %v509, %v707
      %v766 = vsel %vm650, %v512, %v708
      %v767 = vsel %vm651, %v514, %v709
      %v768 = vsel %vm652, %v517, %v710
      %v769 = vsel %vm653, %v519, %v711
      %v770 = vsel %vm654, %v522, %v712
      %v771 = vsel %vm655, %v524, %v713
      %v772 = vsel %vm656, %v527, %v714
      %v773 = vsel %vm657, %v529, %v715
      %v774 = vsel %vm658, %v532, %v716
      %v775 = vsel %vm659, %v534, %v717
      %v776 = vsel %vm660, %v537, %v718
      %v777 = vsel %vm661, %v539, %v719
      %v778 = vsel %vm662, %v542, %v720
      %v779 = vsel %vm663, %v544, %v721
      %v780 = vsel %vm664, %v547, %v722
      %v781 = vsel %vm665, %v549, %v723
      %v782 = vsel %vm666, %v552, %v724
      %v783 = vsel %vm667, %v554, %v725
      %v784 = vsel %vm668, %v557, %v726
      %v785 = vsel %vm669, %v559, %v727
      %v786 = vsel %vm670, %v562, %v728
      %v787 = vsel %vm671, %v564, %v729
      %v788 = vsel %vm672, %v567, %v730
      %v789 = vsel %vm673, %v569, %v731
      %v790 = vsel %vm674, %v572, %v732
      %v791 = vsel %vm675, %v574, %v733
      %v792 = vsel %vm676, %v577, %v734
      %v793 = vsel %vm677, %v579, %v735
      %v794 = vsel %vm678, %v582, %v736
      %v795 = vsel %vm679, %v584, %v737
      %v796 = vsel %vm680, %v587, %v738
      %v797 = vsel %vm681, %v589, %v739
      %v798 = vsel %vm682, %v592, %v740
      %v799 = vsel %vm683, %v594, %v741
      %v800 = vsel %vm684, %v597, %v742
      %v801 = vsel %vm685, %v599, %v743
      %v802 = vsel %vm686, %v602, %v744
      %v803 = vsel %vm687, %v604, %v745
      %v804 = vsel %vm688, %v607, %v746
      %v805 = vsel %vm689, %v609, %v747
      %v806 = vsel %vm690, %v612, %v748
      %v807 = vsel %vm691, %v614, %v749
      %v808 = vsel %vm692, %v617, %v750
      %v809 = vsel %vm693, %v619, %v751
      %v810 = vsel %vm694, %v622, %v752
      %v811 = vsel %vm695, %v624, %v753
      %v812 = vsel %vm696, %v627, %v754
      %v813 = vsel %vm697, %v629, %v755
      %v814 = vsel %vm698, %v632, %v756
      %v815 = vsel %vm699, %v634, %v757
      %v816 = vsel %vm700, %v637, %v758
      %v817 = vsel %vm701, %v639, %v759
      %v818 = vsel %vm702, %v642, %v760
      %v819 = vsel %vm703, %v644, %v761
      %v820 = vpack.c.bf16 %v762, %v762
      %v821 = vpack.c.bf16 %v763, %v763
      %v822 = vpack.c.bf16 %v764, %v764
      %v823 = vpack.c.bf16 %v765, %v765
      %v824 = vpack.c.bf16 %v766, %v766
      %v825 = vpack.c.bf16 %v767, %v767
      %v826 = vpack.c.bf16 %v768, %v768
      %v827 = vpack.c.bf16 %v769, %v769
      %v828 = vpack.c.bf16 %v770, %v770
      %v829 = vpack.c.bf16 %v771, %v771
      %v830 = vpack.c.bf16 %v772, %v772
      %v831 = vpack.c.bf16 %v773, %v773
      %v832 = vpack.c.bf16 %v774, %v774
      %v833 = vpack.c.bf16 %v775, %v775
      %v834 = vpack.c.bf16 %v776, %v776
      %v835 = vpack.c.bf16 %v777, %v777
      %v836 = vpack.c.bf16 %v778, %v778
      %v837 = vpack.c.bf16 %v779, %v779
      %v838 = vpack.c.bf16 %v780, %v780
      %v839 = vpack.c.bf16 %v781, %v781
      %v840 = vpack.c.bf16 %v782, %v782
      %v841 = vpack.c.bf16 %v783, %v783
      %v842 = vpack.c.bf16 %v784, %v784
      %v843 = vpack.c.bf16 %v785, %v785
      %v844 = vpack.c.bf16 %v786, %v786
      %v845 = vpack.c.bf16 %v787, %v787
      %v846 = vpack.c.bf16 %v788, %v788
      %v847 = vpack.c.bf16 %v789, %v789
      %v848 = vpack.c.bf16 %v790, %v790
      %v849 = vpack.c.bf16 %v791, %v791
      %v850 = vpack.c.bf16 %v792, %v792
      %v851 = vpack.c.bf16 %v793, %v793
      %v852 = vpack.c.bf16 %v794, %v794
      %v853 = vpack.c.bf16 %v795, %v795
      %v854 = vpack.c.bf16 %v796, %v796
      %v855 = vpack.c.bf16 %v797, %v797
      %v856 = vpack.c.bf16 %v798, %v798
      %v857 = vpack.c.bf16 %v799, %v799
      %v858 = vpack.c.bf16 %v800, %v800
      %v859 = vpack.c.bf16 %v801, %v801
      %v860 = vpack.c.bf16 %v802, %v802
      %v861 = vpack.c.bf16 %v803, %v803
      %v862 = vpack.c.bf16 %v804, %v804
      %v863 = vpack.c.bf16 %v805, %v805
      %v864 = vpack.c.bf16 %v806, %v806
      %v865 = vpack.c.bf16 %v807, %v807
      %v866 = vpack.c.bf16 %v808, %v808
      %v867 = vpack.c.bf16 %v809, %v809
      %v868 = vpack.c.bf16 %v810, %v810
      %v869 = vpack.c.bf16 %v811, %v811
      %v870 = vpack.c.bf16 %v812, %v812
      %v871 = vpack.c.bf16 %v813, %v813
      %v872 = vpack.c.bf16 %v814, %v814
      %v873 = vpack.c.bf16 %v815, %v815
      %v874 = vpack.c.bf16 %v816, %v816
      %v875 = vpack.c.bf16 %v817, %v817
      %v876 = vpack.c.bf16 %v818, %v818
      %v877 = vpack.c.bf16 %v819, %v819
      %vm878 = vcmask 519168
      %879 = vst.msk [vmem:[%s172] sm:$0xf] %vm878, %v820
      %880 = vst.msk [vmem:[%s172 + $0x4] sm:$0xf] %vm878, %v821
      %881 = vst.msk [vmem:[%s172 + $0x8] sm:$0xf] %vm878, %v822
      %882 = vst.msk [vmem:[%s172 + $0xc] sm:$0xf] %vm878, %v823
      %883 = vst.msk [vmem:[%s172 + $0x10] sm:$0xf] %vm878, %v824
      %884 = vst.msk [vmem:[%s172 + $0x14] sm:$0xf] %vm878, %v825
      %885 = vst.msk [vmem:[%s172 + $0x18] sm:$0xf] %vm878, %v826
      %886 = vst.msk [vmem:[%s172 + $0x1c] sm:$0xf] %vm878, %v827
      %887 = vst.msk [vmem:[%s172 + $0x20] sm:$0xf] %vm878, %v828
      %888 = vst.msk [vmem:[%s172 + $0x24] sm:$0xf] %vm878, %v829
      %889 = vst.msk [vmem:[%s172 + $0x28] sm:$0xf] %vm878, %v830
      %890 = vst.msk [vmem:[%s172 + $0x2c] sm:$0xf] %vm878, %v831
      %891 = vst.msk [vmem:[%s172 + $0x30] sm:$0xf] %vm878, %v832
      %892 = vst.msk [vmem:[%s172 + $0x34] sm:$0xf] %vm878, %v833
      %893 = vst.msk [vmem:[%s172 + $0x38] sm:$0xf] %vm878, %v834
      %894 = vst.msk [vmem:[%s172 + $0x3c] sm:$0xf] %vm878, %v835
      %895 = vst.msk [vmem:[%s172 + $0x40] sm:$0xf] %vm878, %v836
      %896 = vst.msk [vmem:[%s172 + $0x44] sm:$0xf] %vm878, %v837
      %897 = vst.msk [vmem:[%s172 + $0x48] sm:$0xf] %vm878, %v838
      %898 = vst.msk [vmem:[%s172 + $0x4c] sm:$0xf] %vm878, %v839
      %899 = vst.msk [vmem:[%s172 + $0x50] sm:$0xf] %vm878, %v840
      %900 = vst.msk [vmem:[%s172 + $0x54] sm:$0xf] %vm878, %v841
      %901 = vst.msk [vmem:[%s172 + $0x58] sm:$0xf] %vm878, %v842
      %902 = vst.msk [vmem:[%s172 + $0x5c] sm:$0xf] %vm878, %v843
      %903 = vst.msk [vmem:[%s172 + $0x60] sm:$0xf] %vm878, %v844
      %904 = vst.msk [vmem:[%s172 + $0x64] sm:$0xf] %vm878, %v845
      %905 = vst.msk [vmem:[%s172 + $0x68] sm:$0xf] %vm878, %v846
      %906 = vst.msk [vmem:[%s172 + $0x6c] sm:$0xf] %vm878, %v847
      %907 = vst.msk [vmem:[%s172 + $0x70] sm:$0xf] %vm878, %v848
      %908 = vst.msk [vmem:[%s172 + $0x74] sm:$0xf] %vm878, %v849
      %909 = vst.msk [vmem:[%s172 + $0x78] sm:$0xf] %vm878, %v850
      %910 = vst.msk [vmem:[%s172 + $0x7c] sm:$0xf] %vm878, %v851
      %911 = vst.msk [vmem:[%s172 + $0x80] sm:$0xf] %vm878, %v852
      %912 = vst.msk [vmem:[%s172 + $0x84] sm:$0xf] %vm878, %v853
      %913 = vst.msk [vmem:[%s172 + $0x88] sm:$0xf] %vm878, %v854
      %914 = vst.msk [vmem:[%s172 + $0x8c] sm:$0xf] %vm878, %v855
      %915 = vst.msk [vmem:[%s172 + $0x90] sm:$0xf] %vm878, %v856
      %916 = vst.msk [vmem:[%s172 + $0x94] sm:$0xf] %vm878, %v857
      %917 = vst.msk [vmem:[%s172 + $0x98] sm:$0xf] %vm878, %v858
      %918 = vst.msk [vmem:[%s172 + $0x9c] sm:$0xf] %vm878, %v859
      %919 = vst.msk [vmem:[%s172 + $0xa0] sm:$0xf] %vm878, %v860
      %920 = vst.msk [vmem:[%s172 + $0xa4] sm:$0xf] %vm878, %v861
      %921 = vst.msk [vmem:[%s172 + $0xa8] sm:$0xf] %vm878, %v862
      %922 = vst.msk [vmem:[%s172 + $0xac] sm:$0xf] %vm878, %v863
      %923 = vst.msk [vmem:[%s172 + $0xb0] sm:$0xf] %vm878, %v864
      %924 = vst.msk [vmem:[%s172 + $0xb4] sm:$0xf] %vm878, %v865
      %925 = vst.msk [vmem:[%s172 + $0xb8] sm:$0xf] %vm878, %v866
      %926 = vst.msk [vmem:[%s172 + $0xbc] sm:$0xf] %vm878, %v867
      %927 = vst.msk [vmem:[%s172 + $0xc0] sm:$0xf] %vm878, %v868
      %928 = vst.msk [vmem:[%s172 + $0xc4] sm:$0xf] %vm878, %v869
      %929 = vst.msk [vmem:[%s172 + $0xc8] sm:$0xf] %vm878, %v870
      %930 = vst.msk [vmem:[%s172 + $0xcc] sm:$0xf] %vm878, %v871
      %931 = vst.msk [vmem:[%s172 + $0xd0] sm:$0xf] %vm878, %v872
      %932 = vst.msk [vmem:[%s172 + $0xd4] sm:$0xf] %vm878, %v873
      %933 = vst.msk [vmem:[%s172 + $0xd8] sm:$0xf] %vm878, %v874
      %934 = vst.msk [vmem:[%s172 + $0xdc] sm:$0xf] %vm878, %v875
      %935 = vst.msk [vmem:[%s172 + $0xe0] sm:$0xf] %vm878, %v876
      %936 = vst.msk [vmem:[%s172 + $0xe4] sm:$0xf] %vm878, %v877
      %s937 = smul.u32 58, %s14
      %p938 = scmp.lt.s32.totalorder %s937, 289
      %s939 = scalar_select %p938, %s937, 289
      %s940 = smul.addr %s939, 4
      %s941 = scalar_lea.vmem %s3, %s940
      // Predicated region
      $region33: #{lite_face_forward.10} parent=31 // pred_check
        %p942 = pneg %p100
      $region34: #{lite_face_forward.10} parent=31 // pred_check_branch
        %944 = sbr.rel (%p942) target = $region36
      $region35: #{lite_face_forward.10} parent=31 // pred_region
        %s945 = smul.u32 58, %s14
      $region36: #{lite_face_forward.10} parent=31 // pred_fallthru
        _
    $region32: #{lite_face_forward.10} parent=5 // pred_fallthru
      _
    %p946 = scmp.le.s32.totalorder 2, %s9
    // Predicated region
    $region37: #{lite_face_forward.10} parent=5 // pred_check
      %p947 = pneg %p946
    $region38: #{lite_face_forward.10} parent=5 // pred_check_branch
      %949 = sbr.rel (%p947) target = $region40
    $region39: #{lite_face_forward.10} parent=5 // pred_region
      %s950 = ssub.s32 %s9, 2
      // Predicated region
      $region41: #{lite_face_forward.10} parent=39 // pred_check
        %p951 = pneg %p106
      $region42: #{lite_face_forward.10} parent=39 // pred_check_branch
        %953 = sbr.rel (%p951) target = $region44
      $region43: #{lite_face_forward.10} parent=39 // pred_region
        %s954 = smul.u32 58, %s15
        %p955 = scmp.lt.s32.totalorder %s954, 289
        %s956 = scalar_select %p955, %s954, 289
        %s957 = smul.addr %s956, 4
        %s958 = scalar_lea.vmem %s3, %s957
      $region44: #{lite_face_forward.10} parent=39 // pred_fallthru
        _
    $region40: #{lite_face_forward.10} parent=5 // pred_fallthru
      _
  $region6: #{lite_face_forward.10} parent=0 // loop_footer
    %s13 = sadd.s32 1, %s9
  $region7: #{lite_face_forward.10} parent=0 // loop_footer_branch
    %8 = sbr.rel target = $region3
  $region8: #{lite_face_forward.10} parent=0 // loop_exit
    _

// kernel: lite_face_forward.11
$region0: #{lite_face_forward.11}
  #allocation0 [shape = 'u32[]', space=smem, size = 0x4, offset = 0x4, fixed_abs, tag = 'smem constant byte address 0x4 - core index']
  #allocation1 [shape = 'u32[72,128]{1,0:T(1,128)}', space=vmem, size = 0x9000, scoped, tag = 'internal scratch']
  %s0 = inlined_call_operand.vmem [shape: bf16[578,64], index: 0, kind: input, shape index: {}]
  %s1 = inlined_call_operand.vmem [shape: bf16[578,64], index: 1, kind: input, shape index: {}]
  %s2 = inlined_call_operand.vmem [shape: bf16[578,64], index: 2, kind: input, shape index: {}]
  %s3 = inlined_call_operand.vmem [shape: bf16[578,64], index: 3, kind: input, shape index: {}]
  %s4 = inlined_call_operand.vmem [shape: bf16[578,64], index: 4, kind: output, shape index: {}]
  %s5 = sld [smem:[#allocation0]]
  $region26: #{lite_face_forward.11} parent=0
    _
  %s7 = ssub.s32 1, %s5
  %s8 = scalar_select 0, %s7, %s5
  // Predicated region
  $region2: #{lite_face_forward.11} parent=0 // pred_check
    _
  $region3: #{lite_face_forward.11} parent=0 // pred_check_branch
    %10 = sbr.rel (0) target = $region5
  $region4: #{lite_face_forward.11} parent=0 // pred_region
    _
  $region5: #{lite_face_forward.11} parent=0 // pred_fallthru
    _
  // Predicated region
  $region6: #{lite_face_forward.11} parent=0 // pred_check
    _
  $region7: #{lite_face_forward.11} parent=0 // pred_check_branch
    %12 = sbr.rel (0) target = $region9
  $region8: #{lite_face_forward.11} parent=0 // pred_region
    _
  $region9: #{lite_face_forward.11} parent=0 // pred_fallthru
    _
  // Predicated region
  $region10: #{lite_face_forward.11} parent=0 // pred_check
    _
  $region11: #{lite_face_forward.11} parent=0 // pred_check_branch
    %14 = sbr.rel (0) target = $region13
  $region12: #{lite_face_forward.11} parent=0 // pred_region
    _
  $region13: #{lite_face_forward.11} parent=0 // pred_fallthru
    _
  // Predicated region
  $region14: #{lite_face_forward.11} parent=0 // pred_check
    _
  $region15: #{lite_face_forward.11} parent=0 // pred_check_branch
    %16 = sbr.rel (0) target = $region17
  $region16: #{lite_face_forward.11} parent=0 // pred_region
    _
  $region17: #{lite_face_forward.11} parent=0 // pred_fallthru
    _
  %v17 = vld [vmem:[%s0] sm:$0xf]
  %v18 = vld [vmem:[%s0 + $0x4] sm:$0xf]
  %v19 = vld [vmem:[%s0 + $0x8] sm:$0xf]
  %v20 = vld [vmem:[%s0 + $0xc] sm:$0xf]
  %v21 = vld [vmem:[%s0 + $0x10] sm:$0xf]
  %v22 = vld [vmem:[%s0 + $0x14] sm:$0xf]
  %v23 = vld [vmem:[%s0 + $0x18] sm:$0xf]
  %v24 = vld [vmem:[%s0 + $0x1c] sm:$0xf]
  %v25 = vld [vmem:[%s0 + $0x20] sm:$0xf]
  %v26 = vld [vmem:[%s0 + $0x24] sm:$0xf]
  %v27 = vld [vmem:[%s0 + $0x28] sm:$0xf]
  %v28 = vld [vmem:[%s0 + $0x2c] sm:$0xf]
  %v29 = vld [vmem:[%s0 + $0x30] sm:$0xf]
  %v30 = vld [vmem:[%s0 + $0x34] sm:$0xf]
  %v31 = vld [vmem:[%s0 + $0x38] sm:$0xf]
  %v32 = vld [vmem:[%s0 + $0x3c] sm:$0xf]
  %v33 = vld [vmem:[%s0 + $0x40] sm:$0xf]
  %v34 = vld [vmem:[%s0 + $0x44] sm:$0xf]
  %v35 = vld [vmem:[%s0 + $0x48] sm:$0xf]
  %v36 = vld [vmem:[%s0 + $0x4c] sm:$0xf]
  %v37 = vld [vmem:[%s0 + $0x50] sm:$0xf]
  %v38 = vld [vmem:[%s0 + $0x54] sm:$0xf]
  %v39 = vld [vmem:[%s0 + $0x58] sm:$0xf]
  %v40 = vld [vmem:[%s0 + $0x5c] sm:$0xf]
  %v41 = vld [vmem:[%s0 + $0x60] sm:$0xf]
  %v42 = vld [vmem:[%s0 + $0x64] sm:$0xf]
  %v43 = vld [vmem:[%s0 + $0x68] sm:$0xf]
  %v44 = vld [vmem:[%s0 + $0x6c] sm:$0xf]
  %v45 = vld [vmem:[%s0 + $0x70] sm:$0xf]
  %v46 = vld [vmem:[%s0 + $0x74] sm:$0xf]
  %v47 = vld [vmem:[%s0 + $0x78] sm:$0xf]
  %v48 = vld [vmem:[%s0 + $0x7c] sm:$0xf]
  %v49 = vld [vmem:[%s0 + $0x80] sm:$0xf]
  %v50 = vld [vmem:[%s0 + $0x84] sm:$0xf]
  %v51 = vld [vmem:[%s0 + $0x88] sm:$0xf]
  %v52 = vld [vmem:[%s0 + $0x8c] sm:$0xf]
  %v53 = vld [vmem:[%s0 + $0x90] sm:$0xf]
  %v54 = vld [vmem:[%s0 + $0x94] sm:$0xf]
  %v55 = vld [vmem:[%s0 + $0x98] sm:$0xf]
  %v56 = vld [vmem:[%s0 + $0x9c] sm:$0xf]
  %v57 = vld [vmem:[%s0 + $0xa0] sm:$0xf]
  %v58 = vld [vmem:[%s0 + $0xa4] sm:$0xf]
  %v59 = vld [vmem:[%s0 + $0xa8] sm:$0xf]
  %v60 = vld [vmem:[%s0 + $0xac] sm:$0xf]
  %v61 = vld [vmem:[%s0 + $0xb0] sm:$0xf]
  %v62 = vld [vmem:[%s0 + $0xb4] sm:$0xf]
  %v63 = vld [vmem:[%s0 + $0xb8] sm:$0xf]
  %v64 = vld [vmem:[%s0 + $0xbc] sm:$0xf]
  %v65 = vld [vmem:[%s0 + $0xc0] sm:$0xf]
  %v66 = vld [vmem:[%s0 + $0xc4] sm:$0xf]
  %v67 = vld [vmem:[%s0 + $0xc8] sm:$0xf]
  %v68 = vld [vmem:[%s0 + $0xcc] sm:$0xf]
  %v69 = vld [vmem:[%s0 + $0xd0] sm:$0xf]
  %v70 = vld [vmem:[%s0 + $0xd4] sm:$0xf]
  %v71 = vld [vmem:[%s0 + $0xd8] sm:$0xf]
  %v72 = vld [vmem:[%s0 + $0xdc] sm:$0xf]
  %v73 = vld [vmem:[%s0 + $0xe0] sm:$0xf]
  %v74 = vld [vmem:[%s0 + $0xe4] sm:$0xf]
  %v75 = vld [vmem:[%s0 + $0xe8] sm:$0xf]
  %v76 = vld [vmem:[%s0 + $0xec] sm:$0xf]
  %v77 = vld [vmem:[%s0 + $0xf0] sm:$0xf]
  %v78 = vld [vmem:[%s0 + $0xf4] sm:$0xf]
  %v79 = vld [vmem:[%s0 + $0xf8] sm:$0xf]
  %v80 = vld [vmem:[%s0 + $0xfc] sm:$0xf]
  %v81 = vld [vmem:[%s0 + $0x100] sm:$0xf]
  %v82 = vld [vmem:[%s0 + $0x104] sm:$0xf]
  %v83 = vld [vmem:[%s0 + $0x108] sm:$0xf]
  %v84 = vld [vmem:[%s0 + $0x10c] sm:$0xf]
  %v85 = vld [vmem:[%s0 + $0x110] sm:$0xf]
  %v86 = vld [vmem:[%s0 + $0x114] sm:$0xf]
  %v87 = vld [vmem:[%s0 + $0x118] sm:$0xf]
  %v88 = vld [vmem:[%s0 + $0x11c] sm:$0xf]
  %v89 = vld [vmem:[%s0 + $0x120] sm:$0x1]
  %v90 = vld [vmem:[%s1] sm:$0xf]
  %v91 = vld [vmem:[%s1 + $0x4] sm:$0xf]
  %v92 = vld [vmem:[%s1 + $0x8] sm:$0xf]
  %v93 = vld [vmem:[%s1 + $0xc] sm:$0xf]
  %v94 = vld [vmem:[%s1 + $0x10] sm:$0xf]
  %v95 = vld [vmem:[%s1 + $0x14] sm:$0xf]
  %v96 = vld [vmem:[%s1 + $0x18] sm:$0xf]
  %v97 = vld [vmem:[%s1 + $0x1c] sm:$0xf]
  %v98 = vld [vmem:[%s1 + $0x20] sm:$0xf]
  %v99 = vld [vmem:[%s1 + $0x24] sm:$0xf]
  %v100 = vld [vmem:[%s1 + $0x28] sm:$0xf]
  %v101 = vld [vmem:[%s1 + $0x2c] sm:$0xf]
  %v102 = vld [vmem:[%s1 + $0x30] sm:$0xf]
  %v103 = vld [vmem:[%s1 + $0x34] sm:$0xf]
  %v104 = vld [vmem:[%s1 + $0x38] sm:$0xf]
  %v105 = vld [vmem:[%s1 + $0x3c] sm:$0xf]
  %v106 = vld [vmem:[%s1 + $0x40] sm:$0xf]
  %v107 = vld [vmem:[%s1 + $0x44] sm:$0xf]
  %v108 = vld [vmem:[%s1 + $0x48] sm:$0xf]
  %v109 = vld [vmem:[%s1 + $0x4c] sm:$0xf]
  %v110 = vld [vmem:[%s1 + $0x50] sm:$0xf]
  %v111 = vld [vmem:[%s1 + $0x54] sm:$0xf]
  %v112 = vld [vmem:[%s1 + $0x58] sm:$0xf]
  %v113 = vld [vmem:[%s1 + $0x5c] sm:$0xf]
  %v114 = vld [vmem:[%s1 + $0x60] sm:$0xf]
  %v115 = vld [vmem:[%s1 + $0x64] sm:$0xf]
  %v116 = vld [vmem:[%s1 + $0x68] sm:$0xf]
  %v117 = vld [vmem:[%s1 + $0x6c] sm:$0xf]
  %v118 = vld [vmem:[%s1 + $0x70] sm:$0xf]
  %v119 = vld [vmem:[%s1 + $0x74] sm:$0xf]
  %v120 = vld [vmem:[%s1 + $0x78] sm:$0xf]
  %v121 = vld [vmem:[%s1 + $0x7c] sm:$0xf]
  %v122 = vld [vmem:[%s1 + $0x80] sm:$0xf]
  %v123 = vld [vmem:[%s1 + $0x84] sm:$0xf]
  %v124 = vld [vmem:[%s1 + $0x88] sm:$0xf]
  %v125 = vld [vmem:[%s1 + $0x8c] sm:$0xf]
  %v126 = vld [vmem:[%s1 + $0x90] sm:$0xf]
  %v127 = vld [vmem:[%s1 + $0x94] sm:$0xf]
  %v128 = vld [vmem:[%s1 + $0x98] sm:$0xf]
  %v129 = vld [vmem:[%s1 + $0x9c] sm:$0xf]
  %v130 = vld [vmem:[%s1 + $0xa0] sm:$0xf]
  %v131 = vld [vmem:[%s1 + $0xa4] sm:$0xf]
  %v132 = vld [vmem:[%s1 + $0xa8] sm:$0xf]
  %v133 = vld [vmem:[%s1 + $0xac] sm:$0xf]
  %v134 = vld [vmem:[%s1 + $0xb0] sm:$0xf]
  %v135 = vld [vmem:[%s1 + $0xb4] sm:$0xf]
  %v136 = vld [vmem:[%s1 + $0xb8] sm:$0xf]
  %v137 = vld [vmem:[%s1 + $0xbc] sm:$0xf]
  %v138 = vld [vmem:[%s1 + $0xc0] sm:$0xf]
  %v139 = vld [vmem:[%s1 + $0xc4] sm:$0xf]
  %v140 = vld [vmem:[%s1 + $0xc8] sm:$0xf]
  %v141 = vld [vmem:[%s1 + $0xcc] sm:$0xf]
  %v142 = vld [vmem:[%s1 + $0xd0] sm:$0xf]
  %v143 = vld [vmem:[%s1 + $0xd4] sm:$0xf]
  %v144 = vld [vmem:[%s1 + $0xd8] sm:$0xf]
  %v145 = vld [vmem:[%s1 + $0xdc] sm:$0xf]
  %v146 = vld [vmem:[%s1 + $0xe0] sm:$0xf]
  %v147 = vld [vmem:[%s1 + $0xe4] sm:$0xf]
  %v148 = vld [vmem:[%s1 + $0xe8] sm:$0xf]
  %v149 = vld [vmem:[%s1 + $0xec] sm:$0xf]
  %v150 = vld [vmem:[%s1 + $0xf0] sm:$0xf]
  %v151 = vld [vmem:[%s1 + $0xf4] sm:$0xf]
  %v152 = vld [vmem:[%s1 + $0xf8] sm:$0xf]
  %v153 = vld [vmem:[%s1 + $0xfc] sm:$0xf]
  %v154 = vld [vmem:[%s1 + $0x100] sm:$0xf]
  %v155 = vld [vmem:[%s1 + $0x104] sm:$0xf]
  %v156 = vld [vmem:[%s1 + $0x108] sm:$0xf]
  %v157 = vld [vmem:[%s1 + $0x10c] sm:$0xf]
  %v158 = vld [vmem:[%s1 + $0x110] sm:$0xf]
  %v159 = vld [vmem:[%s1 + $0x114] sm:$0xf]
  %v160 = vld [vmem:[%s1 + $0x118] sm:$0xf]
  %v161 = vld [vmem:[%s1 + $0x11c] sm:$0xf]
  %v162 = vld [vmem:[%s1 + $0x120] sm:$0x1]
  %v163 = vunpack.c.l.bf16 %v17
  %v164 = vunpack.c.l.bf16 %v18
  %v165 = vunpack.c.l.bf16 %v19
  %v166 = vunpack.c.l.bf16 %v20
  %v167 = vunpack.c.l.bf16 %v21
  %v168 = vunpack.c.l.bf16 %v22
  %v169 = vunpack.c.l.bf16 %v23
  %v170 = vunpack.c.l.bf16 %v24
  %v171 = vunpack.c.l.bf16 %v25
  %v172 = vunpack.c.l.bf16 %v26
  %v173 = vunpack.c.l.bf16 %v27
  %v174 = vunpack.c.l.bf16 %v28
  %v175 = vunpack.c.l.bf16 %v29
  %v176 = vunpack.c.l.bf16 %v30
  %v177 = vunpack.c.l.bf16 %v31
  %v178 = vunpack.c.l.bf16 %v32
  %v179 = vunpack.c.l.bf16 %v33
  %v180 = vunpack.c.l.bf16 %v34
  %v181 = vunpack.c.l.bf16 %v35
  %v182 = vunpack.c.l.bf16 %v36
  %v183 = vunpack.c.l.bf16 %v37
  %v184 = vunpack.c.l.bf16 %v38
  %v185 = vunpack.c.l.bf16 %v39
  %v186 = vunpack.c.l.bf16 %v40
  %v187 = vunpack.c.l.bf16 %v41
  %v188 = vunpack.c.l.bf16 %v42
  %v189 = vunpack.c.l.bf16 %v43
  %v190 = vunpack.c.l.bf16 %v44
  %v191 = vunpack.c.l.bf16 %v45
  %v192 = vunpack.c.l.bf16 %v46
  %v193 = vunpack.c.l.bf16 %v47
  %v194 = vunpack.c.l.bf16 %v48
  %v195 = vunpack.c.l.bf16 %v49
  %v196 = vunpack.c.l.bf16 %v50
  %v197 = vunpack.c.l.bf16 %v51
  %v198 = vunpack.c.l.bf16 %v52
  %v199 = vunpack.c.l.bf16 %v53
  %v200 = vunpack.c.l.bf16 %v54
  %v201 = vunpack.c.l.bf16 %v55
  %v202 = vunpack.c.l.bf16 %v56
  %v203 = vunpack.c.l.bf16 %v57
  %v204 = vunpack.c.l.bf16 %v58
  %v205 = vunpack.c.l.bf16 %v59
  %v206 = vunpack.c.l.bf16 %v60
  %v207 = vunpack.c.l.bf16 %v61
  %v208 = vunpack.c.l.bf16 %v62
  %v209 = vunpack.c.l.bf16 %v63
  %v210 = vunpack.c.l.bf16 %v64
  %v211 = vunpack.c.l.bf16 %v65
  %v212 = vunpack.c.l.bf16 %v66
  %v213 = vunpack.c.l.bf16 %v67
  %v214 = vunpack.c.l.bf16 %v68
  %v215 = vunpack.c.l.bf16 %v69
  %v216 = vunpack.c.l.bf16 %v70
  %v217 = vunpack.c.l.bf16 %v71
  %v218 = vunpack.c.l.bf16 %v72
  %v219 = vunpack.c.l.bf16 %v73
  %v220 = vunpack.c.l.bf16 %v74
  %v221 = vunpack.c.l.bf16 %v75
  %v222 = vunpack.c.l.bf16 %v76
  %v223 = vunpack.c.l.bf16 %v77
  %v224 = vunpack.c.l.bf16 %v78
  %v225 = vunpack.c.l.bf16 %v79
  %v226 = vunpack.c.l.bf16 %v80
  %v227 = vunpack.c.l.bf16 %v81
  %v228 = vunpack.c.l.bf16 %v82
  %v229 = vunpack.c.l.bf16 %v83
  %v230 = vunpack.c.l.bf16 %v84
  %v231 = vunpack.c.l.bf16 %v85
  %v232 = vunpack.c.l.bf16 %v86
  %v233 = vunpack.c.l.bf16 %v87
  %v234 = vunpack.c.l.bf16 %v88
  %v235 = vunpack.c.l.bf16 %v89
  %v236 = vunpack.c.l.bf16 %v90
  %v237 = vunpack.c.l.bf16 %v91
  %v238 = vunpack.c.l.bf16 %v92
  %v239 = vunpack.c.l.bf16 %v93
  %v240 = vunpack.c.l.bf16 %v94
  %v241 = vunpack.c.l.bf16 %v95
  %v242 = vunpack.c.l.bf16 %v96
  %v243 = vunpack.c.l.bf16 %v97
  %v244 = vunpack.c.l.bf16 %v98
  %v245 = vunpack.c.l.bf16 %v99
  %v246 = vunpack.c.l.bf16 %v100
  %v247 = vunpack.c.l.bf16 %v101
  %v248 = vunpack.c.l.bf16 %v102
  %v249 = vunpack.c.l.bf16 %v103
  %v250 = vunpack.c.l.bf16 %v104
  %v251 = vunpack.c.l.bf16 %v105
  %v252 = vunpack.c.l.bf16 %v106
  %v253 = vunpack.c.l.bf16 %v107
  %v254 = vunpack.c.l.bf16 %v108
  %v255 = vunpack.c.l.bf16 %v109
  %v256 = vunpack.c.l.bf16 %v110
  %v257 = vunpack.c.l.bf16 %v111
  %v258 = vunpack.c.l.bf16 %v112
  %v259 = vunpack.c.l.bf16 %v113
  %v260 = vunpack.c.l.bf16 %v114
  %v261 = vunpack.c.l.bf16 %v115
  %v262 = vunpack.c.l.bf16 %v116
  %v263 = vunpack.c.l.bf16 %v117
  %v264 = vunpack.c.l.bf16 %v118
  %v265 = vunpack.c.l.bf16 %v119
  %v266 = vunpack.c.l.bf16 %v120
  %v267 = vunpack.c.l.bf16 %v121
  %v268 = vunpack.c.l.bf16 %v122
  %v269 = vunpack.c.l.bf16 %v123
  %v270 = vunpack.c.l.bf16 %v124
  %v271 = vunpack.c.l.bf16 %v125
  %v272 = vunpack.c.l.bf16 %v126
  %v273 = vunpack.c.l.bf16 %v127
  %v274 = vunpack.c.l.bf16 %v128
  %v275 = vunpack.c.l.bf16 %v129
  %v276 = vunpack.c.l.bf16 %v130
  %v277 = vunpack.c.l.bf16 %v131
  %v278 = vunpack.c.l.bf16 %v132
  %v279 = vunpack.c.l.bf16 %v133
  %v280 = vunpack.c.l.bf16 %v134
  %v281 = vunpack.c.l.bf16 %v135
  %v282 = vunpack.c.l.bf16 %v136
  %v283 = vunpack.c.l.bf16 %v137
  %v284 = vunpack.c.l.bf16 %v138
  %v285 = vunpack.c.l.bf16 %v139
  %v286 = vunpack.c.l.bf16 %v140
  %v287 = vunpack.c.l.bf16 %v141
  %v288 = vunpack.c.l.bf16 %v142
  %v289 = vunpack.c.l.bf16 %v143
  %v290 = vunpack.c.l.bf16 %v144
  %v291 = vunpack.c.l.bf16 %v145
  %v292 = vunpack.c.l.bf16 %v146
  %v293 = vunpack.c.l.bf16 %v147
  %v294 = vunpack.c.l.bf16 %v148
  %v295 = vunpack.c.l.bf16 %v149
  %v296 = vunpack.c.l.bf16 %v150
  %v297 = vunpack.c.l.bf16 %v151
  %v298 = vunpack.c.l.bf16 %v152
  %v299 = vunpack.c.l.bf16 %v153
  %v300 = vunpack.c.l.bf16 %v154
  %v301 = vunpack.c.l.bf16 %v155
  %v302 = vunpack.c.l.bf16 %v156
  %v303 = vunpack.c.l.bf16 %v157
  %v304 = vunpack.c.l.bf16 %v158
  %v305 = vunpack.c.l.bf16 %v159
  %v306 = vunpack.c.l.bf16 %v160
  %v307 = vunpack.c.l.bf16 %v161
  %v308 = vunpack.c.l.bf16 %v162
  %v309 = vmax.f32 %v163, %v236
  %v310 = vmax.f32 %v164, %v237
  %v311 = vmax.f32 %v165, %v238
  %v312 = vmax.f32 %v166, %v239
  %v313 = vmax.f32 %v167, %v240
  %v314 = vmax.f32 %v168, %v241
  %v315 = vmax.f32 %v169, %v242
  %v316 = vmax.f32 %v170, %v243
  %v317 = vmax.f32 %v171, %v244
  %v318 = vmax.f32 %v172, %v245
  %v319 = vmax.f32 %v173, %v246
  %v320 = vmax.f32 %v174, %v247
  %v321 = vmax.f32 %v175, %v248
  %v322 = vmax.f32 %v176, %v249
  %v323 = vmax.f32 %v177, %v250
  %v324 = vmax.f32 %v178, %v251
  %v325 = vmax.f32 %v179, %v252
  %v326 = vmax.f32 %v180, %v253
  %v327 = vmax.f32 %v181, %v254
  %v328 = vmax.f32 %v182, %v255
  %v329 = vmax.f32 %v183, %v256
  %v330 = vmax.f32 %v184, %v257
  %v331 = vmax.f32 %v185, %v258
  %v332 = vmax.f32 %v186, %v259
  %v333 = vmax.f32 %v187, %v260
  %v334 = vmax.f32 %v188, %v261
  %v335 = vmax.f32 %v189, %v262
  %v336 = vmax.f32 %v190, %v263
  %v337 = vmax.f32 %v191, %v264
  %v338 = vmax.f32 %v192, %v265
  %v339 = vmax.f32 %v193, %v266
  %v340 = vmax.f32 %v194, %v267
  %v341 = vmax.f32 %v195, %v268
  %v342 = vmax.f32 %v196, %v269
  %v343 = vmax.f32 %v197, %v270
  %v344 = vmax.f32 %v198, %v271
  %v345 = vmax.f32 %v199, %v272
  %v346 = vmax.f32 %v200, %v273
  %v347 = vmax.f32 %v201, %v274
  %v348 = vmax.f32 %v202, %v275
  %v349 = vmax.f32 %v203, %v276
  %v350 = vmax.f32 %v204, %v277
  %v351 = vmax.f32 %v205, %v278
  %v352 = vmax.f32 %v206, %v279
  %v353 = vmax.f32 %v207, %v280
  %v354 = vmax.f32 %v208, %v281
  %v355 = vmax.f32 %v209, %v282
  %v356 = vmax.f32 %v210, %v283
  %v357 = vmax.f32 %v211, %v284
  %v358 = vmax.f32 %v212, %v285
  %v359 = vmax.f32 %v213, %v286
  %v360 = vmax.f32 %v214, %v287
  %v361 = vmax.f32 %v215, %v288
  %v362 = vmax.f32 %v216, %v289
  %v363 = vmax.f32 %v217, %v290
  %v364 = vmax.f32 %v218, %v291
  %v365 = vmax.f32 %v219, %v292
  %v366 = vmax.f32 %v220, %v293
  %v367 = vmax.f32 %v221, %v294
  %v368 = vmax.f32 %v222, %v295
  %v369 = vmax.f32 %v223, %v296
  %v370 = vmax.f32 %v224, %v297
  %v371 = vmax.f32 %v225, %v298
  %v372 = vmax.f32 %v226, %v299
  %v373 = vmax.f32 %v227, %v300
  %v374 = vmax.f32 %v228, %v301
  %v375 = vmax.f32 %v229, %v302
  %v376 = vmax.f32 %v230, %v303
  %v377 = vmax.f32 %v231, %v304
  %v378 = vmax.f32 %v232, %v305
  %v379 = vmax.f32 %v233, %v306
  %v380 = vmax.f32 %v234, %v307
  %v381 = vmax.f32 %v235, %v308
  %v382 = vpack.c.bf16 %v309, %v309
  %v383 = vpack.c.bf16 %v310, %v310
  %v384 = vpack.c.bf16 %v311, %v311
  %v385 = vpack.c.bf16 %v312, %v312
  %v386 = vpack.c.bf16 %v313, %v313
  %v387 = vpack.c.bf16 %v314, %v314
  %v388 = vpack.c.bf16 %v315, %v315
  %v389 = vpack.c.bf16 %v316, %v316
  %v390 = vpack.c.bf16 %v317, %v317
  %v391 = vpack.c.bf16 %v318, %v318
  %v392 = vpack.c.bf16 %v319, %v319
  %v393 = vpack.c.bf16 %v320, %v320
  %v394 = vpack.c.bf16 %v321, %v321
  %v395 = vpack.c.bf16 %v322, %v322
  %v396 = vpack.c.bf16 %v323, %v323
  %v397 = vpack.c.bf16 %v324, %v324
  %v398 = vpack.c.bf16 %v325, %v325
  %v399 = vpack.c.bf16 %v326, %v326
  %v400 = vpack.c.bf16 %v327, %v327
  %v401 = vpack.c.bf16 %v328, %v328
  %v402 = vpack.c.bf16 %v329, %v329
  %v403 = vpack.c.bf16 %v330, %v330
  %v404 = vpack.c.bf16 %v331, %v331
  %v405 = vpack.c.bf16 %v332, %v332
  %v406 = vpack.c.bf16 %v333, %v333
  %v407 = vpack.c.bf16 %v334, %v334
  %v408 = vpack.c.bf16 %v335, %v335
  %v409 = vpack.c.bf16 %v336, %v336
  %v410 = vpack.c.bf16 %v337, %v337
  %v411 = vpack.c.bf16 %v338, %v338
  %v412 = vpack.c.bf16 %v339, %v339
  %v413 = vpack.c.bf16 %v340, %v340
  %v414 = vpack.c.bf16 %v341, %v341
  %v415 = vpack.c.bf16 %v342, %v342
  %v416 = vpack.c.bf16 %v343, %v343
  %v417 = vpack.c.bf16 %v344, %v344
  %v418 = vpack.c.bf16 %v345, %v345
  %v419 = vpack.c.bf16 %v346, %v346
  %v420 = vpack.c.bf16 %v347, %v347
  %v421 = vpack.c.bf16 %v348, %v348
  %v422 = vpack.c.bf16 %v349, %v349
  %v423 = vpack.c.bf16 %v350, %v350
  %v424 = vpack.c.bf16 %v351, %v351
  %v425 = vpack.c.bf16 %v352, %v352
  %v426 = vpack.c.bf16 %v353, %v353
  %v427 = vpack.c.bf16 %v354, %v354
  %v428 = vpack.c.bf16 %v355, %v355
  %v429 = vpack.c.bf16 %v356, %v356
  %v430 = vpack.c.bf16 %v357, %v357
  %v431 = vpack.c.bf16 %v358, %v358
  %v432 = vpack.c.bf16 %v359, %v359
  %v433 = vpack.c.bf16 %v360, %v360
  %v434 = vpack.c.bf16 %v361, %v361
  %v435 = vpack.c.bf16 %v362, %v362
  %v436 = vpack.c.bf16 %v363, %v363
  %v437 = vpack.c.bf16 %v364, %v364
  %v438 = vpack.c.bf16 %v365, %v365
  %v439 = vpack.c.bf16 %v366, %v366
  %v440 = vpack.c.bf16 %v367, %v367
  %v441 = vpack.c.bf16 %v368, %v368
  %v442 = vpack.c.bf16 %v369, %v369
  %v443 = vpack.c.bf16 %v370, %v370
  %v444 = vpack.c.bf16 %v371, %v371
  %v445 = vpack.c.bf16 %v372, %v372
  %v446 = vpack.c.bf16 %v373, %v373
  %v447 = vpack.c.bf16 %v374, %v374
  %v448 = vpack.c.bf16 %v375, %v375
  %v449 = vpack.c.bf16 %v376, %v376
  %v450 = vpack.c.bf16 %v377, %v377
  %v451 = vpack.c.bf16 %v378, %v378
  %v452 = vpack.c.bf16 %v379, %v379
  %v453 = vpack.c.bf16 %v380, %v380
  %v454 = vpack.c.bf16 %v381, %v381
  %v455 = vld [vmem:[%s2] sm:$0xf]
  %v456 = vld [vmem:[%s2 + $0x4] sm:$0xf]
  %v457 = vld [vmem:[%s2 + $0x8] sm:$0xf]
  %v458 = vld [vmem:[%s2 + $0xc] sm:$0xf]
  %v459 = vld [vmem:[%s2 + $0x10] sm:$0xf]
  %v460 = vld [vmem:[%s2 + $0x14] sm:$0xf]
  %v461 = vld [vmem:[%s2 + $0x18] sm:$0xf]
  %v462 = vld [vmem:[%s2 + $0x1c] sm:$0xf]
  %v463 = vld [vmem:[%s2 + $0x20] sm:$0xf]
  %v464 = vld [vmem:[%s2 + $0x24] sm:$0xf]
  %v465 = vld [vmem:[%s2 + $0x28] sm:$0xf]
  %v466 = vld [vmem:[%s2 + $0x2c] sm:$0xf]
  %v467 = vld [vmem:[%s2 + $0x30] sm:$0xf]
  %v468 = vld [vmem:[%s2 + $0x34] sm:$0xf]
  %v469 = vld [vmem:[%s2 + $0x38] sm:$0xf]
  %v470 = vld [vmem:[%s2 + $0x3c] sm:$0xf]
  %v471 = vld [vmem:[%s2 + $0x40] sm:$0xf]
  %v472 = vld [vmem:[%s2 + $0x44] sm:$0xf]
  %v473 = vld [vmem:[%s2 + $0x48] sm:$0xf]
  %v474 = vld [vmem:[%s2 + $0x4c] sm:$0xf]
  %v475 = vld [vmem:[%s2 + $0x50] sm:$0xf]
  %v476 = vld [vmem:[%s2 + $0x54] sm:$0xf]
  %v477 = vld [vmem:[%s2 + $0x58] sm:$0xf]
  %v478 = vld [vmem:[%s2 + $0x5c] sm:$0xf]
  %v479 = vld [vmem:[%s2 + $0x60] sm:$0xf]
  %v480 = vld [vmem:[%s2 + $0x64] sm:$0xf]
  %v481 = vld [vmem:[%s2 + $0x68] sm:$0xf]
  %v482 = vld [vmem:[%s2 + $0x6c] sm:$0xf]
  %v483 = vld [vmem:[%s2 + $0x70] sm:$0xf]
  %v484 = vld [vmem:[%s2 + $0x74] sm:$0xf]
  %v485 = vld [vmem:[%s2 + $0x78] sm:$0xf]
  %v486 = vld [vmem:[%s2 + $0x7c] sm:$0xf]
  %v487 = vld [vmem:[%s2 + $0x80] sm:$0xf]
  %v488 = vld [vmem:[%s2 + $0x84] sm:$0xf]
  %v489 = vld [vmem:[%s2 + $0x88] sm:$0xf]
  %v490 = vld [vmem:[%s2 + $0x8c] sm:$0xf]
  %v491 = vld [vmem:[%s2 + $0x90] sm:$0xf]
  %v492 = vld [vmem:[%s2 + $0x94] sm:$0xf]
  %v493 = vld [vmem:[%s2 + $0x98] sm:$0xf]
  %v494 = vld [vmem:[%s2 + $0x9c] sm:$0xf]
  %v495 = vld [vmem:[%s2 + $0xa0] sm:$0xf]
  %v496 = vld [vmem:[%s2 + $0xa4] sm:$0xf]
  %v497 = vld [vmem:[%s2 + $0xa8] sm:$0xf]
  %v498 = vld [vmem:[%s2 + $0xac] sm:$0xf]
  %v499 = vld [vmem:[%s2 + $0xb0] sm:$0xf]
  %v500 = vld [vmem:[%s2 + $0xb4] sm:$0xf]
  %v501 = vld [vmem:[%s2 + $0xb8] sm:$0xf]
  %v502 = vld [vmem:[%s2 + $0xbc] sm:$0xf]
  %v503 = vld [vmem:[%s2 + $0xc0] sm:$0xf]
  %v504 = vld [vmem:[%s2 + $0xc4] sm:$0xf]
  %v505 = vld [vmem:[%s2 + $0xc8] sm:$0xf]
  %v506 = vld [vmem:[%s2 + $0xcc] sm:$0xf]
  %v507 = vld [vmem:[%s2 + $0xd0] sm:$0xf]
  %v508 = vld [vmem:[%s2 + $0xd4] sm:$0xf]
  %v509 = vld [vmem:[%s2 + $0xd8] sm:$0xf]
  %v510 = vld [vmem:[%s2 + $0xdc] sm:$0xf]
  %v511 = vld [vmem:[%s2 + $0xe0] sm:$0xf]
  %v512 = vld [vmem:[%s2 + $0xe4] sm:$0xf]
  %v513 = vld [vmem:[%s2 + $0xe8] sm:$0xf]
  %v514 = vld [vmem:[%s2 + $0xec] sm:$0xf]
  %v515 = vld [vmem:[%s2 + $0xf0] sm:$0xf]
  %v516 = vld [vmem:[%s2 + $0xf4] sm:$0xf]
  %v517 = vld [vmem:[%s2 + $0xf8] sm:$0xf]
  %v518 = vld [vmem:[%s2 + $0xfc] sm:$0xf]
  %v519 = vld [vmem:[%s2 + $0x100] sm:$0xf]
  %v520 = vld [vmem:[%s2 + $0x104] sm:$0xf]
  %v521 = vld [vmem:[%s2 + $0x108] sm:$0xf]
  %v522 = vld [vmem:[%s2 + $0x10c] sm:$0xf]
  %v523 = vld [vmem:[%s2 + $0x110] sm:$0xf]
  %v524 = vld [vmem:[%s2 + $0x114] sm:$0xf]
  %v525 = vld [vmem:[%s2 + $0x118] sm:$0xf]
  %v526 = vld [vmem:[%s2 + $0x11c] sm:$0xf]
  %v527 = vld [vmem:[%s2 + $0x120] sm:$0x1]
  %v528 = vld [vmem:[%s3] sm:$0xf]
  %v529 = vld [vmem:[%s3 + $0x4] sm:$0xf]
  %v530 = vld [vmem:[%s3 + $0x8] sm:$0xf]
  %v531 = vld [vmem:[%s3 + $0xc] sm:$0xf]
  %v532 = vld [vmem:[%s3 + $0x10] sm:$0xf]
  %v533 = vld [vmem:[%s3 + $0x14] sm:$0xf]
  %v534 = vld [vmem:[%s3 + $0x18] sm:$0xf]
  %v535 = vld [vmem:[%s3 + $0x1c] sm:$0xf]
  %v536 = vld [vmem:[%s3 + $0x20] sm:$0xf]
  %v537 = vld [vmem:[%s3 + $0x24] sm:$0xf]
  %v538 = vld [vmem:[%s3 + $0x28] sm:$0xf]
  %v539 = vld [vmem:[%s3 + $0x2c] sm:$0xf]
  %v540 = vld [vmem:[%s3 + $0x30] sm:$0xf]
  %v541 = vld [vmem:[%s3 + $0x34] sm:$0xf]
  %v542 = vld [vmem:[%s3 + $0x38] sm:$0xf]
  %v543 = vld [vmem:[%s3 + $0x3c] sm:$0xf]
  %v544 = vld [vmem:[%s3 + $0x40] sm:$0xf]
  %v545 = vld [vmem:[%s3 + $0x44] sm:$0xf]
  %v546 = vld [vmem:[%s3 + $0x48] sm:$0xf]
  %v547 = vld [vmem:[%s3 + $0x4c] sm:$0xf]
  %v548 = vld [vmem:[%s3 + $0x50] sm:$0xf]
  %v549 = vld [vmem:[%s3 + $0x54] sm:$0xf]
  %v550 = vld [vmem:[%s3 + $0x58] sm:$0xf]
  %v551 = vld [vmem:[%s3 + $0x5c] sm:$0xf]
  %v552 = vld [vmem:[%s3 + $0x60] sm:$0xf]
  %v553 = vld [vmem:[%s3 + $0x64] sm:$0xf]
  %v554 = vld [vmem:[%s3 + $0x68] sm:$0xf]
  %v555 = vld [vmem:[%s3 + $0x6c] sm:$0xf]
  %v556 = vld [vmem:[%s3 + $0x70] sm:$0xf]
  %v557 = vld [vmem:[%s3 + $0x74] sm:$0xf]
  %v558 = vld [vmem:[%s3 + $0x78] sm:$0xf]
  %v559 = vld [vmem:[%s3 + $0x7c] sm:$0xf]
  %v560 = vld [vmem:[%s3 + $0x80] sm:$0xf]
  %v561 = vld [vmem:[%s3 + $0x84] sm:$0xf]
  %v562 = vld [vmem:[%s3 + $0x88] sm:$0xf]
  %v563 = vld [vmem:[%s3 + $0x8c] sm:$0xf]
  %v564 = vld [vmem:[%s3 + $0x90] sm:$0xf]
  %v565 = vld [vmem:[%s3 + $0x94] sm:$0xf]
  %v566 = vld [vmem:[%s3 + $0x98] sm:$0xf]
  %v567 = vld [vmem:[%s3 + $0x9c] sm:$0xf]
  %v568 = vld [vmem:[%s3 + $0xa0] sm:$0xf]
  %v569 = vld [vmem:[%s3 + $0xa4] sm:$0xf]
  %v570 = vld [vmem:[%s3 + $0xa8] sm:$0xf]
  %v571 = vld [vmem:[%s3 + $0xac] sm:$0xf]
  %v572 = vld [vmem:[%s3 + $0xb0] sm:$0xf]
  %v573 = vld [vmem:[%s3 + $0xb4] sm:$0xf]
  %v574 = vld [vmem:[%s3 + $0xb8] sm:$0xf]
  %v575 = vld [vmem:[%s3 + $0xbc] sm:$0xf]
  %v576 = vld [vmem:[%s3 + $0xc0] sm:$0xf]
  %v577 = vld [vmem:[%s3 + $0xc4] sm:$0xf]
  %v578 = vld [vmem:[%s3 + $0xc8] sm:$0xf]
  %v579 = vld [vmem:[%s3 + $0xcc] sm:$0xf]
  %v580 = vld [vmem:[%s3 + $0xd0] sm:$0xf]
  %v581 = vld [vmem:[%s3 + $0xd4] sm:$0xf]
  %v582 = vld [vmem:[%s3 + $0xd8] sm:$0xf]
  %v583 = vld [vmem:[%s3 + $0xdc] sm:$0xf]
  %v584 = vld [vmem:[%s3 + $0xe0] sm:$0xf]
  %v585 = vld [vmem:[%s3 + $0xe4] sm:$0xf]
  %v586 = vld [vmem:[%s3 + $0xe8] sm:$0xf]
  %v587 = vld [vmem:[%s3 + $0xec] sm:$0xf]
  %v588 = vld [vmem:[%s3 + $0xf0] sm:$0xf]
  %v589 = vld [vmem:[%s3 + $0xf4] sm:$0xf]
  %v590 = vld [vmem:[%s3 + $0xf8] sm:$0xf]
  %v591 = vld [vmem:[%s3 + $0xfc] sm:$0xf]
  %v592 = vld [vmem:[%s3 + $0x100] sm:$0xf]
  %v593 = vld [vmem:[%s3 + $0x104] sm:$0xf]
  %v594 = vld [vmem:[%s3 + $0x108] sm:$0xf]
  %v595 = vld [vmem:[%s3 + $0x10c] sm:$0xf]
  %v596 = vld [vmem:[%s3 + $0x110] sm:$0xf]
  %v597 = vld [vmem:[%s3 + $0x114] sm:$0xf]
  %v598 = vld [vmem:[%s3 + $0x118] sm:$0xf]
  %v599 = vld [vmem:[%s3 + $0x11c] sm:$0xf]
  %v600 = vld [vmem:[%s3 + $0x120] sm:$0x1]
  %v601 = vunpack.c.l.bf16 %v455
  %v602 = vunpack.c.l.bf16 %v456
  %v603 = vunpack.c.l.bf16 %v457
  %v604 = vunpack.c.l.bf16 %v458
  %v605 = vunpack.c.l.bf16 %v459
  %v606 = vunpack.c.l.bf16 %v460
  %v607 = vunpack.c.l.bf16 %v461
  %v608 = vunpack.c.l.bf16 %v462
  %v609 = vunpack.c.l.bf16 %v463
  %v610 = vunpack.c.l.bf16 %v464
  %v611 = vunpack.c.l.bf16 %v465
  %v612 = vunpack.c.l.bf16 %v466
  %v613 = vunpack.c.l.bf16 %v467
  %v614 = vunpack.c.l.bf16 %v468
  %v615 = vunpack.c.l.bf16 %v469
  %v616 = vunpack.c.l.bf16 %v470
  %v617 = vunpack.c.l.bf16 %v471
  %v618 = vunpack.c.l.bf16 %v472
  %v619 = vunpack.c.l.bf16 %v473
  %v620 = vunpack.c.l.bf16 %v474
  %v621 = vunpack.c.l.bf16 %v475
  %v622 = vunpack.c.l.bf16 %v476
  %v623 = vunpack.c.l.bf16 %v477
  %v624 = vunpack.c.l.bf16 %v478
  %v625 = vunpack.c.l.bf16 %v479
  %v626 = vunpack.c.l.bf16 %v480
  %v627 = vunpack.c.l.bf16 %v481
  %v628 = vunpack.c.l.bf16 %v482
  %v629 = vunpack.c.l.bf16 %v483
  %v630 = vunpack.c.l.bf16 %v484
  %v631 = vunpack.c.l.bf16 %v485
  %v632 = vunpack.c.l.bf16 %v486
  %v633 = vunpack.c.l.bf16 %v487
  %v634 = vunpack.c.l.bf16 %v488
  %v635 = vunpack.c.l.bf16 %v489
  %v636 = vunpack.c.l.bf16 %v490
  %v637 = vunpack.c.l.bf16 %v491
  %v638 = vunpack.c.l.bf16 %v492
  %v639 = vunpack.c.l.bf16 %v493
  %v640 = vunpack.c.l.bf16 %v494
  %v641 = vunpack.c.l.bf16 %v495
  %v642 = vunpack.c.l.bf16 %v496
  %v643 = vunpack.c.l.bf16 %v497
  %v644 = vunpack.c.l.bf16 %v498
  %v645 = vunpack.c.l.bf16 %v499
  %v646 = vunpack.c.l.bf16 %v500
  %v647 = vunpack.c.l.bf16 %v501
  %v648 = vunpack.c.l.bf16 %v502
  %v649 = vunpack.c.l.bf16 %v503
  %v650 = vunpack.c.l.bf16 %v504
  %v651 = vunpack.c.l.bf16 %v505
  %v652 = vunpack.c.l.bf16 %v506
  %v653 = vunpack.c.l.bf16 %v507
  %v654 = vunpack.c.l.bf16 %v508
  %v655 = vunpack.c.l.bf16 %v509
  %v656 = vunpack.c.l.bf16 %v510
  %v657 = vunpack.c.l.bf16 %v511
  %v658 = vunpack.c.l.bf16 %v512
  %v659 = vunpack.c.l.bf16 %v513
  %v660 = vunpack.c.l.bf16 %v514
  %v661 = vunpack.c.l.bf16 %v515
  %v662 = vunpack.c.l.bf16 %v516
  %v663 = vunpack.c.l.bf16 %v517
  %v664 = vunpack.c.l.bf16 %v518
  %v665 = vunpack.c.l.bf16 %v519
  %v666 = vunpack.c.l.bf16 %v520
  %v667 = vunpack.c.l.bf16 %v521
  %v668 = vunpack.c.l.bf16 %v522
  %v669 = vunpack.c.l.bf16 %v523
  %v670 = vunpack.c.l.bf16 %v524
  %v671 = vunpack.c.l.bf16 %v525
  %v672 = vunpack.c.l.bf16 %v526
  %v673 = vunpack.c.l.bf16 %v527
  %v674 = vunpack.c.l.bf16 %v528
  %v675 = vunpack.c.l.bf16 %v529
  %v676 = vunpack.c.l.bf16 %v530
  %v677 = vunpack.c.l.bf16 %v531
  %v678 = vunpack.c.l.bf16 %v532
  %v679 = vunpack.c.l.bf16 %v533
  %v680 = vunpack.c.l.bf16 %v534
  %v681 = vunpack.c.l.bf16 %v535
  %v682 = vunpack.c.l.bf16 %v536
  %v683 = vunpack.c.l.bf16 %v537
  %v684 = vunpack.c.l.bf16 %v538
  %v685 = vunpack.c.l.bf16 %v539
  %v686 = vunpack.c.l.bf16 %v540
  %v687 = vunpack.c.l.bf16 %v541
  %v688 = vunpack.c.l.bf16 %v542
  %v689 = vunpack.c.l.bf16 %v543
  %v690 = vunpack.c.l.bf16 %v544
  %v691 = vunpack.c.l.bf16 %v545
  %v692 = vunpack.c.l.bf16 %v546
  %v693 = vunpack.c.l.bf16 %v547
  %v694 = vunpack.c.l.bf16 %v548
  %v695 = vunpack.c.l.bf16 %v549
  %v696 = vunpack.c.l.bf16 %v550
  %v697 = vunpack.c.l.bf16 %v551
  %v698 = vunpack.c.l.bf16 %v552
  %v699 = vunpack.c.l.bf16 %v553
  %v700 = vunpack.c.l.bf16 %v554
  %v701 = vunpack.c.l.bf16 %v555
  %v702 = vunpack.c.l.bf16 %v556
  %v703 = vunpack.c.l.bf16 %v557
  %v704 = vunpack.c.l.bf16 %v558
  %v705 = vunpack.c.l.bf16 %v559
  %v706 = vunpack.c.l.bf16 %v560
  %v707 = vunpack.c.l.bf16 %v561
  %v708 = vunpack.c.l.bf16 %v562
  %v709 = vunpack.c.l.bf16 %v563
  %v710 = vunpack.c.l.bf16 %v564
  %v711 = vunpack.c.l.bf16 %v565
  %v712 = vunpack.c.l.bf16 %v566
  %v713 = vunpack.c.l.bf16 %v567
  %v714 = vunpack.c.l.bf16 %v568
  %v715 = vunpack.c.l.bf16 %v569
  %v716 = vunpack.c.l.bf16 %v570
  %v717 = vunpack.c.l.bf16 %v571
  %v718 = vunpack.c.l.bf16 %v572
  %v719 = vunpack.c.l.bf16 %v573
  %v720 = vunpack.c.l.bf16 %v574
  %v721 = vunpack.c.l.bf16 %v575
  %v722 = vunpack.c.l.bf16 %v576
  %v723 = vunpack.c.l.bf16 %v577
  %v724 = vunpack.c.l.bf16 %v578
  %v725 = vunpack.c.l.bf16 %v579
  %v726 = vunpack.c.l.bf16 %v580
  %v727 = vunpack.c.l.bf16 %v581
  %v728 = vunpack.c.l.bf16 %v582
  %v729 = vunpack.c.l.bf16 %v583
  %v730 = vunpack.c.l.bf16 %v584
  %v731 = vunpack.c.l.bf16 %v585
  %v732 = vunpack.c.l.bf16 %v586
  %v733 = vunpack.c.l.bf16 %v587
  %v734 = vunpack.c.l.bf16 %v588
  %v735 = vunpack.c.l.bf16 %v589
  %v736 = vunpack.c.l.bf16 %v590
  %v737 = vunpack.c.l.bf16 %v591
  %v738 = vunpack.c.l.bf16 %v592
  %v739 = vunpack.c.l.bf16 %v593
  %v740 = vunpack.c.l.bf16 %v594
  %v741 = vunpack.c.l.bf16 %v595
  %v742 = vunpack.c.l.bf16 %v596
  %v743 = vunpack.c.l.bf16 %v597
  %v744 = vunpack.c.l.bf16 %v598
  %v745 = vunpack.c.l.bf16 %v599
  %v746 = vunpack.c.l.bf16 %v600
  %v747 = vmax.f32 %v601, %v674
  %v748 = vmax.f32 %v602, %v675
  %v749 = vmax.f32 %v603, %v676
  %v750 = vmax.f32 %v604, %v677
  %v751 = vmax.f32 %v605, %v678
  %v752 = vmax.f32 %v606, %v679
  %v753 = vmax.f32 %v607, %v680
  %v754 = vmax.f32 %v608, %v681
  %v755 = vmax.f32 %v609, %v682
  %v756 = vmax.f32 %v610, %v683
  %v757 = vmax.f32 %v611, %v684
  %v758 = vmax.f32 %v612, %v685
  %v759 = vmax.f32 %v613, %v686
  %v760 = vmax.f32 %v614, %v687
  %v761 = vmax.f32 %v615, %v688
  %v762 = vmax.f32 %v616, %v689
  %v763 = vmax.f32 %v617, %v690
  %v764 = vmax.f32 %v618, %v691
  %v765 = vmax.f32 %v619, %v692
  %v766 = vmax.f32 %v620, %v693
  %v767 = vmax.f32 %v621, %v694
  %v768 = vmax.f32 %v622, %v695
  %v769 = vmax.f32 %v623, %v696
  %v770 = vmax.f32 %v624, %v697
  %v771 = vmax.f32 %v625, %v698
  %v772 = vmax.f32 %v626, %v699
  %v773 = vmax.f32 %v627, %v700
  %v774 = vmax.f32 %v628, %v701
  %v775 = vmax.f32 %v629, %v702
  %v776 = vmax.f32 %v630, %v703
  %v777 = vmax.f32 %v631, %v704
  %v778 = vmax.f32 %v632, %v705
  %v779 = vmax.f32 %v633, %v706
  %v780 = vmax.f32 %v634, %v707
  %v781 = vmax.f32 %v635, %v708
  %v782 = vmax.f32 %v636, %v709
  %v783 = vmax.f32 %v637, %v710
  %v784 = vmax.f32 %v638, %v711
  %v785 = vmax.f32 %v639, %v712
  %v786 = vmax.f32 %v640, %v713
  %v787 = vmax.f32 %v641, %v714
  %v788 = vmax.f32 %v642, %v715
  %v789 = vmax.f32 %v643, %v716
  %v790 = vmax.f32 %v644, %v717
  %v791 = vmax.f32 %v645, %v718
  %v792 = vmax.f32 %v646, %v719
  %v793 = vmax.f32 %v647, %v720
  %v794 = vmax.f32 %v648, %v721
  %v795 = vmax.f32 %v649, %v722
  %v796 = vmax.f32 %v650, %v723
  %v797 = vmax.f32 %v651, %v724
  %v798 = vmax.f32 %v652, %v725
  %v799 = vmax.f32 %v653, %v726
  %v800 = vmax.f32 %v654, %v727
  %v801 = vmax.f32 %v655, %v728
  %v802 = vmax.f32 %v656, %v729
  %v803 = vmax.f32 %v657, %v730
  %v804 = vmax.f32 %v658, %v731
  %v805 = vmax.f32 %v659, %v732
  %v806 = vmax.f32 %v660, %v733
  %v807 = vmax.f32 %v661, %v734
  %v808 = vmax.f32 %v662, %v735
  %v809 = vmax.f32 %v663, %v736
  %v810 = vmax.f32 %v664, %v737
  %v811 = vmax.f32 %v665, %v738
  %v812 = vmax.f32 %v666, %v739
  %v813 = vmax.f32 %v667, %v740
  %v814 = vmax.f32 %v668, %v741
  %v815 = vmax.f32 %v669, %v742
  %v816 = vmax.f32 %v670, %v743
  %v817 = vmax.f32 %v671, %v744
  %v818 = vmax.f32 %v672, %v745
  %v819 = vmax.f32 %v673, %v746
  %v820 = vpack.c.bf16 %v747, %v747
  %v821 = vpack.c.bf16 %v748, %v748
  %v822 = vpack.c.bf16 %v749, %v749
  %v823 = vpack.c.bf16 %v750, %v750
  %v824 = vpack.c.bf16 %v751, %v751
  %v825 = vpack.c.bf16 %v752, %v752
  %v826 = vpack.c.bf16 %v753, %v753
  %v827 = vpack.c.bf16 %v754, %v754
  %v828 = vpack.c.bf16 %v755, %v755
  %v829 = vpack.c.bf16 %v756, %v756
  %v830 = vpack.c.bf16 %v757, %v757
  %v831 = vpack.c.bf16 %v758, %v758
  %v832 = vpack.c.bf16 %v759, %v759
  %v833 = vpack.c.bf16 %v760, %v760
  %v834 = vpack.c.bf16 %v761, %v761
  %v835 = vpack.c.bf16 %v762, %v762
  %v836 = vpack.c.bf16 %v763, %v763
  %v837 = vpack.c.bf16 %v764, %v764
  %v838 = vpack.c.bf16 %v765, %v765
  %v839 = vpack.c.bf16 %v766, %v766
  %v840 = vpack.c.bf16 %v767, %v767
  %v841 = vpack.c.bf16 %v768, %v768
  %v842 = vpack.c.bf16 %v769, %v769
  %v843 = vpack.c.bf16 %v770, %v770
  %v844 = vpack.c.bf16 %v771, %v771
  %v845 = vpack.c.bf16 %v772, %v772
  %v846 = vpack.c.bf16 %v773, %v773
  %v847 = vpack.c.bf16 %v774, %v774
  %v848 = vpack.c.bf16 %v775, %v775
  %v849 = vpack.c.bf16 %v776, %v776
  %v850 = vpack.c.bf16 %v777, %v777
  %v851 = vpack.c.bf16 %v778, %v778
  %v852 = vpack.c.bf16 %v779, %v779
  %v853 = vpack.c.bf16 %v780, %v780
  %v854 = vpack.c.bf16 %v781, %v781
  %v855 = vpack.c.bf16 %v782, %v782
  %v856 = vpack.c.bf16 %v783, %v783
  %v857 = vpack.c.bf16 %v784, %v784
  %v858 = vpack.c.bf16 %v785, %v785
  %v859 = vpack.c.bf16 %v786, %v786
  %v860 = vpack.c.bf16 %v787, %v787
  %v861 = vpack.c.bf16 %v788, %v788
  %v862 = vpack.c.bf16 %v789, %v789
  %v863 = vpack.c.bf16 %v790, %v790
  %v864 = vpack.c.bf16 %v791, %v791
  %v865 = vpack.c.bf16 %v792, %v792
  %v866 = vpack.c.bf16 %v793, %v793
  %v867 = vpack.c.bf16 %v794, %v794
  %v868 = vpack.c.bf16 %v795, %v795
  %v869 = vpack.c.bf16 %v796, %v796
  %v870 = vpack.c.bf16 %v797, %v797
  %v871 = vpack.c.bf16 %v798, %v798
  %v872 = vpack.c.bf16 %v799, %v799
  %v873 = vpack.c.bf16 %v800, %v800
  %v874 = vpack.c.bf16 %v801, %v801
  %v875 = vpack.c.bf16 %v802, %v802
  %v876 = vpack.c.bf16 %v803, %v803
  %v877 = vpack.c.bf16 %v804, %v804
  %v878 = vpack.c.bf16 %v805, %v805
  %v879 = vpack.c.bf16 %v806, %v806
  %v880 = vpack.c.bf16 %v807, %v807
  %v881 = vpack.c.bf16 %v808, %v808
  %v882 = vpack.c.bf16 %v809, %v809
  %v883 = vpack.c.bf16 %v810, %v810
  %v884 = vpack.c.bf16 %v811, %v811
  %v885 = vpack.c.bf16 %v812, %v812
  %v886 = vpack.c.bf16 %v813, %v813
  %v887 = vpack.c.bf16 %v814, %v814
  %v888 = vpack.c.bf16 %v815, %v815
  %v889 = vpack.c.bf16 %v816, %v816
  %v890 = vpack.c.bf16 %v817, %v817
  %v891 = vpack.c.bf16 %v818, %v818
  %v892 = vpack.c.bf16 %v819, %v819
  %v893 = vunpack.c.l.bf16 %v382
  %v894 = vunpack.c.l.bf16 %v383
  %v895 = vunpack.c.l.bf16 %v384
  %v896 = vunpack.c.l.bf16 %v385
  %v897 = vunpack.c.l.bf16 %v386
  %v898 = vunpack.c.l.bf16 %v387
  %v899 = vunpack.c.l.bf16 %v388
  %v900 = vunpack.c.l.bf16 %v389
  %v901 = vunpack.c.l.bf16 %v390
  %v902 = vunpack.c.l.bf16 %v391
  %v903 = vunpack.c.l.bf16 %v392
  %v904 = vunpack.c.l.bf16 %v393
  %v905 = vunpack.c.l.bf16 %v394
  %v906 = vunpack.c.l.bf16 %v395
  %v907 = vunpack.c.l.bf16 %v396
  %v908 = vunpack.c.l.bf16 %v397
  %v909 = vunpack.c.l.bf16 %v398
  %v910 = vunpack.c.l.bf16 %v399
  %v911 = vunpack.c.l.bf16 %v400
  %v912 = vunpack.c.l.bf16 %v401
  %v913 = vunpack.c.l.bf16 %v402
  %v914 = vunpack.c.l.bf16 %v403
  %v915 = vunpack.c.l.bf16 %v404
  %v916 = vunpack.c.l.bf16 %v405
  %v917 = vunpack.c.l.bf16 %v406
  %v918 = vunpack.c.l.bf16 %v407
  %v919 = vunpack.c.l.bf16 %v408
  %v920 = vunpack.c.l.bf16 %v409
  %v921 = vunpack.c.l.bf16 %v410
  %v922 = vunpack.c.l.bf16 %v411
  %v923 = vunpack.c.l.bf16 %v412
  %v924 = vunpack.c.l.bf16 %v413
  %v925 = vunpack.c.l.bf16 %v414
  %v926 = vunpack.c.l.bf16 %v415
  %v927 = vunpack.c.l.bf16 %v416
  %v928 = vunpack.c.l.bf16 %v417
  %v929 = vunpack.c.l.bf16 %v418
  %v930 = vunpack.c.l.bf16 %v419
  %v931 = vunpack.c.l.bf16 %v420
  %v932 = vunpack.c.l.bf16 %v421
  %v933 = vunpack.c.l.bf16 %v422
  %v934 = vunpack.c.l.bf16 %v423
  %v935 = vunpack.c.l.bf16 %v424
  %v936 = vunpack.c.l.bf16 %v425
  %v937 = vunpack.c.l.bf16 %v426
  %v938 = vunpack.c.l.bf16 %v427
  %v939 = vunpack.c.l.bf16 %v428
  %v940 = vunpack.c.l.bf16 %v429
  %v941 = vunpack.c.l.bf16 %v430
  %v942 = vunpack.c.l.bf16 %v431
  %v943 = vunpack.c.l.bf16 %v432
  %v944 = vunpack.c.l.bf16 %v433
  %v945 = vunpack.c.l.bf16 %v434
  %v946 = vunpack.c.l.bf16 %v435
  %v947 = vunpack.c.l.bf16 %v436
  %v948 = vunpack.c.l.bf16 %v437
  %v949 = vunpack.c.l.bf16 %v438
  %v950 = vunpack.c.l.bf16 %v439
  %v951 = vunpack.c.l.bf16 %v440
  %v952 = vunpack.c.l.bf16 %v441
  %v953 = vunpack.c.l.bf16 %v442
  %v954 = vunpack.c.l.bf16 %v443
  %v955 = vunpack.c.l.bf16 %v444
  %v956 = vunpack.c.l.bf16 %v445
  %v957 = vunpack.c.l.bf16 %v446
  %v958 = vunpack.c.l.bf16 %v447
  %v959 = vunpack.c.l.bf16 %v448
  %v960 = vunpack.c.l.bf16 %v449
  %v961 = vunpack.c.l.bf16 %v450
  %v962 = vunpack.c.l.bf16 %v451
  %v963 = vunpack.c.l.bf16 %v452
  %v964 = vunpack.c.l.bf16 %v453
  %v965 = vunpack.c.l.bf16 %v454
  %v966 = vunpack.c.l.bf16 %v820
  %v967 = vunpack.c.l.bf16 %v821
  %v968 = vunpack.c.l.bf16 %v822
  %v969 = vunpack.c.l.bf16 %v823
  %v970 = vunpack.c.l.bf16 %v824
  %v971 = vunpack.c.l.bf16 %v825
  %v972 = vunpack.c.l.bf16 %v826
  %v973 = vunpack.c.l.bf16 %v827
  %v974 = vunpack.c.l.bf16 %v828
  %v975 = vunpack.c.l.bf16 %v829
  %v976 = vunpack.c.l.bf16 %v830
  %v977 = vunpack.c.l.bf16 %v831
  %v978 = vunpack.c.l.bf16 %v832
  %v979 = vunpack.c.l.bf16 %v833
  %v980 = vunpack.c.l.bf16 %v834
  %v981 = vunpack.c.l.bf16 %v835
  %v982 = vunpack.c.l.bf16 %v836
  %v983 = vunpack.c.l.bf16 %v837
  %v984 = vunpack.c.l.bf16 %v838
  %v985 = vunpack.c.l.bf16 %v839
  %v986 = vunpack.c.l.bf16 %v840
  %v987 = vunpack.c.l.bf16 %v841
  %v988 = vunpack.c.l.bf16 %v842
  %v989 = vunpack.c.l.bf16 %v843
  %v990 = vunpack.c.l.bf16 %v844
  %v991 = vunpack.c.l.bf16 %v845
  %v992 = vunpack.c.l.bf16 %v846
  %v993 = vunpack.c.l.bf16 %v847
  %v994 = vunpack.c.l.bf16 %v848
  %v995 = vunpack.c.l.bf16 %v849
  %v996 = vunpack.c.l.bf16 %v850
  %v997 = vunpack.c.l.bf16 %v851
  %v998 = vunpack.c.l.bf16 %v852
  %v999 = vunpack.c.l.bf16 %v853
  %v1000 = vunpack.c.l.bf16 %v854
  %v1001 = vunpack.c.l.bf16 %v855
  %v1002 = vunpack.c.l.bf16 %v856
  %v1003 = vunpack.c.l.bf16 %v857
  %v1004 = vunpack.c.l.bf16 %v858
  %v1005 = vunpack.c.l.bf16 %v859
  %v1006 = vunpack.c.l.bf16 %v860
  %v1007 = vunpack.c.l.bf16 %v861
  %v1008 = vunpack.c.l.bf16 %v862
  %v1009 = vunpack.c.l.bf16 %v863
  %v1010 = vunpack.c.l.bf16 %v864
  %v1011 = vunpack.c.l.bf16 %v865
  %v1012 = vunpack.c.l.bf16 %v866
  %v1013 = vunpack.c.l.bf16 %v867
  %v1014 = vunpack.c.l.bf16 %v868
  %v1015 = vunpack.c.l.bf16 %v869
  %v1016 = vunpack.c.l.bf16 %v870
  %v1017 = vunpack.c.l.bf16 %v871
  %v1018 = vunpack.c.l.bf16 %v872
  %v1019 = vunpack.c.l.bf16 %v873
  %v1020 = vunpack.c.l.bf16 %v874
  %v1021 = vunpack.c.l.bf16 %v875
  %v1022 = vunpack.c.l.bf16 %v876
  %v1023 = vunpack.c.l.bf16 %v877
  %v1024 = vunpack.c.l.bf16 %v878
  %v1025 = vunpack.c.l.bf16 %v879
  %v1026 = vunpack.c.l.bf16 %v880
  %v1027 = vunpack.c.l.bf16 %v881
  %v1028 = vunpack.c.l.bf16 %v882
  %v1029 = vunpack.c.l.bf16 %v883
  %v1030 = vunpack.c.l.bf16 %v884
  %v1031 = vunpack.c.l.bf16 %v885
  %v1032 = vunpack.c.l.bf16 %v886
  %v1033 = vunpack.c.l.bf16 %v887
  %v1034 = vunpack.c.l.bf16 %v888
  %v1035 = vunpack.c.l.bf16 %v889
  %v1036 = vunpack.c.l.bf16 %v890
  %v1037 = vunpack.c.l.bf16 %v891
  %v1038 = vunpack.c.l.bf16 %v892
  %v1039 = vmax.f32 %v893, %v966
  %v1040 = vmax.f32 %v894, %v967
  %v1041 = vmax.f32 %v895, %v968
  %v1042 = vmax.f32 %v896, %v969
  %v1043 = vmax.f32 %v897, %v970
  %v1044 = vmax.f32 %v898, %v971
  %v1045 = vmax.f32 %v899, %v972
  %v1046 = vmax.f32 %v900, %v973
  %v1047 = vmax.f32 %v901, %v974
  %v1048 = vmax.f32 %v902, %v975
  %v1049 = vmax.f32 %v903, %v976
  %v1050 = vmax.f32 %v904, %v977
  %v1051 = vmax.f32 %v905, %v978
  %v1052 = vmax.f32 %v906, %v979
  %v1053 = vmax.f32 %v907, %v980
  %v1054 = vmax.f32 %v908, %v981
  %v1055 = vmax.f32 %v909, %v982
  %v1056 = vmax.f32 %v910, %v983
  %v1057 = vmax.f32 %v911, %v984
  %v1058 = vmax.f32 %v912, %v985
  %v1059 = vmax.f32 %v913, %v986
  %v1060 = vmax.f32 %v914, %v987
  %v1061 = vmax.f32 %v915, %v988
  %v1062 = vmax.f32 %v916, %v989
  %v1063 = vmax.f32 %v917, %v990
  %v1064 = vmax.f32 %v918, %v991
  %v1065 = vmax.f32 %v919, %v992
  %v1066 = vmax.f32 %v920, %v993
  %v1067 = vmax.f32 %v921, %v994
  %v1068 = vmax.f32 %v922, %v995
  %v1069 = vmax.f32 %v923, %v996
  %v1070 = vmax.f32 %v924, %v997
  %v1071 = vmax.f32 %v925, %v998
  %v1072 = vmax.f32 %v926, %v999
  %v1073 = vmax.f32 %v927, %v1000
  %v1074 = vmax.f32 %v928, %v1001
  %v1075 = vmax.f32 %v929, %v1002
  %v1076 = vmax.f32 %v930, %v1003
  %v1077 = vmax.f32 %v931, %v1004
  %v1078 = vmax.f32 %v932, %v1005
  %v1079 = vmax.f32 %v933, %v1006
  %v1080 = vmax.f32 %v934, %v1007
  %v1081 = vmax.f32 %v935, %v1008
  %v1082 = vmax.f32 %v936, %v1009
  %v1083 = vmax.f32 %v937, %v1010
  %v1084 = vmax.f32 %v938, %v1011
  %v1085 = vmax.f32 %v939, %v1012
  %v1086 = vmax.f32 %v940, %v1013
  %v1087 = vmax.f32 %v941, %v1014
  %v1088 = vmax.f32 %v942, %v1015
  %v1089 = vmax.f32 %v943, %v1016
  %v1090 = vmax.f32 %v944, %v1017
  %v1091 = vmax.f32 %v945, %v1018
  %v1092 = vmax.f32 %v946, %v1019
  %v1093 = vmax.f32 %v947, %v1020
  %v1094 = vmax.f32 %v948, %v1021
  %v1095 = vmax.f32 %v949, %v1022
  %v1096 = vmax.f32 %v950, %v1023
  %v1097 = vmax.f32 %v951, %v1024
  %v1098 = vmax.f32 %v952, %v1025
  %v1099 = vmax.f32 %v953, %v1026
  %v1100 = vmax.f32 %v954, %v1027
  %v1101 = vmax.f32 %v955, %v1028
  %v1102 = vmax.f32 %v956, %v1029
  %v1103 = vmax.f32 %v957, %v1030
  %v1104 = vmax.f32 %v958, %v1031
  %v1105 = vmax.f32 %v959, %v1032
  %v1106 = vmax.f32 %v960, %v1033
  %v1107 = vmax.f32 %v961, %v1034
  %v1108 = vmax.f32 %v962, %v1035
  %v1109 = vmax.f32 %v963, %v1036
  %v1110 = vmax.f32 %v964, %v1037
  %v1111 = vmax.f32 %v965, %v1038
  %v1112 = vpack.c.bf16 %v1039, %v1039
  %v1113 = vpack.c.bf16 %v1040, %v1040
  %v1114 = vpack.c.bf16 %v1041, %v1041
  %v1115 = vpack.c.bf16 %v1042, %v1042
  %v1116 = vpack.c.bf16 %v1043, %v1043
  %v1117 = vpack.c.bf16 %v1044, %v1044
  %v1118 = vpack.c.bf16 %v1045, %v1045
  %v1119 = vpack.c.bf16 %v1046, %v1046
  %v1120 = vpack.c.bf16 %v1047, %v1047
  %v1121 = vpack.c.bf16 %v1048, %v1048
  %v1122 = vpack.c.bf16 %v1049, %v1049
  %v1123 = vpack.c.bf16 %v1050, %v1050
  %v1124 = vpack.c.bf16 %v1051, %v1051
  %v1125 = vpack.c.bf16 %v1052, %v1052
  %v1126 = vpack.c.bf16 %v1053, %v1053
  %v1127 = vpack.c.bf16 %v1054, %v1054
  %v1128 = vpack.c.bf16 %v1055, %v1055
  %v1129 = vpack.c.bf16 %v1056, %v1056
  %v1130 = vpack.c.bf16 %v1057, %v1057
  %v1131 = vpack.c.bf16 %v1058, %v1058
  %v1132 = vpack.c.bf16 %v1059, %v1059
  %v1133 = vpack.c.bf16 %v1060, %v1060
  %v1134 = vpack.c.bf16 %v1061, %v1061
  %v1135 = vpack.c.bf16 %v1062, %v1062
  %v1136 = vpack.c.bf16 %v1063, %v1063
  %v1137 = vpack.c.bf16 %v1064, %v1064
  %v1138 = vpack.c.bf16 %v1065, %v1065
  %v1139 = vpack.c.bf16 %v1066, %v1066
  %v1140 = vpack.c.bf16 %v1067, %v1067
  %v1141 = vpack.c.bf16 %v1068, %v1068
  %v1142 = vpack.c.bf16 %v1069, %v1069
  %v1143 = vpack.c.bf16 %v1070, %v1070
  %v1144 = vpack.c.bf16 %v1071, %v1071
  %v1145 = vpack.c.bf16 %v1072, %v1072
  %v1146 = vpack.c.bf16 %v1073, %v1073
  %v1147 = vpack.c.bf16 %v1074, %v1074
  %v1148 = vpack.c.bf16 %v1075, %v1075
  %v1149 = vpack.c.bf16 %v1076, %v1076
  %v1150 = vpack.c.bf16 %v1077, %v1077
  %v1151 = vpack.c.bf16 %v1078, %v1078
  %v1152 = vpack.c.bf16 %v1079, %v1079
  %v1153 = vpack.c.bf16 %v1080, %v1080
  %v1154 = vpack.c.bf16 %v1081, %v1081
  %v1155 = vpack.c.bf16 %v1082, %v1082
  %v1156 = vpack.c.bf16 %v1083, %v1083
  %v1157 = vpack.c.bf16 %v1084, %v1084
  %v1158 = vpack.c.bf16 %v1085, %v1085
  %v1159 = vpack.c.bf16 %v1086, %v1086
  %v1160 = vpack.c.bf16 %v1087, %v1087
  %v1161 = vpack.c.bf16 %v1088, %v1088
  %v1162 = vpack.c.bf16 %v1089, %v1089
  %v1163 = vpack.c.bf16 %v1090, %v1090
  %v1164 = vpack.c.bf16 %v1091, %v1091
  %v1165 = vpack.c.bf16 %v1092, %v1092
  %v1166 = vpack.c.bf16 %v1093, %v1093
  %v1167 = vpack.c.bf16 %v1094, %v1094
  %v1168 = vpack.c.bf16 %v1095, %v1095
  %v1169 = vpack.c.bf16 %v1096, %v1096
  %v1170 = vpack.c.bf16 %v1097, %v1097
  %v1171 = vpack.c.bf16 %v1098, %v1098
  %v1172 = vpack.c.bf16 %v1099, %v1099
  %v1173 = vpack.c.bf16 %v1100, %v1100
  %v1174 = vpack.c.bf16 %v1101, %v1101
  %v1175 = vpack.c.bf16 %v1102, %v1102
  %v1176 = vpack.c.bf16 %v1103, %v1103
  %v1177 = vpack.c.bf16 %v1104, %v1104
  %v1178 = vpack.c.bf16 %v1105, %v1105
  %v1179 = vpack.c.bf16 %v1106, %v1106
  %v1180 = vpack.c.bf16 %v1107, %v1107
  %v1181 = vpack.c.bf16 %v1108, %v1108
  %v1182 = vpack.c.bf16 %v1109, %v1109
  %v1183 = vpack.c.bf16 %v1110, %v1110
  %v1184 = vpack.c.bf16 %v1111, %v1111
  %vm1185 = vcmask 519168
  %1186 = vst.msk [vmem:[%s4] sm:$0xf] %vm1185, %v1112
  %1187 = vst.msk [vmem:[%s4 + $0x4] sm:$0xf] %vm1185, %v1113
  %1188 = vst.msk [vmem:[%s4 + $0x8] sm:$0xf] %vm1185, %v1114
  %1189 = vst.msk [vmem:[%s4 + $0xc] sm:$0xf] %vm1185, %v1115
  %1190 = vst.msk [vmem:[%s4 + $0x10] sm:$0xf] %vm1185, %v1116
  %1191 = vst.msk [vmem:[%s4 + $0x14] sm:$0xf] %vm1185, %v1117
  %1192 = vst.msk [vmem:[%s4 + $0x18] sm:$0xf] %vm1185, %v1118
  %1193 = vst.msk [vmem:[%s4 + $0x1c] sm:$0xf] %vm1185, %v1119
  %1194 = vst.msk [vmem:[%s4 + $0x20] sm:$0xf] %vm1185, %v1120
  %1195 = vst.msk [vmem:[%s4 + $0x24] sm:$0xf] %vm1185, %v1121
  %1196 = vst.msk [vmem:[%s4 + $0x28] sm:$0xf] %vm1185, %v1122
  %1197 = vst.msk [vmem:[%s4 + $0x2c] sm:$0xf] %vm1185, %v1123
  %1198 = vst.msk [vmem:[%s4 + $0x30] sm:$0xf] %vm1185, %v1124
  %1199 = vst.msk [vmem:[%s4 + $0x34] sm:$0xf] %vm1185, %v1125
  %1200 = vst.msk [vmem:[%s4 + $0x38] sm:$0xf] %vm1185, %v1126
  %1201 = vst.msk [vmem:[%s4 + $0x3c] sm:$0xf] %vm1185, %v1127
  %1202 = vst.msk [vmem:[%s4 + $0x40] sm:$0xf] %vm1185, %v1128
  %1203 = vst.msk [vmem:[%s4 + $0x44] sm:$0xf] %vm1185, %v1129
  %1204 = vst.msk [vmem:[%s4 + $0x48] sm:$0xf] %vm1185, %v1130
  %1205 = vst.msk [vmem:[%s4 + $0x4c] sm:$0xf] %vm1185, %v1131
  %1206 = vst.msk [vmem:[%s4 + $0x50] sm:$0xf] %vm1185, %v1132
  %1207 = vst.msk [vmem:[%s4 + $0x54] sm:$0xf] %vm1185, %v1133
  %1208 = vst.msk [vmem:[%s4 + $0x58] sm:$0xf] %vm1185, %v1134
  %1209 = vst.msk [vmem:[%s4 + $0x5c] sm:$0xf] %vm1185, %v1135
  %1210 = vst.msk [vmem:[%s4 + $0x60] sm:$0xf] %vm1185, %v1136
  %1211 = vst.msk [vmem:[%s4 + $0x64] sm:$0xf] %vm1185, %v1137
  %1212 = vst.msk [vmem:[%s4 + $0x68] sm:$0xf] %vm1185, %v1138
  %1213 = vst.msk [vmem:[%s4 + $0x6c] sm:$0xf] %vm1185, %v1139
  %1214 = vst.msk [vmem:[%s4 + $0x70] sm:$0xf] %vm1185, %v1140
  %1215 = vst.msk [vmem:[%s4 + $0x74] sm:$0xf] %vm1185, %v1141
  %1216 = vst.msk [vmem:[%s4 + $0x78] sm:$0xf] %vm1185, %v1142
  %1217 = vst.msk [vmem:[%s4 + $0x7c] sm:$0xf] %vm1185, %v1143
  %1218 = vst.msk [vmem:[%s4 + $0x80] sm:$0xf] %vm1185, %v1144
  %1219 = vst.msk [vmem:[%s4 + $0x84] sm:$0xf] %vm1185, %v1145
  %1220 = vst.msk [vmem:[%s4 + $0x88] sm:$0xf] %vm1185, %v1146
  %1221 = vst.msk [vmem:[%s4 + $0x8c] sm:$0xf] %vm1185, %v1147
  %1222 = vst.msk [vmem:[%s4 + $0x90] sm:$0xf] %vm1185, %v1148
  %1223 = vst.msk [vmem:[%s4 + $0x94] sm:$0xf] %vm1185, %v1149
  %1224 = vst.msk [vmem:[%s4 + $0x98] sm:$0xf] %vm1185, %v1150
  %1225 = vst.msk [vmem:[%s4 + $0x9c] sm:$0xf] %vm1185, %v1151
  %1226 = vst.msk [vmem:[%s4 + $0xa0] sm:$0xf] %vm1185, %v1152
  %1227 = vst.msk [vmem:[%s4 + $0xa4] sm:$0xf] %vm1185, %v1153
  %1228 = vst.msk [vmem:[%s4 + $0xa8] sm:$0xf] %vm1185, %v1154
  %1229 = vst.msk [vmem:[%s4 + $0xac] sm:$0xf] %vm1185, %v1155
  %1230 = vst.msk [vmem:[%s4 + $0xb0] sm:$0xf] %vm1185, %v1156
  %1231 = vst.msk [vmem:[%s4 + $0xb4] sm:$0xf] %vm1185, %v1157
  %1232 = vst.msk [vmem:[%s4 + $0xb8] sm:$0xf] %vm1185, %v1158
  %1233 = vst.msk [vmem:[%s4 + $0xbc] sm:$0xf] %vm1185, %v1159
  %1234 = vst.msk [vmem:[%s4 + $0xc0] sm:$0xf] %vm1185, %v1160
  %1235 = vst.msk [vmem:[%s4 + $0xc4] sm:$0xf] %vm1185, %v1161
  %1236 = vst.msk [vmem:[%s4 + $0xc8] sm:$0xf] %vm1185, %v1162
  %1237 = vst.msk [vmem:[%s4 + $0xcc] sm:$0xf] %vm1185, %v1163
  %1238 = vst.msk [vmem:[%s4 + $0xd0] sm:$0xf] %vm1185, %v1164
  %1239 = vst.msk [vmem:[%s4 + $0xd4] sm:$0xf] %vm1185, %v1165
  %1240 = vst.msk [vmem:[%s4 + $0xd8] sm:$0xf] %vm1185, %v1166
  %1241 = vst.msk [vmem:[%s4 + $0xdc] sm:$0xf] %vm1185, %v1167
  %1242 = vst.msk [vmem:[%s4 + $0xe0] sm:$0xf] %vm1185, %v1168
  %1243 = vst.msk [vmem:[%s4 + $0xe4] sm:$0xf] %vm1185, %v1169
  %1244 = vst.msk [vmem:[%s4 + $0xe8] sm:$0xf] %vm1185, %v1170
  %1245 = vst.msk [vmem:[%s4 + $0xec] sm:$0xf] %vm1185, %v1171
  %1246 = vst.msk [vmem:[%s4 + $0xf0] sm:$0xf] %vm1185, %v1172
  %1247 = vst.msk [vmem:[%s4 + $0xf4] sm:$0xf] %vm1185, %v1173
  %1248 = vst.msk [vmem:[%s4 + $0xf8] sm:$0xf] %vm1185, %v1174
  %1249 = vst.msk [vmem:[%s4 + $0xfc] sm:$0xf] %vm1185, %v1175
  %1250 = vst.msk [vmem:[%s4 + $0x100] sm:$0xf] %vm1185, %v1176
  %1251 = vst.msk [vmem:[%s4 + $0x104] sm:$0xf] %vm1185, %v1177
  %1252 = vst.msk [vmem:[%s4 + $0x108] sm:$0xf] %vm1185, %v1178
  %1253 = vst.msk [vmem:[%s4 + $0x10c] sm:$0xf] %vm1185, %v1179
  %1254 = vst.msk [vmem:[%s4 + $0x110] sm:$0xf] %vm1185, %v1180
  %1255 = vst.msk [vmem:[%s4 + $0x114] sm:$0xf] %vm1185, %v1181
  %1256 = vst.msk [vmem:[%s4 + $0x118] sm:$0xf] %vm1185, %v1182
  %1257 = vst.msk [vmem:[%s4 + $0x11c] sm:$0xf] %vm1185, %v1183
  %vm1258 = vcmask 516096
  %1259 = vst.msk [vmem:[%s4 + $0x120] sm:$0x1] %vm1258, %v1184
  // Predicated region
  $region18: #{lite_face_forward.11} parent=0 // pred_check
    _
  $region19: #{lite_face_forward.11} parent=0 // pred_check_branch
    %1261 = sbr.rel (0) target = $region21
  $region20: #{lite_face_forward.11} parent=0 // pred_region
    _
  $region21: #{lite_face_forward.11} parent=0 // pred_fallthru
    _
  // Predicated region
  $region22: #{lite_face_forward.11} parent=0 // pred_check
    _
  $region23: #{lite_face_forward.11} parent=0 // pred_check_branch
    %1263 = sbr.rel (0) target = $region25
  $region24: #{lite_face_forward.11} parent=0 // pred_region
    _
  $region25: #{lite_face_forward.11} parent=0 // pred_fallthru
    _

// kernel: lite_face_forward.12
$region0: #{lite_face_forward.12}
  #allocation0 [shape = 'u32[]', space=smem, size = 0x4, offset = 0x4, fixed_abs, tag = 'smem constant byte address 0x4 - core index']
  #allocation1 [shape = 'u32[72,128]{1,0:T(1,128)}', space=vmem, size = 0x9000, scoped, tag = 'internal scratch']
  %s0 = inlined_call_operand.vmem [shape: bf16[608,576], index: 0, kind: input, shape index: {}]
  %s1 = inlined_call_operand.vmem [shape: bf16[576,64], index: 1, kind: input, shape index: {}]
  %s2 = inlined_call_operand.vmem [shape: f32[1,64], index: 2, kind: input, shape index: {}]
  %s3 = inlined_call_operand.vmem [shape: bf16[64,16], index: 3, kind: input, shape index: {}]
  %s4 = inlined_call_operand.vmem [shape: f32[1,16], index: 4, kind: input, shape index: {}]
  %s5 = inlined_call_operand.vmem [shape: bf16[608,16], index: 5, kind: output, shape index: {}]
  %s6 = sld [smem:[#allocation0]]
  $region53: #{lite_face_forward.12} parent=0
    _
  %s8 = ssub.s32 1, %s6
  %s9 = scalar_select 0, %s8, %s6
  loop: start=0, step=1, limit=4
  $region2: #{lite_face_forward.12} parent=0 // loop_pre_header
    _
  $region3: #{lite_face_forward.12} parent=0 // loop_header
    %s11 = sphi 0, %s15
    %p12 = scmp.ge.s32.totalorder %s11, 4
    %s21 = sphi 0, %s23
    %s24 = sphi 0, %s21
    %s25 = sphi 0, %s24
    %s41 = sphi 0, %s25
    %s45 = sphi 0, %s45
    %s47 = sphi 0, %s45
    %s48 = sphi 0, %s47
    %s62 = sphi 0, %s48
    %s66 = sphi 0, %s66
    %s68 = sphi 0, %s66
    %s69 = sphi 0, %s68
    %s83 = sphi 0, %s69
    %s87 = sphi 0, %s87
    %s89 = sphi 0, %s87
    %s90 = sphi 0, %s89
    %s104 = sphi 0, %s90
    %s108 = sphi 0, %s108
    %s110 = sphi 0, %s108
    %s111 = sphi 0, %s110
    %s125 = sphi 0, %s111
    %s131 = sphi 0, %s133
    %s134 = sphi 0, %s131
    %s135 = sphi 0, %s134
    %s151 = sphi 0, %s135
  $region4: #{lite_face_forward.12} parent=0 // loop_header_branch
    %14 = sbr.rel (%p12) target = $region8
  $region5: #{lite_face_forward.12} parent=0 // loop_body
    %s16 = ssub.s32 %s11, 1
    %s17 = ssub.s32 %s11, 2
    %s18 = sadd.s32 %s11, 1
    %s19 = ssub.s32 %s11, %s18
    %p20 = scmp.eq.s32.totalorder %s19, 0
    %s22 = sadd.s32 %s21, 1
    %s23 = scalar_select %p20, %s21, %s22
    %p26 = pneg %p20
    %p27 = scmp.eq.s32.totalorder %s11, 1
    %p28 = por %p26, %p27
    %p29 = scmp.ne.s32.totalorder %s21, %s24
    %p30 = scmp.eq.s32.totalorder %s11, 0
    %p31 = por %p29, %p30
    %p32 = scmp.ne.s32.totalorder %s21, %s24
    %p33 = scmp.eq.s32.totalorder %s16, 1
    %p34 = por %p32, %p33
    %p35 = scmp.ne.s32.totalorder %s24, %s25
    %p36 = scmp.eq.s32.totalorder %s16, 0
    %p37 = por %p35, %p36
    %p38 = scmp.ne.s32.totalorder %s24, %s25
    %p39 = scmp.eq.s32.totalorder %s17, 1
    %p40 = por %p38, %p39
    %p42 = scmp.ne.s32.totalorder %s25, %s41
    %p43 = scmp.eq.s32.totalorder %s17, 0
    %p44 = por %p42, %p43
    %s46 = sadd.s32 %s45, 1
    %p49 = scmp.eq.s32.totalorder %s11, 1
    %p50 = scmp.ne.s32.totalorder %s45, %s47
    %p51 = scmp.eq.s32.totalorder %s11, 0
    %p52 = por %p50, %p51
    %p53 = scmp.ne.s32.totalorder %s45, %s47
    %p54 = scmp.eq.s32.totalorder %s16, 1
    %p55 = por %p53, %p54
    %p56 = scmp.ne.s32.totalorder %s47, %s48
    %p57 = scmp.eq.s32.totalorder %s16, 0
    %p58 = por %p56, %p57
    %p59 = scmp.ne.s32.totalorder %s47, %s48
    %p60 = scmp.eq.s32.totalorder %s17, 1
    %p61 = por %p59, %p60
    %p63 = scmp.ne.s32.totalorder %s48, %s62
    %p64 = scmp.eq.s32.totalorder %s17, 0
    %p65 = por %p63, %p64
    %s67 = sadd.s32 %s66, 1
    %p70 = scmp.eq.s32.totalorder %s11, 1
    %p71 = scmp.ne.s32.totalorder %s66, %s68
    %p72 = scmp.eq.s32.totalorder %s11, 0
    %p73 = por %p71, %p72
    %p74 = scmp.ne.s32.totalorder %s66, %s68
    %p75 = scmp.eq.s32.totalorder %s16, 1
    %p76 = por %p74, %p75
    %p77 = scmp.ne.s32.totalorder %s68, %s69
    %p78 = scmp.eq.s32.totalorder %s16, 0
    %p79 = por %p77, %p78
    %p80 = scmp.ne.s32.totalorder %s68, %s69
    %p81 = scmp.eq.s32.totalorder %s17, 1
    %p82 = por %p80, %p81
    %p84 = scmp.ne.s32.totalorder %s69, %s83
    %p85 = scmp.eq.s32.totalorder %s17, 0
    %p86 = por %p84, %p85
    %s88 = sadd.s32 %s87, 1
    %p91 = scmp.eq.s32.totalorder %s11, 1
    %p92 = scmp.ne.s32.totalorder %s87, %s89
    %p93 = scmp.eq.s32.totalorder %s11, 0
    %p94 = por %p92, %p93
    %p95 = scmp.ne.s32.totalorder %s87, %s89
    %p96 = scmp.eq.s32.totalorder %s16, 1
    %p97 = por %p95, %p96
    %p98 = scmp.ne.s32.totalorder %s89, %s90
    %p99 = scmp.eq.s32.totalorder %s16, 0
    %p100 = por %p98, %p99
    %p101 = scmp.ne.s32.totalorder %s89, %s90
    %p102 = scmp.eq.s32.totalorder %s17, 1
    %p103 = por %p101, %p102
    %p105 = scmp.ne.s32.totalorder %s90, %s104
    %p106 = scmp.eq.s32.totalorder %s17, 0
    %p107 = por %p105, %p106
    %s109 = sadd.s32 %s108, 1
    %p112 = scmp.eq.s32.totalorder %s11, 1
    %p113 = scmp.ne.s32.totalorder %s108, %s110
    %p114 = scmp.eq.s32.totalorder %s11, 0
    %p115 = por %p113, %p114
    %p116 = scmp.ne.s32.totalorder %s108, %s110
    %p117 = scmp.eq.s32.totalorder %s16, 1
    %p118 = por %p116, %p117
    %p119 = scmp.ne.s32.totalorder %s110, %s111
    %p120 = scmp.eq.s32.totalorder %s16, 0
    %p121 = por %p119, %p120
    %p122 = scmp.ne.s32.totalorder %s110, %s111
    %p123 = scmp.eq.s32.totalorder %s17, 1
    %p124 = por %p122, %p123
    %p126 = scmp.ne.s32.totalorder %s111, %s125
    %p127 = scmp.eq.s32.totalorder %s17, 0
    %p128 = por %p126, %p127
    %s129 = ssub.s32 %s11, %s18
    %p130 = scmp.eq.s32.totalorder %s129, 0
    %s132 = sadd.s32 %s131, 1
    %s133 = scalar_select %p130, %s131, %s132
    %p136 = pneg %p130
    %p137 = scmp.eq.s32.totalorder %s11, 1
    %p138 = por %p136, %p137
    %p139 = scmp.ne.s32.totalorder %s131, %s134
    %p140 = scmp.eq.s32.totalorder %s11, 0
    %p141 = por %p139, %p140
    %p142 = scmp.ne.s32.totalorder %s131, %s134
    %p143 = scmp.eq.s32.totalorder %s16, 1
    %p144 = por %p142, %p143
    %p145 = scmp.ne.s32.totalorder %s134, %s135
    %p146 = scmp.eq.s32.totalorder %s16, 0
    %p147 = por %p145, %p146
    %p148 = scmp.ne.s32.totalorder %s134, %s135
    %p149 = scmp.eq.s32.totalorder %s17, 1
    %p150 = por %p148, %p149
    %p152 = scmp.ne.s32.totalorder %s135, %s151
    %p153 = scmp.eq.s32.totalorder %s17, 0
    %p154 = por %p152, %p153
    %p155 = scmp.le.s32.totalorder 1, %s11
    %p156 = scmp.lt.s32.totalorder %s11, 3
    %p157 = pnand %p155, %p156
    %p158 = pneg %p157
    // Predicated region
    $region9: #{lite_face_forward.12} parent=5 // pred_check
      _
    $region10: #{lite_face_forward.12} parent=5 // pred_check_branch
      %160 = sbr.rel (%p157) target = $region12
    $region11: #{lite_face_forward.12} parent=5 // pred_region
      %s161 = ssub.s32 %s11, 1
      // Predicated region
      $region13: #{lite_face_forward.12} parent=11 // pred_check
        %p162 = pneg %p58
      $region14: #{lite_face_forward.12} parent=11 // pred_check_branch
        %164 = sbr.rel (%p162) target = $region16
      $region15: #{lite_face_forward.12} parent=11 // pred_region
        _
      $region16: #{lite_face_forward.12} parent=11 // pred_fallthru
        _
      // Predicated region
      $region17: #{lite_face_forward.12} parent=11 // pred_check
        %p165 = pneg %p79
      $region18: #{lite_face_forward.12} parent=11 // pred_check_branch
        %167 = sbr.rel (%p165) target = $region20
      $region19: #{lite_face_forward.12} parent=11 // pred_region
        _
      $region20: #{lite_face_forward.12} parent=11 // pred_fallthru
        _
      // Predicated region
      $region21: #{lite_face_forward.12} parent=11 // pred_check
        %p168 = pneg %p100
      $region22: #{lite_face_forward.12} parent=11 // pred_check_branch
        %170 = sbr.rel (%p168) target = $region24
      $region23: #{lite_face_forward.12} parent=11 // pred_region
        _
      $region24: #{lite_face_forward.12} parent=11 // pred_fallthru
        _
      // Predicated region
      $region25: #{lite_face_forward.12} parent=11 // pred_check
        %p171 = pneg %p121
      $region26: #{lite_face_forward.12} parent=11 // pred_check_branch
        %173 = sbr.rel (%p171) target = $region28
      $region27: #{lite_face_forward.12} parent=11 // pred_region
        _
      $region28: #{lite_face_forward.12} parent=11 // pred_fallthru
        _
    $region12: #{lite_face_forward.12} parent=5 // pred_fallthru
      _
    %p174 = scmp.lt.s32.totalorder %s11, 2
    // Predicated region
    $region29: #{lite_face_forward.12} parent=5 // pred_check
      %p175 = pneg %p174
    $region30: #{lite_face_forward.12} parent=5 // pred_check_branch
      %177 = sbr.rel (%p175) target = $region32
    $region31: #{lite_face_forward.12} parent=5 // pred_region
      // Predicated region
      $region33: #{lite_face_forward.12} parent=31 // pred_check
        %p178 = pneg %p31
      $region34: #{lite_face_forward.12} parent=31 // pred_check_branch
        %180 = sbr.rel (%p178) target = $region36
      $region35: #{lite_face_forward.12} parent=31 // pred_region
        %s181 = smul.u32 38, %s11
        %p182 = scmp.lt.s32.totalorder %s181, 75
        %s183 = scalar_select %p182, %s181, 75
        %s184 = smul.addr %s183, 5
        %s185 = smul.addr %s184, 4
        %s186 = scalar_lea.vmem %s0, %s185
        %s187 = smul.u32 38, %s11
      $region36: #{lite_face_forward.12} parent=31 // pred_fallthru
        _
    $region32: #{lite_face_forward.12} parent=5 // pred_fallthru
      _
    %p188 = scmp.le.s32.totalorder 1, %s11
    %p189 = scmp.lt.s32.totalorder %s11, 3
    %p190 = pnand %p188, %p189
    %p191 = pneg %p190
    // Predicated region
    $region37: #{lite_face_forward.12} parent=5 // pred_check
      _
    $region38: #{lite_face_forward.12} parent=5 // pred_check_branch
      %193 = sbr.rel (%p190) target = $region40
    $region39: #{lite_face_forward.12} parent=5 // pred_region
      %s194 = ssub.s32 %s11, 1
      %s195 = smul.u32 38, %s16
      %p196 = scmp.lt.s32.totalorder %s195, 75
      %s197 = scalar_select %p196, %s195, 75
      %s198 = smul.addr %s197, 5
      %s199 = smul.addr %s198, 4
      %s200 = scalar_lea.vmem %s0, %s199
      %p201 = pneg %p37
      %p202 = pneg %p34
      %p203 = pneg %p58
      %p204 = pneg %p55
      %p205 = pneg %p79
      %p206 = pneg %p76
      %p207 = pneg %p100
      %p208 = pneg %p97
      %p209 = pneg %p121
      %p210 = pneg %p118
      %p211 = pneg %p147
      %p212 = pneg %p144
      %s213 = smul.u32 38, %s16
      %p214 = scmp.lt.s32.totalorder %s213, 75
      %s215 = scalar_select %p214, %s213, 75
      %s216 = smul.addr %s215, 4
      %s217 = scalar_lea.vmem %s5, %s216
      %s218 = smul.u32 38, %s16
      %p219 = scmp.lt.s32.totalorder %s218, 75
      %s220 = scalar_select %p219, %s218, 75
      %s221 = smul.addr %s220, 5
      %s222 = smul.addr %s221, 4
      %s223 = scalar_lea.vmem %s0, %s222
      %s224 = smul.u32 38, %s16
      %s225 = smul.u32 38, %s16
      %p226 = scmp.lt.s32.totalorder %s225, 75
      %s227 = scalar_select %p226, %s225, 75
      %s228 = smul.addr %s227, 4
      %s229 = scalar_lea.vmem %s5, %s228
      %s230 = smul.u32 38, %s16
      %v232 = vld [vmem:[%s223] sm:$0xff]
      %v233 = vld [vmem:[%s223 + $0x8] sm:$0xff]
      %v234 = vld [vmem:[%s223 + $0x10] sm:$0xf]
      %v235 = vld [vmem:[%s223 + $0x14] sm:$0xff]
      %v236 = vld [vmem:[%s223 + $0x1c] sm:$0xff]
      %v237 = vld [vmem:[%s223 + $0x24] sm:$0xf]
      %v238 = vld [vmem:[%s223 + $0x28] sm:$0xff]
      %v239 = vld [vmem:[%s223 + $0x30] sm:$0xff]
      %v240 = vld [vmem:[%s223 + $0x38] sm:$0xf]
      %v241 = vld [vmem:[%s223 + $0x3c] sm:$0xff]
      %v242 = vld [vmem:[%s223 + $0x44] sm:$0xff]
      %v243 = vld [vmem:[%s223 + $0x4c] sm:$0xf]
      %v244 = vld [vmem:[%s223 + $0x50] sm:$0xff]
      %v245 = vld [vmem:[%s223 + $0x58] sm:$0xff]
      %v246 = vld [vmem:[%s223 + $0x60] sm:$0xf]
      %v247 = vld [vmem:[%s223 + $0x64] sm:$0xff]
      %v248 = vld [vmem:[%s223 + $0x6c] sm:$0xff]
      %v249 = vld [vmem:[%s223 + $0x74] sm:$0xf]
      %v250 = vld [vmem:[%s223 + $0x78] sm:$0xff]
      %v251 = vld [vmem:[%s223 + $0x80] sm:$0xff]
      %v252 = vld [vmem:[%s223 + $0x88] sm:$0xf]
      %v253 = vld [vmem:[%s223 + $0x8c] sm:$0xff]
      %v254 = vld [vmem:[%s223 + $0x94] sm:$0xff]
      %v255 = vld [vmem:[%s223 + $0x9c] sm:$0xf]
      %v256 = vld [vmem:[%s223 + $0xa0] sm:$0xff]
      %v257 = vld [vmem:[%s223 + $0xa8] sm:$0xff]
      %v258 = vld [vmem:[%s223 + $0xb0] sm:$0xf]
      %v259 = vld [vmem:[%s223 + $0xb4] sm:$0xff]
      %v260 = vld [vmem:[%s223 + $0xbc] sm:$0xff]
      %v261 = vld [vmem:[%s223 + $0xc4] sm:$0xf]
      %v262 = vld [vmem:[%s223 + $0xc8] sm:$0xff]
      %v263 = vld [vmem:[%s223 + $0xd0] sm:$0xff]
      %v264 = vld [vmem:[%s223 + $0xd8] sm:$0xf]
      %v265 = vld [vmem:[%s223 + $0xdc] sm:$0xff]
      %v266 = vld [vmem:[%s223 + $0xe4] sm:$0xff]
      %v267 = vld [vmem:[%s223 + $0xec] sm:$0xf]
      %v268 = vld [vmem:[%s223 + $0xf0] sm:$0xff]
      %v269 = vld [vmem:[%s223 + $0xf8] sm:$0xff]
      %v270 = vld [vmem:[%s223 + $0x100] sm:$0xf]
      %v271 = vld [vmem:[%s223 + $0x104] sm:$0xff]
      %v272 = vld [vmem:[%s223 + $0x10c] sm:$0xff]
      %v273 = vld [vmem:[%s223 + $0x114] sm:$0xf]
      %v274 = vld [vmem:[%s223 + $0x118] sm:$0xff]
      %v275 = vld [vmem:[%s223 + $0x120] sm:$0xff]
      %v276 = vld [vmem:[%s223 + $0x128] sm:$0xf]
      %v277 = vld [vmem:[%s223 + $0x12c] sm:$0xff]
      %v278 = vld [vmem:[%s223 + $0x134] sm:$0xff]
      %v279 = vld [vmem:[%s223 + $0x13c] sm:$0xf]
      %v280 = vld [vmem:[%s223 + $0x140] sm:$0xff]
      %v281 = vld [vmem:[%s223 + $0x148] sm:$0xff]
      %v282 = vld [vmem:[%s223 + $0x150] sm:$0xf]
      %v283 = vld [vmem:[%s223 + $0x154] sm:$0xff]
      %v284 = vld [vmem:[%s223 + $0x15c] sm:$0xff]
      %v285 = vld [vmem:[%s223 + $0x164] sm:$0xf]
      %v286 = vld [vmem:[%s223 + $0x168] sm:$0xff]
      %v287 = vld [vmem:[%s223 + $0x170] sm:$0xff]
      %v288 = vld [vmem:[%s223 + $0x178] sm:$0xf]
      %v289 = vld [vmem:[%s223 + $0x17c] sm:$0xff]
      %v290 = vld [vmem:[%s223 + $0x184] sm:$0xff]
      %v291 = vld [vmem:[%s223 + $0x18c] sm:$0xf]
      %v292 = vld [vmem:[%s223 + $0x190] sm:$0xff]
      %v293 = vld [vmem:[%s223 + $0x198] sm:$0xff]
      %v294 = vld [vmem:[%s223 + $0x1a0] sm:$0xf]
      %v295 = vld [vmem:[%s223 + $0x1a4] sm:$0xff]
      %v296 = vld [vmem:[%s223 + $0x1ac] sm:$0xff]
      %v297 = vld [vmem:[%s223 + $0x1b4] sm:$0xf]
      %v298 = vld [vmem:[%s223 + $0x1b8] sm:$0xff]
      %v299 = vld [vmem:[%s223 + $0x1c0] sm:$0xff]
      %v300 = vld [vmem:[%s223 + $0x1c8] sm:$0xf]
      %v301 = vld [vmem:[%s223 + $0x1cc] sm:$0xff]
      %v302 = vld [vmem:[%s223 + $0x1d4] sm:$0xff]
      %v303 = vld [vmem:[%s223 + $0x1dc] sm:$0xf]
      %v304 = vld [vmem:[%s223 + $0x1e0] sm:$0xff]
      %v305 = vld [vmem:[%s223 + $0x1e8] sm:$0xff]
      %v306 = vld [vmem:[%s223 + $0x1f0] sm:$0xf]
      %v307 = vld [vmem:[%s223 + $0x1f4] sm:$0xff]
      %v308 = vld [vmem:[%s223 + $0x1fc] sm:$0xff]
      %v309 = vld [vmem:[%s223 + $0x204] sm:$0xf]
      %v310 = vld [vmem:[%s223 + $0x208] sm:$0xff]
      %v311 = vld [vmem:[%s223 + $0x210] sm:$0xff]
      %v312 = vld [vmem:[%s223 + $0x218] sm:$0xf]
      %v313 = vld [vmem:[%s223 + $0x21c] sm:$0xff]
      %v314 = vld [vmem:[%s223 + $0x224] sm:$0xff]
      %v315 = vld [vmem:[%s223 + $0x22c] sm:$0xf]
      %v316 = vld [vmem:[%s223 + $0x230] sm:$0xff]
      %v317 = vld [vmem:[%s223 + $0x238] sm:$0xff]
      %v318 = vld [vmem:[%s223 + $0x240] sm:$0xf]
      %v319 = vld [vmem:[%s223 + $0x244] sm:$0xff]
      %v320 = vld [vmem:[%s223 + $0x24c] sm:$0xff]
      %v321 = vld [vmem:[%s223 + $0x254] sm:$0xf]
      %v322 = vld [vmem:[%s223 + $0x258] sm:$0xff]
      %v323 = vld [vmem:[%s223 + $0x260] sm:$0xff]
      %v324 = vld [vmem:[%s223 + $0x268] sm:$0xf]
      %v325 = vld [vmem:[%s223 + $0x26c] sm:$0xff]
      %v326 = vld [vmem:[%s223 + $0x274] sm:$0xff]
      %v327 = vld [vmem:[%s223 + $0x27c] sm:$0xf]
      %v328 = vld [vmem:[%s223 + $0x280] sm:$0xff]
      %v329 = vld [vmem:[%s223 + $0x288] sm:$0xff]
      %v330 = vld [vmem:[%s223 + $0x290] sm:$0xf]
      %v331 = vld [vmem:[%s223 + $0x294] sm:$0xff]
      %v332 = vld [vmem:[%s223 + $0x29c] sm:$0xff]
      %v333 = vld [vmem:[%s223 + $0x2a4] sm:$0xf]
      %v334 = vld [vmem:[%s223 + $0x2a8] sm:$0xff]
      %v335 = vld [vmem:[%s223 + $0x2b0] sm:$0xff]
      %v336 = vld [vmem:[%s223 + $0x2b8] sm:$0xf]
      %v337 = vld [vmem:[%s223 + $0x2bc] sm:$0xff]
      %v338 = vld [vmem:[%s223 + $0x2c4] sm:$0xff]
      %v339 = vld [vmem:[%s223 + $0x2cc] sm:$0xf]
      %v340 = vld [vmem:[%s223 + $0x2d0] sm:$0xff]
      %v341 = vld [vmem:[%s223 + $0x2d8] sm:$0xff]
      %v342 = vld [vmem:[%s223 + $0x2e0] sm:$0xf]
      %v343 = vld [vmem:[%s223 + $0x2e4] sm:$0xff]
      %v344 = vld [vmem:[%s223 + $0x2ec] sm:$0xff]
      %v345 = vld [vmem:[%s223 + $0x2f4] sm:$0xf]
      %v346 = vld [vmem:[%s1] sm:$0xf]
      %v347 = vld [vmem:[%s1 + $0x4] sm:$0xf]
      %v348 = vld [vmem:[%s1 + $0x8] sm:$0xf]
      %v349 = vld [vmem:[%s1 + $0xc] sm:$0xf]
      %v350 = vld [vmem:[%s1 + $0x10] sm:$0xf]
      %v351 = vld [vmem:[%s1 + $0x14] sm:$0xf]
      %v352 = vld [vmem:[%s1 + $0x18] sm:$0xf]
      %v353 = vld [vmem:[%s1 + $0x1c] sm:$0xf]
      %v354 = vld [vmem:[%s1 + $0x20] sm:$0xf]
      %v355 = vld [vmem:[%s1 + $0x24] sm:$0xf]
      %v356 = vld [vmem:[%s1 + $0x28] sm:$0xf]
      %v357 = vld [vmem:[%s1 + $0x2c] sm:$0xf]
      %v358 = vld [vmem:[%s1 + $0x30] sm:$0xf]
      %v359 = vld [vmem:[%s1 + $0x34] sm:$0xf]
      %v360 = vld [vmem:[%s1 + $0x38] sm:$0xf]
      %v361 = vld [vmem:[%s1 + $0x3c] sm:$0xf]
      %v362 = vld [vmem:[%s1 + $0x40] sm:$0xf]
      %v363 = vld [vmem:[%s1 + $0x44] sm:$0xf]
      %v364 = vld [vmem:[%s1 + $0x48] sm:$0xf]
      %v365 = vld [vmem:[%s1 + $0x4c] sm:$0xf]
      %v366 = vld [vmem:[%s1 + $0x50] sm:$0xf]
      %v367 = vld [vmem:[%s1 + $0x54] sm:$0xf]
      %v368 = vld [vmem:[%s1 + $0x58] sm:$0xf]
      %v369 = vld [vmem:[%s1 + $0x5c] sm:$0xf]
      %v370 = vld [vmem:[%s1 + $0x60] sm:$0xf]
      %v371 = vld [vmem:[%s1 + $0x64] sm:$0xf]
      %v372 = vld [vmem:[%s1 + $0x68] sm:$0xf]
      %v373 = vld [vmem:[%s1 + $0x6c] sm:$0xf]
      %v374 = vld [vmem:[%s1 + $0x70] sm:$0xf]
      %v375 = vld [vmem:[%s1 + $0x74] sm:$0xf]
      %v376 = vld [vmem:[%s1 + $0x78] sm:$0xf]
      %v377 = vld [vmem:[%s1 + $0x7c] sm:$0xf]
      %v378 = vld [vmem:[%s1 + $0x80] sm:$0xf]
      %v379 = vld [vmem:[%s1 + $0x84] sm:$0xf]
      %v380 = vld [vmem:[%s1 + $0x88] sm:$0xf]
      %v381 = vld [vmem:[%s1 + $0x8c] sm:$0xf]
      %v382 = vld [vmem:[%s1 + $0x90] sm:$0xf]
      %v383 = vld [vmem:[%s1 + $0x94] sm:$0xf]
      %v384 = vld [vmem:[%s1 + $0x98] sm:$0xf]
      %v385 = vld [vmem:[%s1 + $0x9c] sm:$0xf]
      %v386 = vld [vmem:[%s1 + $0xa0] sm:$0xf]
      %v387 = vld [vmem:[%s1 + $0xa4] sm:$0xf]
      %v388 = vld [vmem:[%s1 + $0xa8] sm:$0xf]
      %v389 = vld [vmem:[%s1 + $0xac] sm:$0xf]
      %v390 = vld [vmem:[%s1 + $0xb0] sm:$0xf]
      %v391 = vld [vmem:[%s1 + $0xb4] sm:$0xf]
      %v392 = vld [vmem:[%s1 + $0xb8] sm:$0xf]
      %v393 = vld [vmem:[%s1 + $0xbc] sm:$0xf]
      %v394 = vld [vmem:[%s1 + $0xc0] sm:$0xf]
      %v395 = vld [vmem:[%s1 + $0xc4] sm:$0xf]
      %v396 = vld [vmem:[%s1 + $0xc8] sm:$0xf]
      %v397 = vld [vmem:[%s1 + $0xcc] sm:$0xf]
      %v398 = vld [vmem:[%s1 + $0xd0] sm:$0xf]
      %v399 = vld [vmem:[%s1 + $0xd4] sm:$0xf]
      %v400 = vld [vmem:[%s1 + $0xd8] sm:$0xf]
      %v401 = vld [vmem:[%s1 + $0xdc] sm:$0xf]
      %v402 = vld [vmem:[%s1 + $0xe0] sm:$0xf]
      %v403 = vld [vmem:[%s1 + $0xe4] sm:$0xf]
      %v404 = vld [vmem:[%s1 + $0xe8] sm:$0xf]
      %v405 = vld [vmem:[%s1 + $0xec] sm:$0xf]
      %v406 = vld [vmem:[%s1 + $0xf0] sm:$0xf]
      %v407 = vld [vmem:[%s1 + $0xf4] sm:$0xf]
      %v408 = vld [vmem:[%s1 + $0xf8] sm:$0xf]
      %v409 = vld [vmem:[%s1 + $0xfc] sm:$0xf]
      %v410 = vld [vmem:[%s1 + $0x100] sm:$0xf]
      %v411 = vld [vmem:[%s1 + $0x104] sm:$0xf]
      %v412 = vld [vmem:[%s1 + $0x108] sm:$0xf]
      %v413 = vld [vmem:[%s1 + $0x10c] sm:$0xf]
      %v414 = vld [vmem:[%s1 + $0x110] sm:$0xf]
      %v415 = vld [vmem:[%s1 + $0x114] sm:$0xf]
      %v416 = vld [vmem:[%s1 + $0x118] sm:$0xf]
      %v417 = vld [vmem:[%s1 + $0x11c] sm:$0xf]
      %v418 = vld [vmem:[%s2] sm:$0x1]
      %v420 = vperm.slane %v418, 0
      %v536 = vunpack.c.l.b16 %v232
      %v537 = vunpack.c.h.b16 %v232
      %v538 = vunpack.c.l.b16 %v233
      %v539 = vunpack.c.h.b16 %v233
      %v540 = vunpack.c.l.b16 %v234
      %v541 = vunpack.c.l.b16 %v235
      %v542 = vunpack.c.h.b16 %v235
      %v543 = vunpack.c.l.b16 %v236
      %v544 = vunpack.c.h.b16 %v236
      %v545 = vunpack.c.l.b16 %v237
      %v546 = vunpack.c.l.b16 %v238
      %v547 = vunpack.c.h.b16 %v238
      %v548 = vunpack.c.l.b16 %v239
      %v549 = vunpack.c.h.b16 %v239
      %v550 = vunpack.c.l.b16 %v240
      %v551 = vunpack.c.l.b16 %v241
      %v552 = vunpack.c.h.b16 %v241
      %v553 = vunpack.c.l.b16 %v242
      %v554 = vunpack.c.h.b16 %v242
      %v555 = vunpack.c.l.b16 %v243
      %v556 = vunpack.c.l.b16 %v244
      %v557 = vunpack.c.h.b16 %v244
      %v558 = vunpack.c.l.b16 %v245
      %v559 = vunpack.c.h.b16 %v245
      %v560 = vunpack.c.l.b16 %v246
      %v561 = vunpack.c.l.b16 %v247
      %v562 = vunpack.c.h.b16 %v247
      %v563 = vunpack.c.l.b16 %v248
      %v564 = vunpack.c.h.b16 %v248
      %v565 = vunpack.c.l.b16 %v249
      %v566 = vunpack.c.l.b16 %v250
      %v567 = vunpack.c.h.b16 %v250
      %v568 = vunpack.c.l.b16 %v251
      %v569 = vunpack.c.h.b16 %v251
      %v570 = vunpack.c.l.b16 %v252
      %v571 = vunpack.c.l.b16 %v253
      %v572 = vunpack.c.h.b16 %v253
      %v573 = vunpack.c.l.b16 %v254
      %v574 = vunpack.c.h.b16 %v254
      %v575 = vunpack.c.l.b16 %v255
      %v576 = vunpack.c.l.b16 %v256
      %v577 = vunpack.c.h.b16 %v256
      %v578 = vunpack.c.l.b16 %v257
      %v579 = vunpack.c.h.b16 %v257
      %v580 = vunpack.c.l.b16 %v258
      %v581 = vunpack.c.l.b16 %v259
      %v582 = vunpack.c.h.b16 %v259
      %v583 = vunpack.c.l.b16 %v260
      %v584 = vunpack.c.h.b16 %v260
      %v585 = vunpack.c.l.b16 %v261
      %v586 = vunpack.c.l.b16 %v262
      %v587 = vunpack.c.h.b16 %v262
      %v588 = vunpack.c.l.b16 %v263
      %v589 = vunpack.c.h.b16 %v263
      %v590 = vunpack.c.l.b16 %v264
      %v591 = vunpack.c.l.b16 %v265
      %v592 = vunpack.c.h.b16 %v265
      %v593 = vunpack.c.l.b16 %v266
      %v594 = vunpack.c.h.b16 %v266
      %v595 = vunpack.c.l.b16 %v267
      %v596 = vunpack.c.l.b16 %v268
      %v597 = vunpack.c.h.b16 %v268
      %v598 = vunpack.c.l.b16 %v269
      %v599 = vunpack.c.h.b16 %v269
      %v600 = vunpack.c.l.b16 %v270
      %v601 = vunpack.c.l.b16 %v271
      %v602 = vunpack.c.h.b16 %v271
      %v603 = vunpack.c.l.b16 %v272
      %v604 = vunpack.c.h.b16 %v272
      %v605 = vunpack.c.l.b16 %v273
      %v606 = vunpack.c.l.b16 %v274
      %v607 = vunpack.c.h.b16 %v274
      %v608 = vunpack.c.l.b16 %v275
      %v609 = vunpack.c.h.b16 %v275
      %v610 = vunpack.c.l.b16 %v276
      %v611 = vunpack.c.l.b16 %v277
      %v612 = vunpack.c.h.b16 %v277
      %v613 = vunpack.c.l.b16 %v278
      %v614 = vunpack.c.h.b16 %v278
      %v615 = vunpack.c.l.b16 %v279
      %v616 = vunpack.c.l.b16 %v280
      %v617 = vunpack.c.h.b16 %v280
      %v618 = vunpack.c.l.b16 %v281
      %v619 = vunpack.c.h.b16 %v281
      %v620 = vunpack.c.l.b16 %v282
      %v621 = vunpack.c.l.b16 %v283
      %v622 = vunpack.c.h.b16 %v283
      %v623 = vunpack.c.l.b16 %v284
      %v624 = vunpack.c.h.b16 %v284
      %v625 = vunpack.c.l.b16 %v285
      %v626 = vunpack.c.l.b16 %v286
      %v627 = vunpack.c.h.b16 %v286
      %v628 = vunpack.c.l.b16 %v287
      %v629 = vunpack.c.h.b16 %v287
      %v630 = vunpack.c.l.b16 %v288
      %v631 = vunpack.c.l.b16 %v289
      %v632 = vunpack.c.h.b16 %v289
      %v633 = vunpack.c.l.b16 %v290
      %v634 = vunpack.c.h.b16 %v290
      %v635 = vunpack.c.l.b16 %v291
      %v636 = vunpack.c.l.b16 %v292
      %v637 = vunpack.c.h.b16 %v292
      %v638 = vunpack.c.l.b16 %v293
      %v639 = vunpack.c.h.b16 %v293
      %v640 = vunpack.c.l.b16 %v294
      %v641 = vunpack.c.l.b16 %v295
      %v642 = vunpack.c.h.b16 %v295
      %v643 = vunpack.c.l.b16 %v296
      %v644 = vunpack.c.h.b16 %v296
      %v645 = vunpack.c.l.b16 %v297
      %v646 = vunpack.c.l.b16 %v298
      %v647 = vunpack.c.h.b16 %v298
      %v648 = vunpack.c.l.b16 %v299
      %v649 = vunpack.c.h.b16 %v299
      %v650 = vunpack.c.l.b16 %v300
      %v651 = vunpack.c.l.b16 %v301
      %v652 = vunpack.c.h.b16 %v301
      %v653 = vunpack.c.l.b16 %v302
      %v654 = vunpack.c.h.b16 %v302
      %v655 = vunpack.c.l.b16 %v303
      %v656 = vunpack.c.l.b16 %v304
      %v657 = vunpack.c.h.b16 %v304
      %v658 = vunpack.c.l.b16 %v305
      %v659 = vunpack.c.h.b16 %v305
      %v660 = vunpack.c.l.b16 %v306
      %v661 = vunpack.c.l.b16 %v307
      %v662 = vunpack.c.h.b16 %v307
      %v663 = vunpack.c.l.b16 %v308
      %v664 = vunpack.c.h.b16 %v308
      %v665 = vunpack.c.l.b16 %v309
      %v666 = vunpack.c.l.b16 %v310
      %v667 = vunpack.c.h.b16 %v310
      %v668 = vunpack.c.l.b16 %v311
      %v669 = vunpack.c.h.b16 %v311
      %v670 = vunpack.c.l.b16 %v312
      %v671 = vunpack.c.l.b16 %v313
      %v672 = vunpack.c.h.b16 %v313
      %v673 = vunpack.c.l.b16 %v314
      %v674 = vunpack.c.h.b16 %v314
      %v675 = vunpack.c.l.b16 %v315
      %v676 = vunpack.c.l.b16 %v316
      %v677 = vunpack.c.h.b16 %v316
      %v678 = vunpack.c.l.b16 %v317
      %v679 = vunpack.c.h.b16 %v317
      %v680 = vunpack.c.l.b16 %v318
      %v681 = vunpack.c.l.b16 %v319
      %v682 = vunpack.c.h.b16 %v319
      %v683 = vunpack.c.l.b16 %v320
      %v684 = vunpack.c.h.b16 %v320
      %v685 = vunpack.c.l.b16 %v321
      %v686 = vunpack.c.l.b16 %v322
      %v687 = vunpack.c.h.b16 %v322
      %v688 = vunpack.c.l.b16 %v323
      %v689 = vunpack.c.h.b16 %v323
      %v690 = vunpack.c.l.b16 %v324
      %v691 = vunpack.c.l.b16 %v325
      %v692 = vunpack.c.h.b16 %v325
      %v693 = vunpack.c.l.b16 %v326
      %v694 = vunpack.c.h.b16 %v326
      %v695 = vunpack.c.l.b16 %v327
      %v696 = vunpack.c.l.b16 %v328
      %v697 = vunpack.c.h.b16 %v328
      %v698 = vunpack.c.l.b16 %v329
      %v699 = vunpack.c.h.b16 %v329
      %v700 = vunpack.c.l.b16 %v330
      %v701 = vunpack.c.l.b16 %v331
      %v702 = vunpack.c.h.b16 %v331
      %v703 = vunpack.c.l.b16 %v332
      %v704 = vunpack.c.h.b16 %v332
      %v705 = vunpack.c.l.b16 %v333
      %v706 = vunpack.c.l.b16 %v334
      %v707 = vunpack.c.h.b16 %v334
      %v708 = vunpack.c.l.b16 %v335
      %v709 = vunpack.c.h.b16 %v335
      %v710 = vunpack.c.l.b16 %v336
      %v711 = vunpack.c.l.b16 %v337
      %v712 = vunpack.c.h.b16 %v337
      %v713 = vunpack.c.l.b16 %v338
      %v714 = vunpack.c.h.b16 %v338
      %v715 = vunpack.c.l.b16 %v339
      %v716 = vunpack.c.l.b16 %v340
      %v717 = vunpack.c.h.b16 %v340
      %v718 = vunpack.c.l.b16 %v341
      %v719 = vunpack.c.h.b16 %v341
      %v720 = vunpack.c.l.b16 %v342
      %v721 = vunpack.c.l.b16 %v343
      %v722 = vunpack.c.h.b16 %v343
      %v723 = vunpack.c.l.b16 %v344
      %v724 = vunpack.c.h.b16 %v344
      %v725 = vunpack.c.l.b16 %v345
      %v726 = vpack.c.b16 %v541, %v536
      %v727 = vpack.c.b16 %v542, %v537
      %v728 = vpack.c.b16 %v543, %v538
      %v729 = vpack.c.b16 %v544, %v539
      %v730 = vpack.c.b16 %v545, %v540
      %v731 = vpack.c.b16 %v551, %v546
      %v732 = vpack.c.b16 %v552, %v547
      %v733 = vpack.c.b16 %v553, %v548
      %v734 = vpack.c.b16 %v554, %v549
      %v735 = vpack.c.b16 %v555, %v550
      %v736 = vpack.c.b16 %v561, %v556
      %v737 = vpack.c.b16 %v562, %v557
      %v738 = vpack.c.b16 %v563, %v558
      %v739 = vpack.c.b16 %v564, %v559
      %v740 = vpack.c.b16 %v565, %v560
      %v741 = vpack.c.b16 %v571, %v566
      %v742 = vpack.c.b16 %v572, %v567
      %v743 = vpack.c.b16 %v573, %v568
      %v744 = vpack.c.b16 %v574, %v569
      %v745 = vpack.c.b16 %v575, %v570
      %v746 = vpack.c.b16 %v581, %v576
      %v747 = vpack.c.b16 %v582, %v577
      %v748 = vpack.c.b16 %v583, %v578
      %v749 = vpack.c.b16 %v584, %v579
      %v750 = vpack.c.b16 %v585, %v580
      %v751 = vpack.c.b16 %v591, %v586
      %v752 = vpack.c.b16 %v592, %v587
      %v753 = vpack.c.b16 %v593, %v588
      %v754 = vpack.c.b16 %v594, %v589
      %v755 = vpack.c.b16 %v595, %v590
      %v756 = vpack.c.b16 %v601, %v596
      %v757 = vpack.c.b16 %v602, %v597
      %v758 = vpack.c.b16 %v603, %v598
      %v759 = vpack.c.b16 %v604, %v599
      %v760 = vpack.c.b16 %v605, %v600
      %v761 = vpack.c.b16 %v611, %v606
      %v762 = vpack.c.b16 %v612, %v607
      %v763 = vpack.c.b16 %v613, %v608
      %v764 = vpack.c.b16 %v614, %v609
      %v765 = vpack.c.b16 %v615, %v610
      %v766 = vpack.c.b16 %v621, %v616
      %v767 = vpack.c.b16 %v622, %v617
      %v768 = vpack.c.b16 %v623, %v618
      %v769 = vpack.c.b16 %v624, %v619
      %v770 = vpack.c.b16 %v625, %v620
      %v771 = vpack.c.b16 %v631, %v626
      %v772 = vpack.c.b16 %v632, %v627
      %v773 = vpack.c.b16 %v633, %v628
      %v774 = vpack.c.b16 %v634, %v629
      %v775 = vpack.c.b16 %v635, %v630
      %v776 = vpack.c.b16 %v641, %v636
      %v777 = vpack.c.b16 %v642, %v637
      %v778 = vpack.c.b16 %v643, %v638
      %v779 = vpack.c.b16 %v644, %v639
      %v780 = vpack.c.b16 %v645, %v640
      %v781 = vpack.c.b16 %v651, %v646
      %v782 = vpack.c.b16 %v652, %v647
      %v783 = vpack.c.b16 %v653, %v648
      %v784 = vpack.c.b16 %v654, %v649
      %v785 = vpack.c.b16 %v655, %v650
      %v786 = vpack.c.b16 %v661, %v656
      %v787 = vpack.c.b16 %v662, %v657
      %v788 = vpack.c.b16 %v663, %v658
      %v789 = vpack.c.b16 %v664, %v659
      %v790 = vpack.c.b16 %v665, %v660
      %v791 = vpack.c.b16 %v671, %v666
      %v792 = vpack.c.b16 %v672, %v667
      %v793 = vpack.c.b16 %v673, %v668
      %v794 = vpack.c.b16 %v674, %v669
      %v795 = vpack.c.b16 %v675, %v670
      %v796 = vpack.c.b16 %v681, %v676
      %v797 = vpack.c.b16 %v682, %v677
      %v798 = vpack.c.b16 %v683, %v678
      %v799 = vpack.c.b16 %v684, %v679
      %v800 = vpack.c.b16 %v685, %v680
      %v801 = vpack.c.b16 %v691, %v686
      %v802 = vpack.c.b16 %v692, %v687
      %v803 = vpack.c.b16 %v693, %v688
      %v804 = vpack.c.b16 %v694, %v689
      %v805 = vpack.c.b16 %v695, %v690
      %v806 = vpack.c.b16 %v701, %v696
      %v807 = vpack.c.b16 %v702, %v697
      %v808 = vpack.c.b16 %v703, %v698
      %v809 = vpack.c.b16 %v704, %v699
      %v810 = vpack.c.b16 %v705, %v700
      %v811 = vpack.c.b16 %v711, %v706
      %v812 = vpack.c.b16 %v712, %v707
      %v813 = vpack.c.b16 %v713, %v708
      %v814 = vpack.c.b16 %v714, %v709
      %v815 = vpack.c.b16 %v715, %v710
      %v816 = vpack.c.b16 %v721, %v716
      %v817 = vpack.c.b16 %v722, %v717
      %v818 = vpack.c.b16 %v723, %v718
      %v819 = vpack.c.b16 %v724, %v719
      %v820 = vpack.c.b16 %v725, %v720
      %v969 = vunpack.c.l.b16 %v346
      %v970 = vunpack.c.l.b16 %v347
      %v971 = vunpack.c.l.b16 %v348
      %v972 = vunpack.c.l.b16 %v349
      %v973 = vunpack.c.l.b16 %v350
      %v974 = vunpack.c.l.b16 %v351
      %v975 = vunpack.c.l.b16 %v352
      %v976 = vunpack.c.l.b16 %v353
      %v977 = vunpack.c.l.b16 %v354
      %v978 = vunpack.c.l.b16 %v355
      %v979 = vunpack.c.l.b16 %v356
      %v980 = vunpack.c.l.b16 %v357
      %v981 = vunpack.c.l.b16 %v358
      %v982 = vunpack.c.l.b16 %v359
      %v983 = vunpack.c.l.b16 %v360
      %v984 = vunpack.c.l.b16 %v361
      %v985 = vunpack.c.l.b16 %v362
      %v986 = vunpack.c.l.b16 %v363
      %v987 = vunpack.c.l.b16 %v364
      %v988 = vunpack.c.l.b16 %v365
      %v989 = vunpack.c.l.b16 %v366
      %v990 = vunpack.c.l.b16 %v367
      %v991 = vunpack.c.l.b16 %v368
      %v992 = vunpack.c.l.b16 %v369
      %v993 = vunpack.c.l.b16 %v370
      %v994 = vunpack.c.l.b16 %v371
      %v995 = vunpack.c.l.b16 %v372
      %v996 = vunpack.c.l.b16 %v373
      %v997 = vunpack.c.l.b16 %v374
      %v998 = vunpack.c.l.b16 %v375
      %v999 = vunpack.c.l.b16 %v376
      %v1000 = vunpack.c.l.b16 %v377
      %v1001 = vunpack.c.l.b16 %v378
      %v1002 = vunpack.c.l.b16 %v379
      %v1003 = vunpack.c.l.b16 %v380
      %v1004 = vunpack.c.l.b16 %v381
      %v1005 = vunpack.c.l.b16 %v382
      %v1006 = vunpack.c.l.b16 %v383
      %v1007 = vunpack.c.l.b16 %v384
      %v1008 = vunpack.c.l.b16 %v385
      %v1009 = vunpack.c.l.b16 %v386
      %v1010 = vunpack.c.l.b16 %v387
      %v1011 = vunpack.c.l.b16 %v388
      %v1012 = vunpack.c.l.b16 %v389
      %v1013 = vunpack.c.l.b16 %v390
      %v1014 = vunpack.c.l.b16 %v391
      %v1015 = vunpack.c.l.b16 %v392
      %v1016 = vunpack.c.l.b16 %v393
      %v1017 = vunpack.c.l.b16 %v394
      %v1018 = vunpack.c.l.b16 %v395
      %v1019 = vunpack.c.l.b16 %v396
      %v1020 = vunpack.c.l.b16 %v397
      %v1021 = vunpack.c.l.b16 %v398
      %v1022 = vunpack.c.l.b16 %v399
      %v1023 = vunpack.c.l.b16 %v400
      %v1024 = vunpack.c.l.b16 %v401
      %v1025 = vunpack.c.l.b16 %v402
      %v1026 = vunpack.c.l.b16 %v403
      %v1027 = vunpack.c.l.b16 %v404
      %v1028 = vunpack.c.l.b16 %v405
      %v1029 = vunpack.c.l.b16 %v406
      %v1030 = vunpack.c.l.b16 %v407
      %v1031 = vunpack.c.l.b16 %v408
      %v1032 = vunpack.c.l.b16 %v409
      %v1033 = vunpack.c.l.b16 %v410
      %v1034 = vunpack.c.l.b16 %v411
      %v1035 = vunpack.c.l.b16 %v412
      %v1036 = vunpack.c.l.b16 %v413
      %v1037 = vunpack.c.l.b16 %v414
      %v1038 = vunpack.c.l.b16 %v415
      %v1039 = vunpack.c.l.b16 %v416
      %v1040 = vunpack.c.l.b16 %v417
      %v1041 = vpack.c.b16 %v970, %v969
      %v1042 = vpack.c.b16 %v972, %v971
      %v1043 = vpack.c.b16 %v974, %v973
      %v1044 = vpack.c.b16 %v976, %v975
      %v1045 = vpack.c.b16 %v978, %v977
      %v1046 = vpack.c.b16 %v980, %v979
      %v1047 = vpack.c.b16 %v982, %v981
      %v1048 = vpack.c.b16 %v984, %v983
      %v1049 = vpack.c.b16 %v986, %v985
      %v1050 = vpack.c.b16 %v988, %v987
      %v1051 = vpack.c.b16 %v990, %v989
      %v1052 = vpack.c.b16 %v992, %v991
      %v1053 = vpack.c.b16 %v994, %v993
      %v1054 = vpack.c.b16 %v996, %v995
      %v1055 = vpack.c.b16 %v998, %v997
      %v1056 = vpack.c.b16 %v1000, %v999
      %v1057 = vpack.c.b16 %v1002, %v1001
      %v1058 = vpack.c.b16 %v1004, %v1003
      %v1059 = vpack.c.b16 %v1006, %v1005
      %v1060 = vpack.c.b16 %v1008, %v1007
      %v1061 = vpack.c.b16 %v1010, %v1009
      %v1062 = vpack.c.b16 %v1012, %v1011
      %v1063 = vpack.c.b16 %v1014, %v1013
      %v1064 = vpack.c.b16 %v1016, %v1015
      %v1065 = vpack.c.b16 %v1018, %v1017
      %v1066 = vpack.c.b16 %v1020, %v1019
      %v1067 = vpack.c.b16 %v1022, %v1021
      %v1068 = vpack.c.b16 %v1024, %v1023
      %v1069 = vpack.c.b16 %v1026, %v1025
      %v1070 = vpack.c.b16 %v1028, %v1027
      %v1071 = vpack.c.b16 %v1030, %v1029
      %v1072 = vpack.c.b16 %v1032, %v1031
      %v1073 = vpack.c.b16 %v1034, %v1033
      %v1074 = vpack.c.b16 %v1036, %v1035
      %v1075 = vpack.c.b16 %v1038, %v1037
      %v1076 = vpack.c.b16 %v1040, %v1039
      %vm1113 = vcmask 523264
      %v1115 = vsel %vm1113, %v730, 0
      %v1118 = vsel %vm1113, %v735, 0
      %v1121 = vsel %vm1113, %v740, 0
      %v1124 = vsel %vm1113, %v745, 0
      %v1127 = vsel %vm1113, %v750, 0
      %v1130 = vsel %vm1113, %v755, 0
      %v1133 = vsel %vm1113, %v760, 0
      %v1136 = vsel %vm1113, %v765, 0
      %v1139 = vsel %vm1113, %v770, 0
      %v1142 = vsel %vm1113, %v775, 0
      %v1145 = vsel %vm1113, %v780, 0
      %v1148 = vsel %vm1113, %v785, 0
      %v1151 = vsel %vm1113, %v790, 0
      %v1154 = vsel %vm1113, %v795, 0
      %v1157 = vsel %vm1113, %v800, 0
      %v1160 = vsel %vm1113, %v805, 0
      %v1163 = vsel %vm1113, %v810, 0
      %v1166 = vsel %vm1113, %v815, 0
      %v1169 = vsel %vm1113, %v820, 0
      %1171 = vmatpush.bf16.msra.mxu0 %v1048
      %1172 = vmatpush.bf16.msra.mxu0 %v1047
      %1173 = vmatpush.bf16.msra.mxu0 %v1046
      %1174 = vmatpush.bf16.msra.mxu0 %v1045
      %1175 = vmatpush.bf16.msra.mxu0 %v1044
      %1176 = vmatpush.bf16.msra.mxu0 %v1043
      %1177 = vmatpush.bf16.msra.mxu0 %v1042
      %1178 = vmatpush.bf16.msra.mxu0 %v1041
      %1179 = vmatmul.bf16.gmra.mxu0 %v726
      %v1180 = vpop.f32.mrf.mxu0
      %v1181 = vadd.f32 %v420, %v1180
      %v1182 = vpop.f32.mrf.mxu0
      %v1183 = vadd.f32 %v420, %v1182
      %1184 = vmatmul.bf16.gmra.mxu0 %v731
      %v1185 = vpop.f32.mrf.mxu0
      %v1186 = vadd.f32 %v420, %v1185
      %v1187 = vpop.f32.mrf.mxu0
      %v1188 = vadd.f32 %v420, %v1187
      %1189 = vmatmul.bf16.gmra.mxu0 %v736
      %v1190 = vpop.f32.mrf.mxu0
      %v1191 = vadd.f32 %v420, %v1190
      %v1192 = vpop.f32.mrf.mxu0
      %v1193 = vadd.f32 %v420, %v1192
      %1194 = vmatmul.bf16.gmra.mxu0 %v741
      %v1195 = vpop.f32.mrf.mxu0
      %v1196 = vadd.f32 %v420, %v1195
      %v1197 = vpop.f32.mrf.mxu0
      %v1198 = vadd.f32 %v420, %v1197
      %1199 = vmatmul.bf16.gmra.mxu0 %v746
      %v1200 = vpop.f32.mrf.mxu0
      %v1201 = vadd.f32 %v420, %v1200
      %v1202 = vpop.f32.mrf.mxu0
      %v1203 = vadd.f32 %v420, %v1202
      %1204 = vmatmul.bf16.gmra.mxu0 %v751
      %v1205 = vpop.f32.mrf.mxu0
      %v1206 = vadd.f32 %v420, %v1205
      %v1207 = vpop.f32.mrf.mxu0
      %v1208 = vadd.f32 %v420, %v1207
      %1209 = vmatmul.bf16.gmra.mxu0 %v756
      %v1210 = vpop.f32.mrf.mxu0
      %v1211 = vadd.f32 %v420, %v1210
      %v1212 = vpop.f32.mrf.mxu0
      %v1213 = vadd.f32 %v420, %v1212
      %1214 = vmatmul.bf16.gmra.mxu0 %v761
      %v1215 = vpop.f32.mrf.mxu0
      %v1216 = vadd.f32 %v420, %v1215
      %v1217 = vpop.f32.mrf.mxu0
      %v1218 = vadd.f32 %v420, %v1217
      %1219 = vmatmul.bf16.gmra.mxu0 %v766
      %v1220 = vpop.f32.mrf.mxu0
      %v1221 = vadd.f32 %v420, %v1220
      %v1222 = vpop.f32.mrf.mxu0
      %v1223 = vadd.f32 %v420, %v1222
      %1224 = vmatmul.bf16.gmra.mxu0 %v771
      %v1225 = vpop.f32.mrf.mxu0
      %v1226 = vadd.f32 %v420, %v1225
      %v1227 = vpop.f32.mrf.mxu0
      %v1228 = vadd.f32 %v420, %v1227
      %1229 = vmatmul.bf16.gmra.mxu0 %v776
      %v1230 = vpop.f32.mrf.mxu0
      %v1231 = vadd.f32 %v420, %v1230
      %v1232 = vpop.f32.mrf.mxu0
      %v1233 = vadd.f32 %v420, %v1232
      %1234 = vmatmul.bf16.gmra.mxu0 %v781
      %v1235 = vpop.f32.mrf.mxu0
      %v1236 = vadd.f32 %v420, %v1235
      %v1237 = vpop.f32.mrf.mxu0
      %v1238 = vadd.f32 %v420, %v1237
      %1239 = vmatmul.bf16.gmra.mxu0 %v786
      %v1240 = vpop.f32.mrf.mxu0
      %v1241 = vadd.f32 %v420, %v1240
      %v1242 = vpop.f32.mrf.mxu0
      %v1243 = vadd.f32 %v420, %v1242
      %1244 = vmatmul.bf16.gmra.mxu0 %v791
      %v1245 = vpop.f32.mrf.mxu0
      %v1246 = vadd.f32 %v420, %v1245
      %v1247 = vpop.f32.mrf.mxu0
      %v1248 = vadd.f32 %v420, %v1247
      %1249 = vmatmul.bf16.gmra.mxu0 %v796
      %v1250 = vpop.f32.mrf.mxu0
      %v1251 = vadd.f32 %v420, %v1250
      %v1252 = vpop.f32.mrf.mxu0
      %v1253 = vadd.f32 %v420, %v1252
      %1254 = vmatmul.bf16.gmra.mxu0 %v801
      %v1255 = vpop.f32.mrf.mxu0
      %v1256 = vadd.f32 %v420, %v1255
      %v1257 = vpop.f32.mrf.mxu0
      %v1258 = vadd.f32 %v420, %v1257
      %1259 = vmatmul.bf16.gmra.mxu0 %v806
      %v1260 = vpop.f32.mrf.mxu0
      %v1261 = vadd.f32 %v420, %v1260
      %v1262 = vpop.f32.mrf.mxu0
      %v1263 = vadd.f32 %v420, %v1262
      %1264 = vmatmul.bf16.gmra.mxu0 %v811
      %v1265 = vpop.f32.mrf.mxu0
      %v1266 = vadd.f32 %v420, %v1265
      %v1267 = vpop.f32.mrf.mxu0
      %v1268 = vadd.f32 %v420, %v1267
      %1269 = vmatmul.bf16.gmra.mxu0 %v816
      %v1270 = vpop.f32.mrf.mxu0
      %v1271 = vadd.f32 %v420, %v1270
      %v1272 = vpop.f32.mrf.mxu0
      %v1273 = vadd.f32 %v420, %v1272
      %1274 = vdwg.mxu0
      %1275 = vmatpush.bf16.msra.mxu0 %v1056
      %1276 = vmatpush.bf16.msra.mxu0 %v1055
      %1277 = vmatpush.bf16.msra.mxu0 %v1054
      %1278 = vmatpush.bf16.msra.mxu0 %v1053
      %1279 = vmatpush.bf16.msra.mxu0 %v1052
      %1280 = vmatpush.bf16.msra.mxu0 %v1051
      %1281 = vmatpush.bf16.msra.mxu0 %v1050
      %1282 = vmatpush.bf16.msra.mxu0 %v1049
      %1283 = vmatmul.bf16.gmra.mxu0 %v727
      %v1284 = vpop.f32.mrf.mxu0
      %v1285 = vadd.f32 %v1181, %v1284
      %v1286 = vpop.f32.mrf.mxu0
      %v1287 = vadd.f32 %v1183, %v1286
      %1288 = vmatmul.bf16.gmra.mxu0 %v732
      %v1289 = vpop.f32.mrf.mxu0
      %v1290 = vadd.f32 %v1186, %v1289
      %v1291 = vpop.f32.mrf.mxu0
      %v1292 = vadd.f32 %v1188, %v1291
      %1293 = vmatmul.bf16.gmra.mxu0 %v737
      %v1294 = vpop.f32.mrf.mxu0
      %v1295 = vadd.f32 %v1191, %v1294
      %v1296 = vpop.f32.mrf.mxu0
      %v1297 = vadd.f32 %v1193, %v1296
      %1298 = vmatmul.bf16.gmra.mxu0 %v742
      %v1299 = vpop.f32.mrf.mxu0
      %v1300 = vadd.f32 %v1196, %v1299
      %v1301 = vpop.f32.mrf.mxu0
      %v1302 = vadd.f32 %v1198, %v1301
      %1303 = vmatmul.bf16.gmra.mxu0 %v747
      %v1304 = vpop.f32.mrf.mxu0
      %v1305 = vadd.f32 %v1201, %v1304
      %v1306 = vpop.f32.mrf.mxu0
      %v1307 = vadd.f32 %v1203, %v1306
      %1308 = vmatmul.bf16.gmra.mxu0 %v752
      %v1309 = vpop.f32.mrf.mxu0
      %v1310 = vadd.f32 %v1206, %v1309
      %v1311 = vpop.f32.mrf.mxu0
      %v1312 = vadd.f32 %v1208, %v1311
      %1313 = vmatmul.bf16.gmra.mxu0 %v757
      %v1314 = vpop.f32.mrf.mxu0
      %v1315 = vadd.f32 %v1211, %v1314
      %v1316 = vpop.f32.mrf.mxu0
      %v1317 = vadd.f32 %v1213, %v1316
      %1318 = vmatmul.bf16.gmra.mxu0 %v762
      %v1319 = vpop.f32.mrf.mxu0
      %v1320 = vadd.f32 %v1216, %v1319
      %v1321 = vpop.f32.mrf.mxu0
      %v1322 = vadd.f32 %v1218, %v1321
      %1323 = vmatmul.bf16.gmra.mxu0 %v767
      %v1324 = vpop.f32.mrf.mxu0
      %v1325 = vadd.f32 %v1221, %v1324
      %v1326 = vpop.f32.mrf.mxu0
      %v1327 = vadd.f32 %v1223, %v1326
      %1328 = vmatmul.bf16.gmra.mxu0 %v772
      %v1329 = vpop.f32.mrf.mxu0
      %v1330 = vadd.f32 %v1226, %v1329
      %v1331 = vpop.f32.mrf.mxu0
      %v1332 = vadd.f32 %v1228, %v1331
      %1333 = vmatmul.bf16.gmra.mxu0 %v777
      %v1334 = vpop.f32.mrf.mxu0
      %v1335 = vadd.f32 %v1231, %v1334
      %v1336 = vpop.f32.mrf.mxu0
      %v1337 = vadd.f32 %v1233, %v1336
      %1338 = vmatmul.bf16.gmra.mxu0 %v782
      %v1339 = vpop.f32.mrf.mxu0
      %v1340 = vadd.f32 %v1236, %v1339
      %v1341 = vpop.f32.mrf.mxu0
      %v1342 = vadd.f32 %v1238, %v1341
      %1343 = vmatmul.bf16.gmra.mxu0 %v787
      %v1344 = vpop.f32.mrf.mxu0
      %v1345 = vadd.f32 %v1241, %v1344
      %v1346 = vpop.f32.mrf.mxu0
      %v1347 = vadd.f32 %v1243, %v1346
      %1348 = vmatmul.bf16.gmra.mxu0 %v792
      %v1349 = vpop.f32.mrf.mxu0
      %v1350 = vadd.f32 %v1246, %v1349
      %v1351 = vpop.f32.mrf.mxu0
      %v1352 = vadd.f32 %v1248, %v1351
      %1353 = vmatmul.bf16.gmra.mxu0 %v797
      %v1354 = vpop.f32.mrf.mxu0
      %v1355 = vadd.f32 %v1251, %v1354
      %v1356 = vpop.f32.mrf.mxu0
      %v1357 = vadd.f32 %v1253, %v1356
      %1358 = vmatmul.bf16.gmra.mxu0 %v802
      %v1359 = vpop.f32.mrf.mxu0
      %v1360 = vadd.f32 %v1256, %v1359
      %v1361 = vpop.f32.mrf.mxu0
      %v1362 = vadd.f32 %v1258, %v1361
      %1363 = vmatmul.bf16.gmra.mxu0 %v807
      %v1364 = vpop.f32.mrf.mxu0
      %v1365 = vadd.f32 %v1261, %v1364
      %v1366 = vpop.f32.mrf.mxu0
      %v1367 = vadd.f32 %v1263, %v1366
      %1368 = vmatmul.bf16.gmra.mxu0 %v812
      %v1369 = vpop.f32.mrf.mxu0
      %v1370 = vadd.f32 %v1266, %v1369
      %v1371 = vpop.f32.mrf.mxu0
      %v1372 = vadd.f32 %v1268, %v1371
      %1373 = vmatmul.bf16.gmra.mxu0 %v817
      %v1374 = vpop.f32.mrf.mxu0
      %v1375 = vadd.f32 %v1271, %v1374
      %v1376 = vpop.f32.mrf.mxu0
      %v1377 = vadd.f32 %v1273, %v1376
      %1378 = vdwg.mxu0
      %1379 = vmatpush.bf16.msra.mxu0 %v1064
      %1380 = vmatpush.bf16.msra.mxu0 %v1063
      %1381 = vmatpush.bf16.msra.mxu0 %v1062
      %1382 = vmatpush.bf16.msra.mxu0 %v1061
      %1383 = vmatpush.bf16.msra.mxu0 %v1060
      %1384 = vmatpush.bf16.msra.mxu0 %v1059
      %1385 = vmatpush.bf16.msra.mxu0 %v1058
      %1386 = vmatpush.bf16.msra.mxu0 %v1057
      %1387 = vmatmul.bf16.gmra.mxu0 %v728
      %v1388 = vpop.f32.mrf.mxu0
      %v1389 = vadd.f32 %v1285, %v1388
      %v1390 = vpop.f32.mrf.mxu0
      %v1391 = vadd.f32 %v1287, %v1390
      %1392 = vmatmul.bf16.gmra.mxu0 %v733
      %v1393 = vpop.f32.mrf.mxu0
      %v1394 = vadd.f32 %v1290, %v1393
      %v1395 = vpop.f32.mrf.mxu0
      %v1396 = vadd.f32 %v1292, %v1395
      %1397 = vmatmul.bf16.gmra.mxu0 %v738
      %v1398 = vpop.f32.mrf.mxu0
      %v1399 = vadd.f32 %v1295, %v1398
      %v1400 = vpop.f32.mrf.mxu0
      %v1401 = vadd.f32 %v1297, %v1400
      %1402 = vmatmul.bf16.gmra.mxu0 %v743
      %v1403 = vpop.f32.mrf.mxu0
      %v1404 = vadd.f32 %v1300, %v1403
      %v1405 = vpop.f32.mrf.mxu0
      %v1406 = vadd.f32 %v1302, %v1405
      %1407 = vmatmul.bf16.gmra.mxu0 %v748
      %v1408 = vpop.f32.mrf.mxu0
      %v1409 = vadd.f32 %v1305, %v1408
      %v1410 = vpop.f32.mrf.mxu0
      %v1411 = vadd.f32 %v1307, %v1410
      %1412 = vmatmul.bf16.gmra.mxu0 %v753
      %v1413 = vpop.f32.mrf.mxu0
      %v1414 = vadd.f32 %v1310, %v1413
      %v1415 = vpop.f32.mrf.mxu0
      %v1416 = vadd.f32 %v1312, %v1415
      %1417 = vmatmul.bf16.gmra.mxu0 %v758
      %v1418 = vpop.f32.mrf.mxu0
      %v1419 = vadd.f32 %v1315, %v1418
      %v1420 = vpop.f32.mrf.mxu0
      %v1421 = vadd.f32 %v1317, %v1420
      %1422 = vmatmul.bf16.gmra.mxu0 %v763
      %v1423 = vpop.f32.mrf.mxu0
      %v1424 = vadd.f32 %v1320, %v1423
      %v1425 = vpop.f32.mrf.mxu0
      %v1426 = vadd.f32 %v1322, %v1425
      %1427 = vmatmul.bf16.gmra.mxu0 %v768
      %v1428 = vpop.f32.mrf.mxu0
      %v1429 = vadd.f32 %v1325, %v1428
      %v1430 = vpop.f32.mrf.mxu0
      %v1431 = vadd.f32 %v1327, %v1430
      %1432 = vmatmul.bf16.gmra.mxu0 %v773
      %v1433 = vpop.f32.mrf.mxu0
      %v1434 = vadd.f32 %v1330, %v1433
      %v1435 = vpop.f32.mrf.mxu0
      %v1436 = vadd.f32 %v1332, %v1435
      %1437 = vmatmul.bf16.gmra.mxu0 %v778
      %v1438 = vpop.f32.mrf.mxu0
      %v1439 = vadd.f32 %v1335, %v1438
      %v1440 = vpop.f32.mrf.mxu0
      %v1441 = vadd.f32 %v1337, %v1440
      %1442 = vmatmul.bf16.gmra.mxu0 %v783
      %v1443 = vpop.f32.mrf.mxu0
      %v1444 = vadd.f32 %v1340, %v1443
      %v1445 = vpop.f32.mrf.mxu0
      %v1446 = vadd.f32 %v1342, %v1445
      %1447 = vmatmul.bf16.gmra.mxu0 %v788
      %v1448 = vpop.f32.mrf.mxu0
      %v1449 = vadd.f32 %v1345, %v1448
      %v1450 = vpop.f32.mrf.mxu0
      %v1451 = vadd.f32 %v1347, %v1450
      %1452 = vmatmul.bf16.gmra.mxu0 %v793
      %v1453 = vpop.f32.mrf.mxu0
      %v1454 = vadd.f32 %v1350, %v1453
      %v1455 = vpop.f32.mrf.mxu0
      %v1456 = vadd.f32 %v1352, %v1455
      %1457 = vmatmul.bf16.gmra.mxu0 %v798
      %v1458 = vpop.f32.mrf.mxu0
      %v1459 = vadd.f32 %v1355, %v1458
      %v1460 = vpop.f32.mrf.mxu0
      %v1461 = vadd.f32 %v1357, %v1460
      %1462 = vmatmul.bf16.gmra.mxu0 %v803
      %v1463 = vpop.f32.mrf.mxu0
      %v1464 = vadd.f32 %v1360, %v1463
      %v1465 = vpop.f32.mrf.mxu0
      %v1466 = vadd.f32 %v1362, %v1465
      %1467 = vmatmul.bf16.gmra.mxu0 %v808
      %v1468 = vpop.f32.mrf.mxu0
      %v1469 = vadd.f32 %v1365, %v1468
      %v1470 = vpop.f32.mrf.mxu0
      %v1471 = vadd.f32 %v1367, %v1470
      %1472 = vmatmul.bf16.gmra.mxu0 %v813
      %v1473 = vpop.f32.mrf.mxu0
      %v1474 = vadd.f32 %v1370, %v1473
      %v1475 = vpop.f32.mrf.mxu0
      %v1476 = vadd.f32 %v1372, %v1475
      %1477 = vmatmul.bf16.gmra.mxu0 %v818
      %v1478 = vpop.f32.mrf.mxu0
      %v1479 = vadd.f32 %v1375, %v1478
      %v1480 = vpop.f32.mrf.mxu0
      %v1481 = vadd.f32 %v1377, %v1480
      %1482 = vdwg.mxu0
      %1483 = vmatpush.bf16.msra.mxu0 %v1072
      %1484 = vmatpush.bf16.msra.mxu0 %v1071
      %1485 = vmatpush.bf16.msra.mxu0 %v1070
      %1486 = vmatpush.bf16.msra.mxu0 %v1069
      %1487 = vmatpush.bf16.msra.mxu0 %v1068
      %1488 = vmatpush.bf16.msra.mxu0 %v1067
      %1489 = vmatpush.bf16.msra.mxu0 %v1066
      %1490 = vmatpush.bf16.msra.mxu0 %v1065
      %1491 = vmatmul.bf16.gmra.mxu0 %v729
      %v1492 = vpop.f32.mrf.mxu0
      %v1493 = vadd.f32 %v1389, %v1492
      %v1494 = vpop.f32.mrf.mxu0
      %v1495 = vadd.f32 %v1391, %v1494
      %1496 = vmatmul.bf16.gmra.mxu0 %v734
      %v1497 = vpop.f32.mrf.mxu0
      %v1498 = vadd.f32 %v1394, %v1497
      %v1499 = vpop.f32.mrf.mxu0
      %v1500 = vadd.f32 %v1396, %v1499
      %1501 = vmatmul.bf16.gmra.mxu0 %v739
      %v1502 = vpop.f32.mrf.mxu0
      %v1503 = vadd.f32 %v1399, %v1502
      %v1504 = vpop.f32.mrf.mxu0
      %v1505 = vadd.f32 %v1401, %v1504
      %1506 = vmatmul.bf16.gmra.mxu0 %v744
      %v1507 = vpop.f32.mrf.mxu0
      %v1508 = vadd.f32 %v1404, %v1507
      %v1509 = vpop.f32.mrf.mxu0
      %v1510 = vadd.f32 %v1406, %v1509
      %1511 = vmatmul.bf16.gmra.mxu0 %v749
      %v1512 = vpop.f32.mrf.mxu0
      %v1513 = vadd.f32 %v1409, %v1512
      %v1514 = vpop.f32.mrf.mxu0
      %v1515 = vadd.f32 %v1411, %v1514
      %1516 = vmatmul.bf16.gmra.mxu0 %v754
      %v1517 = vpop.f32.mrf.mxu0
      %v1518 = vadd.f32 %v1414, %v1517
      %v1519 = vpop.f32.mrf.mxu0
      %v1520 = vadd.f32 %v1416, %v1519
      %1521 = vmatmul.bf16.gmra.mxu0 %v759
      %v1522 = vpop.f32.mrf.mxu0
      %v1523 = vadd.f32 %v1419, %v1522
      %v1524 = vpop.f32.mrf.mxu0
      %v1525 = vadd.f32 %v1421, %v1524
      %1526 = vmatmul.bf16.gmra.mxu0 %v764
      %v1527 = vpop.f32.mrf.mxu0
      %v1528 = vadd.f32 %v1424, %v1527
      %v1529 = vpop.f32.mrf.mxu0
      %v1530 = vadd.f32 %v1426, %v1529
      %1531 = vmatmul.bf16.gmra.mxu0 %v769
      %v1532 = vpop.f32.mrf.mxu0
      %v1533 = vadd.f32 %v1429, %v1532
      %v1534 = vpop.f32.mrf.mxu0
      %v1535 = vadd.f32 %v1431, %v1534
      %1536 = vmatmul.bf16.gmra.mxu0 %v774
      %v1537 = vpop.f32.mrf.mxu0
      %v1538 = vadd.f32 %v1434, %v1537
      %v1539 = vpop.f32.mrf.mxu0
      %v1540 = vadd.f32 %v1436, %v1539
      %1541 = vmatmul.bf16.gmra.mxu0 %v779
      %v1542 = vpop.f32.mrf.mxu0
      %v1543 = vadd.f32 %v1439, %v1542
      %v1544 = vpop.f32.mrf.mxu0
      %v1545 = vadd.f32 %v1441, %v1544
      %1546 = vmatmul.bf16.gmra.mxu0 %v784
      %v1547 = vpop.f32.mrf.mxu0
      %v1548 = vadd.f32 %v1444, %v1547
      %v1549 = vpop.f32.mrf.mxu0
      %v1550 = vadd.f32 %v1446, %v1549
      %1551 = vmatmul.bf16.gmra.mxu0 %v789
      %v1552 = vpop.f32.mrf.mxu0
      %v1553 = vadd.f32 %v1449, %v1552
      %v1554 = vpop.f32.mrf.mxu0
      %v1555 = vadd.f32 %v1451, %v1554
      %1556 = vmatmul.bf16.gmra.mxu0 %v794
      %v1557 = vpop.f32.mrf.mxu0
      %v1558 = vadd.f32 %v1454, %v1557
      %v1559 = vpop.f32.mrf.mxu0
      %v1560 = vadd.f32 %v1456, %v1559
      %1561 = vmatmul.bf16.gmra.mxu0 %v799
      %v1562 = vpop.f32.mrf.mxu0
      %v1563 = vadd.f32 %v1459, %v1562
      %v1564 = vpop.f32.mrf.mxu0
      %v1565 = vadd.f32 %v1461, %v1564
      %1566 = vmatmul.bf16.gmra.mxu0 %v804
      %v1567 = vpop.f32.mrf.mxu0
      %v1568 = vadd.f32 %v1464, %v1567
      %v1569 = vpop.f32.mrf.mxu0
      %v1570 = vadd.f32 %v1466, %v1569
      %1571 = vmatmul.bf16.gmra.mxu0 %v809
      %v1572 = vpop.f32.mrf.mxu0
      %v1573 = vadd.f32 %v1469, %v1572
      %v1574 = vpop.f32.mrf.mxu0
      %v1575 = vadd.f32 %v1471, %v1574
      %1576 = vmatmul.bf16.gmra.mxu0 %v814
      %v1577 = vpop.f32.mrf.mxu0
      %v1578 = vadd.f32 %v1474, %v1577
      %v1579 = vpop.f32.mrf.mxu0
      %v1580 = vadd.f32 %v1476, %v1579
      %1581 = vmatmul.bf16.gmra.mxu0 %v819
      %v1582 = vpop.f32.mrf.mxu0
      %v1583 = vadd.f32 %v1479, %v1582
      %v1584 = vpop.f32.mrf.mxu0
      %v1585 = vadd.f32 %v1481, %v1584
      %1586 = vdwg.mxu0
      %1587 = vmatpush.bf16.msra.mxu0 0
      %1588 = vmatpush.bf16.msra.mxu0 0
      %1589 = vmatpush.bf16.msra.mxu0 0
      %1590 = vmatpush.bf16.msra.mxu0 0
      %1591 = vmatpush.bf16.msra.mxu0 %v1076
      %1592 = vmatpush.bf16.msra.mxu0 %v1075
      %1593 = vmatpush.bf16.msra.mxu0 %v1074
      %1594 = vmatpush.bf16.msra.mxu0 %v1073
      %1595 = vmatmul.bf16.gmra.mxu0 %v1115
      %v1596 = vpop.f32.mrf.mxu0
      %v1597 = vadd.f32 %v1493, %v1596
      %v1598 = vpop.f32.mrf.mxu0
      %v1599 = vadd.f32 %v1495, %v1598
      %1600 = vmatmul.bf16.gmra.mxu0 %v1118
      %v1601 = vpop.f32.mrf.mxu0
      %v1602 = vadd.f32 %v1498, %v1601
      %v1603 = vpop.f32.mrf.mxu0
      %v1604 = vadd.f32 %v1500, %v1603
      %1605 = vmatmul.bf16.gmra.mxu0 %v1121
      %v1606 = vpop.f32.mrf.mxu0
      %v1607 = vadd.f32 %v1503, %v1606
      %v1608 = vpop.f32.mrf.mxu0
      %v1609 = vadd.f32 %v1505, %v1608
      %1610 = vmatmul.bf16.gmra.mxu0 %v1124
      %v1611 = vpop.f32.mrf.mxu0
      %v1612 = vadd.f32 %v1508, %v1611
      %v1613 = vpop.f32.mrf.mxu0
      %v1614 = vadd.f32 %v1510, %v1613
      %1615 = vmatmul.bf16.gmra.mxu0 %v1127
      %v1616 = vpop.f32.mrf.mxu0
      %v1617 = vadd.f32 %v1513, %v1616
      %v1618 = vpop.f32.mrf.mxu0
      %v1619 = vadd.f32 %v1515, %v1618
      %1620 = vmatmul.bf16.gmra.mxu0 %v1130
      %v1621 = vpop.f32.mrf.mxu0
      %v1622 = vadd.f32 %v1518, %v1621
      %v1623 = vpop.f32.mrf.mxu0
      %v1624 = vadd.f32 %v1520, %v1623
      %1625 = vmatmul.bf16.gmra.mxu0 %v1133
      %v1626 = vpop.f32.mrf.mxu0
      %v1627 = vadd.f32 %v1523, %v1626
      %v1628 = vpop.f32.mrf.mxu0
      %v1629 = vadd.f32 %v1525, %v1628
      %1630 = vmatmul.bf16.gmra.mxu0 %v1136
      %v1631 = vpop.f32.mrf.mxu0
      %v1632 = vadd.f32 %v1528, %v1631
      %v1633 = vpop.f32.mrf.mxu0
      %v1634 = vadd.f32 %v1530, %v1633
      %1635 = vmatmul.bf16.gmra.mxu0 %v1139
      %v1636 = vpop.f32.mrf.mxu0
      %v1637 = vadd.f32 %v1533, %v1636
      %v1638 = vpop.f32.mrf.mxu0
      %v1639 = vadd.f32 %v1535, %v1638
      %1640 = vmatmul.bf16.gmra.mxu0 %v1142
      %v1641 = vpop.f32.mrf.mxu0
      %v1642 = vadd.f32 %v1538, %v1641
      %v1643 = vpop.f32.mrf.mxu0
      %v1644 = vadd.f32 %v1540, %v1643
      %1645 = vmatmul.bf16.gmra.mxu0 %v1145
      %v1646 = vpop.f32.mrf.mxu0
      %v1647 = vadd.f32 %v1543, %v1646
      %v1648 = vpop.f32.mrf.mxu0
      %v1649 = vadd.f32 %v1545, %v1648
      %1650 = vmatmul.bf16.gmra.mxu0 %v1148
      %v1651 = vpop.f32.mrf.mxu0
      %v1652 = vadd.f32 %v1548, %v1651
      %v1653 = vpop.f32.mrf.mxu0
      %v1654 = vadd.f32 %v1550, %v1653
      %1655 = vmatmul.bf16.gmra.mxu0 %v1151
      %v1656 = vpop.f32.mrf.mxu0
      %v1657 = vadd.f32 %v1553, %v1656
      %v1658 = vpop.f32.mrf.mxu0
      %v1659 = vadd.f32 %v1555, %v1658
      %1660 = vmatmul.bf16.gmra.mxu0 %v1154
      %v1661 = vpop.f32.mrf.mxu0
      %v1662 = vadd.f32 %v1558, %v1661
      %v1663 = vpop.f32.mrf.mxu0
      %v1664 = vadd.f32 %v1560, %v1663
      %1665 = vmatmul.bf16.gmra.mxu0 %v1157
      %v1666 = vpop.f32.mrf.mxu0
      %v1667 = vadd.f32 %v1563, %v1666
      %v1668 = vpop.f32.mrf.mxu0
      %v1669 = vadd.f32 %v1565, %v1668
      %1670 = vmatmul.bf16.gmra.mxu0 %v1160
      %v1671 = vpop.f32.mrf.mxu0
      %v1672 = vadd.f32 %v1568, %v1671
      %v1673 = vpop.f32.mrf.mxu0
      %v1674 = vadd.f32 %v1570, %v1673
      %1675 = vmatmul.bf16.gmra.mxu0 %v1163
      %v1676 = vpop.f32.mrf.mxu0
      %v1677 = vadd.f32 %v1573, %v1676
      %v1678 = vpop.f32.mrf.mxu0
      %v1679 = vadd.f32 %v1575, %v1678
      %1680 = vmatmul.bf16.gmra.mxu0 %v1166
      %v1681 = vpop.f32.mrf.mxu0
      %v1682 = vadd.f32 %v1578, %v1681
      %v1683 = vpop.f32.mrf.mxu0
      %v1684 = vadd.f32 %v1580, %v1683
      %1685 = vmatmul.bf16.gmra.mxu0 %v1169
      %v1686 = vpop.f32.mrf.mxu0
      %v1687 = vadd.f32 %v1583, %v1686
      %v1688 = vpop.f32.mrf.mxu0
      %v1689 = vadd.f32 %v1585, %v1688
      %1690 = vdwg.mxu0
      %vm1691 = vcmp.ge.f32.partialorder %v1597, 0.0
      %vm1692 = vcmp.ge.f32.partialorder %v1599, 0.0
      %vm1693 = vcmp.ge.f32.partialorder %v1602, 0.0
      %vm1694 = vcmp.ge.f32.partialorder %v1604, 0.0
      %vm1695 = vcmp.ge.f32.partialorder %v1607, 0.0
      %vm1696 = vcmp.ge.f32.partialorder %v1609, 0.0
      %vm1697 = vcmp.ge.f32.partialorder %v1612, 0.0
      %vm1698 = vcmp.ge.f32.partialorder %v1614, 0.0
      %vm1699 = vcmp.ge.f32.partialorder %v1617, 0.0
      %vm1700 = vcmp.ge.f32.partialorder %v1619, 0.0
      %vm1701 = vcmp.ge.f32.partialorder %v1622, 0.0
      %vm1702 = vcmp.ge.f32.partialorder %v1624, 0.0
      %vm1703 = vcmp.ge.f32.partialorder %v1627, 0.0
      %vm1704 = vcmp.ge.f32.partialorder %v1629, 0.0
      %vm1705 = vcmp.ge.f32.partialorder %v1632, 0.0
      %vm1706 = vcmp.ge.f32.partialorder %v1634, 0.0
      %vm1707 = vcmp.ge.f32.partialorder %v1637, 0.0
      %vm1708 = vcmp.ge.f32.partialorder %v1639, 0.0
      %vm1709 = vcmp.ge.f32.partialorder %v1642, 0.0
      %vm1710 = vcmp.ge.f32.partialorder %v1644, 0.0
      %vm1711 = vcmp.ge.f32.partialorder %v1647, 0.0
      %vm1712 = vcmp.ge.f32.partialorder %v1649, 0.0
      %vm1713 = vcmp.ge.f32.partialorder %v1652, 0.0
      %vm1714 = vcmp.ge.f32.partialorder %v1654, 0.0
      %vm1715 = vcmp.ge.f32.partialorder %v1657, 0.0
      %vm1716 = vcmp.ge.f32.partialorder %v1659, 0.0
      %vm1717 = vcmp.ge.f32.partialorder %v1662, 0.0
      %vm1718 = vcmp.ge.f32.partialorder %v1664, 0.0
      %vm1719 = vcmp.ge.f32.partialorder %v1667, 0.0
      %vm1720 = vcmp.ge.f32.partialorder %v1669, 0.0
      %vm1721 = vcmp.ge.f32.partialorder %v1672, 0.0
      %vm1722 = vcmp.ge.f32.partialorder %v1674, 0.0
      %vm1723 = vcmp.ge.f32.partialorder %v1677, 0.0
      %vm1724 = vcmp.ge.f32.partialorder %v1679, 0.0
      %vm1725 = vcmp.ge.f32.partialorder %v1682, 0.0
      %vm1726 = vcmp.ge.f32.partialorder %v1684, 0.0
      %vm1727 = vcmp.ge.f32.partialorder %v1687, 0.0
      %vm1728 = vcmp.ge.f32.partialorder %v1689, 0.0
      %v1729 = vmul.f32 %v1597, 0.1
      %v1730 = vmul.f32 %v1599, 0.1
      %v1731 = vmul.f32 %v1602, 0.1
      %v1732 = vmul.f32 %v1604, 0.1
      %v1733 = vmul.f32 %v1607, 0.1
      %v1734 = vmul.f32 %v1609, 0.1
      %v1735 = vmul.f32 %v1612, 0.1
      %v1736 = vmul.f32 %v1614, 0.1
      %v1737 = vmul.f32 %v1617, 0.1
      %v1738 = vmul.f32 %v1619, 0.1
      %v1739 = vmul.f32 %v1622, 0.1
      %v1740 = vmul.f32 %v1624, 0.1
      %v1741 = vmul.f32 %v1627, 0.1
      %v1742 = vmul.f32 %v1629, 0.1
      %v1743 = vmul.f32 %v1632, 0.1
      %v1744 = vmul.f32 %v1634, 0.1
      %v1745 = vmul.f32 %v1637, 0.1
      %v1746 = vmul.f32 %v1639, 0.1
      %v1747 = vmul.f32 %v1642, 0.1
      %v1748 = vmul.f32 %v1644, 0.1
      %v1749 = vmul.f32 %v1647, 0.1
      %v1750 = vmul.f32 %v1649, 0.1
      %v1751 = vmul.f32 %v1652, 0.1
      %v1752 = vmul.f32 %v1654, 0.1
      %v1753 = vmul.f32 %v1657, 0.1
      %v1754 = vmul.f32 %v1659, 0.1
      %v1755 = vmul.f32 %v1662, 0.1
      %v1756 = vmul.f32 %v1664, 0.1
      %v1757 = vmul.f32 %v1667, 0.1
      %v1758 = vmul.f32 %v1669, 0.1
      %v1759 = vmul.f32 %v1672, 0.1
      %v1760 = vmul.f32 %v1674, 0.1
      %v1761 = vmul.f32 %v1677, 0.1
      %v1762 = vmul.f32 %v1679, 0.1
      %v1763 = vmul.f32 %v1682, 0.1
      %v1764 = vmul.f32 %v1684, 0.1
      %v1765 = vmul.f32 %v1687, 0.1
      %v1766 = vmul.f32 %v1689, 0.1
      %v1767 = vsel %vm1691, %v1597, %v1729
      %v1768 = vsel %vm1692, %v1599, %v1730
      %v1769 = vsel %vm1693, %v1602, %v1731
      %v1770 = vsel %vm1694, %v1604, %v1732
      %v1771 = vsel %vm1695, %v1607, %v1733
      %v1772 = vsel %vm1696, %v1609, %v1734
      %v1773 = vsel %vm1697, %v1612, %v1735
      %v1774 = vsel %vm1698, %v1614, %v1736
      %v1775 = vsel %vm1699, %v1617, %v1737
      %v1776 = vsel %vm1700, %v1619, %v1738
      %v1777 = vsel %vm1701, %v1622, %v1739
      %v1778 = vsel %vm1702, %v1624, %v1740
      %v1779 = vsel %vm1703, %v1627, %v1741
      %v1780 = vsel %vm1704, %v1629, %v1742
      %v1781 = vsel %vm1705, %v1632, %v1743
      %v1782 = vsel %vm1706, %v1634, %v1744
      %v1783 = vsel %vm1707, %v1637, %v1745
      %v1784 = vsel %vm1708, %v1639, %v1746
      %v1785 = vsel %vm1709, %v1642, %v1747
      %v1786 = vsel %vm1710, %v1644, %v1748
      %v1787 = vsel %vm1711, %v1647, %v1749
      %v1788 = vsel %vm1712, %v1649, %v1750
      %v1789 = vsel %vm1713, %v1652, %v1751
      %v1790 = vsel %vm1714, %v1654, %v1752
      %v1791 = vsel %vm1715, %v1657, %v1753
      %v1792 = vsel %vm1716, %v1659, %v1754
      %v1793 = vsel %vm1717, %v1662, %v1755
      %v1794 = vsel %vm1718, %v1664, %v1756
      %v1795 = vsel %vm1719, %v1667, %v1757
      %v1796 = vsel %vm1720, %v1669, %v1758
      %v1797 = vsel %vm1721, %v1672, %v1759
      %v1798 = vsel %vm1722, %v1674, %v1760
      %v1799 = vsel %vm1723, %v1677, %v1761
      %v1800 = vsel %vm1724, %v1679, %v1762
      %v1801 = vsel %vm1725, %v1682, %v1763
      %v1802 = vsel %vm1726, %v1684, %v1764
      %v1803 = vsel %vm1727, %v1687, %v1765
      %v1804 = vsel %vm1728, %v1689, %v1766
      %v1805 = vpack.c.bf16 %v1768, %v1767
      %v1806 = vpack.c.bf16 %v1770, %v1769
      %v1807 = vpack.c.bf16 %v1772, %v1771
      %v1808 = vpack.c.bf16 %v1774, %v1773
      %v1809 = vpack.c.bf16 %v1776, %v1775
      %v1810 = vpack.c.bf16 %v1778, %v1777
      %v1811 = vpack.c.bf16 %v1780, %v1779
      %v1812 = vpack.c.bf16 %v1782, %v1781
      %v1813 = vpack.c.bf16 %v1784, %v1783
      %v1814 = vpack.c.bf16 %v1786, %v1785
      %v1815 = vpack.c.bf16 %v1788, %v1787
      %v1816 = vpack.c.bf16 %v1790, %v1789
      %v1817 = vpack.c.bf16 %v1792, %v1791
      %v1818 = vpack.c.bf16 %v1794, %v1793
      %v1819 = vpack.c.bf16 %v1796, %v1795
      %v1820 = vpack.c.bf16 %v1798, %v1797
      %v1821 = vpack.c.bf16 %v1800, %v1799
      %v1822 = vpack.c.bf16 %v1802, %v1801
      %v1823 = vpack.c.bf16 %v1804, %v1803
      %v1824 = vld [vmem:[%s3] sm:$0xf]
      %v1825 = vld [vmem:[%s3 + $0x4] sm:$0xf]
      %v1826 = vld [vmem:[%s3 + $0x8] sm:$0xf]
      %v1827 = vld [vmem:[%s3 + $0xc] sm:$0xf]
      %v1828 = vld [vmem:[%s3 + $0x10] sm:$0xf]
      %v1829 = vld [vmem:[%s3 + $0x14] sm:$0xf]
      %v1830 = vld [vmem:[%s3 + $0x18] sm:$0xf]
      %v1831 = vld [vmem:[%s3 + $0x1c] sm:$0xf]
      %v1832 = vld [vmem:[%s4] sm:$0x1]
      %v1834 = vperm.slane %v1832, 0
      %v1844 = vunpack.c.l.b16 %v1824
      %v1845 = vunpack.c.l.b16 %v1825
      %v1846 = vunpack.c.l.b16 %v1826
      %v1847 = vunpack.c.l.b16 %v1827
      %v1848 = vunpack.c.l.b16 %v1828
      %v1849 = vunpack.c.l.b16 %v1829
      %v1850 = vunpack.c.l.b16 %v1830
      %v1851 = vunpack.c.l.b16 %v1831
      %v1852 = vpack.c.b16 %v1845, %v1844
      %v1853 = vpack.c.b16 %v1847, %v1846
      %v1854 = vpack.c.b16 %v1849, %v1848
      %v1855 = vpack.c.b16 %v1851, %v1850
      %v1861 = vsel %vm1113, %v1805, 0
      %v1864 = vsel %vm1113, %v1806, 0
      %v1867 = vsel %vm1113, %v1807, 0
      %v1870 = vsel %vm1113, %v1808, 0
      %v1873 = vsel %vm1113, %v1809, 0
      %v1876 = vsel %vm1113, %v1810, 0
      %v1879 = vsel %vm1113, %v1811, 0
      %v1882 = vsel %vm1113, %v1812, 0
      %v1885 = vsel %vm1113, %v1813, 0
      %v1888 = vsel %vm1113, %v1814, 0
      %v1891 = vsel %vm1113, %v1815, 0
      %v1894 = vsel %vm1113, %v1816, 0
      %v1897 = vsel %vm1113, %v1817, 0
      %v1900 = vsel %vm1113, %v1818, 0
      %v1903 = vsel %vm1113, %v1819, 0
      %v1906 = vsel %vm1113, %v1820, 0
      %v1909 = vsel %vm1113, %v1821, 0
      %v1912 = vsel %vm1113, %v1822, 0
      %v1915 = vsel %vm1113, %v1823, 0
      %1917 = vmatpush.bf16.msra.mxu0 0
      %1918 = vmatpush.bf16.msra.mxu0 0
      %1919 = vmatpush.bf16.msra.mxu0 0
      %1920 = vmatpush.bf16.msra.mxu0 0
      %1921 = vmatpush.bf16.msra.mxu0 %v1855
      %1922 = vmatpush.bf16.msra.mxu0 %v1854
      %1923 = vmatpush.bf16.msra.mxu0 %v1853
      %1924 = vmatpush.bf16.msra.mxu0 %v1852
      %1925 = vmatmul.bf16.gmra.mxu0 %v1861
      %v1926 = vpop.f32.mrf.mxu0
      %v1927 = vadd.f32 %v1834, %v1926
      %v1928 = vpop.f32.mrf.mxu0
      %v1929 = vadd.f32 %v1834, %v1928
      %1930 = vmatmul.bf16.gmra.mxu0 %v1864
      %v1931 = vpop.f32.mrf.mxu0
      %v1932 = vadd.f32 %v1834, %v1931
      %v1933 = vpop.f32.mrf.mxu0
      %v1934 = vadd.f32 %v1834, %v1933
      %1935 = vmatmul.bf16.gmra.mxu0 %v1867
      %v1936 = vpop.f32.mrf.mxu0
      %v1937 = vadd.f32 %v1834, %v1936
      %v1938 = vpop.f32.mrf.mxu0
      %v1939 = vadd.f32 %v1834, %v1938
      %1940 = vmatmul.bf16.gmra.mxu0 %v1870
      %v1941 = vpop.f32.mrf.mxu0
      %v1942 = vadd.f32 %v1834, %v1941
      %v1943 = vpop.f32.mrf.mxu0
      %v1944 = vadd.f32 %v1834, %v1943
      %1945 = vmatmul.bf16.gmra.mxu0 %v1873
      %v1946 = vpop.f32.mrf.mxu0
      %v1947 = vadd.f32 %v1834, %v1946
      %v1948 = vpop.f32.mrf.mxu0
      %v1949 = vadd.f32 %v1834, %v1948
      %1950 = vmatmul.bf16.gmra.mxu0 %v1876
      %v1951 = vpop.f32.mrf.mxu0
      %v1952 = vadd.f32 %v1834, %v1951
      %v1953 = vpop.f32.mrf.mxu0
      %v1954 = vadd.f32 %v1834, %v1953
      %1955 = vmatmul.bf16.gmra.mxu0 %v1879
      %v1956 = vpop.f32.mrf.mxu0
      %v1957 = vadd.f32 %v1834, %v1956
      %v1958 = vpop.f32.mrf.mxu0
      %v1959 = vadd.f32 %v1834, %v1958
      %1960 = vmatmul.bf16.gmra.mxu0 %v1882
      %v1961 = vpop.f32.mrf.mxu0
      %v1962 = vadd.f32 %v1834, %v1961
      %v1963 = vpop.f32.mrf.mxu0
      %v1964 = vadd.f32 %v1834, %v1963
      %1965 = vmatmul.bf16.gmra.mxu0 %v1885
      %v1966 = vpop.f32.mrf.mxu0
      %v1967 = vadd.f32 %v1834, %v1966
      %v1968 = vpop.f32.mrf.mxu0
      %v1969 = vadd.f32 %v1834, %v1968
      %1970 = vmatmul.bf16.gmra.mxu0 %v1888
      %v1971 = vpop.f32.mrf.mxu0
      %v1972 = vadd.f32 %v1834, %v1971
      %v1973 = vpop.f32.mrf.mxu0
      %v1974 = vadd.f32 %v1834, %v1973
      %1975 = vmatmul.bf16.gmra.mxu0 %v1891
      %v1976 = vpop.f32.mrf.mxu0
      %v1977 = vadd.f32 %v1834, %v1976
      %v1978 = vpop.f32.mrf.mxu0
      %v1979 = vadd.f32 %v1834, %v1978
      %1980 = vmatmul.bf16.gmra.mxu0 %v1894
      %v1981 = vpop.f32.mrf.mxu0
      %v1982 = vadd.f32 %v1834, %v1981
      %v1983 = vpop.f32.mrf.mxu0
      %v1984 = vadd.f32 %v1834, %v1983
      %1985 = vmatmul.bf16.gmra.mxu0 %v1897
      %v1986 = vpop.f32.mrf.mxu0
      %v1987 = vadd.f32 %v1834, %v1986
      %v1988 = vpop.f32.mrf.mxu0
      %v1989 = vadd.f32 %v1834, %v1988
      %1990 = vmatmul.bf16.gmra.mxu0 %v1900
      %v1991 = vpop.f32.mrf.mxu0
      %v1992 = vadd.f32 %v1834, %v1991
      %v1993 = vpop.f32.mrf.mxu0
      %v1994 = vadd.f32 %v1834, %v1993
      %1995 = vmatmul.bf16.gmra.mxu0 %v1903
      %v1996 = vpop.f32.mrf.mxu0
      %v1997 = vadd.f32 %v1834, %v1996
      %v1998 = vpop.f32.mrf.mxu0
      %v1999 = vadd.f32 %v1834, %v1998
      %2000 = vmatmul.bf16.gmra.mxu0 %v1906
      %v2001 = vpop.f32.mrf.mxu0
      %v2002 = vadd.f32 %v1834, %v2001
      %v2003 = vpop.f32.mrf.mxu0
      %v2004 = vadd.f32 %v1834, %v2003
      %2005 = vmatmul.bf16.gmra.mxu0 %v1909
      %v2006 = vpop.f32.mrf.mxu0
      %v2007 = vadd.f32 %v1834, %v2006
      %v2008 = vpop.f32.mrf.mxu0
      %v2009 = vadd.f32 %v1834, %v2008
      %2010 = vmatmul.bf16.gmra.mxu0 %v1912
      %v2011 = vpop.f32.mrf.mxu0
      %v2012 = vadd.f32 %v1834, %v2011
      %v2013 = vpop.f32.mrf.mxu0
      %v2014 = vadd.f32 %v1834, %v2013
      %2015 = vmatmul.bf16.gmra.mxu0 %v1915
      %v2016 = vpop.f32.mrf.mxu0
      %v2017 = vadd.f32 %v1834, %v2016
      %v2018 = vpop.f32.mrf.mxu0
      %v2019 = vadd.f32 %v1834, %v2018
      %2020 = vdwg.mxu0
      %vm2021 = vcmp.ge.f32.partialorder %v1927, 0.0
      %vm2022 = vcmp.ge.f32.partialorder %v1929, 0.0
      %vm2023 = vcmp.ge.f32.partialorder %v1932, 0.0
      %vm2024 = vcmp.ge.f32.partialorder %v1934, 0.0
      %vm2025 = vcmp.ge.f32.partialorder %v1937, 0.0
      %vm2026 = vcmp.ge.f32.partialorder %v1939, 0.0
      %vm2027 = vcmp.ge.f32.partialorder %v1942, 0.0
      %vm2028 = vcmp.ge.f32.partialorder %v1944, 0.0
      %vm2029 = vcmp.ge.f32.partialorder %v1947, 0.0
      %vm2030 = vcmp.ge.f32.partialorder %v1949, 0.0
      %vm2031 = vcmp.ge.f32.partialorder %v1952, 0.0
      %vm2032 = vcmp.ge.f32.partialorder %v1954, 0.0
      %vm2033 = vcmp.ge.f32.partialorder %v1957, 0.0
      %vm2034 = vcmp.ge.f32.partialorder %v1959, 0.0
      %vm2035 = vcmp.ge.f32.partialorder %v1962, 0.0
      %vm2036 = vcmp.ge.f32.partialorder %v1964, 0.0
      %vm2037 = vcmp.ge.f32.partialorder %v1967, 0.0
      %vm2038 = vcmp.ge.f32.partialorder %v1969, 0.0
      %vm2039 = vcmp.ge.f32.partialorder %v1972, 0.0
      %vm2040 = vcmp.ge.f32.partialorder %v1974, 0.0
      %vm2041 = vcmp.ge.f32.partialorder %v1977, 0.0
      %vm2042 = vcmp.ge.f32.partialorder %v1979, 0.0
      %vm2043 = vcmp.ge.f32.partialorder %v1982, 0.0
      %vm2044 = vcmp.ge.f32.partialorder %v1984, 0.0
      %vm2045 = vcmp.ge.f32.partialorder %v1987, 0.0
      %vm2046 = vcmp.ge.f32.partialorder %v1989, 0.0
      %vm2047 = vcmp.ge.f32.partialorder %v1992, 0.0
      %vm2048 = vcmp.ge.f32.partialorder %v1994, 0.0
      %vm2049 = vcmp.ge.f32.partialorder %v1997, 0.0
      %vm2050 = vcmp.ge.f32.partialorder %v1999, 0.0
      %vm2051 = vcmp.ge.f32.partialorder %v2002, 0.0
      %vm2052 = vcmp.ge.f32.partialorder %v2004, 0.0
      %vm2053 = vcmp.ge.f32.partialorder %v2007, 0.0
      %vm2054 = vcmp.ge.f32.partialorder %v2009, 0.0
      %vm2055 = vcmp.ge.f32.partialorder %v2012, 0.0
      %vm2056 = vcmp.ge.f32.partialorder %v2014, 0.0
      %vm2057 = vcmp.ge.f32.partialorder %v2017, 0.0
      %vm2058 = vcmp.ge.f32.partialorder %v2019, 0.0
      %v2059 = vmul.f32 %v1927, 0.1
      %v2060 = vmul.f32 %v1929, 0.1
      %v2061 = vmul.f32 %v1932, 0.1
      %v2062 = vmul.f32 %v1934, 0.1
      %v2063 = vmul.f32 %v1937, 0.1
      %v2064 = vmul.f32 %v1939, 0.1
      %v2065 = vmul.f32 %v1942, 0.1
      %v2066 = vmul.f32 %v1944, 0.1
      %v2067 = vmul.f32 %v1947, 0.1
      %v2068 = vmul.f32 %v1949, 0.1
      %v2069 = vmul.f32 %v1952, 0.1
      %v2070 = vmul.f32 %v1954, 0.1
      %v2071 = vmul.f32 %v1957, 0.1
      %v2072 = vmul.f32 %v1959, 0.1
      %v2073 = vmul.f32 %v1962, 0.1
      %v2074 = vmul.f32 %v1964, 0.1
      %v2075 = vmul.f32 %v1967, 0.1
      %v2076 = vmul.f32 %v1969, 0.1
      %v2077 = vmul.f32 %v1972, 0.1
      %v2078 = vmul.f32 %v1974, 0.1
      %v2079 = vmul.f32 %v1977, 0.1
      %v2080 = vmul.f32 %v1979, 0.1
      %v2081 = vmul.f32 %v1982, 0.1
      %v2082 = vmul.f32 %v1984, 0.1
      %v2083 = vmul.f32 %v1987, 0.1
      %v2084 = vmul.f32 %v1989, 0.1
      %v2085 = vmul.f32 %v1992, 0.1
      %v2086 = vmul.f32 %v1994, 0.1
      %v2087 = vmul.f32 %v1997, 0.1
      %v2088 = vmul.f32 %v1999, 0.1
      %v2089 = vmul.f32 %v2002, 0.1
      %v2090 = vmul.f32 %v2004, 0.1
      %v2091 = vmul.f32 %v2007, 0.1
      %v2092 = vmul.f32 %v2009, 0.1
      %v2093 = vmul.f32 %v2012, 0.1
      %v2094 = vmul.f32 %v2014, 0.1
      %v2095 = vmul.f32 %v2017, 0.1
      %v2096 = vmul.f32 %v2019, 0.1
      %v2097 = vsel %vm2021, %v1927, %v2059
      %v2098 = vsel %vm2022, %v1929, %v2060
      %v2099 = vsel %vm2023, %v1932, %v2061
      %v2100 = vsel %vm2024, %v1934, %v2062
      %v2101 = vsel %vm2025, %v1937, %v2063
      %v2102 = vsel %vm2026, %v1939, %v2064
      %v2103 = vsel %vm2027, %v1942, %v2065
      %v2104 = vsel %vm2028, %v1944, %v2066
      %v2105 = vsel %vm2029, %v1947, %v2067
      %v2106 = vsel %vm2030, %v1949, %v2068
      %v2107 = vsel %vm2031, %v1952, %v2069
      %v2108 = vsel %vm2032, %v1954, %v2070
      %v2109 = vsel %vm2033, %v1957, %v2071
      %v2110 = vsel %vm2034, %v1959, %v2072
      %v2111 = vsel %vm2035, %v1962, %v2073
      %v2112 = vsel %vm2036, %v1964, %v2074
      %v2113 = vsel %vm2037, %v1967, %v2075
      %v2114 = vsel %vm2038, %v1969, %v2076
      %v2115 = vsel %vm2039, %v1972, %v2077
      %v2116 = vsel %vm2040, %v1974, %v2078
      %v2117 = vsel %vm2041, %v1977, %v2079
      %v2118 = vsel %vm2042, %v1979, %v2080
      %v2119 = vsel %vm2043, %v1982, %v2081
      %v2120 = vsel %vm2044, %v1984, %v2082
      %v2121 = vsel %vm2045, %v1987, %v2083
      %v2122 = vsel %vm2046, %v1989, %v2084
      %v2123 = vsel %vm2047, %v1992, %v2085
      %v2124 = vsel %vm2048, %v1994, %v2086
      %v2125 = vsel %vm2049, %v1997, %v2087
      %v2126 = vsel %vm2050, %v1999, %v2088
      %v2127 = vsel %vm2051, %v2002, %v2089
      %v2128 = vsel %vm2052, %v2004, %v2090
      %v2129 = vsel %vm2053, %v2007, %v2091
      %v2130 = vsel %vm2054, %v2009, %v2092
      %v2131 = vsel %vm2055, %v2012, %v2093
      %v2132 = vsel %vm2056, %v2014, %v2094
      %v2133 = vsel %vm2057, %v2017, %v2095
      %v2134 = vsel %vm2058, %v2019, %v2096
      %v2135 = vpack.c.bf16 %v2097, %v2097
      %v2136 = vpack.c.bf16 %v2098, %v2098
      %v2137 = vpack.c.bf16 %v2099, %v2099
      %v2138 = vpack.c.bf16 %v2100, %v2100
      %v2139 = vpack.c.bf16 %v2101, %v2101
      %v2140 = vpack.c.bf16 %v2102, %v2102
      %v2141 = vpack.c.bf16 %v2103, %v2103
      %v2142 = vpack.c.bf16 %v2104, %v2104
      %v2143 = vpack.c.bf16 %v2105, %v2105
      %v2144 = vpack.c.bf16 %v2106, %v2106
      %v2145 = vpack.c.bf16 %v2107, %v2107
      %v2146 = vpack.c.bf16 %v2108, %v2108
      %v2147 = vpack.c.bf16 %v2109, %v2109
      %v2148 = vpack.c.bf16 %v2110, %v2110
      %v2149 = vpack.c.bf16 %v2111, %v2111
      %v2150 = vpack.c.bf16 %v2112, %v2112
      %v2151 = vpack.c.bf16 %v2113, %v2113
      %v2152 = vpack.c.bf16 %v2114, %v2114
      %v2153 = vpack.c.bf16 %v2115, %v2115
      %v2154 = vpack.c.bf16 %v2116, %v2116
      %v2155 = vpack.c.bf16 %v2117, %v2117
      %v2156 = vpack.c.bf16 %v2118, %v2118
      %v2157 = vpack.c.bf16 %v2119, %v2119
      %v2158 = vpack.c.bf16 %v2120, %v2120
      %v2159 = vpack.c.bf16 %v2121, %v2121
      %v2160 = vpack.c.bf16 %v2122, %v2122
      %v2161 = vpack.c.bf16 %v2123, %v2123
      %v2162 = vpack.c.bf16 %v2124, %v2124
      %v2163 = vpack.c.bf16 %v2125, %v2125
      %v2164 = vpack.c.bf16 %v2126, %v2126
      %v2165 = vpack.c.bf16 %v2127, %v2127
      %v2166 = vpack.c.bf16 %v2128, %v2128
      %v2167 = vpack.c.bf16 %v2129, %v2129
      %v2168 = vpack.c.bf16 %v2130, %v2130
      %v2169 = vpack.c.bf16 %v2131, %v2131
      %v2170 = vpack.c.bf16 %v2132, %v2132
      %v2171 = vpack.c.bf16 %v2133, %v2133
      %v2172 = vpack.c.bf16 %v2134, %v2134
      %vm2173 = vcmask 125952
      %2174 = vst.msk [vmem:[%s229] sm:$0xf] %vm2173, %v2135
      %2175 = vst.msk [vmem:[%s229 + $0x4] sm:$0xf] %vm2173, %v2136
      %2176 = vst.msk [vmem:[%s229 + $0x8] sm:$0xf] %vm2173, %v2137
      %2177 = vst.msk [vmem:[%s229 + $0xc] sm:$0xf] %vm2173, %v2138
      %2178 = vst.msk [vmem:[%s229 + $0x10] sm:$0xf] %vm2173, %v2139
      %2179 = vst.msk [vmem:[%s229 + $0x14] sm:$0xf] %vm2173, %v2140
      %2180 = vst.msk [vmem:[%s229 + $0x18] sm:$0xf] %vm2173, %v2141
      %2181 = vst.msk [vmem:[%s229 + $0x1c] sm:$0xf] %vm2173, %v2142
      %2182 = vst.msk [vmem:[%s229 + $0x20] sm:$0xf] %vm2173, %v2143
      %2183 = vst.msk [vmem:[%s229 + $0x24] sm:$0xf] %vm2173, %v2144
      %2184 = vst.msk [vmem:[%s229 + $0x28] sm:$0xf] %vm2173, %v2145
      %2185 = vst.msk [vmem:[%s229 + $0x2c] sm:$0xf] %vm2173, %v2146
      %2186 = vst.msk [vmem:[%s229 + $0x30] sm:$0xf] %vm2173, %v2147
      %2187 = vst.msk [vmem:[%s229 + $0x34] sm:$0xf] %vm2173, %v2148
      %2188 = vst.msk [vmem:[%s229 + $0x38] sm:$0xf] %vm2173, %v2149
      %2189 = vst.msk [vmem:[%s229 + $0x3c] sm:$0xf] %vm2173, %v2150
      %2190 = vst.msk [vmem:[%s229 + $0x40] sm:$0xf] %vm2173, %v2151
      %2191 = vst.msk [vmem:[%s229 + $0x44] sm:$0xf] %vm2173, %v2152
      %2192 = vst.msk [vmem:[%s229 + $0x48] sm:$0xf] %vm2173, %v2153
      %2193 = vst.msk [vmem:[%s229 + $0x4c] sm:$0xf] %vm2173, %v2154
      %2194 = vst.msk [vmem:[%s229 + $0x50] sm:$0xf] %vm2173, %v2155
      %2195 = vst.msk [vmem:[%s229 + $0x54] sm:$0xf] %vm2173, %v2156
      %2196 = vst.msk [vmem:[%s229 + $0x58] sm:$0xf] %vm2173, %v2157
      %2197 = vst.msk [vmem:[%s229 + $0x5c] sm:$0xf] %vm2173, %v2158
      %2198 = vst.msk [vmem:[%s229 + $0x60] sm:$0xf] %vm2173, %v2159
      %2199 = vst.msk [vmem:[%s229 + $0x64] sm:$0xf] %vm2173, %v2160
      %2200 = vst.msk [vmem:[%s229 + $0x68] sm:$0xf] %vm2173, %v2161
      %2201 = vst.msk [vmem:[%s229 + $0x6c] sm:$0xf] %vm2173, %v2162
      %2202 = vst.msk [vmem:[%s229 + $0x70] sm:$0xf] %vm2173, %v2163
      %2203 = vst.msk [vmem:[%s229 + $0x74] sm:$0xf] %vm2173, %v2164
      %2204 = vst.msk [vmem:[%s229 + $0x78] sm:$0xf] %vm2173, %v2165
      %2205 = vst.msk [vmem:[%s229 + $0x7c] sm:$0xf] %vm2173, %v2166
      %2206 = vst.msk [vmem:[%s229 + $0x80] sm:$0xf] %vm2173, %v2167
      %2207 = vst.msk [vmem:[%s229 + $0x84] sm:$0xf] %vm2173, %v2168
      %2208 = vst.msk [vmem:[%s229 + $0x88] sm:$0xf] %vm2173, %v2169
      %2209 = vst.msk [vmem:[%s229 + $0x8c] sm:$0xf] %vm2173, %v2170
      %2210 = vst.msk [vmem:[%s229 + $0x90] sm:$0xf] %vm2173, %v2171
      %2211 = vst.msk [vmem:[%s229 + $0x94] sm:$0xf] %vm2173, %v2172
      %s2212 = smul.u32 38, %s16
      %p2213 = scmp.lt.s32.totalorder %s2212, 75
      %s2214 = scalar_select %p2213, %s2212, 75
      %s2215 = smul.addr %s2214, 4
      %s2216 = scalar_lea.vmem %s5, %s2215
      // Predicated region
      $region41: #{lite_face_forward.12} parent=39 // pred_check
        %p2217 = pneg %p144
      $region42: #{lite_face_forward.12} parent=39 // pred_check_branch
        %2219 = sbr.rel (%p2217) target = $region44
      $region43: #{lite_face_forward.12} parent=39 // pred_region
        %s2220 = smul.u32 38, %s16
      $region44: #{lite_face_forward.12} parent=39 // pred_fallthru
        _
    $region40: #{lite_face_forward.12} parent=5 // pred_fallthru
      _
    %p2221 = scmp.le.s32.totalorder 2, %s11
    // Predicated region
    $region45: #{lite_face_forward.12} parent=5 // pred_check
      %p2222 = pneg %p2221
    $region46: #{lite_face_forward.12} parent=5 // pred_check_branch
      %2224 = sbr.rel (%p2222) target = $region48
    $region47: #{lite_face_forward.12} parent=5 // pred_region
      %s2225 = ssub.s32 %s11, 2
      // Predicated region
      $region49: #{lite_face_forward.12} parent=47 // pred_check
        %p2226 = pneg %p150
      $region50: #{lite_face_forward.12} parent=47 // pred_check_branch
        %2228 = sbr.rel (%p2226) target = $region52
      $region51: #{lite_face_forward.12} parent=47 // pred_region
        %s2229 = smul.u32 38, %s17
        %p2230 = scmp.lt.s32.totalorder %s2229, 75
        %s2231 = scalar_select %p2230, %s2229, 75
        %s2232 = smul.addr %s2231, 4
        %s2233 = scalar_lea.vmem %s5, %s2232
      $region52: #{lite_face_forward.12} parent=47 // pred_fallthru
        _
    $region48: #{lite_face_forward.12} parent=5 // pred_fallthru
      _
  $region6: #{lite_face_forward.12} parent=0 // loop_footer
    %s15 = sadd.s32 1, %s11
  $region7: #{lite_face_forward.12} parent=0 // loop_footer_branch
    %10 = sbr.rel target = $region3
  $region8: #{lite_face_forward.12} parent=0 // loop_exit
    _

// kernel: lite_face_forward.13
$region0: #{lite_face_forward.13}
  #allocation0 [shape = 'u32[]', space=smem, size = 0x4, offset = 0x4, fixed_abs, tag = 'smem constant byte address 0x4 - core index']
  #allocation1 [shape = 'u32[72,128]{1,0:T(1,128)}', space=vmem, size = 0x9000, scoped, tag = 'internal scratch']
  %s0 = inlined_call_operand.vmem [shape: bf16[128,16], index: 0, kind: input, shape index: {}]
  %s1 = inlined_call_operand.vmem [shape: bf16[128,16], index: 1, kind: input, shape index: {}]
  %s2 = inlined_call_operand.vmem [shape: bf16[128,16], index: 2, kind: input, shape index: {}]
  %s3 = inlined_call_operand.vmem [shape: bf16[128,16], index: 3, kind: input, shape index: {}]
  %s4 = inlined_call_operand.vmem [shape: bf16[128,16], index: 4, kind: output, shape index: {}]
  %s5 = sld [smem:[#allocation0]]
  $region26: #{lite_face_forward.13} parent=0
    _
  %s7 = ssub.s32 1, %s5
  %s8 = scalar_select 0, %s7, %s5
  // Predicated region
  $region2: #{lite_face_forward.13} parent=0 // pred_check
    _
  $region3: #{lite_face_forward.13} parent=0 // pred_check_branch
    %10 = sbr.rel (0) target = $region5
  $region4: #{lite_face_forward.13} parent=0 // pred_region
    _
  $region5: #{lite_face_forward.13} parent=0 // pred_fallthru
    _
  // Predicated region
  $region6: #{lite_face_forward.13} parent=0 // pred_check
    _
  $region7: #{lite_face_forward.13} parent=0 // pred_check_branch
    %12 = sbr.rel (0) target = $region9
  $region8: #{lite_face_forward.13} parent=0 // pred_region
    _
  $region9: #{lite_face_forward.13} parent=0 // pred_fallthru
    _
  // Predicated region
  $region10: #{lite_face_forward.13} parent=0 // pred_check
    _
  $region11: #{lite_face_forward.13} parent=0 // pred_check_branch
    %14 = sbr.rel (0) target = $region13
  $region12: #{lite_face_forward.13} parent=0 // pred_region
    _
  $region13: #{lite_face_forward.13} parent=0 // pred_fallthru
    _
  // Predicated region
  $region14: #{lite_face_forward.13} parent=0 // pred_check
    _
  $region15: #{lite_face_forward.13} parent=0 // pred_check_branch
    %16 = sbr.rel (0) target = $region17
  $region16: #{lite_face_forward.13} parent=0 // pred_region
    _
  $region17: #{lite_face_forward.13} parent=0 // pred_fallthru
    _
  %v17 = vld [vmem:[%s0] sm:$0xf]
  %v18 = vld [vmem:[%s0 + $0x4] sm:$0xf]
  %v19 = vld [vmem:[%s0 + $0x8] sm:$0xf]
  %v20 = vld [vmem:[%s0 + $0xc] sm:$0xf]
  %v21 = vld [vmem:[%s0 + $0x10] sm:$0xf]
  %v22 = vld [vmem:[%s0 + $0x14] sm:$0xf]
  %v23 = vld [vmem:[%s0 + $0x18] sm:$0xf]
  %v24 = vld [vmem:[%s0 + $0x1c] sm:$0xf]
  %v25 = vld [vmem:[%s0 + $0x20] sm:$0xf]
  %v26 = vld [vmem:[%s0 + $0x24] sm:$0xf]
  %v27 = vld [vmem:[%s0 + $0x28] sm:$0xf]
  %v28 = vld [vmem:[%s0 + $0x2c] sm:$0xf]
  %v29 = vld [vmem:[%s0 + $0x30] sm:$0xf]
  %v30 = vld [vmem:[%s0 + $0x34] sm:$0xf]
  %v31 = vld [vmem:[%s0 + $0x38] sm:$0xf]
  %v32 = vld [vmem:[%s0 + $0x3c] sm:$0xf]
  %v33 = vld [vmem:[%s1] sm:$0xf]
  %v34 = vld [vmem:[%s1 + $0x4] sm:$0xf]
  %v35 = vld [vmem:[%s1 + $0x8] sm:$0xf]
  %v36 = vld [vmem:[%s1 + $0xc] sm:$0xf]
  %v37 = vld [vmem:[%s1 + $0x10] sm:$0xf]
  %v38 = vld [vmem:[%s1 + $0x14] sm:$0xf]
  %v39 = vld [vmem:[%s1 + $0x18] sm:$0xf]
  %v40 = vld [vmem:[%s1 + $0x1c] sm:$0xf]
  %v41 = vld [vmem:[%s1 + $0x20] sm:$0xf]
  %v42 = vld [vmem:[%s1 + $0x24] sm:$0xf]
  %v43 = vld [vmem:[%s1 + $0x28] sm:$0xf]
  %v44 = vld [vmem:[%s1 + $0x2c] sm:$0xf]
  %v45 = vld [vmem:[%s1 + $0x30] sm:$0xf]
  %v46 = vld [vmem:[%s1 + $0x34] sm:$0xf]
  %v47 = vld [vmem:[%s1 + $0x38] sm:$0xf]
  %v48 = vld [vmem:[%s1 + $0x3c] sm:$0xf]
  %v49 = vunpack.c.l.bf16 %v17
  %v50 = vunpack.c.l.bf16 %v18
  %v51 = vunpack.c.l.bf16 %v19
  %v52 = vunpack.c.l.bf16 %v20
  %v53 = vunpack.c.l.bf16 %v21
  %v54 = vunpack.c.l.bf16 %v22
  %v55 = vunpack.c.l.bf16 %v23
  %v56 = vunpack.c.l.bf16 %v24
  %v57 = vunpack.c.l.bf16 %v25
  %v58 = vunpack.c.l.bf16 %v26
  %v59 = vunpack.c.l.bf16 %v27
  %v60 = vunpack.c.l.bf16 %v28
  %v61 = vunpack.c.l.bf16 %v29
  %v62 = vunpack.c.l.bf16 %v30
  %v63 = vunpack.c.l.bf16 %v31
  %v64 = vunpack.c.l.bf16 %v32
  %v65 = vunpack.c.l.bf16 %v33
  %v66 = vunpack.c.l.bf16 %v34
  %v67 = vunpack.c.l.bf16 %v35
  %v68 = vunpack.c.l.bf16 %v36
  %v69 = vunpack.c.l.bf16 %v37
  %v70 = vunpack.c.l.bf16 %v38
  %v71 = vunpack.c.l.bf16 %v39
  %v72 = vunpack.c.l.bf16 %v40
  %v73 = vunpack.c.l.bf16 %v41
  %v74 = vunpack.c.l.bf16 %v42
  %v75 = vunpack.c.l.bf16 %v43
  %v76 = vunpack.c.l.bf16 %v44
  %v77 = vunpack.c.l.bf16 %v45
  %v78 = vunpack.c.l.bf16 %v46
  %v79 = vunpack.c.l.bf16 %v47
  %v80 = vunpack.c.l.bf16 %v48
  %v81 = vmax.f32 %v49, %v65
  %v82 = vmax.f32 %v50, %v66
  %v83 = vmax.f32 %v51, %v67
  %v84 = vmax.f32 %v52, %v68
  %v85 = vmax.f32 %v53, %v69
  %v86 = vmax.f32 %v54, %v70
  %v87 = vmax.f32 %v55, %v71
  %v88 = vmax.f32 %v56, %v72
  %v89 = vmax.f32 %v57, %v73
  %v90 = vmax.f32 %v58, %v74
  %v91 = vmax.f32 %v59, %v75
  %v92 = vmax.f32 %v60, %v76
  %v93 = vmax.f32 %v61, %v77
  %v94 = vmax.f32 %v62, %v78
  %v95 = vmax.f32 %v63, %v79
  %v96 = vmax.f32 %v64, %v80
  %v97 = vpack.c.bf16 %v81, %v81
  %v98 = vpack.c.bf16 %v82, %v82
  %v99 = vpack.c.bf16 %v83, %v83
  %v100 = vpack.c.bf16 %v84, %v84
  %v101 = vpack.c.bf16 %v85, %v85
  %v102 = vpack.c.bf16 %v86, %v86
  %v103 = vpack.c.bf16 %v87, %v87
  %v104 = vpack.c.bf16 %v88, %v88
  %v105 = vpack.c.bf16 %v89, %v89
  %v106 = vpack.c.bf16 %v90, %v90
  %v107 = vpack.c.bf16 %v91, %v91
  %v108 = vpack.c.bf16 %v92, %v92
  %v109 = vpack.c.bf16 %v93, %v93
  %v110 = vpack.c.bf16 %v94, %v94
  %v111 = vpack.c.bf16 %v95, %v95
  %v112 = vpack.c.bf16 %v96, %v96
  %v113 = vld [vmem:[%s2] sm:$0xf]
  %v114 = vld [vmem:[%s2 + $0x4] sm:$0xf]
  %v115 = vld [vmem:[%s2 + $0x8] sm:$0xf]
  %v116 = vld [vmem:[%s2 + $0xc] sm:$0xf]
  %v117 = vld [vmem:[%s2 + $0x10] sm:$0xf]
  %v118 = vld [vmem:[%s2 + $0x14] sm:$0xf]
  %v119 = vld [vmem:[%s2 + $0x18] sm:$0xf]
  %v120 = vld [vmem:[%s2 + $0x1c] sm:$0xf]
  %v121 = vld [vmem:[%s2 + $0x20] sm:$0xf]
  %v122 = vld [vmem:[%s2 + $0x24] sm:$0xf]
  %v123 = vld [vmem:[%s2 + $0x28] sm:$0xf]
  %v124 = vld [vmem:[%s2 + $0x2c] sm:$0xf]
  %v125 = vld [vmem:[%s2 + $0x30] sm:$0xf]
  %v126 = vld [vmem:[%s2 + $0x34] sm:$0xf]
  %v127 = vld [vmem:[%s2 + $0x38] sm:$0xf]
  %v128 = vld [vmem:[%s2 + $0x3c] sm:$0xf]
  %v129 = vld [vmem:[%s3] sm:$0xf]
  %v130 = vld [vmem:[%s3 + $0x4] sm:$0xf]
  %v131 = vld [vmem:[%s3 + $0x8] sm:$0xf]
  %v132 = vld [vmem:[%s3 + $0xc] sm:$0xf]
  %v133 = vld [vmem:[%s3 + $0x10] sm:$0xf]
  %v134 = vld [vmem:[%s3 + $0x14] sm:$0xf]
  %v135 = vld [vmem:[%s3 + $0x18] sm:$0xf]
  %v136 = vld [vmem:[%s3 + $0x1c] sm:$0xf]
  %v137 = vld [vmem:[%s3 + $0x20] sm:$0xf]
  %v138 = vld [vmem:[%s3 + $0x24] sm:$0xf]
  %v139 = vld [vmem:[%s3 + $0x28] sm:$0xf]
  %v140 = vld [vmem:[%s3 + $0x2c] sm:$0xf]
  %v141 = vld [vmem:[%s3 + $0x30] sm:$0xf]
  %v142 = vld [vmem:[%s3 + $0x34] sm:$0xf]
  %v143 = vld [vmem:[%s3 + $0x38] sm:$0xf]
  %v144 = vld [vmem:[%s3 + $0x3c] sm:$0xf]
  %v145 = vunpack.c.l.bf16 %v113
  %v146 = vunpack.c.l.bf16 %v114
  %v147 = vunpack.c.l.bf16 %v115
  %v148 = vunpack.c.l.bf16 %v116
  %v149 = vunpack.c.l.bf16 %v117
  %v150 = vunpack.c.l.bf16 %v118
  %v151 = vunpack.c.l.bf16 %v119
  %v152 = vunpack.c.l.bf16 %v120
  %v153 = vunpack.c.l.bf16 %v121
  %v154 = vunpack.c.l.bf16 %v122
  %v155 = vunpack.c.l.bf16 %v123
  %v156 = vunpack.c.l.bf16 %v124
  %v157 = vunpack.c.l.bf16 %v125
  %v158 = vunpack.c.l.bf16 %v126
  %v159 = vunpack.c.l.bf16 %v127
  %v160 = vunpack.c.l.bf16 %v128
  %v161 = vunpack.c.l.bf16 %v129
  %v162 = vunpack.c.l.bf16 %v130
  %v163 = vunpack.c.l.bf16 %v131
  %v164 = vunpack.c.l.bf16 %v132
  %v165 = vunpack.c.l.bf16 %v133
  %v166 = vunpack.c.l.bf16 %v134
  %v167 = vunpack.c.l.bf16 %v135
  %v168 = vunpack.c.l.bf16 %v136
  %v169 = vunpack.c.l.bf16 %v137
  %v170 = vunpack.c.l.bf16 %v138
  %v171 = vunpack.c.l.bf16 %v139
  %v172 = vunpack.c.l.bf16 %v140
  %v173 = vunpack.c.l.bf16 %v141
  %v174 = vunpack.c.l.bf16 %v142
  %v175 = vunpack.c.l.bf16 %v143
  %v176 = vunpack.c.l.bf16 %v144
  %v177 = vmax.f32 %v145, %v161
  %v178 = vmax.f32 %v146, %v162
  %v179 = vmax.f32 %v147, %v163
  %v180 = vmax.f32 %v148, %v164
  %v181 = vmax.f32 %v149, %v165
  %v182 = vmax.f32 %v150, %v166
  %v183 = vmax.f32 %v151, %v167
  %v184 = vmax.f32 %v152, %v168
  %v185 = vmax.f32 %v153, %v169
  %v186 = vmax.f32 %v154, %v170
  %v187 = vmax.f32 %v155, %v171
  %v188 = vmax.f32 %v156, %v172
  %v189 = vmax.f32 %v157, %v173
  %v190 = vmax.f32 %v158, %v174
  %v191 = vmax.f32 %v159, %v175
  %v192 = vmax.f32 %v160, %v176
  %v193 = vpack.c.bf16 %v177, %v177
  %v194 = vpack.c.bf16 %v178, %v178
  %v195 = vpack.c.bf16 %v179, %v179
  %v196 = vpack.c.bf16 %v180, %v180
  %v197 = vpack.c.bf16 %v181, %v181
  %v198 = vpack.c.bf16 %v182, %v182
  %v199 = vpack.c.bf16 %v183, %v183
  %v200 = vpack.c.bf16 %v184, %v184
  %v201 = vpack.c.bf16 %v185, %v185
  %v202 = vpack.c.bf16 %v186, %v186
  %v203 = vpack.c.bf16 %v187, %v187
  %v204 = vpack.c.bf16 %v188, %v188
  %v205 = vpack.c.bf16 %v189, %v189
  %v206 = vpack.c.bf16 %v190, %v190
  %v207 = vpack.c.bf16 %v191, %v191
  %v208 = vpack.c.bf16 %v192, %v192
  %v209 = vunpack.c.l.bf16 %v97
  %v210 = vunpack.c.l.bf16 %v98
  %v211 = vunpack.c.l.bf16 %v99
  %v212 = vunpack.c.l.bf16 %v100
  %v213 = vunpack.c.l.bf16 %v101
  %v214 = vunpack.c.l.bf16 %v102
  %v215 = vunpack.c.l.bf16 %v103
  %v216 = vunpack.c.l.bf16 %v104
  %v217 = vunpack.c.l.bf16 %v105
  %v218 = vunpack.c.l.bf16 %v106
  %v219 = vunpack.c.l.bf16 %v107
  %v220 = vunpack.c.l.bf16 %v108
  %v221 = vunpack.c.l.bf16 %v109
  %v222 = vunpack.c.l.bf16 %v110
  %v223 = vunpack.c.l.bf16 %v111
  %v224 = vunpack.c.l.bf16 %v112
  %v225 = vunpack.c.l.bf16 %v193
  %v226 = vunpack.c.l.bf16 %v194
  %v227 = vunpack.c.l.bf16 %v195
  %v228 = vunpack.c.l.bf16 %v196
  %v229 = vunpack.c.l.bf16 %v197
  %v230 = vunpack.c.l.bf16 %v198
  %v231 = vunpack.c.l.bf16 %v199
  %v232 = vunpack.c.l.bf16 %v200
  %v233 = vunpack.c.l.bf16 %v201
  %v234 = vunpack.c.l.bf16 %v202
  %v235 = vunpack.c.l.bf16 %v203
  %v236 = vunpack.c.l.bf16 %v204
  %v237 = vunpack.c.l.bf16 %v205
  %v238 = vunpack.c.l.bf16 %v206
  %v239 = vunpack.c.l.bf16 %v207
  %v240 = vunpack.c.l.bf16 %v208
  %v241 = vmax.f32 %v209, %v225
  %v242 = vmax.f32 %v210, %v226
  %v243 = vmax.f32 %v211, %v227
  %v244 = vmax.f32 %v212, %v228
  %v245 = vmax.f32 %v213, %v229
  %v246 = vmax.f32 %v214, %v230
  %v247 = vmax.f32 %v215, %v231
  %v248 = vmax.f32 %v216, %v232
  %v249 = vmax.f32 %v217, %v233
  %v250 = vmax.f32 %v218, %v234
  %v251 = vmax.f32 %v219, %v235
  %v252 = vmax.f32 %v220, %v236
  %v253 = vmax.f32 %v221, %v237
  %v254 = vmax.f32 %v222, %v238
  %v255 = vmax.f32 %v223, %v239
  %v256 = vmax.f32 %v224, %v240
  %v257 = vpack.c.bf16 %v241, %v241
  %v258 = vpack.c.bf16 %v242, %v242
  %v259 = vpack.c.bf16 %v243, %v243
  %v260 = vpack.c.bf16 %v244, %v244
  %v261 = vpack.c.bf16 %v245, %v245
  %v262 = vpack.c.bf16 %v246, %v246
  %v263 = vpack.c.bf16 %v247, %v247
  %v264 = vpack.c.bf16 %v248, %v248
  %v265 = vpack.c.bf16 %v249, %v249
  %v266 = vpack.c.bf16 %v250, %v250
  %v267 = vpack.c.bf16 %v251, %v251
  %v268 = vpack.c.bf16 %v252, %v252
  %v269 = vpack.c.bf16 %v253, %v253
  %v270 = vpack.c.bf16 %v254, %v254
  %v271 = vpack.c.bf16 %v255, %v255
  %v272 = vpack.c.bf16 %v256, %v256
  %vm273 = vcmask 125952
  %274 = vst.msk [vmem:[%s4] sm:$0xf] %vm273, %v257
  %275 = vst.msk [vmem:[%s4 + $0x4] sm:$0xf] %vm273, %v258
  %276 = vst.msk [vmem:[%s4 + $0x8] sm:$0xf] %vm273, %v259
  %277 = vst.msk [vmem:[%s4 + $0xc] sm:$0xf] %vm273, %v260
  %278 = vst.msk [vmem:[%s4 + $0x10] sm:$0xf] %vm273, %v261
  %279 = vst.msk [vmem:[%s4 + $0x14] sm:$0xf] %vm273, %v262
  %280 = vst.msk [vmem:[%s4 + $0x18] sm:$0xf] %vm273, %v263
  %281 = vst.msk [vmem:[%s4 + $0x1c] sm:$0xf] %vm273, %v264
  %282 = vst.msk [vmem:[%s4 + $0x20] sm:$0xf] %vm273, %v265
  %283 = vst.msk [vmem:[%s4 + $0x24] sm:$0xf] %vm273, %v266
  %284 = vst.msk [vmem:[%s4 + $0x28] sm:$0xf] %vm273, %v267
  %285 = vst.msk [vmem:[%s4 + $0x2c] sm:$0xf] %vm273, %v268
  %286 = vst.msk [vmem:[%s4 + $0x30] sm:$0xf] %vm273, %v269
  %287 = vst.msk [vmem:[%s4 + $0x34] sm:$0xf] %vm273, %v270
  %288 = vst.msk [vmem:[%s4 + $0x38] sm:$0xf] %vm273, %v271
  %289 = vst.msk [vmem:[%s4 + $0x3c] sm:$0xf] %vm273, %v272
  // Predicated region
  $region18: #{lite_face_forward.13} parent=0 // pred_check
    _
  $region19: #{lite_face_forward.13} parent=0 // pred_check_branch
    %291 = sbr.rel (0) target = $region21
  $region20: #{lite_face_forward.13} parent=0 // pred_region
    _
  $region21: #{lite_face_forward.13} parent=0 // pred_fallthru
    _
  // Predicated region
  $region22: #{lite_face_forward.13} parent=0 // pred_check
    _
  $region23: #{lite_face_forward.13} parent=0 // pred_check_branch
    %293 = sbr.rel (0) target = $region25
  $region24: #{lite_face_forward.13} parent=0 // pred_region
    _
  $region25: #{lite_face_forward.13} parent=0 // pred_fallthru
    _

// kernel: lite_face_forward.14
$region0: #{lite_face_forward.14}
  #allocation0 [shape = 'u32[]', space=smem, size = 0x4, offset = 0x4, fixed_abs, tag = 'smem constant byte address 0x4 - core index']
  #allocation1 [shape = 'u32[72,128]{1,0:T(1,128)}', space=vmem, size = 0x9000, scoped, tag = 'internal scratch']
  %s0 = inlined_call_operand.vmem [shape: bf16[128,144], index: 0, kind: input, shape index: {}]
  %s1 = inlined_call_operand.vmem [shape: bf16[144,64], index: 1, kind: input, shape index: {}]
  %s2 = inlined_call_operand.vmem [shape: f32[1,64], index: 2, kind: input, shape index: {}]
  %s3 = inlined_call_operand.vmem [shape: bf16[64,16], index: 3, kind: input, shape index: {}]
  %s4 = inlined_call_operand.vmem [shape: f32[1,16], index: 4, kind: input, shape index: {}]
  %s5 = inlined_call_operand.vmem [shape: bf16[128,16], index: 5, kind: output, shape index: {}]
  %s6 = sld [smem:[#allocation0]]
  $region30: #{lite_face_forward.14} parent=0
    _
  %s8 = ssub.s32 1, %s6
  %s9 = scalar_select 0, %s8, %s6
  // Predicated region
  $region2: #{lite_face_forward.14} parent=0 // pred_check
    _
  $region3: #{lite_face_forward.14} parent=0 // pred_check_branch
    %11 = sbr.rel (0) target = $region5
  $region4: #{lite_face_forward.14} parent=0 // pred_region
    _
  $region5: #{lite_face_forward.14} parent=0 // pred_fallthru
    _
  // Predicated region
  $region6: #{lite_face_forward.14} parent=0 // pred_check
    _
  $region7: #{lite_face_forward.14} parent=0 // pred_check_branch
    %13 = sbr.rel (0) target = $region9
  $region8: #{lite_face_forward.14} parent=0 // pred_region
    _
  $region9: #{lite_face_forward.14} parent=0 // pred_fallthru
    _
  // Predicated region
  $region10: #{lite_face_forward.14} parent=0 // pred_check
    _
  $region11: #{lite_face_forward.14} parent=0 // pred_check_branch
    %15 = sbr.rel (0) target = $region13
  $region12: #{lite_face_forward.14} parent=0 // pred_region
    _
  $region13: #{lite_face_forward.14} parent=0 // pred_fallthru
    _
  // Predicated region
  $region14: #{lite_face_forward.14} parent=0 // pred_check
    _
  $region15: #{lite_face_forward.14} parent=0 // pred_check_branch
    %17 = sbr.rel (0) target = $region17
  $region16: #{lite_face_forward.14} parent=0 // pred_region
    _
  $region17: #{lite_face_forward.14} parent=0 // pred_fallthru
    _
  // Predicated region
  $region18: #{lite_face_forward.14} parent=0 // pred_check
    _
  $region19: #{lite_face_forward.14} parent=0 // pred_check_branch
    %19 = sbr.rel (0) target = $region21
  $region20: #{lite_face_forward.14} parent=0 // pred_region
    _
  $region21: #{lite_face_forward.14} parent=0 // pred_fallthru
    _
  %v21 = vld [vmem:[%s0] sm:$0xff]
  %v22 = vld [vmem:[%s0 + $0x8] sm:$0xff]
  %v23 = vld [vmem:[%s0 + $0x10] sm:$0xff]
  %v24 = vld [vmem:[%s0 + $0x18] sm:$0xff]
  %v25 = vld [vmem:[%s0 + $0x20] sm:$0xff]
  %v26 = vld [vmem:[%s0 + $0x28] sm:$0xff]
  %v27 = vld [vmem:[%s0 + $0x30] sm:$0xff]
  %v28 = vld [vmem:[%s0 + $0x38] sm:$0xff]
  %v29 = vld [vmem:[%s0 + $0x40] sm:$0xff]
  %v30 = vld [vmem:[%s0 + $0x48] sm:$0xff]
  %v31 = vld [vmem:[%s0 + $0x50] sm:$0xff]
  %v32 = vld [vmem:[%s0 + $0x58] sm:$0xff]
  %v33 = vld [vmem:[%s0 + $0x60] sm:$0xff]
  %v34 = vld [vmem:[%s0 + $0x68] sm:$0xff]
  %v35 = vld [vmem:[%s0 + $0x70] sm:$0xff]
  %v36 = vld [vmem:[%s0 + $0x78] sm:$0xff]
  %v37 = vld [vmem:[%s1] sm:$0xf]
  %v38 = vld [vmem:[%s1 + $0x4] sm:$0xf]
  %v39 = vld [vmem:[%s1 + $0x8] sm:$0xf]
  %v40 = vld [vmem:[%s1 + $0xc] sm:$0xf]
  %v41 = vld [vmem:[%s1 + $0x10] sm:$0xf]
  %v42 = vld [vmem:[%s1 + $0x14] sm:$0xf]
  %v43 = vld [vmem:[%s1 + $0x18] sm:$0xf]
  %v44 = vld [vmem:[%s1 + $0x1c] sm:$0xf]
  %v45 = vld [vmem:[%s1 + $0x20] sm:$0xf]
  %v46 = vld [vmem:[%s1 + $0x24] sm:$0xf]
  %v47 = vld [vmem:[%s1 + $0x28] sm:$0xf]
  %v48 = vld [vmem:[%s1 + $0x2c] sm:$0xf]
  %v49 = vld [vmem:[%s1 + $0x30] sm:$0xf]
  %v50 = vld [vmem:[%s1 + $0x34] sm:$0xf]
  %v51 = vld [vmem:[%s1 + $0x38] sm:$0xf]
  %v52 = vld [vmem:[%s1 + $0x3c] sm:$0xf]
  %v53 = vld [vmem:[%s1 + $0x40] sm:$0xf]
  %v54 = vld [vmem:[%s1 + $0x44] sm:$0xf]
  %v55 = vld [vmem:[%s2] sm:$0x1]
  %v57 = vperm.slane %v55, 0
  %v75 = vunpack.c.l.b16 %v21
  %v76 = vunpack.c.h.b16 %v21
  %v77 = vunpack.c.l.b16 %v22
  %v78 = vunpack.c.h.b16 %v22
  %v79 = vunpack.c.l.b16 %v23
  %v80 = vunpack.c.h.b16 %v23
  %v81 = vunpack.c.l.b16 %v24
  %v82 = vunpack.c.h.b16 %v24
  %v83 = vunpack.c.l.b16 %v25
  %v84 = vunpack.c.h.b16 %v25
  %v85 = vunpack.c.l.b16 %v26
  %v86 = vunpack.c.h.b16 %v26
  %v87 = vunpack.c.l.b16 %v27
  %v88 = vunpack.c.h.b16 %v27
  %v89 = vunpack.c.l.b16 %v28
  %v90 = vunpack.c.h.b16 %v28
  %v91 = vunpack.c.l.b16 %v29
  %v92 = vunpack.c.h.b16 %v29
  %v93 = vunpack.c.l.b16 %v30
  %v94 = vunpack.c.h.b16 %v30
  %v95 = vunpack.c.l.b16 %v31
  %v96 = vunpack.c.h.b16 %v31
  %v97 = vunpack.c.l.b16 %v32
  %v98 = vunpack.c.h.b16 %v32
  %v99 = vunpack.c.l.b16 %v33
  %v100 = vunpack.c.h.b16 %v33
  %v101 = vunpack.c.l.b16 %v34
  %v102 = vunpack.c.h.b16 %v34
  %v103 = vunpack.c.l.b16 %v35
  %v104 = vunpack.c.h.b16 %v35
  %v105 = vunpack.c.l.b16 %v36
  %v106 = vunpack.c.h.b16 %v36
  %v107 = vpack.c.b16 %v77, %v75
  %v108 = vpack.c.b16 %v78, %v76
  %v109 = vpack.c.b16 %v81, %v79
  %v110 = vpack.c.b16 %v82, %v80
  %v111 = vpack.c.b16 %v85, %v83
  %v112 = vpack.c.b16 %v86, %v84
  %v113 = vpack.c.b16 %v89, %v87
  %v114 = vpack.c.b16 %v90, %v88
  %v115 = vpack.c.b16 %v93, %v91
  %v116 = vpack.c.b16 %v94, %v92
  %v117 = vpack.c.b16 %v97, %v95
  %v118 = vpack.c.b16 %v98, %v96
  %v119 = vpack.c.b16 %v101, %v99
  %v120 = vpack.c.b16 %v102, %v100
  %v121 = vpack.c.b16 %v105, %v103
  %v122 = vpack.c.b16 %v106, %v104
  %v149 = vunpack.c.l.b16 %v37
  %v150 = vunpack.c.l.b16 %v38
  %v151 = vunpack.c.l.b16 %v39
  %v152 = vunpack.c.l.b16 %v40
  %v153 = vunpack.c.l.b16 %v41
  %v154 = vunpack.c.l.b16 %v42
  %v155 = vunpack.c.l.b16 %v43
  %v156 = vunpack.c.l.b16 %v44
  %v157 = vunpack.c.l.b16 %v45
  %v158 = vunpack.c.l.b16 %v46
  %v159 = vunpack.c.l.b16 %v47
  %v160 = vunpack.c.l.b16 %v48
  %v161 = vunpack.c.l.b16 %v49
  %v162 = vunpack.c.l.b16 %v50
  %v163 = vunpack.c.l.b16 %v51
  %v164 = vunpack.c.l.b16 %v52
  %v165 = vunpack.c.l.b16 %v53
  %v166 = vunpack.c.l.b16 %v54
  %v167 = vpack.c.b16 %v150, %v149
  %v168 = vpack.c.b16 %v152, %v151
  %v169 = vpack.c.b16 %v154, %v153
  %v170 = vpack.c.b16 %v156, %v155
  %v171 = vpack.c.b16 %v158, %v157
  %v172 = vpack.c.b16 %v160, %v159
  %v173 = vpack.c.b16 %v162, %v161
  %v174 = vpack.c.b16 %v164, %v163
  %v175 = vpack.c.b16 %v166, %v165
  %vm185 = vcmask 130048
  %v187 = vsel %vm185, %v108, 0
  %v190 = vsel %vm185, %v110, 0
  %v193 = vsel %vm185, %v112, 0
  %v196 = vsel %vm185, %v114, 0
  %v199 = vsel %vm185, %v116, 0
  %v202 = vsel %vm185, %v118, 0
  %v205 = vsel %vm185, %v120, 0
  %v208 = vsel %vm185, %v122, 0
  %210 = vmatpush.bf16.msra.mxu0 %v174
  %211 = vmatpush.bf16.msra.mxu0 %v173
  %212 = vmatpush.bf16.msra.mxu0 %v172
  %213 = vmatpush.bf16.msra.mxu0 %v171
  %214 = vmatpush.bf16.msra.mxu0 %v170
  %215 = vmatpush.bf16.msra.mxu0 %v169
  %216 = vmatpush.bf16.msra.mxu0 %v168
  %217 = vmatpush.bf16.msra.mxu0 %v167
  %218 = vmatmul.bf16.gmra.mxu0 %v107
  %v219 = vpop.f32.mrf.mxu0
  %v220 = vadd.f32 %v57, %v219
  %v221 = vpop.f32.mrf.mxu0
  %v222 = vadd.f32 %v57, %v221
  %223 = vmatmul.bf16.gmra.mxu0 %v109
  %v224 = vpop.f32.mrf.mxu0
  %v225 = vadd.f32 %v57, %v224
  %v226 = vpop.f32.mrf.mxu0
  %v227 = vadd.f32 %v57, %v226
  %228 = vmatmul.bf16.gmra.mxu0 %v111
  %v229 = vpop.f32.mrf.mxu0
  %v230 = vadd.f32 %v57, %v229
  %v231 = vpop.f32.mrf.mxu0
  %v232 = vadd.f32 %v57, %v231
  %233 = vmatmul.bf16.gmra.mxu0 %v113
  %v234 = vpop.f32.mrf.mxu0
  %v235 = vadd.f32 %v57, %v234
  %v236 = vpop.f32.mrf.mxu0
  %v237 = vadd.f32 %v57, %v236
  %238 = vmatmul.bf16.gmra.mxu0 %v115
  %v239 = vpop.f32.mrf.mxu0
  %v240 = vadd.f32 %v57, %v239
  %v241 = vpop.f32.mrf.mxu0
  %v242 = vadd.f32 %v57, %v241
  %243 = vmatmul.bf16.gmra.mxu0 %v117
  %v244 = vpop.f32.mrf.mxu0
  %v245 = vadd.f32 %v57, %v244
  %v246 = vpop.f32.mrf.mxu0
  %v247 = vadd.f32 %v57, %v246
  %248 = vmatmul.bf16.gmra.mxu0 %v119
  %v249 = vpop.f32.mrf.mxu0
  %v250 = vadd.f32 %v57, %v249
  %v251 = vpop.f32.mrf.mxu0
  %v252 = vadd.f32 %v57, %v251
  %253 = vmatmul.bf16.gmra.mxu0 %v121
  %v254 = vpop.f32.mrf.mxu0
  %v255 = vadd.f32 %v57, %v254
  %v256 = vpop.f32.mrf.mxu0
  %v257 = vadd.f32 %v57, %v256
  %258 = vdwg.mxu0
  %259 = vmatpush.bf16.msra.mxu0 0
  %260 = vmatpush.bf16.msra.mxu0 0
  %261 = vmatpush.bf16.msra.mxu0 0
  %262 = vmatpush.bf16.msra.mxu0 0
  %263 = vmatpush.bf16.msra.mxu0 0
  %264 = vmatpush.bf16.msra.mxu0 0
  %265 = vmatpush.bf16.msra.mxu0 0
  %266 = vmatpush.bf16.msra.mxu0 %v175
  %267 = vmatmul.bf16.gmra.mxu0 %v187
  %v268 = vpop.f32.mrf.mxu0
  %v269 = vadd.f32 %v220, %v268
  %v270 = vpop.f32.mrf.mxu0
  %v271 = vadd.f32 %v222, %v270
  %272 = vmatmul.bf16.gmra.mxu0 %v190
  %v273 = vpop.f32.mrf.mxu0
  %v274 = vadd.f32 %v225, %v273
  %v275 = vpop.f32.mrf.mxu0
  %v276 = vadd.f32 %v227, %v275
  %277 = vmatmul.bf16.gmra.mxu0 %v193
  %v278 = vpop.f32.mrf.mxu0
  %v279 = vadd.f32 %v230, %v278
  %v280 = vpop.f32.mrf.mxu0
  %v281 = vadd.f32 %v232, %v280
  %282 = vmatmul.bf16.gmra.mxu0 %v196
  %v283 = vpop.f32.mrf.mxu0
  %v284 = vadd.f32 %v235, %v283
  %v285 = vpop.f32.mrf.mxu0
  %v286 = vadd.f32 %v237, %v285
  %287 = vmatmul.bf16.gmra.mxu0 %v199
  %v288 = vpop.f32.mrf.mxu0
  %v289 = vadd.f32 %v240, %v288
  %v290 = vpop.f32.mrf.mxu0
  %v291 = vadd.f32 %v242, %v290
  %292 = vmatmul.bf16.gmra.mxu0 %v202
  %v293 = vpop.f32.mrf.mxu0
  %v294 = vadd.f32 %v245, %v293
  %v295 = vpop.f32.mrf.mxu0
  %v296 = vadd.f32 %v247, %v295
  %297 = vmatmul.bf16.gmra.mxu0 %v205
  %v298 = vpop.f32.mrf.mxu0
  %v299 = vadd.f32 %v250, %v298
  %v300 = vpop.f32.mrf.mxu0
  %v301 = vadd.f32 %v252, %v300
  %302 = vmatmul.bf16.gmra.mxu0 %v208
  %v303 = vpop.f32.mrf.mxu0
  %v304 = vadd.f32 %v255, %v303
  %v305 = vpop.f32.mrf.mxu0
  %v306 = vadd.f32 %v257, %v305
  %307 = vdwg.mxu0
  %vm308 = vcmp.ge.f32.partialorder %v269, 0.0
  %vm309 = vcmp.ge.f32.partialorder %v271, 0.0
  %vm310 = vcmp.ge.f32.partialorder %v274, 0.0
  %vm311 = vcmp.ge.f32.partialorder %v276, 0.0
  %vm312 = vcmp.ge.f32.partialorder %v279, 0.0
  %vm313 = vcmp.ge.f32.partialorder %v281, 0.0
  %vm314 = vcmp.ge.f32.partialorder %v284, 0.0
  %vm315 = vcmp.ge.f32.partialorder %v286, 0.0
  %vm316 = vcmp.ge.f32.partialorder %v289, 0.0
  %vm317 = vcmp.ge.f32.partialorder %v291, 0.0
  %vm318 = vcmp.ge.f32.partialorder %v294, 0.0
  %vm319 = vcmp.ge.f32.partialorder %v296, 0.0
  %vm320 = vcmp.ge.f32.partialorder %v299, 0.0
  %vm321 = vcmp.ge.f32.partialorder %v301, 0.0
  %vm322 = vcmp.ge.f32.partialorder %v304, 0.0
  %vm323 = vcmp.ge.f32.partialorder %v306, 0.0
  %v324 = vmul.f32 %v269, 0.1
  %v325 = vmul.f32 %v271, 0.1
  %v326 = vmul.f32 %v274, 0.1
  %v327 = vmul.f32 %v276, 0.1
  %v328 = vmul.f32 %v279, 0.1
  %v329 = vmul.f32 %v281, 0.1
  %v330 = vmul.f32 %v284, 0.1
  %v331 = vmul.f32 %v286, 0.1
  %v332 = vmul.f32 %v289, 0.1
  %v333 = vmul.f32 %v291, 0.1
  %v334 = vmul.f32 %v294, 0.1
  %v335 = vmul.f32 %v296, 0.1
  %v336 = vmul.f32 %v299, 0.1
  %v337 = vmul.f32 %v301, 0.1
  %v338 = vmul.f32 %v304, 0.1
  %v339 = vmul.f32 %v306, 0.1
  %v340 = vsel %vm308, %v269, %v324
  %v341 = vsel %vm309, %v271, %v325
  %v342 = vsel %vm310, %v274, %v326
  %v343 = vsel %vm311, %v276, %v327
  %v344 = vsel %vm312, %v279, %v328
  %v345 = vsel %vm313, %v281, %v329
  %v346 = vsel %vm314, %v284, %v330
  %v347 = vsel %vm315, %v286, %v331
  %v348 = vsel %vm316, %v289, %v332
  %v349 = vsel %vm317, %v291, %v333
  %v350 = vsel %vm318, %v294, %v334
  %v351 = vsel %vm319, %v296, %v335
  %v352 = vsel %vm320, %v299, %v336
  %v353 = vsel %vm321, %v301, %v337
  %v354 = vsel %vm322, %v304, %v338
  %v355 = vsel %vm323, %v306, %v339
  %v356 = vpack.c.bf16 %v341, %v340
  %v357 = vpack.c.bf16 %v343, %v342
  %v358 = vpack.c.bf16 %v345, %v344
  %v359 = vpack.c.bf16 %v347, %v346
  %v360 = vpack.c.bf16 %v349, %v348
  %v361 = vpack.c.bf16 %v351, %v350
  %v362 = vpack.c.bf16 %v353, %v352
  %v363 = vpack.c.bf16 %v355, %v354
  %v364 = vld [vmem:[%s3] sm:$0xf]
  %v365 = vld [vmem:[%s3 + $0x4] sm:$0xf]
  %v366 = vld [vmem:[%s3 + $0x8] sm:$0xf]
  %v367 = vld [vmem:[%s3 + $0xc] sm:$0xf]
  %v368 = vld [vmem:[%s3 + $0x10] sm:$0xf]
  %v369 = vld [vmem:[%s3 + $0x14] sm:$0xf]
  %v370 = vld [vmem:[%s3 + $0x18] sm:$0xf]
  %v371 = vld [vmem:[%s3 + $0x1c] sm:$0xf]
  %v372 = vld [vmem:[%s4] sm:$0x1]
  %v374 = vperm.slane %v372, 0
  %v384 = vunpack.c.l.b16 %v364
  %v385 = vunpack.c.l.b16 %v365
  %v386 = vunpack.c.l.b16 %v366
  %v387 = vunpack.c.l.b16 %v367
  %v388 = vunpack.c.l.b16 %v368
  %v389 = vunpack.c.l.b16 %v369
  %v390 = vunpack.c.l.b16 %v370
  %v391 = vunpack.c.l.b16 %v371
  %v392 = vpack.c.b16 %v385, %v384
  %v393 = vpack.c.b16 %v387, %v386
  %v394 = vpack.c.b16 %v389, %v388
  %v395 = vpack.c.b16 %v391, %v390
  %vm400 = vcmask 523264
  %v402 = vsel %vm400, %v356, 0
  %v405 = vsel %vm400, %v357, 0
  %v408 = vsel %vm400, %v358, 0
  %v411 = vsel %vm400, %v359, 0
  %v414 = vsel %vm400, %v360, 0
  %v417 = vsel %vm400, %v361, 0
  %v420 = vsel %vm400, %v362, 0
  %v423 = vsel %vm400, %v363, 0
  %425 = vmatpush.bf16.msra.mxu0 0
  %426 = vmatpush.bf16.msra.mxu0 0
  %427 = vmatpush.bf16.msra.mxu0 0
  %428 = vmatpush.bf16.msra.mxu0 0
  %429 = vmatpush.bf16.msra.mxu0 %v395
  %430 = vmatpush.bf16.msra.mxu0 %v394
  %431 = vmatpush.bf16.msra.mxu0 %v393
  %432 = vmatpush.bf16.msra.mxu0 %v392
  %433 = vmatmul.bf16.gmra.mxu0 %v402
  %v434 = vpop.f32.mrf.mxu0
  %v435 = vadd.f32 %v374, %v434
  %v436 = vpop.f32.mrf.mxu0
  %v437 = vadd.f32 %v374, %v436
  %438 = vmatmul.bf16.gmra.mxu0 %v405
  %v439 = vpop.f32.mrf.mxu0
  %v440 = vadd.f32 %v374, %v439
  %v441 = vpop.f32.mrf.mxu0
  %v442 = vadd.f32 %v374, %v441
  %443 = vmatmul.bf16.gmra.mxu0 %v408
  %v444 = vpop.f32.mrf.mxu0
  %v445 = vadd.f32 %v374, %v444
  %v446 = vpop.f32.mrf.mxu0
  %v447 = vadd.f32 %v374, %v446
  %448 = vmatmul.bf16.gmra.mxu0 %v411
  %v449 = vpop.f32.mrf.mxu0
  %v450 = vadd.f32 %v374, %v449
  %v451 = vpop.f32.mrf.mxu0
  %v452 = vadd.f32 %v374, %v451
  %453 = vmatmul.bf16.gmra.mxu0 %v414
  %v454 = vpop.f32.mrf.mxu0
  %v455 = vadd.f32 %v374, %v454
  %v456 = vpop.f32.mrf.mxu0
  %v457 = vadd.f32 %v374, %v456
  %458 = vmatmul.bf16.gmra.mxu0 %v417
  %v459 = vpop.f32.mrf.mxu0
  %v460 = vadd.f32 %v374, %v459
  %v461 = vpop.f32.mrf.mxu0
  %v462 = vadd.f32 %v374, %v461
  %463 = vmatmul.bf16.gmra.mxu0 %v420
  %v464 = vpop.f32.mrf.mxu0
  %v465 = vadd.f32 %v374, %v464
  %v466 = vpop.f32.mrf.mxu0
  %v467 = vadd.f32 %v374, %v466
  %468 = vmatmul.bf16.gmra.mxu0 %v423
  %v469 = vpop.f32.mrf.mxu0
  %v470 = vadd.f32 %v374, %v469
  %v471 = vpop.f32.mrf.mxu0
  %v472 = vadd.f32 %v374, %v471
  %473 = vdwg.mxu0
  %vm474 = vcmp.ge.f32.partialorder %v435, 0.0
  %vm475 = vcmp.ge.f32.partialorder %v437, 0.0
  %vm476 = vcmp.ge.f32.partialorder %v440, 0.0
  %vm477 = vcmp.ge.f32.partialorder %v442, 0.0
  %vm478 = vcmp.ge.f32.partialorder %v445, 0.0
  %vm479 = vcmp.ge.f32.partialorder %v447, 0.0
  %vm480 = vcmp.ge.f32.partialorder %v450, 0.0
  %vm481 = vcmp.ge.f32.partialorder %v452, 0.0
  %vm482 = vcmp.ge.f32.partialorder %v455, 0.0
  %vm483 = vcmp.ge.f32.partialorder %v457, 0.0
  %vm484 = vcmp.ge.f32.partialorder %v460, 0.0
  %vm485 = vcmp.ge.f32.partialorder %v462, 0.0
  %vm486 = vcmp.ge.f32.partialorder %v465, 0.0
  %vm487 = vcmp.ge.f32.partialorder %v467, 0.0
  %vm488 = vcmp.ge.f32.partialorder %v470, 0.0
  %vm489 = vcmp.ge.f32.partialorder %v472, 0.0
  %v490 = vmul.f32 %v435, 0.1
  %v491 = vmul.f32 %v437, 0.1
  %v492 = vmul.f32 %v440, 0.1
  %v493 = vmul.f32 %v442, 0.1
  %v494 = vmul.f32 %v445, 0.1
  %v495 = vmul.f32 %v447, 0.1
  %v496 = vmul.f32 %v450, 0.1
  %v497 = vmul.f32 %v452, 0.1
  %v498 = vmul.f32 %v455, 0.1
  %v499 = vmul.f32 %v457, 0.1
  %v500 = vmul.f32 %v460, 0.1
  %v501 = vmul.f32 %v462, 0.1
  %v502 = vmul.f32 %v465, 0.1
  %v503 = vmul.f32 %v467, 0.1
  %v504 = vmul.f32 %v470, 0.1
  %v505 = vmul.f32 %v472, 0.1
  %v506 = vsel %vm474, %v435, %v490
  %v507 = vsel %vm475, %v437, %v491
  %v508 = vsel %vm476, %v440, %v492
  %v509 = vsel %vm477, %v442, %v493
  %v510 = vsel %vm478, %v445, %v494
  %v511 = vsel %vm479, %v447, %v495
  %v512 = vsel %vm480, %v450, %v496
  %v513 = vsel %vm481, %v452, %v497
  %v514 = vsel %vm482, %v455, %v498
  %v515 = vsel %vm483, %v457, %v499
  %v516 = vsel %vm484, %v460, %v500
  %v517 = vsel %vm485, %v462, %v501
  %v518 = vsel %vm486, %v465, %v502
  %v519 = vsel %vm487, %v467, %v503
  %v520 = vsel %vm488, %v470, %v504
  %v521 = vsel %vm489, %v472, %v505
  %v522 = vpack.c.bf16 %v506, %v506
  %v523 = vpack.c.bf16 %v507, %v507
  %v524 = vpack.c.bf16 %v508, %v508
  %v525 = vpack.c.bf16 %v509, %v509
  %v526 = vpack.c.bf16 %v510, %v510
  %v527 = vpack.c.bf16 %v511, %v511
  %v528 = vpack.c.bf16 %v512, %v512
  %v529 = vpack.c.bf16 %v513, %v513
  %v530 = vpack.c.bf16 %v514, %v514
  %v531 = vpack.c.bf16 %v515, %v515
  %v532 = vpack.c.bf16 %v516, %v516
  %v533 = vpack.c.bf16 %v517, %v517
  %v534 = vpack.c.bf16 %v518, %v518
  %v535 = vpack.c.bf16 %v519, %v519
  %v536 = vpack.c.bf16 %v520, %v520
  %v537 = vpack.c.bf16 %v521, %v521
  %vm538 = vcmask 125952
  %539 = vst.msk [vmem:[%s5] sm:$0xf] %vm538, %v522
  %540 = vst.msk [vmem:[%s5 + $0x4] sm:$0xf] %vm538, %v523
  %541 = vst.msk [vmem:[%s5 + $0x8] sm:$0xf] %vm538, %v524
  %542 = vst.msk [vmem:[%s5 + $0xc] sm:$0xf] %vm538, %v525
  %543 = vst.msk [vmem:[%s5 + $0x10] sm:$0xf] %vm538, %v526
  %544 = vst.msk [vmem:[%s5 + $0x14] sm:$0xf] %vm538, %v527
  %545 = vst.msk [vmem:[%s5 + $0x18] sm:$0xf] %vm538, %v528
  %546 = vst.msk [vmem:[%s5 + $0x1c] sm:$0xf] %vm538, %v529
  %547 = vst.msk [vmem:[%s5 + $0x20] sm:$0xf] %vm538, %v530
  %548 = vst.msk [vmem:[%s5 + $0x24] sm:$0xf] %vm538, %v531
  %549 = vst.msk [vmem:[%s5 + $0x28] sm:$0xf] %vm538, %v532
  %550 = vst.msk [vmem:[%s5 + $0x2c] sm:$0xf] %vm538, %v533
  %551 = vst.msk [vmem:[%s5 + $0x30] sm:$0xf] %vm538, %v534
  %552 = vst.msk [vmem:[%s5 + $0x34] sm:$0xf] %vm538, %v535
  %553 = vst.msk [vmem:[%s5 + $0x38] sm:$0xf] %vm538, %v536
  %554 = vst.msk [vmem:[%s5 + $0x3c] sm:$0xf] %vm538, %v537
  // Predicated region
  $region22: #{lite_face_forward.14} parent=0 // pred_check
    _
  $region23: #{lite_face_forward.14} parent=0 // pred_check_branch
    %556 = sbr.rel (0) target = $region25
  $region24: #{lite_face_forward.14} parent=0 // pred_region
    _
  $region25: #{lite_face_forward.14} parent=0 // pred_fallthru
    _
  // Predicated region
  $region26: #{lite_face_forward.14} parent=0 // pred_check
    _
  $region27: #{lite_face_forward.14} parent=0 // pred_check_branch
    %558 = sbr.rel (0) target = $region29
  $region28: #{lite_face_forward.14} parent=0 // pred_region
    _
  $region29: #{lite_face_forward.14} parent=0 // pred_fallthru
    _

// kernel: lite_face_forward.15
$region0: #{lite_face_forward.15}
  #allocation0 [shape = 'u32[]', space=smem, size = 0x4, offset = 0x4, fixed_abs, tag = 'smem constant byte address 0x4 - core index']
  #allocation1 [shape = 'u32[72,128]{1,0:T(1,128)}', space=vmem, size = 0x9000, scoped, tag = 'internal scratch']
  %s0 = inlined_call_operand.vmem [shape: bf16[32,16], index: 0, kind: input, shape index: {}]
  %s1 = inlined_call_operand.vmem [shape: bf16[32,16], index: 1, kind: input, shape index: {}]
  %s2 = inlined_call_operand.vmem [shape: bf16[32,16], index: 2, kind: input, shape index: {}]
  %s3 = inlined_call_operand.vmem [shape: bf16[32,16], index: 3, kind: input, shape index: {}]
  %s4 = inlined_call_operand.vmem [shape: bf16[32,16], index: 4, kind: output, shape index: {}]
  %s5 = sld [smem:[#allocation0]]
  $region26: #{lite_face_forward.15} parent=0
    _
  %s7 = ssub.s32 1, %s5
  %s8 = scalar_select 0, %s7, %s5
  // Predicated region
  $region2: #{lite_face_forward.15} parent=0 // pred_check
    _
  $region3: #{lite_face_forward.15} parent=0 // pred_check_branch
    %10 = sbr.rel (0) target = $region5
  $region4: #{lite_face_forward.15} parent=0 // pred_region
    _
  $region5: #{lite_face_forward.15} parent=0 // pred_fallthru
    _
  // Predicated region
  $region6: #{lite_face_forward.15} parent=0 // pred_check
    _
  $region7: #{lite_face_forward.15} parent=0 // pred_check_branch
    %12 = sbr.rel (0) target = $region9
  $region8: #{lite_face_forward.15} parent=0 // pred_region
    _
  $region9: #{lite_face_forward.15} parent=0 // pred_fallthru
    _
  // Predicated region
  $region10: #{lite_face_forward.15} parent=0 // pred_check
    _
  $region11: #{lite_face_forward.15} parent=0 // pred_check_branch
    %14 = sbr.rel (0) target = $region13
  $region12: #{lite_face_forward.15} parent=0 // pred_region
    _
  $region13: #{lite_face_forward.15} parent=0 // pred_fallthru
    _
  // Predicated region
  $region14: #{lite_face_forward.15} parent=0 // pred_check
    _
  $region15: #{lite_face_forward.15} parent=0 // pred_check_branch
    %16 = sbr.rel (0) target = $region17
  $region16: #{lite_face_forward.15} parent=0 // pred_region
    _
  $region17: #{lite_face_forward.15} parent=0 // pred_fallthru
    _
  %v17 = vld [vmem:[%s0] sm:$0xf]
  %v18 = vld [vmem:[%s0 + $0x4] sm:$0xf]
  %v19 = vld [vmem:[%s0 + $0x8] sm:$0xf]
  %v20 = vld [vmem:[%s0 + $0xc] sm:$0xf]
  %v21 = vld [vmem:[%s1] sm:$0xf]
  %v22 = vld [vmem:[%s1 + $0x4] sm:$0xf]
  %v23 = vld [vmem:[%s1 + $0x8] sm:$0xf]
  %v24 = vld [vmem:[%s1 + $0xc] sm:$0xf]
  %v25 = vunpack.c.l.bf16 %v17
  %v26 = vunpack.c.l.bf16 %v18
  %v27 = vunpack.c.l.bf16 %v19
  %v28 = vunpack.c.l.bf16 %v20
  %v29 = vunpack.c.l.bf16 %v21
  %v30 = vunpack.c.l.bf16 %v22
  %v31 = vunpack.c.l.bf16 %v23
  %v32 = vunpack.c.l.bf16 %v24
  %v33 = vmax.f32 %v25, %v29
  %v34 = vmax.f32 %v26, %v30
  %v35 = vmax.f32 %v27, %v31
  %v36 = vmax.f32 %v28, %v32
  %v37 = vpack.c.bf16 %v33, %v33
  %v38 = vpack.c.bf16 %v34, %v34
  %v39 = vpack.c.bf16 %v35, %v35
  %v40 = vpack.c.bf16 %v36, %v36
  %v41 = vld [vmem:[%s2] sm:$0xf]
  %v42 = vld [vmem:[%s2 + $0x4] sm:$0xf]
  %v43 = vld [vmem:[%s2 + $0x8] sm:$0xf]
  %v44 = vld [vmem:[%s2 + $0xc] sm:$0xf]
  %v45 = vld [vmem:[%s3] sm:$0xf]
  %v46 = vld [vmem:[%s3 + $0x4] sm:$0xf]
  %v47 = vld [vmem:[%s3 + $0x8] sm:$0xf]
  %v48 = vld [vmem:[%s3 + $0xc] sm:$0xf]
  %v49 = vunpack.c.l.bf16 %v41
  %v50 = vunpack.c.l.bf16 %v42
  %v51 = vunpack.c.l.bf16 %v43
  %v52 = vunpack.c.l.bf16 %v44
  %v53 = vunpack.c.l.bf16 %v45
  %v54 = vunpack.c.l.bf16 %v46
  %v55 = vunpack.c.l.bf16 %v47
  %v56 = vunpack.c.l.bf16 %v48
  %v57 = vmax.f32 %v49, %v53
  %v58 = vmax.f32 %v50, %v54
  %v59 = vmax.f32 %v51, %v55
  %v60 = vmax.f32 %v52, %v56
  %v61 = vpack.c.bf16 %v57, %v57
  %v62 = vpack.c.bf16 %v58, %v58
  %v63 = vpack.c.bf16 %v59, %v59
  %v64 = vpack.c.bf16 %v60, %v60
  %v65 = vunpack.c.l.bf16 %v37
  %v66 = vunpack.c.l.bf16 %v38
  %v67 = vunpack.c.l.bf16 %v39
  %v68 = vunpack.c.l.bf16 %v40
  %v69 = vunpack.c.l.bf16 %v61
  %v70 = vunpack.c.l.bf16 %v62
  %v71 = vunpack.c.l.bf16 %v63
  %v72 = vunpack.c.l.bf16 %v64
  %v73 = vmax.f32 %v65, %v69
  %v74 = vmax.f32 %v66, %v70
  %v75 = vmax.f32 %v67, %v71
  %v76 = vmax.f32 %v68, %v72
  %v77 = vpack.c.bf16 %v73, %v73
  %v78 = vpack.c.bf16 %v74, %v74
  %v79 = vpack.c.bf16 %v75, %v75
  %v80 = vpack.c.bf16 %v76, %v76
  %vm81 = vcmask 125952
  %82 = vst.msk [vmem:[%s4] sm:$0xf] %vm81, %v77
  %83 = vst.msk [vmem:[%s4 + $0x4] sm:$0xf] %vm81, %v78
  %84 = vst.msk [vmem:[%s4 + $0x8] sm:$0xf] %vm81, %v79
  %85 = vst.msk [vmem:[%s4 + $0xc] sm:$0xf] %vm81, %v80
  // Predicated region
  $region18: #{lite_face_forward.15} parent=0 // pred_check
    _
  $region19: #{lite_face_forward.15} parent=0 // pred_check_branch
    %87 = sbr.rel (0) target = $region21
  $region20: #{lite_face_forward.15} parent=0 // pred_region
    _
  $region21: #{lite_face_forward.15} parent=0 // pred_fallthru
    _
  // Predicated region
  $region22: #{lite_face_forward.15} parent=0 // pred_check
    _
  $region23: #{lite_face_forward.15} parent=0 // pred_check_branch
    %89 = sbr.rel (0) target = $region25
  $region24: #{lite_face_forward.15} parent=0 // pred_region
    _
  $region25: #{lite_face_forward.15} parent=0 // pred_fallthru
    _

// kernel: lite_face_forward.16
$region0: #{lite_face_forward.16}
  #allocation0 [shape = 'u32[]', space=smem, size = 0x4, offset = 0x4, fixed_abs, tag = 'smem constant byte address 0x4 - core index']
  #allocation1 [shape = 'u32[72,128]{1,0:T(1,128)}', space=vmem, size = 0x9000, scoped, tag = 'internal scratch']
  %s0 = inlined_call_operand.vmem [shape: bf16[32,144], index: 0, kind: input, shape index: {}]
  %s1 = inlined_call_operand.vmem [shape: bf16[144,64], index: 1, kind: input, shape index: {}]
  %s2 = inlined_call_operand.vmem [shape: f32[1,64], index: 2, kind: input, shape index: {}]
  %s3 = inlined_call_operand.vmem [shape: bf16[64,16], index: 3, kind: input, shape index: {}]
  %s4 = inlined_call_operand.vmem [shape: f32[1,16], index: 4, kind: input, shape index: {}]
  %s5 = inlined_call_operand.vmem [shape: bf16[32,16], index: 5, kind: output, shape index: {}]
  %s6 = sld [smem:[#allocation0]]
  $region30: #{lite_face_forward.16} parent=0
    _
  %s8 = ssub.s32 1, %s6
  %s9 = scalar_select 0, %s8, %s6
  // Predicated region
  $region2: #{lite_face_forward.16} parent=0 // pred_check
    _
  $region3: #{lite_face_forward.16} parent=0 // pred_check_branch
    %11 = sbr.rel (0) target = $region5
  $region4: #{lite_face_forward.16} parent=0 // pred_region
    _
  $region5: #{lite_face_forward.16} parent=0 // pred_fallthru
    _
  // Predicated region
  $region6: #{lite_face_forward.16} parent=0 // pred_check
    _
  $region7: #{lite_face_forward.16} parent=0 // pred_check_branch
    %13 = sbr.rel (0) target = $region9
  $region8: #{lite_face_forward.16} parent=0 // pred_region
    _
  $region9: #{lite_face_forward.16} parent=0 // pred_fallthru
    _
  // Predicated region
  $region10: #{lite_face_forward.16} parent=0 // pred_check
    _
  $region11: #{lite_face_forward.16} parent=0 // pred_check_branch
    %15 = sbr.rel (0) target = $region13
  $region12: #{lite_face_forward.16} parent=0 // pred_region
    _
  $region13: #{lite_face_forward.16} parent=0 // pred_fallthru
    _
  // Predicated region
  $region14: #{lite_face_forward.16} parent=0 // pred_check
    _
  $region15: #{lite_face_forward.16} parent=0 // pred_check_branch
    %17 = sbr.rel (0) target = $region17
  $region16: #{lite_face_forward.16} parent=0 // pred_region
    _
  $region17: #{lite_face_forward.16} parent=0 // pred_fallthru
    _
  // Predicated region
  $region18: #{lite_face_forward.16} parent=0 // pred_check
    _
  $region19: #{lite_face_forward.16} parent=0 // pred_check_branch
    %19 = sbr.rel (0) target = $region21
  $region20: #{lite_face_forward.16} parent=0 // pred_region
    _
  $region21: #{lite_face_forward.16} parent=0 // pred_fallthru
    _
  %v21 = vld [vmem:[%s0] sm:$0xff]
  %v22 = vld [vmem:[%s0 + $0x8] sm:$0xff]
  %v23 = vld [vmem:[%s0 + $0x10] sm:$0xff]
  %v24 = vld [vmem:[%s0 + $0x18] sm:$0xff]
  %v25 = vld [vmem:[%s1] sm:$0xf]
  %v26 = vld [vmem:[%s1 + $0x4] sm:$0xf]
  %v27 = vld [vmem:[%s1 + $0x8] sm:$0xf]
  %v28 = vld [vmem:[%s1 + $0xc] sm:$0xf]
  %v29 = vld [vmem:[%s1 + $0x10] sm:$0xf]
  %v30 = vld [vmem:[%s1 + $0x14] sm:$0xf]
  %v31 = vld [vmem:[%s1 + $0x18] sm:$0xf]
  %v32 = vld [vmem:[%s1 + $0x1c] sm:$0xf]
  %v33 = vld [vmem:[%s1 + $0x20] sm:$0xf]
  %v34 = vld [vmem:[%s1 + $0x24] sm:$0xf]
  %v35 = vld [vmem:[%s1 + $0x28] sm:$0xf]
  %v36 = vld [vmem:[%s1 + $0x2c] sm:$0xf]
  %v37 = vld [vmem:[%s1 + $0x30] sm:$0xf]
  %v38 = vld [vmem:[%s1 + $0x34] sm:$0xf]
  %v39 = vld [vmem:[%s1 + $0x38] sm:$0xf]
  %v40 = vld [vmem:[%s1 + $0x3c] sm:$0xf]
  %v41 = vld [vmem:[%s1 + $0x40] sm:$0xf]
  %v42 = vld [vmem:[%s1 + $0x44] sm:$0xf]
  %v43 = vld [vmem:[%s2] sm:$0x1]
  %v45 = vperm.slane %v43, 0
  %v51 = vunpack.c.l.b16 %v21
  %v52 = vunpack.c.h.b16 %v21
  %v53 = vunpack.c.l.b16 %v22
  %v54 = vunpack.c.h.b16 %v22
  %v55 = vunpack.c.l.b16 %v23
  %v56 = vunpack.c.h.b16 %v23
  %v57 = vunpack.c.l.b16 %v24
  %v58 = vunpack.c.h.b16 %v24
  %v59 = vpack.c.b16 %v53, %v51
  %v60 = vpack.c.b16 %v54, %v52
  %v61 = vpack.c.b16 %v57, %v55
  %v62 = vpack.c.b16 %v58, %v56
  %v83 = vunpack.c.l.b16 %v25
  %v84 = vunpack.c.l.b16 %v26
  %v85 = vunpack.c.l.b16 %v27
  %v86 = vunpack.c.l.b16 %v28
  %v87 = vunpack.c.l.b16 %v29
  %v88 = vunpack.c.l.b16 %v30
  %v89 = vunpack.c.l.b16 %v31
  %v90 = vunpack.c.l.b16 %v32
  %v91 = vunpack.c.l.b16 %v33
  %v92 = vunpack.c.l.b16 %v34
  %v93 = vunpack.c.l.b16 %v35
  %v94 = vunpack.c.l.b16 %v36
  %v95 = vunpack.c.l.b16 %v37
  %v96 = vunpack.c.l.b16 %v38
  %v97 = vunpack.c.l.b16 %v39
  %v98 = vunpack.c.l.b16 %v40
  %v99 = vunpack.c.l.b16 %v41
  %v100 = vunpack.c.l.b16 %v42
  %v101 = vpack.c.b16 %v84, %v83
  %v102 = vpack.c.b16 %v86, %v85
  %v103 = vpack.c.b16 %v88, %v87
  %v104 = vpack.c.b16 %v90, %v89
  %v105 = vpack.c.b16 %v92, %v91
  %v106 = vpack.c.b16 %v94, %v93
  %v107 = vpack.c.b16 %v96, %v95
  %v108 = vpack.c.b16 %v98, %v97
  %v109 = vpack.c.b16 %v100, %v99
  %vm119 = vcmask 130048
  %v121 = vsel %vm119, %v60, 0
  %v124 = vsel %vm119, %v62, 0
  %126 = vmatpush.bf16.msra.mxu0 %v108
  %127 = vmatpush.bf16.msra.mxu0 %v107
  %128 = vmatpush.bf16.msra.mxu0 %v106
  %129 = vmatpush.bf16.msra.mxu0 %v105
  %130 = vmatpush.bf16.msra.mxu0 %v104
  %131 = vmatpush.bf16.msra.mxu0 %v103
  %132 = vmatpush.bf16.msra.mxu0 %v102
  %133 = vmatpush.bf16.msra.mxu0 %v101
  %134 = vmatmul.bf16.gmra.mxu0 %v59
  %v135 = vpop.f32.mrf.mxu0
  %v136 = vadd.f32 %v45, %v135
  %v137 = vpop.f32.mrf.mxu0
  %v138 = vadd.f32 %v45, %v137
  %139 = vmatmul.bf16.gmra.mxu0 %v61
  %v140 = vpop.f32.mrf.mxu0
  %v141 = vadd.f32 %v45, %v140
  %v142 = vpop.f32.mrf.mxu0
  %v143 = vadd.f32 %v45, %v142
  %144 = vdwg.mxu0
  %145 = vmatpush.bf16.msra.mxu0 0
  %146 = vmatpush.bf16.msra.mxu0 0
  %147 = vmatpush.bf16.msra.mxu0 0
  %148 = vmatpush.bf16.msra.mxu0 0
  %149 = vmatpush.bf16.msra.mxu0 0
  %150 = vmatpush.bf16.msra.mxu0 0
  %151 = vmatpush.bf16.msra.mxu0 0
  %152 = vmatpush.bf16.msra.mxu0 %v109
  %153 = vmatmul.bf16.gmra.mxu0 %v121
  %v154 = vpop.f32.mrf.mxu0
  %v155 = vadd.f32 %v136, %v154
  %v156 = vpop.f32.mrf.mxu0
  %v157 = vadd.f32 %v138, %v156
  %158 = vmatmul.bf16.gmra.mxu0 %v124
  %v159 = vpop.f32.mrf.mxu0
  %v160 = vadd.f32 %v141, %v159
  %v161 = vpop.f32.mrf.mxu0
  %v162 = vadd.f32 %v143, %v161
  %163 = vdwg.mxu0
  %vm164 = vcmp.ge.f32.partialorder %v155, 0.0
  %vm165 = vcmp.ge.f32.partialorder %v157, 0.0
  %vm166 = vcmp.ge.f32.partialorder %v160, 0.0
  %vm167 = vcmp.ge.f32.partialorder %v162, 0.0
  %v168 = vmul.f32 %v155, 0.1
  %v169 = vmul.f32 %v157, 0.1
  %v170 = vmul.f32 %v160, 0.1
  %v171 = vmul.f32 %v162, 0.1
  %v172 = vsel %vm164, %v155, %v168
  %v173 = vsel %vm165, %v157, %v169
  %v174 = vsel %vm166, %v160, %v170
  %v175 = vsel %vm167, %v162, %v171
  %v176 = vpack.c.bf16 %v173, %v172
  %v177 = vpack.c.bf16 %v175, %v174
  %v178 = vld [vmem:[%s3] sm:$0xf]
  %v179 = vld [vmem:[%s3 + $0x4] sm:$0xf]
  %v180 = vld [vmem:[%s3 + $0x8] sm:$0xf]
  %v181 = vld [vmem:[%s3 + $0xc] sm:$0xf]
  %v182 = vld [vmem:[%s3 + $0x10] sm:$0xf]
  %v183 = vld [vmem:[%s3 + $0x14] sm:$0xf]
  %v184 = vld [vmem:[%s3 + $0x18] sm:$0xf]
  %v185 = vld [vmem:[%s3 + $0x1c] sm:$0xf]
  %v186 = vld [vmem:[%s4] sm:$0x1]
  %v188 = vperm.slane %v186, 0
  %v198 = vunpack.c.l.b16 %v178
  %v199 = vunpack.c.l.b16 %v179
  %v200 = vunpack.c.l.b16 %v180
  %v201 = vunpack.c.l.b16 %v181
  %v202 = vunpack.c.l.b16 %v182
  %v203 = vunpack.c.l.b16 %v183
  %v204 = vunpack.c.l.b16 %v184
  %v205 = vunpack.c.l.b16 %v185
  %v206 = vpack.c.b16 %v199, %v198
  %v207 = vpack.c.b16 %v201, %v200
  %v208 = vpack.c.b16 %v203, %v202
  %v209 = vpack.c.b16 %v205, %v204
  %vm214 = vcmask 523264
  %v216 = vsel %vm214, %v176, 0
  %v219 = vsel %vm214, %v177, 0
  %221 = vmatpush.bf16.msra.mxu0 0
  %222 = vmatpush.bf16.msra.mxu0 0
  %223 = vmatpush.bf16.msra.mxu0 0
  %224 = vmatpush.bf16.msra.mxu0 0
  %225 = vmatpush.bf16.msra.mxu0 %v209
  %226 = vmatpush.bf16.msra.mxu0 %v208
  %227 = vmatpush.bf16.msra.mxu0 %v207
  %228 = vmatpush.bf16.msra.mxu0 %v206
  %229 = vmatmul.bf16.gmra.mxu0 %v216
  %v230 = vpop.f32.mrf.mxu0
  %v231 = vadd.f32 %v188, %v230
  %v232 = vpop.f32.mrf.mxu0
  %v233 = vadd.f32 %v188, %v232
  %234 = vmatmul.bf16.gmra.mxu0 %v219
  %v235 = vpop.f32.mrf.mxu0
  %v236 = vadd.f32 %v188, %v235
  %v237 = vpop.f32.mrf.mxu0
  %v238 = vadd.f32 %v188, %v237
  %239 = vdwg.mxu0
  %vm240 = vcmp.ge.f32.partialorder %v231, 0.0
  %vm241 = vcmp.ge.f32.partialorder %v233, 0.0
  %vm242 = vcmp.ge.f32.partialorder %v236, 0.0
  %vm243 = vcmp.ge.f32.partialorder %v238, 0.0
  %v244 = vmul.f32 %v231, 0.1
  %v245 = vmul.f32 %v233, 0.1
  %v246 = vmul.f32 %v236, 0.1
  %v247 = vmul.f32 %v238, 0.1
  %v248 = vsel %vm240, %v231, %v244
  %v249 = vsel %vm241, %v233, %v245
  %v250 = vsel %vm242, %v236, %v246
  %v251 = vsel %vm243, %v238, %v247
  %v252 = vpack.c.bf16 %v248, %v248
  %v253 = vpack.c.bf16 %v249, %v249
  %v254 = vpack.c.bf16 %v250, %v250
  %v255 = vpack.c.bf16 %v251, %v251
  %vm256 = vcmask 125952
  %257 = vst.msk [vmem:[%s5] sm:$0xf] %vm256, %v252
  %258 = vst.msk [vmem:[%s5 + $0x4] sm:$0xf] %vm256, %v253
  %259 = vst.msk [vmem:[%s5 + $0x8] sm:$0xf] %vm256, %v254
  %260 = vst.msk [vmem:[%s5 + $0xc] sm:$0xf] %vm256, %v255
  // Predicated region
  $region22: #{lite_face_forward.16} parent=0 // pred_check
    _
  $region23: #{lite_face_forward.16} parent=0 // pred_check_branch
    %262 = sbr.rel (0) target = $region25
  $region24: #{lite_face_forward.16} parent=0 // pred_region
    _
  $region25: #{lite_face_forward.16} parent=0 // pred_fallthru
    _
  // Predicated region
  $region26: #{lite_face_forward.16} parent=0 // pred_check
    _
  $region27: #{lite_face_forward.16} parent=0 // pred_check_branch
    %264 = sbr.rel (0) target = $region29
  $region28: #{lite_face_forward.16} parent=0 // pred_region
    _
  $region29: #{lite_face_forward.16} parent=0 // pred_fallthru
    _

// kernel: lite_face_forward.17
$region0: #{lite_face_forward.17}
  #allocation0 [shape = 'u32[]', space=smem, size = 0x4, offset = 0x4, fixed_abs, tag = 'smem constant byte address 0x4 - core index']
  #allocation1 [shape = 'u32[72,128]{1,0:T(1,128)}', space=vmem, size = 0x9000, scoped, tag = 'internal scratch']
  %s0 = inlined_call_operand.vmem [shape: bf16[8,16], index: 0, kind: input, shape index: {}]
  %s1 = inlined_call_operand.vmem [shape: bf16[8,16], index: 1, kind: input, shape index: {}]
  %s2 = inlined_call_operand.vmem [shape: bf16[8,16], index: 2, kind: input, shape index: {}]
  %s3 = inlined_call_operand.vmem [shape: bf16[8,16], index: 3, kind: input, shape index: {}]
  %s4 = inlined_call_operand.vmem [shape: bf16[8,16], index: 4, kind: output, shape index: {}]
  %s5 = sld [smem:[#allocation0]]
  $region26: #{lite_face_forward.17} parent=0
    _
  %s7 = ssub.s32 1, %s5
  %s8 = scalar_select 0, %s7, %s5
  // Predicated region
  $region2: #{lite_face_forward.17} parent=0 // pred_check
    _
  $region3: #{lite_face_forward.17} parent=0 // pred_check_branch
    %10 = sbr.rel (0) target = $region5
  $region4: #{lite_face_forward.17} parent=0 // pred_region
    _
  $region5: #{lite_face_forward.17} parent=0 // pred_fallthru
    _
  // Predicated region
  $region6: #{lite_face_forward.17} parent=0 // pred_check
    _
  $region7: #{lite_face_forward.17} parent=0 // pred_check_branch
    %12 = sbr.rel (0) target = $region9
  $region8: #{lite_face_forward.17} parent=0 // pred_region
    _
  $region9: #{lite_face_forward.17} parent=0 // pred_fallthru
    _
  // Predicated region
  $region10: #{lite_face_forward.17} parent=0 // pred_check
    _
  $region11: #{lite_face_forward.17} parent=0 // pred_check_branch
    %14 = sbr.rel (0) target = $region13
  $region12: #{lite_face_forward.17} parent=0 // pred_region
    _
  $region13: #{lite_face_forward.17} parent=0 // pred_fallthru
    _
  // Predicated region
  $region14: #{lite_face_forward.17} parent=0 // pred_check
    _
  $region15: #{lite_face_forward.17} parent=0 // pred_check_branch
    %16 = sbr.rel (0) target = $region17
  $region16: #{lite_face_forward.17} parent=0 // pred_region
    _
  $region17: #{lite_face_forward.17} parent=0 // pred_fallthru
    _
  %v17 = vld [vmem:[%s0] sm:$0xf]
  %v18 = vld [vmem:[%s1] sm:$0xf]
  %v19 = vunpack.c.l.bf16 %v17
  %v20 = vunpack.c.l.bf16 %v18
  %v21 = vmax.f32 %v19, %v20
  %v22 = vpack.c.bf16 %v21, %v21
  %v23 = vld [vmem:[%s2] sm:$0xf]
  %v24 = vld [vmem:[%s3] sm:$0xf]
  %v25 = vunpack.c.l.bf16 %v23
  %v26 = vunpack.c.l.bf16 %v24
  %v27 = vmax.f32 %v25, %v26
  %v28 = vpack.c.bf16 %v27, %v27
  %v29 = vunpack.c.l.bf16 %v22
  %v30 = vunpack.c.l.bf16 %v28
  %v31 = vmax.f32 %v29, %v30
  %v32 = vpack.c.bf16 %v31, %v31
  %vm33 = vcmask 125952
  %34 = vst.msk [vmem:[%s4] sm:$0xf] %vm33, %v32
  // Predicated region
  $region18: #{lite_face_forward.17} parent=0 // pred_check
    _
  $region19: #{lite_face_forward.17} parent=0 // pred_check_branch
    %36 = sbr.rel (0) target = $region21
  $region20: #{lite_face_forward.17} parent=0 // pred_region
    _
  $region21: #{lite_face_forward.17} parent=0 // pred_fallthru
    _
  // Predicated region
  $region22: #{lite_face_forward.17} parent=0 // pred_check
    _
  $region23: #{lite_face_forward.17} parent=0 // pred_check_branch
    %38 = sbr.rel (0) target = $region25
  $region24: #{lite_face_forward.17} parent=0 // pred_region
    _
  $region25: #{lite_face_forward.17} parent=0 // pred_fallthru
    _

// kernel: lite_face_forward.18
$region0: #{lite_face_forward.18}
  #allocation0 [shape = 'u32[]', space=smem, size = 0x4, offset = 0x4, fixed_abs, tag = 'smem constant byte address 0x4 - core index']
  #allocation1 [shape = 'u32[72,128]{1,0:T(1,128)}', space=vmem, size = 0x9000, scoped, tag = 'internal scratch']
  %s0 = inlined_call_operand.vmem [shape: bf16[16,144], index: 0, kind: input, shape index: {}]
  %s1 = inlined_call_operand.vmem [shape: bf16[144,256], index: 1, kind: input, shape index: {}]
  %s2 = inlined_call_operand.vmem [shape: f32[1,256], index: 2, kind: input, shape index: {}]
  %s3 = inlined_call_operand.vmem [shape: bf16[16,256], index: 3, kind: output, shape index: {}]
  %s4 = sld [smem:[#allocation0]]
  $region22: #{lite_face_forward.18} parent=0
    _
  %s6 = ssub.s32 1, %s4
  %s7 = scalar_select 0, %s6, %s4
  // Predicated region
  $region2: #{lite_face_forward.18} parent=0 // pred_check
    _
  $region3: #{lite_face_forward.18} parent=0 // pred_check_branch
    %9 = sbr.rel (0) target = $region5
  $region4: #{lite_face_forward.18} parent=0 // pred_region
    _
  $region5: #{lite_face_forward.18} parent=0 // pred_fallthru
    _
  // Predicated region
  $region6: #{lite_face_forward.18} parent=0 // pred_check
    _
  $region7: #{lite_face_forward.18} parent=0 // pred_check_branch
    %11 = sbr.rel (0) target = $region9
  $region8: #{lite_face_forward.18} parent=0 // pred_region
    _
  $region9: #{lite_face_forward.18} parent=0 // pred_fallthru
    _
  // Predicated region
  $region10: #{lite_face_forward.18} parent=0 // pred_check
    _
  $region11: #{lite_face_forward.18} parent=0 // pred_check_branch
    %13 = sbr.rel (0) target = $region13
  $region12: #{lite_face_forward.18} parent=0 // pred_region
    _
  $region13: #{lite_face_forward.18} parent=0 // pred_fallthru
    _
  %v15 = vld [vmem:[%s0] sm:$0xff]
  %v16 = vld [vmem:[%s0 + $0x8] sm:$0xff]
  %v17 = vld [vmem:[%s1] sm:$0xff]
  %v18 = vld [vmem:[%s1 + $0x8] sm:$0xff]
  %v19 = vld [vmem:[%s1 + $0x10] sm:$0xff]
  %v20 = vld [vmem:[%s1 + $0x18] sm:$0xff]
  %v21 = vld [vmem:[%s1 + $0x20] sm:$0xff]
  %v22 = vld [vmem:[%s1 + $0x28] sm:$0xff]
  %v23 = vld [vmem:[%s1 + $0x30] sm:$0xff]
  %v24 = vld [vmem:[%s1 + $0x38] sm:$0xff]
  %v25 = vld [vmem:[%s1 + $0x40] sm:$0xff]
  %v26 = vld [vmem:[%s1 + $0x48] sm:$0xff]
  %v27 = vld [vmem:[%s1 + $0x50] sm:$0xff]
  %v28 = vld [vmem:[%s1 + $0x58] sm:$0xff]
  %v29 = vld [vmem:[%s1 + $0x60] sm:$0xff]
  %v30 = vld [vmem:[%s1 + $0x68] sm:$0xff]
  %v31 = vld [vmem:[%s1 + $0x70] sm:$0xff]
  %v32 = vld [vmem:[%s1 + $0x78] sm:$0xff]
  %v33 = vld [vmem:[%s1 + $0x80] sm:$0xff]
  %v34 = vld [vmem:[%s1 + $0x88] sm:$0xff]
  %v35 = vld [vmem:[%s2] sm:$0x3]
  %v37 = vperm.slane %v35, 0
  %v38 = vperm.slane %v35, 1
  %v43 = vunpack.c.l.b16 %v15
  %v44 = vunpack.c.h.b16 %v15
  %v45 = vunpack.c.l.b16 %v16
  %v46 = vunpack.c.h.b16 %v16
  %v47 = vpack.c.b16 %v45, %v43
  %v48 = vpack.c.b16 %v46, %v44
  %v68 = vunpack.c.l.b16 %v17
  %v69 = vunpack.c.h.b16 %v17
  %v70 = vunpack.c.l.b16 %v18
  %v71 = vunpack.c.h.b16 %v18
  %v72 = vunpack.c.l.b16 %v19
  %v73 = vunpack.c.h.b16 %v19
  %v74 = vunpack.c.l.b16 %v20
  %v75 = vunpack.c.h.b16 %v20
  %v76 = vunpack.c.l.b16 %v21
  %v77 = vunpack.c.h.b16 %v21
  %v78 = vunpack.c.l.b16 %v22
  %v79 = vunpack.c.h.b16 %v22
  %v80 = vunpack.c.l.b16 %v23
  %v81 = vunpack.c.h.b16 %v23
  %v82 = vunpack.c.l.b16 %v24
  %v83 = vunpack.c.h.b16 %v24
  %v84 = vunpack.c.l.b16 %v25
  %v85 = vunpack.c.h.b16 %v25
  %v86 = vunpack.c.l.b16 %v26
  %v87 = vunpack.c.h.b16 %v26
  %v88 = vunpack.c.l.b16 %v27
  %v89 = vunpack.c.h.b16 %v27
  %v90 = vunpack.c.l.b16 %v28
  %v91 = vunpack.c.h.b16 %v28
  %v92 = vunpack.c.l.b16 %v29
  %v93 = vunpack.c.h.b16 %v29
  %v94 = vunpack.c.l.b16 %v30
  %v95 = vunpack.c.h.b16 %v30
  %v96 = vunpack.c.l.b16 %v31
  %v97 = vunpack.c.h.b16 %v31
  %v98 = vunpack.c.l.b16 %v32
  %v99 = vunpack.c.h.b16 %v32
  %v100 = vunpack.c.l.b16 %v33
  %v101 = vunpack.c.h.b16 %v33
  %v102 = vunpack.c.l.b16 %v34
  %v103 = vunpack.c.h.b16 %v34
  %v104 = vpack.c.b16 %v70, %v68
  %v105 = vpack.c.b16 %v71, %v69
  %v106 = vpack.c.b16 %v74, %v72
  %v107 = vpack.c.b16 %v75, %v73
  %v108 = vpack.c.b16 %v78, %v76
  %v109 = vpack.c.b16 %v79, %v77
  %v110 = vpack.c.b16 %v82, %v80
  %v111 = vpack.c.b16 %v83, %v81
  %v112 = vpack.c.b16 %v86, %v84
  %v113 = vpack.c.b16 %v87, %v85
  %v114 = vpack.c.b16 %v90, %v88
  %v115 = vpack.c.b16 %v91, %v89
  %v116 = vpack.c.b16 %v94, %v92
  %v117 = vpack.c.b16 %v95, %v93
  %v118 = vpack.c.b16 %v98, %v96
  %v119 = vpack.c.b16 %v99, %v97
  %v120 = vpack.c.b16 %v102, %v100
  %v121 = vpack.c.b16 %v103, %v101
  %vm140 = vcmask 130048
  %v142 = vsel %vm140, %v48, 0
  %144 = vmatpush.bf16.msra.mxu0 %v118
  %145 = vmatpush.bf16.msra.mxu0 %v116
  %146 = vmatpush.bf16.msra.mxu0 %v114
  %147 = vmatpush.bf16.msra.mxu0 %v112
  %148 = vmatpush.bf16.msra.mxu0 %v110
  %149 = vmatpush.bf16.msra.mxu0 %v108
  %150 = vmatpush.bf16.msra.mxu0 %v106
  %151 = vmatpush.bf16.msra.mxu0 %v104
  %152 = vmatmul.bf16.gmra.mxu0 %v47
  %v153 = vpop.f32.mrf.mxu0
  %v154 = vadd.f32 %v37, %v153
  %v155 = vpop.f32.mrf.mxu0
  %v156 = vadd.f32 %v37, %v155
  %157 = vdwg.mxu0
  %158 = vmatpush.bf16.msra.mxu0 0
  %159 = vmatpush.bf16.msra.mxu0 0
  %160 = vmatpush.bf16.msra.mxu0 0
  %161 = vmatpush.bf16.msra.mxu0 0
  %162 = vmatpush.bf16.msra.mxu0 0
  %163 = vmatpush.bf16.msra.mxu0 0
  %164 = vmatpush.bf16.msra.mxu0 0
  %165 = vmatpush.bf16.msra.mxu0 %v120
  %166 = vmatmul.bf16.gmra.mxu0 %v142
  %v167 = vpop.f32.mrf.mxu0
  %v168 = vadd.f32 %v154, %v167
  %v169 = vpop.f32.mrf.mxu0
  %v170 = vadd.f32 %v156, %v169
  %171 = vdwg.mxu0
  %172 = vmatpush.bf16.msra.mxu0 %v119
  %173 = vmatpush.bf16.msra.mxu0 %v117
  %174 = vmatpush.bf16.msra.mxu0 %v115
  %175 = vmatpush.bf16.msra.mxu0 %v113
  %176 = vmatpush.bf16.msra.mxu0 %v111
  %177 = vmatpush.bf16.msra.mxu0 %v109
  %178 = vmatpush.bf16.msra.mxu0 %v107
  %179 = vmatpush.bf16.msra.mxu0 %v105
  %180 = vmatmul.bf16.gmra.mxu0 %v47
  %v181 = vpop.f32.mrf.mxu0
  %v182 = vadd.f32 %v38, %v181
  %v183 = vpop.f32.mrf.mxu0
  %v184 = vadd.f32 %v38, %v183
  %185 = vdwg.mxu0
  %186 = vmatpush.bf16.msra.mxu0 0
  %187 = vmatpush.bf16.msra.mxu0 0
  %188 = vmatpush.bf16.msra.mxu0 0
  %189 = vmatpush.bf16.msra.mxu0 0
  %190 = vmatpush.bf16.msra.mxu0 0
  %191 = vmatpush.bf16.msra.mxu0 0
  %192 = vmatpush.bf16.msra.mxu0 0
  %193 = vmatpush.bf16.msra.mxu0 %v121
  %194 = vmatmul.bf16.gmra.mxu0 %v142
  %v195 = vpop.f32.mrf.mxu0
  %v196 = vadd.f32 %v182, %v195
  %v197 = vpop.f32.mrf.mxu0
  %v198 = vadd.f32 %v184, %v197
  %199 = vdwg.mxu0
  %vm200 = vcmp.ge.f32.partialorder %v168, 0.0
  %vm201 = vcmp.ge.f32.partialorder %v196, 0.0
  %vm202 = vcmp.ge.f32.partialorder %v170, 0.0
  %vm203 = vcmp.ge.f32.partialorder %v198, 0.0
  %v204 = vmul.f32 %v168, 0.1
  %v205 = vmul.f32 %v196, 0.1
  %v206 = vmul.f32 %v170, 0.1
  %v207 = vmul.f32 %v198, 0.1
  %v208 = vsel %vm200, %v168, %v204
  %v209 = vsel %vm201, %v196, %v205
  %v210 = vsel %vm202, %v170, %v206
  %v211 = vsel %vm203, %v198, %v207
  %v212 = vpack.c.bf16 %v209, %v208
  %v213 = vpack.c.bf16 %v211, %v210
  %214 = vst [vmem:[%s3] sm:$0xff] %v212
  %215 = vst [vmem:[%s3 + $0x8] sm:$0xff] %v213
  // Predicated region
  $region14: #{lite_face_forward.18} parent=0 // pred_check
    _
  $region15: #{lite_face_forward.18} parent=0 // pred_check_branch
    %217 = sbr.rel (0) target = $region17
  $region16: #{lite_face_forward.18} parent=0 // pred_region
    _
  $region17: #{lite_face_forward.18} parent=0 // pred_fallthru
    _
  // Predicated region
  $region18: #{lite_face_forward.18} parent=0 // pred_check
    _
  $region19: #{lite_face_forward.18} parent=0 // pred_check_branch
    %219 = sbr.rel (0) target = $region21
  $region20: #{lite_face_forward.18} parent=0 // pred_region
    _
  $region21: #{lite_face_forward.18} parent=0 // pred_fallthru
    _

// kernel: lite_face_forward.19
$region0: #{lite_face_forward.19}
  #allocation0 [shape = 'u32[]', space=smem, size = 0x4, offset = 0x4, fixed_abs, tag = 'smem constant byte address 0x4 - core index']
  #allocation1 [shape = 'u32[72,128]{1,0:T(1,128)}', space=vmem, size = 0x9000, scoped, tag = 'internal scratch']
  %s0 = inlined_call_operand.vmem [shape: bf16[8,256], index: 0, kind: input, shape index: {}]
  %s1 = inlined_call_operand.vmem [shape: f32[2,8], index: 1, kind: input, shape index: {}]
  %s2 = inlined_call_operand.vmem [shape: bf16[256,256], index: 2, kind: input, shape index: {}]
  %s3 = inlined_call_operand.vmem [shape: f32[1,256], index: 3, kind: input, shape index: {}]
  %s4 = inlined_call_operand.vmem [shape: bf16[256,32], index: 4, kind: input, shape index: {}]
  %s5 = inlined_call_operand.vmem [shape: f32[1,32], index: 5, kind: input, shape index: {}]
  %s6 = inlined_call_operand.hbm [shape: f32[2,32], index: 6, kind: output, shape index: {}]
  %s7 = sld [smem:[#allocation0]]
  $region34: #{lite_face_forward.19} parent=0
    _
  %s9 = ssub.s32 1, %s7
  %s10 = scalar_select 0, %s9, %s7
  $region1: #{lite_face_forward.19} parent=0
    #allocation2 [shape = 'u8[1024]{0}', space=vmem, size = 0x400, scoped, tag = 'output window, operand 0, single buffered']
    #allocation3 [shape = 's32[1]{0}', space=sflag, size = 0x4, scoped, tag = 'scoped memory for lite_face_forward.19']
    %11 = vsyncpa [#allocation3], 0
    // Predicated region
    $region2: #{lite_face_forward.19} parent=1 // pred_check
      _
    $region3: #{lite_face_forward.19} parent=1 // pred_check_branch
      %13 = sbr.rel (0) target = $region5
    $region4: #{lite_face_forward.19} parent=1 // pred_region
      _
    $region5: #{lite_face_forward.19} parent=1 // pred_fallthru
      _
    // Predicated region
    $region6: #{lite_face_forward.19} parent=1 // pred_check
      _
    $region7: #{lite_face_forward.19} parent=1 // pred_check_branch
      %15 = sbr.rel (0) target = $region9
    $region8: #{lite_face_forward.19} parent=1 // pred_region
      _
    $region9: #{lite_face_forward.19} parent=1 // pred_fallthru
      _
    // Predicated region
    $region10: #{lite_face_forward.19} parent=1 // pred_check
      _
    $region11: #{lite_face_forward.19} parent=1 // pred_check_branch
      %17 = sbr.rel (0) target = $region13
    $region12: #{lite_face_forward.19} parent=1 // pred_region
      _
    $region13: #{lite_face_forward.19} parent=1 // pred_fallthru
      _
    // Predicated region
    $region14: #{lite_face_forward.19} parent=1 // pred_check
      _
    $region15: #{lite_face_forward.19} parent=1 // pred_check_branch
      %19 = sbr.rel (0) target = $region17
    $region16: #{lite_face_forward.19} parent=1 // pred_region
      _
    $region17: #{lite_face_forward.19} parent=1 // pred_fallthru
      _
    // Predicated region
    $region18: #{lite_face_forward.19} parent=1 // pred_check
      _
    $region19: #{lite_face_forward.19} parent=1 // pred_check_branch
      %21 = sbr.rel (0) target = $region21
    $region20: #{lite_face_forward.19} parent=1 // pred_region
      _
    $region21: #{lite_face_forward.19} parent=1 // pred_fallthru
      _
    // Predicated region
    $region22: #{lite_face_forward.19} parent=1 // pred_check
      _
    $region23: #{lite_face_forward.19} parent=1 // pred_check_branch
      %23 = sbr.rel (0) target = $region25
    $region24: #{lite_face_forward.19} parent=1 // pred_region
      _
    $region25: #{lite_face_forward.19} parent=1 // pred_fallthru
      _
    %v24 = vld [vmem:[%s1] sm:$0x3]
    %v25 = vld [vmem:[%s0] sm:$0xff]
    %v26 = vunpack.c.l.bf16 %v25
    %v27 = vunpack.c.h.bf16 %v25
    %vm28 = vcmask 64512
    %v30 = vsel %vm28, %v24, 0
    %32 = vmatpush.msra.mxu0 0.0
    %33 = vmatpush.msra.mxu0 0.0
    %34 = vmatpush.msra.mxu0 0.0
    %35 = vmatpush.msra.mxu0 0.0
    %36 = vmatpush.msra.mxu0 0.0
    %37 = vmatpush.msra.mxu0 0.0
    %38 = vmatpush.msra.mxu0 0.0
    %39 = vmatpush.msra.mxu0 0.0
    %40 = vmatpush.msra.mxu0 0.0
    %41 = vmatpush.msra.mxu0 0.0
    %42 = vmatpush.msra.mxu0 0.0
    %43 = vmatpush.msra.mxu0 0.0
    %44 = vmatpush.msra.mxu0 0.0
    %45 = vmatpush.msra.mxu0 0.0
    %46 = vmatpush.msra.mxu0 0.0
    %47 = vmatpush.msra.mxu0 %v26
    %48 = vmatmul.f32.gmra.mxu0 %v30
    %v49 = vpop.f32.mrf.mxu0
    %v50 = vadd.f32 0.0, %v49
    %51 = vdwg.mxu0
    %52 = vmatpush.msra.mxu0 0.0
    %53 = vmatpush.msra.mxu0 0.0
    %54 = vmatpush.msra.mxu0 0.0
    %55 = vmatpush.msra.mxu0 0.0
    %56 = vmatpush.msra.mxu0 0.0
    %57 = vmatpush.msra.mxu0 0.0
    %58 = vmatpush.msra.mxu0 0.0
    %59 = vmatpush.msra.mxu0 0.0
    %60 = vmatpush.msra.mxu0 0.0
    %61 = vmatpush.msra.mxu0 0.0
    %62 = vmatpush.msra.mxu0 0.0
    %63 = vmatpush.msra.mxu0 0.0
    %64 = vmatpush.msra.mxu0 0.0
    %65 = vmatpush.msra.mxu0 0.0
    %66 = vmatpush.msra.mxu0 0.0
    %67 = vmatpush.msra.mxu0 %v27
    %68 = vmatmul.f32.gmra.mxu0 %v30
    %v69 = vpop.f32.mrf.mxu0
    %v70 = vadd.f32 0.0, %v69
    %71 = vdwg.mxu0
    %v72 = vpack.c.bf16 %v50, %v50
    %v73 = vpack.c.bf16 %v70, %v70
    %v74 = vld [vmem:[%s2] sm:$0xff]
    %v75 = vld [vmem:[%s2 + $0x8] sm:$0xff]
    %v76 = vld [vmem:[%s2 + $0x10] sm:$0xff]
    %v77 = vld [vmem:[%s2 + $0x18] sm:$0xff]
    %v78 = vld [vmem:[%s2 + $0x20] sm:$0xff]
    %v79 = vld [vmem:[%s2 + $0x28] sm:$0xff]
    %v80 = vld [vmem:[%s2 + $0x30] sm:$0xff]
    %v81 = vld [vmem:[%s2 + $0x38] sm:$0xff]
    %v82 = vld [vmem:[%s2 + $0x40] sm:$0xff]
    %v83 = vld [vmem:[%s2 + $0x48] sm:$0xff]
    %v84 = vld [vmem:[%s2 + $0x50] sm:$0xff]
    %v85 = vld [vmem:[%s2 + $0x58] sm:$0xff]
    %v86 = vld [vmem:[%s2 + $0x60] sm:$0xff]
    %v87 = vld [vmem:[%s2 + $0x68] sm:$0xff]
    %v88 = vld [vmem:[%s2 + $0x70] sm:$0xff]
    %v89 = vld [vmem:[%s2 + $0x78] sm:$0xff]
    %v90 = vld [vmem:[%s2 + $0x80] sm:$0xff]
    %v91 = vld [vmem:[%s2 + $0x88] sm:$0xff]
    %v92 = vld [vmem:[%s2 + $0x90] sm:$0xff]
    %v93 = vld [vmem:[%s2 + $0x98] sm:$0xff]
    %v94 = vld [vmem:[%s2 + $0xa0] sm:$0xff]
    %v95 = vld [vmem:[%s2 + $0xa8] sm:$0xff]
    %v96 = vld [vmem:[%s2 + $0xb0] sm:$0xff]
    %v97 = vld [vmem:[%s2 + $0xb8] sm:$0xff]
    %v98 = vld [vmem:[%s2 + $0xc0] sm:$0xff]
    %v99 = vld [vmem:[%s2 + $0xc8] sm:$0xff]
    %v100 = vld [vmem:[%s2 + $0xd0] sm:$0xff]
    %v101 = vld [vmem:[%s2 + $0xd8] sm:$0xff]
    %v102 = vld [vmem:[%s2 + $0xe0] sm:$0xff]
    %v103 = vld [vmem:[%s2 + $0xe8] sm:$0xff]
    %v104 = vld [vmem:[%s2 + $0xf0] sm:$0xff]
    %v105 = vld [vmem:[%s2 + $0xf8] sm:$0xff]
    %v106 = vld [vmem:[%s3] sm:$0x3]
    %v108 = vperm.slane %v106, 0
    %v109 = vperm.slane %v106, 1
    %v144 = vunpack.c.l.b16 %v74
    %v145 = vunpack.c.h.b16 %v74
    %v146 = vunpack.c.l.b16 %v75
    %v147 = vunpack.c.h.b16 %v75
    %v148 = vunpack.c.l.b16 %v76
    %v149 = vunpack.c.h.b16 %v76
    %v150 = vunpack.c.l.b16 %v77
    %v151 = vunpack.c.h.b16 %v77
    %v152 = vunpack.c.l.b16 %v78
    %v153 = vunpack.c.h.b16 %v78
    %v154 = vunpack.c.l.b16 %v79
    %v155 = vunpack.c.h.b16 %v79
    %v156 = vunpack.c.l.b16 %v80
    %v157 = vunpack.c.h.b16 %v80
    %v158 = vunpack.c.l.b16 %v81
    %v159 = vunpack.c.h.b16 %v81
    %v160 = vunpack.c.l.b16 %v82
    %v161 = vunpack.c.h.b16 %v82
    %v162 = vunpack.c.l.b16 %v83
    %v163 = vunpack.c.h.b16 %v83
    %v164 = vunpack.c.l.b16 %v84
    %v165 = vunpack.c.h.b16 %v84
    %v166 = vunpack.c.l.b16 %v85
    %v167 = vunpack.c.h.b16 %v85
    %v168 = vunpack.c.l.b16 %v86
    %v169 = vunpack.c.h.b16 %v86
    %v170 = vunpack.c.l.b16 %v87
    %v171 = vunpack.c.h.b16 %v87
    %v172 = vunpack.c.l.b16 %v88
    %v173 = vunpack.c.h.b16 %v88
    %v174 = vunpack.c.l.b16 %v89
    %v175 = vunpack.c.h.b16 %v89
    %v176 = vunpack.c.l.b16 %v90
    %v177 = vunpack.c.h.b16 %v90
    %v178 = vunpack.c.l.b16 %v91
    %v179 = vunpack.c.h.b16 %v91
    %v180 = vunpack.c.l.b16 %v92
    %v181 = vunpack.c.h.b16 %v92
    %v182 = vunpack.c.l.b16 %v93
    %v183 = vunpack.c.h.b16 %v93
    %v184 = vunpack.c.l.b16 %v94
    %v185 = vunpack.c.h.b16 %v94
    %v186 = vunpack.c.l.b16 %v95
    %v187 = vunpack.c.h.b16 %v95
    %v188 = vunpack.c.l.b16 %v96
    %v189 = vunpack.c.h.b16 %v96
    %v190 = vunpack.c.l.b16 %v97
    %v191 = vunpack.c.h.b16 %v97
    %v192 = vunpack.c.l.b16 %v98
    %v193 = vunpack.c.h.b16 %v98
    %v194 = vunpack.c.l.b16 %v99
    %v195 = vunpack.c.h.b16 %v99
    %v196 = vunpack.c.l.b16 %v100
    %v197 = vunpack.c.h.b16 %v100
    %v198 = vunpack.c.l.b16 %v101
    %v199 = vunpack.c.h.b16 %v101
    %v200 = vunpack.c.l.b16 %v102
    %v201 = vunpack.c.h.b16 %v102
    %v202 = vunpack.c.l.b16 %v103
    %v203 = vunpack.c.h.b16 %v103
    %v204 = vunpack.c.l.b16 %v104
    %v205 = vunpack.c.h.b16 %v104
    %v206 = vunpack.c.l.b16 %v105
    %v207 = vunpack.c.h.b16 %v105
    %v208 = vpack.c.b16 %v146, %v144
    %v209 = vpack.c.b16 %v147, %v145
    %v210 = vpack.c.b16 %v150, %v148
    %v211 = vpack.c.b16 %v151, %v149
    %v212 = vpack.c.b16 %v154, %v152
    %v213 = vpack.c.b16 %v155, %v153
    %v214 = vpack.c.b16 %v158, %v156
    %v215 = vpack.c.b16 %v159, %v157
    %v216 = vpack.c.b16 %v162, %v160
    %v217 = vpack.c.b16 %v163, %v161
    %v218 = vpack.c.b16 %v166, %v164
    %v219 = vpack.c.b16 %v167, %v165
    %v220 = vpack.c.b16 %v170, %v168
    %v221 = vpack.c.b16 %v171, %v169
    %v222 = vpack.c.b16 %v174, %v172
    %v223 = vpack.c.b16 %v175, %v173
    %v224 = vpack.c.b16 %v178, %v176
    %v225 = vpack.c.b16 %v179, %v177
    %v226 = vpack.c.b16 %v182, %v180
    %v227 = vpack.c.b16 %v183, %v181
    %v228 = vpack.c.b16 %v186, %v184
    %v229 = vpack.c.b16 %v187, %v185
    %v230 = vpack.c.b16 %v190, %v188
    %v231 = vpack.c.b16 %v191, %v189
    %v232 = vpack.c.b16 %v194, %v192
    %v233 = vpack.c.b16 %v195, %v193
    %v234 = vpack.c.b16 %v198, %v196
    %v235 = vpack.c.b16 %v199, %v197
    %v236 = vpack.c.b16 %v202, %v200
    %v237 = vpack.c.b16 %v203, %v201
    %v238 = vpack.c.b16 %v206, %v204
    %v239 = vpack.c.b16 %v207, %v205
    %272 = vmatpush.bf16.msra.mxu0 %v222
    %273 = vmatpush.bf16.msra.mxu0 %v220
    %274 = vmatpush.bf16.msra.mxu0 %v218
    %275 = vmatpush.bf16.msra.mxu0 %v216
    %276 = vmatpush.bf16.msra.mxu0 %v214
    %277 = vmatpush.bf16.msra.mxu0 %v212
    %278 = vmatpush.bf16.msra.mxu0 %v210
    %279 = vmatpush.bf16.msra.mxu0 %v208
    %280 = vmatmul.bf16.gmra.mxu0 %v72
    %v281 = vpop.f32.mrf.mxu0
    %v282 = vadd.f32 %v108, %v281
    %v283 = vpop.f32.mrf.mxu0
    %284 = vdwg.mxu0
    %285 = vmatpush.bf16.msra.mxu0 %v238
    %286 = vmatpush.bf16.msra.mxu0 %v236
    %287 = vmatpush.bf16.msra.mxu0 %v234
    %288 = vmatpush.bf16.msra.mxu0 %v232
    %289 = vmatpush.bf16.msra.mxu0 %v230
    %290 = vmatpush.bf16.msra.mxu0 %v228
    %291 = vmatpush.bf16.msra.mxu0 %v226
    %292 = vmatpush.bf16.msra.mxu0 %v224
    %293 = vmatmul.bf16.gmra.mxu0 %v73
    %v294 = vpop.f32.mrf.mxu0
    %v295 = vadd.f32 %v282, %v294
    %v296 = vpop.f32.mrf.mxu0
    %297 = vdwg.mxu0
    %298 = vmatpush.bf16.msra.mxu0 %v223
    %299 = vmatpush.bf16.msra.mxu0 %v221
    %300 = vmatpush.bf16.msra.mxu0 %v219
    %301 = vmatpush.bf16.msra.mxu0 %v217
    %302 = vmatpush.bf16.msra.mxu0 %v215
    %303 = vmatpush.bf16.msra.mxu0 %v213
    %304 = vmatpush.bf16.msra.mxu0 %v211
    %305 = vmatpush.bf16.msra.mxu0 %v209
    %306 = vmatmul.bf16.gmra.mxu0 %v72
    %v307 = vpop.f32.mrf.mxu0
    %v308 = vadd.f32 %v109, %v307
    %v309 = vpop.f32.mrf.mxu0
    %310 = vdwg.mxu0
    %311 = vmatpush.bf16.msra.mxu0 %v239
    %312 = vmatpush.bf16.msra.mxu0 %v237
    %313 = vmatpush.bf16.msra.mxu0 %v235
    %314 = vmatpush.bf16.msra.mxu0 %v233
    %315 = vmatpush.bf16.msra.mxu0 %v231
    %316 = vmatpush.bf16.msra.mxu0 %v229
    %317 = vmatpush.bf16.msra.mxu0 %v227
    %318 = vmatpush.bf16.msra.mxu0 %v225
    %319 = vmatmul.bf16.gmra.mxu0 %v73
    %v320 = vpop.f32.mrf.mxu0
    %v321 = vadd.f32 %v308, %v320
    %v322 = vpop.f32.mrf.mxu0
    %323 = vdwg.mxu0
    %vm324 = vcmp.ge.f32.partialorder %v295, 0.0
    %vm325 = vcmp.ge.f32.partialorder %v321, 0.0
    %v326 = vmul.f32 %v295, 0.1
    %v327 = vmul.f32 %v321, 0.1
    %v328 = vsel %vm324, %v295, %v326
    %v329 = vsel %vm325, %v321, %v327
    %v330 = vpack.c.bf16 %v328, %v328
    %v331 = vpack.c.bf16 %v329, %v329
    %v332 = vld [vmem:[%s4] sm:$0xf]
    %v333 = vld [vmem:[%s4 + $0x4] sm:$0xf]
    %v334 = vld [vmem:[%s4 + $0x8] sm:$0xf]
    %v335 = vld [vmem:[%s4 + $0xc] sm:$0xf]
    %v336 = vld [vmem:[%s4 + $0x10] sm:$0xf]
    %v337 = vld [vmem:[%s4 + $0x14] sm:$0xf]
    %v338 = vld [vmem:[%s4 + $0x18] sm:$0xf]
    %v339 = vld [vmem:[%s4 + $0x1c] sm:$0xf]
    %v340 = vld [vmem:[%s4 + $0x20] sm:$0xf]
    %v341 = vld [vmem:[%s4 + $0x24] sm:$0xf]
    %v342 = vld [vmem:[%s4 + $0x28] sm:$0xf]
    %v343 = vld [vmem:[%s4 + $0x2c] sm:$0xf]
    %v344 = vld [vmem:[%s4 + $0x30] sm:$0xf]
    %v345 = vld [vmem:[%s4 + $0x34] sm:$0xf]
    %v346 = vld [vmem:[%s4 + $0x38] sm:$0xf]
    %v347 = vld [vmem:[%s4 + $0x3c] sm:$0xf]
    %v348 = vld [vmem:[%s4 + $0x40] sm:$0xf]
    %v349 = vld [vmem:[%s4 + $0x44] sm:$0xf]
    %v350 = vld [vmem:[%s4 + $0x48] sm:$0xf]
    %v351 = vld [vmem:[%s4 + $0x4c] sm:$0xf]
    %v352 = vld [vmem:[%s4 + $0x50] sm:$0xf]
    %v353 = vld [vmem:[%s4 + $0x54] sm:$0xf]
    %v354 = vld [vmem:[%s4 + $0x58] sm:$0xf]
    %v355 = vld [vmem:[%s4 + $0x5c] sm:$0xf]
    %v356 = vld [vmem:[%s4 + $0x60] sm:$0xf]
    %v357 = vld [vmem:[%s4 + $0x64] sm:$0xf]
    %v358 = vld [vmem:[%s4 + $0x68] sm:$0xf]
    %v359 = vld [vmem:[%s4 + $0x6c] sm:$0xf]
    %v360 = vld [vmem:[%s4 + $0x70] sm:$0xf]
    %v361 = vld [vmem:[%s4 + $0x74] sm:$0xf]
    %v362 = vld [vmem:[%s4 + $0x78] sm:$0xf]
    %v363 = vld [vmem:[%s4 + $0x7c] sm:$0xf]
    %v364 = vld [vmem:[%s5] sm:$0x1]
    %v366 = vperm.slane %v364, 0
    %v400 = vunpack.c.l.b16 %v332
    %v401 = vunpack.c.l.b16 %v333
    %v402 = vunpack.c.l.b16 %v334
    %v403 = vunpack.c.l.b16 %v335
    %v404 = vunpack.c.l.b16 %v336
    %v405 = vunpack.c.l.b16 %v337
    %v406 = vunpack.c.l.b16 %v338
    %v407 = vunpack.c.l.b16 %v339
    %v408 = vunpack.c.l.b16 %v340
    %v409 = vunpack.c.l.b16 %v341
    %v410 = vunpack.c.l.b16 %v342
    %v411 = vunpack.c.l.b16 %v343
    %v412 = vunpack.c.l.b16 %v344
    %v413 = vunpack.c.l.b16 %v345
    %v414 = vunpack.c.l.b16 %v346
    %v415 = vunpack.c.l.b16 %v347
    %v416 = vunpack.c.l.b16 %v348
    %v417 = vunpack.c.l.b16 %v349
    %v418 = vunpack.c.l.b16 %v350
    %v419 = vunpack.c.l.b16 %v351
    %v420 = vunpack.c.l.b16 %v352
    %v421 = vunpack.c.l.b16 %v353
    %v422 = vunpack.c.l.b16 %v354
    %v423 = vunpack.c.l.b16 %v355
    %v424 = vunpack.c.l.b16 %v356
    %v425 = vunpack.c.l.b16 %v357
    %v426 = vunpack.c.l.b16 %v358
    %v427 = vunpack.c.l.b16 %v359
    %v428 = vunpack.c.l.b16 %v360
    %v429 = vunpack.c.l.b16 %v361
    %v430 = vunpack.c.l.b16 %v362
    %v431 = vunpack.c.l.b16 %v363
    %v432 = vpack.c.b16 %v401, %v400
    %v433 = vpack.c.b16 %v403, %v402
    %v434 = vpack.c.b16 %v405, %v404
    %v435 = vpack.c.b16 %v407, %v406
    %v436 = vpack.c.b16 %v409, %v408
    %v437 = vpack.c.b16 %v411, %v410
    %v438 = vpack.c.b16 %v413, %v412
    %v439 = vpack.c.b16 %v415, %v414
    %v440 = vpack.c.b16 %v417, %v416
    %v441 = vpack.c.b16 %v419, %v418
    %v442 = vpack.c.b16 %v421, %v420
    %v443 = vpack.c.b16 %v423, %v422
    %v444 = vpack.c.b16 %v425, %v424
    %v445 = vpack.c.b16 %v427, %v426
    %v446 = vpack.c.b16 %v429, %v428
    %v447 = vpack.c.b16 %v431, %v430
    %464 = vmatpush.bf16.msra.mxu0 %v439
    %465 = vmatpush.bf16.msra.mxu0 %v438
    %466 = vmatpush.bf16.msra.mxu0 %v437
    %467 = vmatpush.bf16.msra.mxu0 %v436
    %468 = vmatpush.bf16.msra.mxu0 %v435
    %469 = vmatpush.bf16.msra.mxu0 %v434
    %470 = vmatpush.bf16.msra.mxu0 %v433
    %471 = vmatpush.bf16.msra.mxu0 %v432
    %472 = vmatmul.bf16.gmra.mxu0 %v330
    %v473 = vpop.f32.mrf.mxu0
    %v474 = vadd.f32 %v366, %v473
    %v475 = vpop.f32.mrf.mxu0
    %476 = vdwg.mxu0
    %477 = vmatpush.bf16.msra.mxu0 %v447
    %478 = vmatpush.bf16.msra.mxu0 %v446
    %479 = vmatpush.bf16.msra.mxu0 %v445
    %480 = vmatpush.bf16.msra.mxu0 %v444
    %481 = vmatpush.bf16.msra.mxu0 %v443
    %482 = vmatpush.bf16.msra.mxu0 %v442
    %483 = vmatpush.bf16.msra.mxu0 %v441
    %484 = vmatpush.bf16.msra.mxu0 %v440
    %485 = vmatmul.bf16.gmra.mxu0 %v331
    %v486 = vpop.f32.mrf.mxu0
    %v487 = vadd.f32 %v474, %v486
    %v488 = vpop.f32.mrf.mxu0
    %489 = vdwg.mxu0
    %vm490 = vcmask 254976
    %491 = vst.msk [vmem:[#allocation2] sm:$0x3] %vm490, %v487
    // Predicated region
    $region26: #{lite_face_forward.19} parent=1 // pred_check
      _
    $region27: #{lite_face_forward.19} parent=1 // pred_check_branch
      %493 = sbr.rel (0) target = $region29
    $region28: #{lite_face_forward.19} parent=1 // pred_region
      %495 = vsyncadd [#allocation3], 0
      %s497 = sshll.u32 [#allocation2], 4
      %s498 = int_to_ptr.vmem [resolvable:$true] %s497
      %s499 = sshll.u32 %s6, 4
      %s500 = int_to_ptr.hbm [resolvable:$true] %s499
      %502 = dma.vmem_to_hbm [thread:$0]  %s498, 32, %s500, [#allocation3]
    $region29: #{lite_face_forward.19} parent=1 // pred_fallthru
      _
    // Predicated region
    $region30: #{lite_face_forward.19} parent=1 // pred_check
      _
    $region31: #{lite_face_forward.19} parent=1 // pred_check_branch
      %504 = sbr.rel (0) target = $region33
    $region32: #{lite_face_forward.19} parent=1 // pred_region
      %506 = dma.done [#allocation3], 32
    $region33: #{lite_face_forward.19} parent=1 // pred_fallthru
      _
    %507 = vsyncpa [#allocation3], 1

</llo_original>
